<compile_context>
chip_gen: v7x
topology: tpu7x:2x2x1
jax: 0.10.0
libtpu: 0.0.40
codegen_flags: <defaults>
</compile_context>

<pallas_src>
import functools

import jax
import jax.numpy as jnp
from jax.experimental import pallas as pl
from jax.experimental.pallas import tpu as pltpu


# ---------------------------------------------------------------------------
# Pallas kernel.
# Grid = (batch blocks [parallel], FC1 blocks [arbitrary]).
# ---------------------------------------------------------------------------
def fused_forward_kernel(res_ref, att_ref, agg_ref, wconv_ref, bconv_ref,
                         w1i_ref, w1t_ref, w1a_ref,
                         w2i_ref, w2t_ref, w2a_ref,
                         w3i_ref, w3ca_ref, w3cb_ref,
                         bias1_ref, bias2_ref, b3i_ref,
                         img_embed_ref, att_cat_ref, img_cls_ref,
                         acc_img, acc_txt, acc_agg, conv_sc):
    f32, bf16 = jnp.float32, jnp.bfloat16
    relu = lambda x: jnp.maximum(x, 0.0)

    k = pl.program_id(1)
    nk = pl.num_programs(1)

    @pl.when(k == 0)
    def _init():
        acc_img[...] = jnp.zeros_like(acc_img)
        acc_txt[...] = jnp.zeros_like(acc_txt)
        acc_agg[...] = jnp.zeros_like(acc_agg)
        # 1x1 Conv2d(C -> 1): VPU multiply (bf16) + cross-sublane reduce (f32 acc).
        # Keeps the MXU free for the real matmuls (no M=1 matmul pushes).
        prod = (agg_ref[...] * wconv_ref[...]).astype(f32)        # (TB, C, A)
        conv = jnp.sum(prod, axis=1) + bconv_ref[0]               # (TB, A), SMEM bias
        conv_sc[...] = relu(conv).astype(bf16)                    # bf16: next use is MXU

    bias1 = bias1_ref[...]        # (3, TK1) f32 slice of the stacked fc1 biases

    def fc1_slice(x_bf16, w1_ref, row):
        # bf16 MXU operands, f32 accumulation, f32 bias add + relu, then bf16
        # immediately (the only consumer is the next bf16 MXU operand).
        h = relu(jnp.dot(x_bf16, w1_ref[...], preferred_element_type=f32)
                 + bias1[row:row + 1, :])
        return h.astype(bf16)

    # ---- image branch slice: fc1_img(+bn)+relu(+dropout=id) -> partial fc2_img ----
    h_img = fc1_slice(res_ref[...], w1i_ref, 0)
    acc_img[...] += jnp.dot(h_img, w2i_ref[...], preferred_element_type=f32)

    # ---- text branch slice ----
    h_txt = fc1_slice(att_ref[...], w1t_ref, 1)
    acc_txt[...] += jnp.dot(h_txt, w2t_ref[...], preferred_element_type=f32)

    # ---- agg branch slice (input is the conv output cached in scratch) ----
    h_agg = fc1_slice(conv_sc[...], w1a_ref, 2)
    acc_agg[...] += jnp.dot(h_agg, w2a_ref[...], preferred_element_type=f32)

    @pl.when(k == nk - 1)
    def _finalize():
        bias2 = bias2_ref[...]    # (4, FC2_P) f32: [fc2_img, fc2_text, fc2_agg, fc3_concat]

        img_embed = acc_img[...] + bias2[0:1, :]
        img_embed_ref[...] = img_embed

        # fc3_img + log_softmax(dim=1).  Padded class lanes carry a -1e30 f32 bias,
        # so they never win the max and contribute exp()==0 to the sum.
        logits = (jnp.dot(img_embed.astype(bf16), w3i_ref[...],
                          preferred_element_type=f32) + b3i_ref[...])
        m = jnp.max(logits, axis=1, keepdims=True)
        z = logits - m
        lse = jnp.log(jnp.sum(jnp.exp(z), axis=1, keepdims=True))
        img_cls_ref[...] = z - lse

        text_embed = acc_txt[...] + bias2[1:2, :]
        text_embed_agg = acc_agg[...] + bias2[2:3, :]
        # relu(cat(a, b)) @ W = relu(a) @ W[:F] + relu(b) @ W[F:]  (W split in glue)
        ca = relu(text_embed).astype(bf16)
        cb = relu(text_embed_agg).astype(bf16)
        att_cat_ref[...] = (jnp.dot(ca, w3ca_ref[...], preferred_element_type=f32)
                            + jnp.dot(cb, w3cb_ref[...], preferred_element_type=f32)
                            + bias2[3:4, :])


# ---------------------------------------------------------------------------
# Glue: parameter construction (deterministic), BN folding, padding/bf16 prep,
# and the pallas_call wrapper.
# ---------------------------------------------------------------------------
def init_params(key, res_size, att_size, fc1, fc2, nclass, nclass_all):
    """Logical (PyTorch-equivalent) f32 params, with eval-mode BN pre-folded."""
    eps = 1e-5
    keys = iter(jax.random.split(key, 32))

    def linear(fan_in, fan_out):
        k1, k2 = jax.random.split(next(keys))
        w = jax.random.normal(k1, (fan_in, fan_out), jnp.float32) * 0.05
        b = jax.random.normal(k2, (1, fan_out), jnp.float32) * 0.05
        return w, b

    def bn(n):
        k1, k2, k3, k4 = jax.random.split(next(keys), 4)
        gamma = 1.0 + 0.1 * jax.random.normal(k1, (n,), jnp.float32)
        beta = 0.1 * jax.random.normal(k2, (n,), jnp.float32)
        mean = 0.1 * jax.random.normal(k3, (n,), jnp.float32)
        var = 0.9 + 0.2 * jax.random.uniform(k4, (n,), jnp.float32)
        return gamma, beta, mean, var

    def fold(lin_wb, bn_p):
        w, b = lin_wb
        gamma, beta, mean, var = bn_p
        scale = gamma / jnp.sqrt(var + eps)                 # keep the fold in f32
        return w * scale[None, :], b * scale[None, :] + (beta - mean * scale)[None, :]

    p = {}
    p["w1i"], p["b1i"] = fold(linear(res_size, fc1), bn(fc1))   # fc1_img + bn
    p["w2i"], p["b2i"] = fold(linear(fc1, fc2), bn(fc2))        # fc2_img + bn
    p["w3i"], p["b3i"] = linear(fc2, nclass)                    # fc3_img
    p["w1t"], p["b1t"] = fold(linear(att_size, fc1), bn(fc1))   # fc1_text + bn
    p["w2t"], p["b2t"] = fold(linear(fc1, fc2), bn(fc2))        # fc2_text + bn
    p["w1a"], p["b1a"] = fold(linear(att_size, fc1), bn(fc1))   # fc1_agg + bn
    p["w2a"], p["b2a"] = fold(linear(fc1, fc2), bn(fc2))        # fc2_agg + bn
    wcat, bcat = fold(linear(2 * fc2, fc2), bn(fc2))            # fc3_concat + bn
    p["w3ca"], p["w3cb"] = wcat[:fc2, :], wcat[fc2:, :]
    p["b3c"] = bcat
    # conv1: init_weights() fills weight with 1.0, bias with 0.0
    p["wconv"] = jnp.ones((nclass_all,), jnp.float32)
    p["bconv"] = jnp.zeros((1,), jnp.float32)
    return p


def _round_up(n, m=128):
    return ((n + m - 1) // m) * m


def _pad2(x, rows, cols, fill=0.0):
    return jnp.pad(x, ((0, rows - x.shape[0]), (0, cols - x.shape[1])),
                   constant_values=fill)


def _pick_fc1_block(fc1_p, target):
    """Largest multiple-of-128 divisor of fc1_p that is <= max(target, 128)."""
    target = max(128, (min(target, fc1_p) // 128) * 128)
    for cand in range(target, 127, -128):
        if fc1_p % cand == 0:
            return cand
    return fc1_p


def _vmem_limit_bytes():
    """~7/8 of physical VMEM (capped at 112 MiB): ~56 MiB on v7x, 112 MiB on v5e/v6e."""
    try:
        cap = int(pltpu.get_tpu_info().vmem_capacity_bytes)
    except Exception:
        cap = 128 * 1024 * 1024
    return min((cap * 7) // 8, 112 * 1024 * 1024)


def _spec(shape, index_map, *, single_buffer=False):
    """BlockSpec; grid-invariant operands are single-buffered (pl.Buffered(1)) so
    VMEM-resident weights don't pay a useless double-buffer."""
    if single_buffer:
        try:
            return pl.BlockSpec(shape, index_map, pipeline_mode=pl.Buffered(1))
        except (TypeError, ValueError):
            pass   # older jax: fall back to the default double-buffered pipeline
    return pl.BlockSpec(shape, index_map)


def prepare_kernel_params(p):
    """Pad feature/K dims to multiples of 128 (lane-dense DMAs and stores), cast
    matmul weights to bf16 AFTER the f32 BN fold, and stack biases (fewer DMAs)."""
    bf16, f32 = jnp.bfloat16, jnp.float32
    res_size, fc1 = p["w1i"].shape
    att_size = p["w1t"].shape[0]
    A = p["w1a"].shape[0]                      # attSize (conv output dim)
    fc2 = p["w2i"].shape[1]
    nclass = p["w3i"].shape[1]
    RES_P, ATT_P = _round_up(res_size), _round_up(att_size)
    FC1_P, FC2_P, NC_P = _round_up(fc1), _round_up(fc2), _round_up(nclass)

    kp = {
        # Direct-input K dims padded to 128.  TODO(synk): the agg-branch K dim
        # (attSize) is left unpadded because the conv output is produced in-kernel.
        "w1i": _pad2(p["w1i"], RES_P, FC1_P).astype(bf16),
        "w1t": _pad2(p["w1t"], ATT_P, FC1_P).astype(bf16),
        "w1a": _pad2(p["w1a"], A, FC1_P).astype(bf16),
        "w2i": _pad2(p["w2i"], FC1_P, FC2_P).astype(bf16),
        "w2t": _pad2(p["w2t"], FC1_P, FC2_P).astype(bf16),
        "w2a": _pad2(p["w2a"], FC1_P, FC2_P).astype(bf16),
        "w3i": _pad2(p["w3i"], FC2_P, NC_P).astype(bf16),
        "w3ca": _pad2(p["w3ca"], FC2_P, FC2_P).astype(bf16),
        "w3cb": _pad2(p["w3cb"], FC2_P, FC2_P).astype(bf16),
        # Stacked f32 biases (rows: img/text/agg, and img/text/agg/concat).
        "bias1": jnp.concatenate([_pad2(p[k], 1, FC1_P) for k in ("b1i", "b1t", "b1a")], axis=0),
        "bias2": jnp.concatenate([_pad2(p[k], 1, FC2_P) for k in ("b2i", "b2t", "b2a", "b3c")], axis=0),
        # Padded class lanes get a -1e30 bias so the in-kernel log-softmax ignores them.
        "b3i": _pad2(p["b3i"], 1, NC_P, fill=-1e30),
        "wconv": p["wconv"].reshape(1, -1, 1).astype(bf16),     # (1, C, 1) for VPU broadcast
        "bconv": p["bconv"].astype(f32),
    }
    # The -1e30 padded-class trick is only safe while b3i stays f32.
    assert kp["b3i"].dtype == jnp.float32 and kp["bias2"].dtype == jnp.float32
    return kp


@functools.partial(jax.jit, static_argnames=("fc2", "nclass", "batch_block", "fc1_block"))
def mlp_att_twoway_conv(res, att, att_agg, kp, *, fc2, nclass,
                        batch_block=256, fc1_block=512):
    B = res.shape[0]
    C = kp["wconv"].shape[1]          # nclass_all
    A = kp["w1a"].shape[0]            # attSize (agg-branch K dim)
    RES_P, FC1_P = kp["w1i"].shape
    ATT_P = kp["w1t"].shape[0]
    FC2_P = kp["w2i"].shape[1]
    NC_P = kp["w3i"].shape[1]

    # --- batch tiling: pad ragged batches up to a multiple of the batch tile ---
    TB = max(8, (min(batch_block, _round_up(B, 8)) // 8) * 8)
    B_pad = _round_up(B, TB)
    n_b = B_pad // TB

    # --- FC1 (reduction) tiling ---
    TK1 = _pick_fc1_block(FC1_P, fc1_block)
    n_k = FC1_P // TK1
    single_k = (n_k == 1)             # fc1/fc2 blocks are then grid-invariant too

    bf16 = jnp.bfloat16

    # Activations to bf16 (halves the dominant agg DMA / VMEM block) + zero padding.
    # TODO(synk): produce these bf16 upstream so the cast fuses into the producer.
    def prep2d(x, cols):
        x = jnp.pad(x, ((0, B_pad - x.shape[0]), (0, cols - x.shape[1])))
        return x.astype(bf16)

    res_p = prep2d(res, RES_P)
    att_p = prep2d(att, ATT_P)
    agg = att_agg.reshape(B, C, A).astype(bf16)          # free reshape + cast
    agg_p = jnp.pad(agg, ((0, B_pad - B), (0, 0), (0, 0)))

    # --- index maps (grid = (batch block i, FC1 block k)) ---
    idx_b2 = lambda i, k: (i, 0)
    idx_b3 = lambda i, k: (i, 0, 0)
    idx_c2 = lambda i, k: (0, 0)
    idx_c3 = lambda i, k: (0, 0, 0)
    idx_w1 = lambda i, k: (0, k)      # fc1 weights / bias1 blocked along N
    idx_w2 = lambda i, k: (k, 0)      # fc2 weights blocked along K

    in_specs = [
        pl.BlockSpec((TB, RES_P), idx_b2),                      # res (batch-tiled, bf16)
        pl.BlockSpec((TB, ATT_P), idx_b2),                      # att
        pl.BlockSpec((TB, C, A), idx_b3),                       # agg
        _spec((1, C, 1), idx_c3, single_buffer=True),           # conv weight (resident)
        pl.BlockSpec(memory_space=pltpu.MemorySpace.SMEM),      # conv bias scalar
        _spec((RES_P, TK1), idx_w1, single_buffer=single_k),    # w1_img (N-blocked)
        _spec((ATT_P, TK1), idx_w1, single_buffer=single_k),    # w1_text
        _spec((A, TK1), idx_w1, single_buffer=single_k),        # w1_agg
        _spec((TK1, FC2_P), idx_w2, single_buffer=single_k),    # w2_img (K-blocked)
        _spec((TK1, FC2_P), idx_w2, single_buffer=single_k),    # w2_text
        _spec((TK1, FC2_P), idx_w2, single_buffer=single_k),    # w2_agg
        _spec((FC2_P, NC_P), idx_c2, single_buffer=True),       # w3_img (resident)
        _spec((FC2_P, FC2_P), idx_c2, single_buffer=True),      # w3_concat[:fc2]
        _spec((FC2_P, FC2_P), idx_c2, single_buffer=True),      # w3_concat[fc2:]
        _spec((3, TK1), idx_w1, single_buffer=single_k),        # stacked fc1 biases
        _spec((4, FC2_P), idx_c2, single_buffer=True),          # stacked fc2/concat biases
        _spec((1, NC_P), idx_c2, single_buffer=True),           # fc3_img bias (f32, -1e30 pad)
    ]
    out_shape = (jax.ShapeDtypeStruct((B_pad, FC2_P), jnp.float32),
                 jax.ShapeDtypeStruct((B_pad, FC2_P), jnp.float32),
                 jax.ShapeDtypeStruct((B_pad, NC_P), jnp.float32))
    out_specs = (pl.BlockSpec((TB, FC2_P), idx_b2),
                 pl.BlockSpec((TB, FC2_P), idx_b2),
                 pl.BlockSpec((TB, NC_P), idx_b2))
    scratch_shapes = [
        pltpu.VMEM((TB, FC2_P), jnp.float32),    # acc_img
        pltpu.VMEM((TB, FC2_P), jnp.float32),    # acc_txt
        pltpu.VMEM((TB, FC2_P), jnp.float32),    # acc_agg
        pltpu.VMEM((TB, A), jnp.bfloat16),       # conv output cache
    ]

    inputs = [res_p, att_p, agg_p, kp["wconv"], kp["bconv"],
              kp["w1i"], kp["w1t"], kp["w1a"],
              kp["w2i"], kp["w2t"], kp["w2a"],
              kp["w3i"], kp["w3ca"], kp["w3cb"],
              kp["bias1"], kp["bias2"], kp["b3i"]]

    flops = 2 * B_pad * (RES_P * FC1_P + ATT_P * FC1_P + A * FC1_P
                         + 3 * FC1_P * FC2_P + C * A
                         + FC2_P * NC_P + 2 * FC2_P * FC2_P)
    bytes_accessed = sum(int(x.size) * x.dtype.itemsize for x in inputs)
    bytes_accessed += 4 * B_pad * (2 * FC2_P + NC_P)
    cost = pl.CostEstimate(flops=int(flops),
                           transcendentals=int(B_pad * (NC_P + 1)),
                           bytes_accessed=int(bytes_accessed))

    fn = pl.pallas_call(
        fused_forward_kernel,
        out_shape=out_shape,
        grid=(n_b, n_k),
        in_specs=in_specs,
        out_specs=out_specs,
        scratch_shapes=scratch_shapes,
        compiler_params=pltpu.CompilerParams(
            dimension_semantics=("parallel", "arbitrary"),
            vmem_limit_bytes=_vmem_limit_bytes()),
        cost_estimate=cost,
    )
    img_embed_p, att_cat_p, img_cls_p = fn(*inputs)
    # Strip batch/lane padding back off (outputs keep the module's logical shapes).
    return (img_embed_p[:B, :fc2], att_cat_p[:B, :fc2], img_cls_p[:B, :nclass])


# ---------------------------------------------------------------------------
# Pure-JAX references.
# ---------------------------------------------------------------------------
def reference(res, att, att_agg, p, quantized=False):
    """f32 reference (PyTorch eval-mode semantics).  quantized=True mirrors the
    kernel's bf16 matmul operands with f32 accumulation for a tight check."""
    f32 = jnp.float32
    cast = (lambda x: x.astype(jnp.bfloat16)) if quantized else (lambda x: x)
    relu = lambda x: jnp.maximum(x, 0.0)

    def lin(x, w, b):
        return jnp.dot(cast(x), cast(w), preferred_element_type=f32) + b

    B = res.shape[0]
    C = p["wconv"].shape[0]
    A = p["w1a"].shape[0]
    agg = att_agg.reshape(B, C, A)

    h = relu(lin(res, p["w1i"], p["b1i"]))
    img_embed = lin(h, p["w2i"], p["b2i"])
    img_cls = jax.nn.log_softmax(lin(img_embed, p["w3i"], p["b3i"]), axis=1)

    ht = relu(lin(att, p["w1t"], p["b1t"]))
    text_embed = lin(ht, p["w2t"], p["b2t"])

    conv = jnp.einsum('bca,c->ba', cast(agg), cast(p["wconv"]),
                      preferred_element_type=f32) + p["bconv"][0]
    conv = relu(conv)
    ha = relu(lin(conv, p["w1a"], p["b1a"]))
    text_embed_agg = lin(ha, p["w2a"], p["b2a"])

    att_cat = (jnp.dot(cast(relu(text_embed)), cast(p["w3ca"]), preferred_element_type=f32)
               + jnp.dot(cast(relu(text_embed_agg)), cast(p["w3cb"]), preferred_element_type=f32)
               + p["b3c"])
    return img_embed, att_cat, img_cls


if __name__ == "__main__":
    # Small synthetic config (opt.resSize, opt.attSize, opt.fc1_size, opt.fc2_size,
    # nclass, opt.nclass_all).  B=250 (ragged) exercises the batch-padding path,
    # batch_block=128 gives a 2-step "parallel" batch grid, and fc1_block=128 with
    # FC1=256 exercises the FC1-blocked accumulation path (2 K blocks).
    B, RES, ATT, FC1, FC2, NCLASS, NCLASS_ALL = 250, 64, 32, 256, 64, 10, 16

    key = jax.random.PRNGKey(0)
    k_param, k_res, k_att, k_agg = jax.random.split(key, 4)

    params = init_params(k_param, RES, ATT, FC1, FC2, NCLASS, NCLASS_ALL)
    kparams = prepare_kernel_params(params)

    res = jax.random.normal(k_res, (B, RES), jnp.float32)
    att = jax.random.normal(k_att, (B, ATT), jnp.float32)
    att_agg = jax.random.normal(k_agg, (B, NCLASS_ALL * ATT), jnp.float32)

    outs = mlp_att_twoway_conv(res, att, att_agg, kparams,
                               fc2=FC2, nclass=NCLASS,
                               batch_block=128, fc1_block=128)
    outs = jax.block_until_ready(outs)

    refs_f32 = reference(res, att, att_agg, params, quantized=False)
    refs_bf16 = reference(res, att, att_agg, params, quantized=True)
    names = ("img_embed", "att_concat_embed", "img_cls")
    for name, o, rf, rq in zip(names, outs, refs_f32, refs_bf16):
        assert o.shape == rf.shape and o.dtype == rf.dtype, name
        # Tight structural check vs the bf16-mirroring reference.
        assert jnp.allclose(o, rq, atol=1e-2, rtol=1e-2), f"{name}: mismatch vs bf16 reference"
        # Loose check vs the full-f32 (PyTorch-semantics) reference.
        assert jnp.allclose(o, rf, atol=3e-2, rtol=3e-2), f"{name}: mismatch vs f32 reference"

    print("KERNEL_OK")
</pallas_src>

<mosaic_0001>
module attributes {stable_mosaic.version = 11 : i64} {
  func.func @fused_forward_kernel(%arg0: i32, %arg1: i32, %arg2: memref<128x128xbf16, #tpu.memory_space<vmem>>, %arg3: memref<128x128xbf16, #tpu.memory_space<vmem>>, %arg4: memref<128x16x32xbf16, #tpu.memory_space<vmem>>, %arg5: memref<1x16x1xbf16, #tpu.memory_space<vmem>>, %arg6: memref<1xf32, #tpu.memory_space<smem>>, %arg7: memref<128x128xbf16, #tpu.memory_space<vmem>>, %arg8: memref<128x128xbf16, #tpu.memory_space<vmem>>, %arg9: memref<32x128xbf16, #tpu.memory_space<vmem>>, %arg10: memref<128x128xbf16, #tpu.memory_space<vmem>>, %arg11: memref<128x128xbf16, #tpu.memory_space<vmem>>, %arg12: memref<128x128xbf16, #tpu.memory_space<vmem>>, %arg13: memref<128x128xbf16, #tpu.memory_space<vmem>>, %arg14: memref<128x128xbf16, #tpu.memory_space<vmem>>, %arg15: memref<128x128xbf16, #tpu.memory_space<vmem>>, %arg16: memref<3x128xf32, #tpu.memory_space<vmem>>, %arg17: memref<4x128xf32, #tpu.memory_space<vmem>>, %arg18: memref<1x128xf32, #tpu.memory_space<vmem>>, %arg19: memref<128x128xf32, #tpu.memory_space<vmem>>, %arg20: memref<128x128xf32, #tpu.memory_space<vmem>>, %arg21: memref<128x128xf32, #tpu.memory_space<vmem>>, %arg22: memref<128x128xf32, #tpu.memory_space<vmem>>, %arg23: memref<128x128xf32, #tpu.memory_space<vmem>>, %arg24: memref<128x128xf32, #tpu.memory_space<vmem>>, %arg25: memref<128x32xbf16, #tpu.memory_space<vmem>>) attributes {dimension_semantics = [#tpu.dimension_semantics<parallel>, #tpu.dimension_semantics<arbitrary>], iteration_bounds = array<i64: 2, 2>, scalar_prefetch = 0 : i64, scratch_operands = 4 : i64, tpu.core_type = #tpu.core_type<tc>, window_params = [{transform_indices = @transform_0, window_bounds = array<i64: 128, 128>}, {transform_indices = @transform_1, window_bounds = array<i64: 128, 128>}, {transform_indices = @transform_2, window_bounds = array<i64: 128, 16, 32>}, {pipeline_mode = #tpu.pipeline_mode<synchronous>, transform_indices = @transform_3, window_bounds = array<i64: 1, 16, 1>}, {transform_indices = @transform_4, window_bounds = array<i64: 1>}, {transform_indices = @transform_5, window_bounds = array<i64: 128, 128>}, {transform_indices = @transform_6, window_bounds = array<i64: 128, 128>}, {transform_indices = @transform_7, window_bounds = array<i64: 32, 128>}, {transform_indices = @transform_8, window_bounds = array<i64: 128, 128>}, {transform_indices = @transform_9, window_bounds = array<i64: 128, 128>}, {transform_indices = @transform_10, window_bounds = array<i64: 128, 128>}, {pipeline_mode = #tpu.pipeline_mode<synchronous>, transform_indices = @transform_11, window_bounds = array<i64: 128, 128>}, {pipeline_mode = #tpu.pipeline_mode<synchronous>, transform_indices = @transform_12, window_bounds = array<i64: 128, 128>}, {pipeline_mode = #tpu.pipeline_mode<synchronous>, transform_indices = @transform_13, window_bounds = array<i64: 128, 128>}, {transform_indices = @transform_14, window_bounds = array<i64: 3, 128>}, {pipeline_mode = #tpu.pipeline_mode<synchronous>, transform_indices = @transform_15, window_bounds = array<i64: 4, 128>}, {pipeline_mode = #tpu.pipeline_mode<synchronous>, transform_indices = @transform_16, window_bounds = array<i64: 1, 128>}, {transform_indices = @transform_17, window_bounds = array<i64: 128, 128>}, {transform_indices = @transform_18, window_bounds = array<i64: 128, 128>}, {transform_indices = @transform_19, window_bounds = array<i64: 128, 128>}]} {
    %c0_i32 = arith.constant 0 : i32
    %0 = arith.cmpi eq, %arg1, %c0_i32 : i32
    %1 = arith.extui %0 : i1 to i32
    %c0_i32_0 = arith.constant 0 : i32
    %2 = arith.cmpi ne, %1, %c0_i32_0 : i32
    scf.if %2 {
      %cst_41 = arith.constant 0.000000e+00 : f32
      %49 = vector.broadcast %cst_41 : f32 to vector<128x128xf32>
      %c0_42 = arith.constant 0 : index
      %c0_43 = arith.constant 0 : index
      %50 = vector.load %arg22[%c0_42, %c0_43] : memref<128x128xf32, #tpu.memory_space<vmem>>, vector<128x128xf32>
      tpu.vector_store %arg22[%c0_42, %c0_43], %49 {strides = array<i32>} : memref<128x128xf32, #tpu.memory_space<vmem>>, vector<128x128xf32>,
      %cst_44 = arith.constant 0.000000e+00 : f32
      %51 = vector.broadcast %cst_44 : f32 to vector<128x128xf32>
      %c0_45 = arith.constant 0 : index
      %c0_46 = arith.constant 0 : index
      %52 = vector.load %arg23[%c0_45, %c0_46] : memref<128x128xf32, #tpu.memory_space<vmem>>, vector<128x128xf32>
      tpu.vector_store %arg23[%c0_45, %c0_46], %51 {strides = array<i32>} : memref<128x128xf32, #tpu.memory_space<vmem>>, vector<128x128xf32>,
      %cst_47 = arith.constant 0.000000e+00 : f32
      %53 = vector.broadcast %cst_47 : f32 to vector<128x128xf32>
      %c0_48 = arith.constant 0 : index
      %c0_49 = arith.constant 0 : index
      %54 = vector.load %arg24[%c0_48, %c0_49] : memref<128x128xf32, #tpu.memory_space<vmem>>, vector<128x128xf32>
      tpu.vector_store %arg24[%c0_48, %c0_49], %53 {strides = array<i32>} : memref<128x128xf32, #tpu.memory_space<vmem>>, vector<128x128xf32>,
      %c0_50 = arith.constant 0 : index
      %c0_51 = arith.constant 0 : index
      %c0_52 = arith.constant 0 : index
      %55 = vector.load %arg4[%c0_50, %c0_51, %c0_52] : memref<128x16x32xbf16, #tpu.memory_space<vmem>>, vector<128x16x32xbf16>
      %c0_53 = arith.constant 0 : index
      %c0_54 = arith.constant 0 : index
      %c0_55 = arith.constant 0 : index
      %56 = vector.load %arg5[%c0_53, %c0_54, %c0_55] : memref<1x16x1xbf16, #tpu.memory_space<vmem>>, vector<1x16x1xbf16>
      %57 = vector.broadcast %56 : vector<1x16x1xbf16> to vector<128x16x32xbf16>
      %58 = arith.mulf %55, %57 : vector<128x16x32xbf16>
      %59 = arith.extf %58 : vector<128x16x32xbf16> to vector<128x16x32xf32>
      %cst_56 = arith.constant dense<0.000000e+00> : vector<128x32xf32>
      %60 = vector.multi_reduction <add>, %59, %cst_56 [1] : vector<128x16x32xf32> to vector<128x32xf32>
      %c0_57 = arith.constant 0 : index
      %61 = memref.load %arg6[%c0_57] : memref<1xf32, #tpu.memory_space<smem>>
      %62 = vector.broadcast %61 : f32 to vector<128x32xf32>
      %63 = arith.addf %60, %62 : vector<128x32xf32>
      %cst_58 = arith.constant 0.000000e+00 : f32
      %64 = vector.broadcast %cst_58 : f32 to vector<128x32xf32>
      %65 = arith.maximumf %63, %64 : vector<128x32xf32>
      %66 = arith.truncf %65 : vector<128x32xf32> to vector<128x32xbf16>
      %c0_59 = arith.constant 0 : index
      %c0_60 = arith.constant 0 : index
      %67 = vector.load %arg25[%c0_59, %c0_60] : memref<128x32xbf16, #tpu.memory_space<vmem>>, vector<128x32xbf16>
      tpu.vector_store %arg25[%c0_59, %c0_60], %66 {strides = array<i32>} : memref<128x32xbf16, #tpu.memory_space<vmem>>, vector<128x32xbf16>,
    } else {
    }
    %c0 = arith.constant 0 : index
    %c0_1 = arith.constant 0 : index
    %3 = vector.load %arg16[%c0, %c0_1] : memref<3x128xf32, #tpu.memory_space<vmem>>, vector<3x128xf32>
    %c0_2 = arith.constant 0 : index
    %c0_3 = arith.constant 0 : index
    %4 = vector.load %arg2[%c0_2, %c0_3] : memref<128x128xbf16, #tpu.memory_space<vmem>>, vector<128x128xbf16>
    %c0_4 = arith.constant 0 : index
    %c0_5 = arith.constant 0 : index
    %5 = vector.load %arg7[%c0_4, %c0_5] : memref<128x128xbf16, #tpu.memory_space<vmem>>, vector<128x128xbf16>
    %cst = arith.constant dense<0.000000e+00> : vector<128x128xf32>
    %6 = tpu.matmul %4, %5, %cst {dimension_numbers = #tpu.dot_dimension_numbers<[1], [0], [0], [1], [0, 0, 1, 1], [], []>} : vector<128x128xbf16>, vector<128x128xbf16>, vector<128x128xf32> -> vector<128x128xf32>
    %7 = vector.extract_strided_slice %3 {offsets = [0, 0], sizes = [1, 128], strides = [1, 1]} : vector<3x128xf32> to vector<1x128xf32>
    %8 = vector.broadcast %7 : vector<1x128xf32> to vector<128x128xf32>
    %9 = arith.addf %6, %8 : vector<128x128xf32>
    %cst_6 = arith.constant 0.000000e+00 : f32
    %10 = vector.broadcast %cst_6 : f32 to vector<128x128xf32>
    %11 = arith.maximumf %9, %10 : vector<128x128xf32>
    %12 = arith.truncf %11 : vector<128x128xf32> to vector<128x128xbf16>
    %c0_7 = arith.constant 0 : index
    %c0_8 = arith.constant 0 : index
    %13 = vector.load %arg22[%c0_7, %c0_8] : memref<128x128xf32, #tpu.memory_space<vmem>>, vector<128x128xf32>
    %c0_9 = arith.constant 0 : index
    %c0_10 = arith.constant 0 : index
    %14 = vector.load %arg10[%c0_9, %c0_10] : memref<128x128xbf16, #tpu.memory_space<vmem>>, vector<128x128xbf16>
    %cst_11 = arith.constant dense<0.000000e+00> : vector<128x128xf32>
    %15 = tpu.matmul %12, %14, %cst_11 {dimension_numbers = #tpu.dot_dimension_numbers<[1], [0], [0], [1], [0, 0, 1, 1], [], []>} : vector<128x128xbf16>, vector<128x128xbf16>, vector<128x128xf32> -> vector<128x128xf32>
    %16 = arith.addf %13, %15 : vector<128x128xf32>
    %c0_12 = arith.constant 0 : index
    %c0_13 = arith.constant 0 : index
    %17 = vector.load %arg22[%c0_12, %c0_13] : memref<128x128xf32, #tpu.memory_space<vmem>>, vector<128x128xf32>
    tpu.vector_store %arg22[%c0_12, %c0_13], %16 {strides = array<i32>} : memref<128x128xf32, #tpu.memory_space<vmem>>, vector<128x128xf32>,
    %c0_14 = arith.constant 0 : index
    %c0_15 = arith.constant 0 : index
    %18 = vector.load %arg3[%c0_14, %c0_15] : memref<128x128xbf16, #tpu.memory_space<vmem>>, vector<128x128xbf16>
    %c0_16 = arith.constant 0 : index
    %c0_17 = arith.constant 0 : index
    %19 = vector.load %arg8[%c0_16, %c0_17] : memref<128x128xbf16, #tpu.memory_space<vmem>>, vector<128x128xbf16>
    %cst_18 = arith.constant dense<0.000000e+00> : vector<128x128xf32>
    %20 = tpu.matmul %18, %19, %cst_18 {dimension_numbers = #tpu.dot_dimension_numbers<[1], [0], [0], [1], [0, 0, 1, 1], [], []>} : vector<128x128xbf16>, vector<128x128xbf16>, vector<128x128xf32> -> vector<128x128xf32>
    %21 = vector.extract_strided_slice %3 {offsets = [1, 0], sizes = [1, 128], strides = [1, 1]} : vector<3x128xf32> to vector<1x128xf32>
    %22 = vector.broadcast %21 : vector<1x128xf32> to vector<128x128xf32>
    %23 = arith.addf %20, %22 : vector<128x128xf32>
    %cst_19 = arith.constant 0.000000e+00 : f32
    %24 = vector.broadcast %cst_19 : f32 to vector<128x128xf32>
    %25 = arith.maximumf %23, %24 : vector<128x128xf32>
    %26 = arith.truncf %25 : vector<128x128xf32> to vector<128x128xbf16>
    %c0_20 = arith.constant 0 : index
    %c0_21 = arith.constant 0 : index
    %27 = vector.load %arg23[%c0_20, %c0_21] : memref<128x128xf32, #tpu.memory_space<vmem>>, vector<128x128xf32>
    %c0_22 = arith.constant 0 : index
    %c0_23 = arith.constant 0 : index
    %28 = vector.load %arg11[%c0_22, %c0_23] : memref<128x128xbf16, #tpu.memory_space<vmem>>, vector<128x128xbf16>
    %cst_24 = arith.constant dense<0.000000e+00> : vector<128x128xf32>
    %29 = tpu.matmul %26, %28, %cst_24 {dimension_numbers = #tpu.dot_dimension_numbers<[1], [0], [0], [1], [0, 0, 1, 1], [], []>} : vector<128x128xbf16>, vector<128x128xbf16>, vector<128x128xf32> -> vector<128x128xf32>
    %30 = arith.addf %27, %29 : vector<128x128xf32>
    %c0_25 = arith.constant 0 : index
    %c0_26 = arith.constant 0 : index
    %31 = vector.load %arg23[%c0_25, %c0_26] : memref<128x128xf32, #tpu.memory_space<vmem>>, vector<128x128xf32>
    tpu.vector_store %arg23[%c0_25, %c0_26], %30 {strides = array<i32>} : memref<128x128xf32, #tpu.memory_space<vmem>>, vector<128x128xf32>,
    %c0_27 = arith.constant 0 : index
    %c0_28 = arith.constant 0 : index
    %32 = vector.load %arg25[%c0_27, %c0_28] : memref<128x32xbf16, #tpu.memory_space<vmem>>, vector<128x32xbf16>
    %c0_29 = arith.constant 0 : index
    %c0_30 = arith.constant 0 : index
    %33 = vector.load %arg9[%c0_29, %c0_30] : memref<32x128xbf16, #tpu.memory_space<vmem>>, vector<32x128xbf16>
    %cst_31 = arith.constant dense<0.000000e+00> : vector<128x128xf32>
    %34 = tpu.matmul %32, %33, %cst_31 {dimension_numbers = #tpu.dot_dimension_numbers<[1], [0], [0], [1], [0, 0, 1, 1], [], []>} : vector<128x32xbf16>, vector<32x128xbf16>, vector<128x128xf32> -> vector<128x128xf32>
    %35 = vector.extract_strided_slice %3 {offsets = [2, 0], sizes = [1, 128], strides = [1, 1]} : vector<3x128xf32> to vector<1x128xf32>
    %36 = vector.broadcast %35 : vector<1x128xf32> to vector<128x128xf32>
    %37 = arith.addf %34, %36 : vector<128x128xf32>
    %cst_32 = arith.constant 0.000000e+00 : f32
    %38 = vector.broadcast %cst_32 : f32 to vector<128x128xf32>
    %39 = arith.maximumf %37, %38 : vector<128x128xf32>
    %40 = arith.truncf %39 : vector<128x128xf32> to vector<128x128xbf16>
    %c0_33 = arith.constant 0 : index
    %c0_34 = arith.constant 0 : index
    %41 = vector.load %arg24[%c0_33, %c0_34] : memref<128x128xf32, #tpu.memory_space<vmem>>, vector<128x128xf32>
    %c0_35 = arith.constant 0 : index
    %c0_36 = arith.constant 0 : index
    %42 = vector.load %arg12[%c0_35, %c0_36] : memref<128x128xbf16, #tpu.memory_space<vmem>>, vector<128x128xbf16>
    %cst_37 = arith.constant dense<0.000000e+00> : vector<128x128xf32>
    %43 = tpu.matmul %40, %42, %cst_37 {dimension_numbers = #tpu.dot_dimension_numbers<[1], [0], [0], [1], [0, 0, 1, 1], [], []>} : vector<128x128xbf16>, vector<128x128xbf16>, vector<128x128xf32> -> vector<128x128xf32>
    %44 = arith.addf %41, %43 : vector<128x128xf32>
    %c0_38 = arith.constant 0 : index
    %c0_39 = arith.constant 0 : index
    %45 = vector.load %arg24[%c0_38, %c0_39] : memref<128x128xf32, #tpu.memory_space<vmem>>, vector<128x128xf32>
    tpu.vector_store %arg24[%c0_38, %c0_39], %44 {strides = array<i32>} : memref<128x128xf32, #tpu.memory_space<vmem>>, vector<128x128xf32>,
    %c1_i32 = arith.constant 1 : i32
    %46 = arith.cmpi eq, %arg1, %c1_i32 : i32
    %47 = arith.extui %46 : i1 to i32
    %c0_i32_40 = arith.constant 0 : i32
    %48 = arith.cmpi ne, %47, %c0_i32_40 : i32
    scf.if %48 {
      %c0_41 = arith.constant 0 : index
      %c0_42 = arith.constant 0 : index
      %49 = vector.load %arg17[%c0_41, %c0_42] : memref<4x128xf32, #tpu.memory_space<vmem>>, vector<4x128xf32>
      %c0_43 = arith.constant 0 : index
      %c0_44 = arith.constant 0 : index
      %50 = vector.load %arg22[%c0_43, %c0_44] : memref<128x128xf32, #tpu.memory_space<vmem>>, vector<128x128xf32>
      %51 = vector.extract_strided_slice %49 {offsets = [0, 0], sizes = [1, 128], strides = [1, 1]} : vector<4x128xf32> to vector<1x128xf32>
      %52 = vector.broadcast %51 : vector<1x128xf32> to vector<128x128xf32>
      %53 = arith.addf %50, %52 : vector<128x128xf32>
      %c0_45 = arith.constant 0 : index
      %c0_46 = arith.constant 0 : index
      %54 = vector.load %arg19[%c0_45, %c0_46] : memref<128x128xf32, #tpu.memory_space<vmem>>, vector<128x128xf32>
      tpu.vector_store %arg19[%c0_45, %c0_46], %53 {strides = array<i32>} : memref<128x128xf32, #tpu.memory_space<vmem>>, vector<128x128xf32>,
      %55 = arith.truncf %53 : vector<128x128xf32> to vector<128x128xbf16>
      %c0_47 = arith.constant 0 : index
      %c0_48 = arith.constant 0 : index
      %56 = vector.load %arg13[%c0_47, %c0_48] : memref<128x128xbf16, #tpu.memory_space<vmem>>, vector<128x128xbf16>
      %cst_49 = arith.constant dense<0.000000e+00> : vector<128x128xf32>
      %57 = tpu.matmul %55, %56, %cst_49 {dimension_numbers = #tpu.dot_dimension_numbers<[1], [0], [0], [1], [0, 0, 1, 1], [], []>} : vector<128x128xbf16>, vector<128x128xbf16>, vector<128x128xf32> -> vector<128x128xf32>
      %c0_50 = arith.constant 0 : index
      %c0_51 = arith.constant 0 : index
      %58 = vector.load %arg18[%c0_50, %c0_51] : memref<1x128xf32, #tpu.memory_space<vmem>>, vector<1x128xf32>
      %59 = vector.broadcast %58 : vector<1x128xf32> to vector<128x128xf32>
      %60 = arith.addf %57, %59 : vector<128x128xf32>
      %cst_52 = arith.constant dense<0xFF800000> : vector<128xf32>
      %61 = vector.multi_reduction <maximumf>, %60, %cst_52 [1] : vector<128x128xf32> to vector<128xf32>
      %62 = vector.shape_cast %61 : vector<128xf32> to vector<128x1xf32>
      %63 = vector.broadcast %62 : vector<128x1xf32> to vector<128x128xf32>
      %64 = arith.subf %60, %63 : vector<128x128xf32>
      %65 = math.exp %64 : vector<128x128xf32>
      %cst_53 = arith.constant dense<0.000000e+00> : vector<128xf32>
      %66 = vector.multi_reduction <add>, %65, %cst_53 [1] : vector<128x128xf32> to vector<128xf32>
      %67 = vector.shape_cast %66 : vector<128xf32> to vector<128x1xf32>
      %68 = math.log %67 : vector<128x1xf32>
      %69 = vector.broadcast %68 : vector<128x1xf32> to vector<128x128xf32>
      %70 = arith.subf %64, %69 : vector<128x128xf32>
      %c0_54 = arith.constant 0 : index
      %c0_55 = arith.constant 0 : index
      %71 = vector.load %arg21[%c0_54, %c0_55] : memref<128x128xf32, #tpu.memory_space<vmem>>, vector<128x128xf32>
      tpu.vector_store %arg21[%c0_54, %c0_55], %70 {strides = array<i32>} : memref<128x128xf32, #tpu.memory_space<vmem>>, vector<128x128xf32>,
      %c0_56 = arith.constant 0 : index
      %c0_57 = arith.constant 0 : index
      %72 = vector.load %arg23[%c0_56, %c0_57] : memref<128x128xf32, #tpu.memory_space<vmem>>, vector<128x128xf32>
      %73 = vector.extract_strided_slice %49 {offsets = [1, 0], sizes = [1, 128], strides = [1, 1]} : vector<4x128xf32> to vector<1x128xf32>
      %74 = vector.broadcast %73 : vector<1x128xf32> to vector<128x128xf32>
      %75 = arith.addf %72, %74 : vector<128x128xf32>
      %c0_58 = arith.constant 0 : index
      %c0_59 = arith.constant 0 : index
      %76 = vector.load %arg24[%c0_58, %c0_59] : memref<128x128xf32, #tpu.memory_space<vmem>>, vector<128x128xf32>
      %77 = vector.extract_strided_slice %49 {offsets = [2, 0], sizes = [1, 128], strides = [1, 1]} : vector<4x128xf32> to vector<1x128xf32>
      %78 = vector.broadcast %77 : vector<1x128xf32> to vector<128x128xf32>
      %79 = arith.addf %76, %78 : vector<128x128xf32>
      %cst_60 = arith.constant 0.000000e+00 : f32
      %80 = vector.broadcast %cst_60 : f32 to vector<128x128xf32>
      %81 = arith.maximumf %75, %80 : vector<128x128xf32>
      %82 = arith.truncf %81 : vector<128x128xf32> to vector<128x128xbf16>
      %cst_61 = arith.constant 0.000000e+00 : f32
      %83 = vector.broadcast %cst_61 : f32 to vector<128x128xf32>
      %84 = arith.maximumf %79, %83 : vector<128x128xf32>
      %85 = arith.truncf %84 : vector<128x128xf32> to vector<128x128xbf16>
      %c0_62 = arith.constant 0 : index
      %c0_63 = arith.constant 0 : index
      %86 = vector.load %arg14[%c0_62, %c0_63] : memref<128x128xbf16, #tpu.memory_space<vmem>>, vector<128x128xbf16>
      %cst_64 = arith.constant dense<0.000000e+00> : vector<128x128xf32>
      %87 = tpu.matmul %82, %86, %cst_64 {dimension_numbers = #tpu.dot_dimension_numbers<[1], [0], [0], [1], [0, 0, 1, 1], [], []>} : vector<128x128xbf16>, vector<128x128xbf16>, vector<128x128xf32> -> vector<128x128xf32>
      %c0_65 = arith.constant 0 : index
      %c0_66 = arith.constant 0 : index
      %88 = vector.load %arg15[%c0_65, %c0_66] : memref<128x128xbf16, #tpu.memory_space<vmem>>, vector<128x128xbf16>
      %cst_67 = arith.constant dense<0.000000e+00> : vector<128x128xf32>
      %89 = tpu.matmul %85, %88, %cst_67 {dimension_numbers = #tpu.dot_dimension_numbers<[1], [0], [0], [1], [0, 0, 1, 1], [], []>} : vector<128x128xbf16>, vector<128x128xbf16>, vector<128x128xf32> -> vector<128x128xf32>
      %90 = arith.addf %87, %89 : vector<128x128xf32>
      %91 = vector.extract_strided_slice %49 {offsets = [3, 0], sizes = [1, 128], strides = [1, 1]} : vector<4x128xf32> to vector<1x128xf32>
      %92 = vector.broadcast %91 : vector<1x128xf32> to vector<128x128xf32>
      %93 = arith.addf %90, %92 : vector<128x128xf32>
      %c0_68 = arith.constant 0 : index
      %c0_69 = arith.constant 0 : index
      %94 = vector.load %arg20[%c0_68, %c0_69] : memref<128x128xf32, #tpu.memory_space<vmem>>, vector<128x128xf32>
      tpu.vector_store %arg20[%c0_68, %c0_69], %93 {strides = array<i32>} : memref<128x128xf32, #tpu.memory_space<vmem>>, vector<128x128xf32>,
    } else {
    }
    return
  }
  func.func @transform_0(%arg0: i32, %arg1: i32) -> (i32, i32) {
    %c0_i32 = arith.constant 0 : i32
    %c0_i32_0 = arith.constant 0 : i32
    return %arg0, %c0_i32 : i32, i32
  }
  func.func @transform_1(%arg0: i32, %arg1: i32) -> (i32, i32) {
    %c0_i32 = arith.constant 0 : i32
    %c0_i32_0 = arith.constant 0 : i32
    return %arg0, %c0_i32 : i32, i32
  }
  func.func @transform_2(%arg0: i32, %arg1: i32) -> (i32, i32, i32) {
    %c0_i32 = arith.constant 0 : i32
    %c0_i32_0 = arith.constant 0 : i32
    %c0_i32_1 = arith.constant 0 : i32
    return %arg0, %c0_i32, %c0_i32_0 : i32, i32, i32
  }
  func.func @transform_3(%arg0: i32, %arg1: i32) -> (i32, i32, i32) {
    %c0_i32 = arith.constant 0 : i32
    %c0_i32_0 = arith.constant 0 : i32
    %c0_i32_1 = arith.constant 0 : i32
    %c0_i32_2 = arith.constant 0 : i32
    return %c0_i32, %c0_i32_0, %c0_i32_1 : i32, i32, i32
  }
  func.func @transform_4(%arg0: i32, %arg1: i32) -> i32 {
    %c0_i32 = arith.constant 0 : i32
    %c0_i32_0 = arith.constant 0 : i32
    return %c0_i32 : i32
  }
  func.func @transform_5(%arg0: i32, %arg1: i32) -> (i32, i32) {
    %c0_i32 = arith.constant 0 : i32
    %c0_i32_0 = arith.constant 0 : i32
    return %c0_i32, %arg1 : i32, i32
  }
  func.func @transform_6(%arg0: i32, %arg1: i32) -> (i32, i32) {
    %c0_i32 = arith.constant 0 : i32
    %c0_i32_0 = arith.constant 0 : i32
    return %c0_i32, %arg1 : i32, i32
  }
  func.func @transform_7(%arg0: i32, %arg1: i32) -> (i32, i32) {
    %c0_i32 = arith.constant 0 : i32
    %c0_i32_0 = arith.constant 0 : i32
    return %c0_i32, %arg1 : i32, i32
  }
  func.func @transform_8(%arg0: i32, %arg1: i32) -> (i32, i32) {
    %c0_i32 = arith.constant 0 : i32
    %c0_i32_0 = arith.constant 0 : i32
    return %arg1, %c0_i32 : i32, i32
  }
  func.func @transform_9(%arg0: i32, %arg1: i32) -> (i32, i32) {
    %c0_i32 = arith.constant 0 : i32
    %c0_i32_0 = arith.constant 0 : i32
    return %arg1, %c0_i32 : i32, i32
  }
  func.func @transform_10(%arg0: i32, %arg1: i32) -> (i32, i32) {
    %c0_i32 = arith.constant 0 : i32
    %c0_i32_0 = arith.constant 0 : i32
    return %arg1, %c0_i32 : i32, i32
  }
  func.func @transform_11(%arg0: i32, %arg1: i32) -> (i32, i32) {
    %c0_i32 = arith.constant 0 : i32
    %c0_i32_0 = arith.constant 0 : i32
    %c0_i32_1 = arith.constant 0 : i32
    return %c0_i32, %c0_i32_0 : i32, i32
  }
  func.func @transform_12(%arg0: i32, %arg1: i32) -> (i32, i32) {
    %c0_i32 = arith.constant 0 : i32
    %c0_i32_0 = arith.constant 0 : i32
    %c0_i32_1 = arith.constant 0 : i32
    return %c0_i32, %c0_i32_0 : i32, i32
  }
  func.func @transform_13(%arg0: i32, %arg1: i32) -> (i32, i32) {
    %c0_i32 = arith.constant 0 : i32
    %c0_i32_0 = arith.constant 0 : i32
    %c0_i32_1 = arith.constant 0 : i32
    return %c0_i32, %c0_i32_0 : i32, i32
  }
  func.func @transform_14(%arg0: i32, %arg1: i32) -> (i32, i32) {
    %c0_i32 = arith.constant 0 : i32
    %c0_i32_0 = arith.constant 0 : i32
    return %c0_i32, %arg1 : i32, i32
  }
  func.func @transform_15(%arg0: i32, %arg1: i32) -> (i32, i32) {
    %c0_i32 = arith.constant 0 : i32
    %c0_i32_0 = arith.constant 0 : i32
    %c0_i32_1 = arith.constant 0 : i32
    return %c0_i32, %c0_i32_0 : i32, i32
  }
  func.func @transform_16(%arg0: i32, %arg1: i32) -> (i32, i32) {
    %c0_i32 = arith.constant 0 : i32
    %c0_i32_0 = arith.constant 0 : i32
    %c0_i32_1 = arith.constant 0 : i32
    return %c0_i32, %c0_i32_0 : i32, i32
  }
  func.func @transform_17(%arg0: i32, %arg1: i32) -> (i32, i32) {
    %c0_i32 = arith.constant 0 : i32
    %c0_i32_0 = arith.constant 0 : i32
    return %arg0, %c0_i32 : i32, i32
  }
  func.func @transform_18(%arg0: i32, %arg1: i32) -> (i32, i32) {
    %c0_i32 = arith.constant 0 : i32
    %c0_i32_0 = arith.constant 0 : i32
    return %arg0, %c0_i32 : i32, i32
  }
  func.func @transform_19(%arg0: i32, %arg1: i32) -> (i32, i32) {
    %c0_i32 = arith.constant 0 : i32
    %c0_i32_0 = arith.constant 0 : i32
    return %arg0, %c0_i32 : i32, i32
  }
}

</mosaic_0001>

<llo_original>
// kernel: mlp_att_twoway_conv.1
$region0: #{mlp_att_twoway_conv.1}
  #allocation0 [shape = 'u32[]', space=smem, size = 0x4, offset = 0x4, fixed_abs, tag = 'smem constant byte address 0x4 - core index']
  #allocation1 [shape = 'u32[144,128]{1,0:T(1,128)}', space=vmem, size = 0x12000, scoped, tag = 'internal scratch']
  #allocation2 [shape = 'f32[128,128]{1,0:T(8,128)}', space=vmem, size = 0x10000, scoped, tag = 'scratch operand']
  #allocation3 [shape = 'f32[128,128]{1,0:T(8,128)}', space=vmem, size = 0x10000, scoped, tag = 'scratch operand']
  #allocation4 [shape = 'f32[128,128]{1,0:T(8,128)}', space=vmem, size = 0x10000, scoped, tag = 'scratch operand']
  #allocation5 [shape = 'bf16[128,32]{1,0:T(16,128)(2,1)}', space=vmem, size = 0x8000, scoped, tag = 'scratch operand']
  #allocation6 [shape = 'f32[1]{0:T(128)S(6)}', space=smem, size = 0x200, scoped, tag = 'scoped memory for mlp_att_twoway_conv.1']
  %s0 = inlined_call_operand.hbm [shape: bf16[256,128], index: 0, kind: input, shape index: {}]
  %s1 = inlined_call_operand.hbm [shape: bf16[256,128], index: 1, kind: input, shape index: {}]
  %s2 = inlined_call_operand.hbm [shape: bf16[256,16,32], index: 2, kind: input, shape index: {}]
  %s3 = inlined_call_operand.hbm [shape: bf16[1,16,1], index: 3, kind: input, shape index: {}]
  %s4 = inlined_call_operand.<no memory space> [shape: f32[1], index: 4, kind: input, shape index: {}]
  %s5 = inlined_call_operand.hbm [shape: bf16[128,256], index: 5, kind: input, shape index: {}]
  %s6 = inlined_call_operand.hbm [shape: bf16[128,256], index: 6, kind: input, shape index: {}]
  %s7 = inlined_call_operand.hbm [shape: bf16[32,256], index: 7, kind: input, shape index: {}]
  %s8 = inlined_call_operand.hbm [shape: bf16[256,128], index: 8, kind: input, shape index: {}]
  %s9 = inlined_call_operand.hbm [shape: bf16[256,128], index: 9, kind: input, shape index: {}]
  %s10 = inlined_call_operand.hbm [shape: bf16[256,128], index: 10, kind: input, shape index: {}]
  %s11 = inlined_call_operand.hbm [shape: bf16[128,128], index: 11, kind: input, shape index: {}]
  %s12 = inlined_call_operand.hbm [shape: bf16[128,128], index: 12, kind: input, shape index: {}]
  %s13 = inlined_call_operand.hbm [shape: bf16[128,128], index: 13, kind: input, shape index: {}]
  %s14 = inlined_call_operand.hbm [shape: f32[3,256], index: 14, kind: input, shape index: {}]
  %s15 = inlined_call_operand.hbm [shape: f32[4,128], index: 15, kind: input, shape index: {}]
  %s16 = inlined_call_operand.hbm [shape: f32[1,128], index: 16, kind: input, shape index: {}]
  %s17 = inlined_call_operand.hbm [shape: f32[256,128], index: 17, kind: output, shape index: {0}]
  %s18 = inlined_call_operand.hbm [shape: f32[256,128], index: 18, kind: output, shape index: {1}]
  %s19 = inlined_call_operand.hbm [shape: f32[256,128], index: 19, kind: output, shape index: {2}]
  %20 = xla_tuple %s17, %s18, %s19
  %s21 = sld [smem:[#allocation0]]
  $region189: #{mlp_att_twoway_conv.1} parent=0
    _
  %s23 = ssub.s32 1, %s21
  %s24 = scalar_select 0, %s23, %s21
  %25 = sst [smem:[#allocation6]] %s4
  $region1: #{mlp_att_twoway_conv.1} parent=0
    #allocation7 [shape = 'u8[65536]{0}', space=vmem, size = 0x10000, scoped, tag = 'input window, operand 0']
    #allocation8 [shape = 's32[2]{0}', space=sflag, size = 0x8, scoped, tag = 'scoped memory for mlp_att_twoway_conv.1']
    #allocation9 [shape = 's32[2]{0}', space=sflag, size = 0x8, scoped, tag = 'scoped memory for mlp_att_twoway_conv.1']
    #allocation10 [shape = 'u8[65536]{0}', space=vmem, size = 0x10000, scoped, tag = 'input window, operand 1']
    #allocation11 [shape = 's32[2]{0}', space=sflag, size = 0x8, scoped, tag = 'scoped memory for mlp_att_twoway_conv.1']
    #allocation12 [shape = 'u8[1048576]{0}', space=vmem, size = 0x100000, scoped, tag = 'input window, operand 2']
    #allocation13 [shape = 'u8[4096]{0}', space=vmem, size = 0x1000, scoped, tag = 'input window, operand 3, single buffered']
    #allocation14 [shape = 's32[1]{0}', space=sflag, size = 0x4, scoped, tag = 'scoped memory for mlp_att_twoway_conv.1']
    #allocation15 [shape = 'u8[65536]{0}', space=vmem, size = 0x10000, scoped, tag = 'input window, operand 5']
    #allocation16 [shape = 'u8[65536]{0}', space=vmem, size = 0x10000, scoped, tag = 'input window, operand 6']
    #allocation17 [shape = 'u8[16384]{0}', space=vmem, size = 0x4000, scoped, tag = 'input window, operand 7']
    #allocation18 [shape = 'u8[65536]{0}', space=vmem, size = 0x10000, scoped, tag = 'input window, operand 8']
    #allocation19 [shape = 'u8[65536]{0}', space=vmem, size = 0x10000, scoped, tag = 'input window, operand 9']
    #allocation20 [shape = 'u8[65536]{0}', space=vmem, size = 0x10000, scoped, tag = 'input window, operand 10']
    #allocation21 [shape = 'u8[32768]{0}', space=vmem, size = 0x8000, scoped, tag = 'input window, operand 11, single buffered']
    #allocation22 [shape = 'u8[32768]{0}', space=vmem, size = 0x8000, scoped, tag = 'input window, operand 12, single buffered']
    #allocation23 [shape = 's32[1]{0}', space=sflag, size = 0x4, scoped, tag = 'scoped memory for mlp_att_twoway_conv.1']
    #allocation24 [shape = 'u8[32768]{0}', space=vmem, size = 0x8000, scoped, tag = 'input window, operand 13, single buffered']
    #allocation25 [shape = 'u8[4096]{0}', space=vmem, size = 0x1000, scoped, tag = 'input window, operand 14']
    #allocation26 [shape = 's32[2]{0}', space=sflag, size = 0x8, scoped, tag = 'scoped memory for mlp_att_twoway_conv.1']
    #allocation27 [shape = 'u8[2048]{0}', space=vmem, size = 0x800, scoped, tag = 'input window, operand 15, single buffered']
    #allocation28 [shape = 'u8[512]{0}', space=vmem, size = 0x400, scoped, tag = 'input window, operand 16, single buffered']
    #allocation29 [shape = 's32[1]{0}', space=sflag, size = 0x4, scoped, tag = 'scoped memory for mlp_att_twoway_conv.1']
    #allocation30 [shape = 'u8[131072]{0}', space=vmem, size = 0x20000, scoped, tag = 'output window, operand 0']
    #allocation31 [shape = 'u8[131072]{0}', space=vmem, size = 0x20000, scoped, tag = 'output window, operand 1']
    #allocation32 [shape = 's32[2]{0}', space=sflag, size = 0x8, scoped, tag = 'scoped memory for mlp_att_twoway_conv.1']
    #allocation33 [shape = 'u8[131072]{0}', space=vmem, size = 0x20000, scoped, tag = 'output window, operand 2']
    %26 = vsyncpa [#allocation8], 0
    %s27 = scalar_lea.sflag [#allocation8], 1
    %28 = vsyncpa %s27, 0
    %29 = vsyncpa [#allocation11], 0
    %s30 = scalar_lea.sflag [#allocation11], 1
    %31 = vsyncpa %s30, 0
    %32 = vsyncpa [#allocation14], 0
    %33 = vsyncpa [#allocation23], 0
    %34 = vsyncpa [#allocation26], 0
    %s35 = scalar_lea.sflag [#allocation26], 1
    %36 = vsyncpa %s35, 0
    %37 = vsyncpa [#allocation29], 0
    %38 = vsyncpa [#allocation9], 0
    %s39 = scalar_lea.sflag [#allocation9], 1
    %40 = vsyncpa %s39, 0
    %41 = vsyncpa [#allocation32], 0
    %s42 = scalar_lea.sflag [#allocation32], 1
    %43 = vsyncpa %s42, 0
    loop: start=0, step=1, limit=6
    $region2: #{mlp_att_twoway_conv.1} parent=1 // loop_pre_header
      _
    $region3: #{mlp_att_twoway_conv.1} parent=1 // loop_header
      %s45 = sphi 0, %s49
      %p46 = scmp.ge.s32.totalorder %s45, 6
      %s52 = sphi 0, %s64
      %s53 = sphi 0, %s60
      %s54 = sphi 0, %s52
      %s55 = sphi 0, %s53
      %s56 = sphi 0, %s54
      %s57 = sphi 0, %s55
      %s67 = sphi 0, %s69
      %s70 = sphi 0, %s67
      %s71 = sphi 0, %s70
      %s87 = sphi 0, %s71
      %s93 = sphi 0, %s95
      %s96 = sphi 0, %s93
      %s97 = sphi 0, %s96
      %s113 = sphi 0, %s97
      %s119 = sphi 0, %s121
      %s122 = sphi 0, %s119
      %s123 = sphi 0, %s122
      %s139 = sphi 0, %s123
      %s143 = sphi 0, %s143
      %s145 = sphi 0, %s143
      %s146 = sphi 0, %s145
      %s160 = sphi 0, %s146
      %s164 = sphi 0, %s164
      %s166 = sphi 0, %s164
      %s167 = sphi 0, %s166
      %s181 = sphi 0, %s167
      %s187 = sphi 0, %s189
      %s190 = sphi 0, %s187
      %s191 = sphi 0, %s190
      %s207 = sphi 0, %s191
      %s213 = sphi 0, %s215
      %s216 = sphi 0, %s213
      %s217 = sphi 0, %s216
      %s233 = sphi 0, %s217
      %s239 = sphi 0, %s241
      %s242 = sphi 0, %s239
      %s243 = sphi 0, %s242
      %s259 = sphi 0, %s243
      %s265 = sphi 0, %s267
      %s268 = sphi 0, %s265
      %s269 = sphi 0, %s268
      %s285 = sphi 0, %s269
      %s291 = sphi 0, %s293
      %s294 = sphi 0, %s291
      %s295 = sphi 0, %s294
      %s311 = sphi 0, %s295
      %s317 = sphi 0, %s319
      %s320 = sphi 0, %s317
      %s321 = sphi 0, %s320
      %s337 = sphi 0, %s321
      %s341 = sphi 0, %s341
      %s343 = sphi 0, %s341
      %s344 = sphi 0, %s343
      %s358 = sphi 0, %s344
      %s362 = sphi 0, %s362
      %s364 = sphi 0, %s362
      %s365 = sphi 0, %s364
      %s379 = sphi 0, %s365
      %s383 = sphi 0, %s383
      %s385 = sphi 0, %s383
      %s386 = sphi 0, %s385
      %s400 = sphi 0, %s386
      %s406 = sphi 0, %s408
      %s409 = sphi 0, %s406
      %s410 = sphi 0, %s409
      %s426 = sphi 0, %s410
      %s430 = sphi 0, %s430
      %s432 = sphi 0, %s430
      %s433 = sphi 0, %s432
      %s447 = sphi 0, %s433
      %s451 = sphi 0, %s451
      %s453 = sphi 0, %s451
      %s454 = sphi 0, %s453
      %s468 = sphi 0, %s454
      %s474 = sphi 0, %s476
      %s477 = sphi 0, %s474
      %s478 = sphi 0, %s477
      %s494 = sphi 0, %s478
      %s500 = sphi 0, %s502
      %s503 = sphi 0, %s500
      %s504 = sphi 0, %s503
      %s520 = sphi 0, %s504
      %s526 = sphi 0, %s528
      %s529 = sphi 0, %s526
      %s530 = sphi 0, %s529
      %s546 = sphi 0, %s530
    $region4: #{mlp_att_twoway_conv.1} parent=1 // loop_header_branch
      %48 = sbr.rel (%p46) target = $region8
    $region5: #{mlp_att_twoway_conv.1} parent=1 // loop_body
      %s50 = ssub.s32 %s45, 1
      %s51 = ssub.s32 %s45, 2
      %s58 = sadd.s32 1, %s53
      %p59 = scmp.ge.s32.totalorder %s58, 2
      %s60 = scalar_select %p59, 0, %s58
      %s61 = sadd.s32 1, %s52
      %s62 = scalar_select %p59, %s61, %s52
      %p63 = scmp.ge.s32.totalorder %s62, 2
      %s64 = scalar_select %p63, 0, %s62
      %s65 = ssub.s32 %s52, %s64
      %p66 = scmp.eq.s32.totalorder %s65, 0
      %s68 = sadd.s32 %s67, 1
      %s69 = scalar_select %p66, %s67, %s68
      %p72 = pneg %p66
      %p73 = scmp.eq.s32.totalorder %s45, 3
      %p74 = por %p72, %p73
      %p75 = scmp.ne.s32.totalorder %s67, %s70
      %p76 = scmp.eq.s32.totalorder %s45, 0
      %p77 = por %p75, %p76
      %p78 = scmp.ne.s32.totalorder %s67, %s70
      %p79 = scmp.eq.s32.totalorder %s50, 3
      %p80 = por %p78, %p79
      %p81 = scmp.ne.s32.totalorder %s70, %s71
      %p82 = scmp.eq.s32.totalorder %s50, 0
      %p83 = por %p81, %p82
      %p84 = scmp.ne.s32.totalorder %s70, %s71
      %p85 = scmp.eq.s32.totalorder %s51, 3
      %p86 = por %p84, %p85
      %p88 = scmp.ne.s32.totalorder %s71, %s87
      %p89 = scmp.eq.s32.totalorder %s51, 0
      %p90 = por %p88, %p89
      %s91 = ssub.s32 %s52, %s64
      %p92 = scmp.eq.s32.totalorder %s91, 0
      %s94 = sadd.s32 %s93, 1
      %s95 = scalar_select %p92, %s93, %s94
      %p98 = pneg %p92
      %p99 = scmp.eq.s32.totalorder %s45, 3
      %p100 = por %p98, %p99
      %p101 = scmp.ne.s32.totalorder %s93, %s96
      %p102 = scmp.eq.s32.totalorder %s45, 0
      %p103 = por %p101, %p102
      %p104 = scmp.ne.s32.totalorder %s93, %s96
      %p105 = scmp.eq.s32.totalorder %s50, 3
      %p106 = por %p104, %p105
      %p107 = scmp.ne.s32.totalorder %s96, %s97
      %p108 = scmp.eq.s32.totalorder %s50, 0
      %p109 = por %p107, %p108
      %p110 = scmp.ne.s32.totalorder %s96, %s97
      %p111 = scmp.eq.s32.totalorder %s51, 3
      %p112 = por %p110, %p111
      %p114 = scmp.ne.s32.totalorder %s97, %s113
      %p115 = scmp.eq.s32.totalorder %s51, 0
      %p116 = por %p114, %p115
      %s117 = ssub.s32 %s52, %s64
      %p118 = scmp.eq.s32.totalorder %s117, 0
      %s120 = sadd.s32 %s119, 1
      %s121 = scalar_select %p118, %s119, %s120
      %p124 = pneg %p118
      %p125 = scmp.eq.s32.totalorder %s45, 3
      %p126 = por %p124, %p125
      %p127 = scmp.ne.s32.totalorder %s119, %s122
      %p128 = scmp.eq.s32.totalorder %s45, 0
      %p129 = por %p127, %p128
      %p130 = scmp.ne.s32.totalorder %s119, %s122
      %p131 = scmp.eq.s32.totalorder %s50, 3
      %p132 = por %p130, %p131
      %p133 = scmp.ne.s32.totalorder %s122, %s123
      %p134 = scmp.eq.s32.totalorder %s50, 0
      %p135 = por %p133, %p134
      %p136 = scmp.ne.s32.totalorder %s122, %s123
      %p137 = scmp.eq.s32.totalorder %s51, 3
      %p138 = por %p136, %p137
      %p140 = scmp.ne.s32.totalorder %s123, %s139
      %p141 = scmp.eq.s32.totalorder %s51, 0
      %p142 = por %p140, %p141
      %s144 = sadd.s32 %s143, 1
      %p147 = scmp.eq.s32.totalorder %s45, 3
      %p148 = scmp.ne.s32.totalorder %s143, %s145
      %p149 = scmp.eq.s32.totalorder %s45, 0
      %p150 = por %p148, %p149
      %p151 = scmp.ne.s32.totalorder %s143, %s145
      %p152 = scmp.eq.s32.totalorder %s50, 3
      %p153 = por %p151, %p152
      %p154 = scmp.ne.s32.totalorder %s145, %s146
      %p155 = scmp.eq.s32.totalorder %s50, 0
      %p156 = por %p154, %p155
      %p157 = scmp.ne.s32.totalorder %s145, %s146
      %p158 = scmp.eq.s32.totalorder %s51, 3
      %p159 = por %p157, %p158
      %p161 = scmp.ne.s32.totalorder %s146, %s160
      %p162 = scmp.eq.s32.totalorder %s51, 0
      %p163 = por %p161, %p162
      %s165 = sadd.s32 %s164, 1
      %p168 = scmp.eq.s32.totalorder %s45, 3
      %p169 = scmp.ne.s32.totalorder %s164, %s166
      %p170 = scmp.eq.s32.totalorder %s45, 0
      %p171 = por %p169, %p170
      %p172 = scmp.ne.s32.totalorder %s164, %s166
      %p173 = scmp.eq.s32.totalorder %s50, 3
      %p174 = por %p172, %p173
      %p175 = scmp.ne.s32.totalorder %s166, %s167
      %p176 = scmp.eq.s32.totalorder %s50, 0
      %p177 = por %p175, %p176
      %p178 = scmp.ne.s32.totalorder %s166, %s167
      %p179 = scmp.eq.s32.totalorder %s51, 3
      %p180 = por %p178, %p179
      %p182 = scmp.ne.s32.totalorder %s167, %s181
      %p183 = scmp.eq.s32.totalorder %s51, 0
      %p184 = por %p182, %p183
      %s185 = ssub.s32 %s53, %s60
      %p186 = scmp.eq.s32.totalorder %s185, 0
      %s188 = sadd.s32 %s187, 1
      %s189 = scalar_select %p186, %s187, %s188
      %p192 = pneg %p186
      %p193 = scmp.eq.s32.totalorder %s45, 3
      %p194 = por %p192, %p193
      %p195 = scmp.ne.s32.totalorder %s187, %s190
      %p196 = scmp.eq.s32.totalorder %s45, 0
      %p197 = por %p195, %p196
      %p198 = scmp.ne.s32.totalorder %s187, %s190
      %p199 = scmp.eq.s32.totalorder %s50, 3
      %p200 = por %p198, %p199
      %p201 = scmp.ne.s32.totalorder %s190, %s191
      %p202 = scmp.eq.s32.totalorder %s50, 0
      %p203 = por %p201, %p202
      %p204 = scmp.ne.s32.totalorder %s190, %s191
      %p205 = scmp.eq.s32.totalorder %s51, 3
      %p206 = por %p204, %p205
      %p208 = scmp.ne.s32.totalorder %s191, %s207
      %p209 = scmp.eq.s32.totalorder %s51, 0
      %p210 = por %p208, %p209
      %s211 = ssub.s32 %s53, %s60
      %p212 = scmp.eq.s32.totalorder %s211, 0
      %s214 = sadd.s32 %s213, 1
      %s215 = scalar_select %p212, %s213, %s214
      %p218 = pneg %p212
      %p219 = scmp.eq.s32.totalorder %s45, 3
      %p220 = por %p218, %p219
      %p221 = scmp.ne.s32.totalorder %s213, %s216
      %p222 = scmp.eq.s32.totalorder %s45, 0
      %p223 = por %p221, %p222
      %p224 = scmp.ne.s32.totalorder %s213, %s216
      %p225 = scmp.eq.s32.totalorder %s50, 3
      %p226 = por %p224, %p225
      %p227 = scmp.ne.s32.totalorder %s216, %s217
      %p228 = scmp.eq.s32.totalorder %s50, 0
      %p229 = por %p227, %p228
      %p230 = scmp.ne.s32.totalorder %s216, %s217
      %p231 = scmp.eq.s32.totalorder %s51, 3
      %p232 = por %p230, %p231
      %p234 = scmp.ne.s32.totalorder %s217, %s233
      %p235 = scmp.eq.s32.totalorder %s51, 0
      %p236 = por %p234, %p235
      %s237 = ssub.s32 %s53, %s60
      %p238 = scmp.eq.s32.totalorder %s237, 0
      %s240 = sadd.s32 %s239, 1
      %s241 = scalar_select %p238, %s239, %s240
      %p244 = pneg %p238
      %p245 = scmp.eq.s32.totalorder %s45, 3
      %p246 = por %p244, %p245
      %p247 = scmp.ne.s32.totalorder %s239, %s242
      %p248 = scmp.eq.s32.totalorder %s45, 0
      %p249 = por %p247, %p248
      %p250 = scmp.ne.s32.totalorder %s239, %s242
      %p251 = scmp.eq.s32.totalorder %s50, 3
      %p252 = por %p250, %p251
      %p253 = scmp.ne.s32.totalorder %s242, %s243
      %p254 = scmp.eq.s32.totalorder %s50, 0
      %p255 = por %p253, %p254
      %p256 = scmp.ne.s32.totalorder %s242, %s243
      %p257 = scmp.eq.s32.totalorder %s51, 3
      %p258 = por %p256, %p257
      %p260 = scmp.ne.s32.totalorder %s243, %s259
      %p261 = scmp.eq.s32.totalorder %s51, 0
      %p262 = por %p260, %p261
      %s263 = ssub.s32 %s53, %s60
      %p264 = scmp.eq.s32.totalorder %s263, 0
      %s266 = sadd.s32 %s265, 1
      %s267 = scalar_select %p264, %s265, %s266
      %p270 = pneg %p264
      %p271 = scmp.eq.s32.totalorder %s45, 3
      %p272 = por %p270, %p271
      %p273 = scmp.ne.s32.totalorder %s265, %s268
      %p274 = scmp.eq.s32.totalorder %s45, 0
      %p275 = por %p273, %p274
      %p276 = scmp.ne.s32.totalorder %s265, %s268
      %p277 = scmp.eq.s32.totalorder %s50, 3
      %p278 = por %p276, %p277
      %p279 = scmp.ne.s32.totalorder %s268, %s269
      %p280 = scmp.eq.s32.totalorder %s50, 0
      %p281 = por %p279, %p280
      %p282 = scmp.ne.s32.totalorder %s268, %s269
      %p283 = scmp.eq.s32.totalorder %s51, 3
      %p284 = por %p282, %p283
      %p286 = scmp.ne.s32.totalorder %s269, %s285
      %p287 = scmp.eq.s32.totalorder %s51, 0
      %p288 = por %p286, %p287
      %s289 = ssub.s32 %s53, %s60
      %p290 = scmp.eq.s32.totalorder %s289, 0
      %s292 = sadd.s32 %s291, 1
      %s293 = scalar_select %p290, %s291, %s292
      %p296 = pneg %p290
      %p297 = scmp.eq.s32.totalorder %s45, 3
      %p298 = por %p296, %p297
      %p299 = scmp.ne.s32.totalorder %s291, %s294
      %p300 = scmp.eq.s32.totalorder %s45, 0
      %p301 = por %p299, %p300
      %p302 = scmp.ne.s32.totalorder %s291, %s294
      %p303 = scmp.eq.s32.totalorder %s50, 3
      %p304 = por %p302, %p303
      %p305 = scmp.ne.s32.totalorder %s294, %s295
      %p306 = scmp.eq.s32.totalorder %s50, 0
      %p307 = por %p305, %p306
      %p308 = scmp.ne.s32.totalorder %s294, %s295
      %p309 = scmp.eq.s32.totalorder %s51, 3
      %p310 = por %p308, %p309
      %p312 = scmp.ne.s32.totalorder %s295, %s311
      %p313 = scmp.eq.s32.totalorder %s51, 0
      %p314 = por %p312, %p313
      %s315 = ssub.s32 %s53, %s60
      %p316 = scmp.eq.s32.totalorder %s315, 0
      %s318 = sadd.s32 %s317, 1
      %s319 = scalar_select %p316, %s317, %s318
      %p322 = pneg %p316
      %p323 = scmp.eq.s32.totalorder %s45, 3
      %p324 = por %p322, %p323
      %p325 = scmp.ne.s32.totalorder %s317, %s320
      %p326 = scmp.eq.s32.totalorder %s45, 0
      %p327 = por %p325, %p326
      %p328 = scmp.ne.s32.totalorder %s317, %s320
      %p329 = scmp.eq.s32.totalorder %s50, 3
      %p330 = por %p328, %p329
      %p331 = scmp.ne.s32.totalorder %s320, %s321
      %p332 = scmp.eq.s32.totalorder %s50, 0
      %p333 = por %p331, %p332
      %p334 = scmp.ne.s32.totalorder %s320, %s321
      %p335 = scmp.eq.s32.totalorder %s51, 3
      %p336 = por %p334, %p335
      %p338 = scmp.ne.s32.totalorder %s321, %s337
      %p339 = scmp.eq.s32.totalorder %s51, 0
      %p340 = por %p338, %p339
      %s342 = sadd.s32 %s341, 1
      %p345 = scmp.eq.s32.totalorder %s45, 3
      %p346 = scmp.ne.s32.totalorder %s341, %s343
      %p347 = scmp.eq.s32.totalorder %s45, 0
      %p348 = por %p346, %p347
      %p349 = scmp.ne.s32.totalorder %s341, %s343
      %p350 = scmp.eq.s32.totalorder %s50, 3
      %p351 = por %p349, %p350
      %p352 = scmp.ne.s32.totalorder %s343, %s344
      %p353 = scmp.eq.s32.totalorder %s50, 0
      %p354 = por %p352, %p353
      %p355 = scmp.ne.s32.totalorder %s343, %s344
      %p356 = scmp.eq.s32.totalorder %s51, 3
      %p357 = por %p355, %p356
      %p359 = scmp.ne.s32.totalorder %s344, %s358
      %p360 = scmp.eq.s32.totalorder %s51, 0
      %p361 = por %p359, %p360
      %s363 = sadd.s32 %s362, 1
      %p366 = scmp.eq.s32.totalorder %s45, 3
      %p367 = scmp.ne.s32.totalorder %s362, %s364
      %p368 = scmp.eq.s32.totalorder %s45, 0
      %p369 = por %p367, %p368
      %p370 = scmp.ne.s32.totalorder %s362, %s364
      %p371 = scmp.eq.s32.totalorder %s50, 3
      %p372 = por %p370, %p371
      %p373 = scmp.ne.s32.totalorder %s364, %s365
      %p374 = scmp.eq.s32.totalorder %s50, 0
      %p375 = por %p373, %p374
      %p376 = scmp.ne.s32.totalorder %s364, %s365
      %p377 = scmp.eq.s32.totalorder %s51, 3
      %p378 = por %p376, %p377
      %p380 = scmp.ne.s32.totalorder %s365, %s379
      %p381 = scmp.eq.s32.totalorder %s51, 0
      %p382 = por %p380, %p381
      %s384 = sadd.s32 %s383, 1
      %p387 = scmp.eq.s32.totalorder %s45, 3
      %p388 = scmp.ne.s32.totalorder %s383, %s385
      %p389 = scmp.eq.s32.totalorder %s45, 0
      %p390 = por %p388, %p389
      %p391 = scmp.ne.s32.totalorder %s383, %s385
      %p392 = scmp.eq.s32.totalorder %s50, 3
      %p393 = por %p391, %p392
      %p394 = scmp.ne.s32.totalorder %s385, %s386
      %p395 = scmp.eq.s32.totalorder %s50, 0
      %p396 = por %p394, %p395
      %p397 = scmp.ne.s32.totalorder %s385, %s386
      %p398 = scmp.eq.s32.totalorder %s51, 3
      %p399 = por %p397, %p398
      %p401 = scmp.ne.s32.totalorder %s386, %s400
      %p402 = scmp.eq.s32.totalorder %s51, 0
      %p403 = por %p401, %p402
      %s404 = ssub.s32 %s53, %s60
      %p405 = scmp.eq.s32.totalorder %s404, 0
      %s407 = sadd.s32 %s406, 1
      %s408 = scalar_select %p405, %s406, %s407
      %p411 = pneg %p405
      %p412 = scmp.eq.s32.totalorder %s45, 3
      %p413 = por %p411, %p412
      %p414 = scmp.ne.s32.totalorder %s406, %s409
      %p415 = scmp.eq.s32.totalorder %s45, 0
      %p416 = por %p414, %p415
      %p417 = scmp.ne.s32.totalorder %s406, %s409
      %p418 = scmp.eq.s32.totalorder %s50, 3
      %p419 = por %p417, %p418
      %p420 = scmp.ne.s32.totalorder %s409, %s410
      %p421 = scmp.eq.s32.totalorder %s50, 0
      %p422 = por %p420, %p421
      %p423 = scmp.ne.s32.totalorder %s409, %s410
      %p424 = scmp.eq.s32.totalorder %s51, 3
      %p425 = por %p423, %p424
      %p427 = scmp.ne.s32.totalorder %s410, %s426
      %p428 = scmp.eq.s32.totalorder %s51, 0
      %p429 = por %p427, %p428
      %s431 = sadd.s32 %s430, 1
      %p434 = scmp.eq.s32.totalorder %s45, 3
      %p435 = scmp.ne.s32.totalorder %s430, %s432
      %p436 = scmp.eq.s32.totalorder %s45, 0
      %p437 = por %p435, %p436
      %p438 = scmp.ne.s32.totalorder %s430, %s432
      %p439 = scmp.eq.s32.totalorder %s50, 3
      %p440 = por %p438, %p439
      %p441 = scmp.ne.s32.totalorder %s432, %s433
      %p442 = scmp.eq.s32.totalorder %s50, 0
      %p443 = por %p441, %p442
      %p444 = scmp.ne.s32.totalorder %s432, %s433
      %p445 = scmp.eq.s32.totalorder %s51, 3
      %p446 = por %p444, %p445
      %p448 = scmp.ne.s32.totalorder %s433, %s447
      %p449 = scmp.eq.s32.totalorder %s51, 0
      %p450 = por %p448, %p449
      %s452 = sadd.s32 %s451, 1
      %p455 = scmp.eq.s32.totalorder %s45, 3
      %p456 = scmp.ne.s32.totalorder %s451, %s453
      %p457 = scmp.eq.s32.totalorder %s45, 0
      %p458 = por %p456, %p457
      %p459 = scmp.ne.s32.totalorder %s451, %s453
      %p460 = scmp.eq.s32.totalorder %s50, 3
      %p461 = por %p459, %p460
      %p462 = scmp.ne.s32.totalorder %s453, %s454
      %p463 = scmp.eq.s32.totalorder %s50, 0
      %p464 = por %p462, %p463
      %p465 = scmp.ne.s32.totalorder %s453, %s454
      %p466 = scmp.eq.s32.totalorder %s51, 3
      %p467 = por %p465, %p466
      %p469 = scmp.ne.s32.totalorder %s454, %s468
      %p470 = scmp.eq.s32.totalorder %s51, 0
      %p471 = por %p469, %p470
      %s472 = ssub.s32 %s52, %s64
      %p473 = scmp.eq.s32.totalorder %s472, 0
      %s475 = sadd.s32 %s474, 1
      %s476 = scalar_select %p473, %s474, %s475
      %p479 = pneg %p473
      %p480 = scmp.eq.s32.totalorder %s45, 3
      %p481 = por %p479, %p480
      %p482 = scmp.ne.s32.totalorder %s474, %s477
      %p483 = scmp.eq.s32.totalorder %s45, 0
      %p484 = por %p482, %p483
      %p485 = scmp.ne.s32.totalorder %s474, %s477
      %p486 = scmp.eq.s32.totalorder %s50, 3
      %p487 = por %p485, %p486
      %p488 = scmp.ne.s32.totalorder %s477, %s478
      %p489 = scmp.eq.s32.totalorder %s50, 0
      %p490 = por %p488, %p489
      %p491 = scmp.ne.s32.totalorder %s477, %s478
      %p492 = scmp.eq.s32.totalorder %s51, 3
      %p493 = por %p491, %p492
      %p495 = scmp.ne.s32.totalorder %s478, %s494
      %p496 = scmp.eq.s32.totalorder %s51, 0
      %p497 = por %p495, %p496
      %s498 = ssub.s32 %s52, %s64
      %p499 = scmp.eq.s32.totalorder %s498, 0
      %s501 = sadd.s32 %s500, 1
      %s502 = scalar_select %p499, %s500, %s501
      %p505 = pneg %p499
      %p506 = scmp.eq.s32.totalorder %s45, 3
      %p507 = por %p505, %p506
      %p508 = scmp.ne.s32.totalorder %s500, %s503
      %p509 = scmp.eq.s32.totalorder %s45, 0
      %p510 = por %p508, %p509
      %p511 = scmp.ne.s32.totalorder %s500, %s503
      %p512 = scmp.eq.s32.totalorder %s50, 3
      %p513 = por %p511, %p512
      %p514 = scmp.ne.s32.totalorder %s503, %s504
      %p515 = scmp.eq.s32.totalorder %s50, 0
      %p516 = por %p514, %p515
      %p517 = scmp.ne.s32.totalorder %s503, %s504
      %p518 = scmp.eq.s32.totalorder %s51, 3
      %p519 = por %p517, %p518
      %p521 = scmp.ne.s32.totalorder %s504, %s520
      %p522 = scmp.eq.s32.totalorder %s51, 0
      %p523 = por %p521, %p522
      %s524 = ssub.s32 %s52, %s64
      %p525 = scmp.eq.s32.totalorder %s524, 0
      %s527 = sadd.s32 %s526, 1
      %s528 = scalar_select %p525, %s526, %s527
      %p531 = pneg %p525
      %p532 = scmp.eq.s32.totalorder %s45, 3
      %p533 = por %p531, %p532
      %p534 = scmp.ne.s32.totalorder %s526, %s529
      %p535 = scmp.eq.s32.totalorder %s45, 0
      %p536 = por %p534, %p535
      %p537 = scmp.ne.s32.totalorder %s526, %s529
      %p538 = scmp.eq.s32.totalorder %s50, 3
      %p539 = por %p537, %p538
      %p540 = scmp.ne.s32.totalorder %s529, %s530
      %p541 = scmp.eq.s32.totalorder %s50, 0
      %p542 = por %p540, %p541
      %p543 = scmp.ne.s32.totalorder %s529, %s530
      %p544 = scmp.eq.s32.totalorder %s51, 3
      %p545 = por %p543, %p544
      %p547 = scmp.ne.s32.totalorder %s530, %s546
      %p548 = scmp.eq.s32.totalorder %s51, 0
      %p549 = por %p547, %p548
      %p550 = scmp.le.s32.totalorder 1, %s45
      %p551 = scmp.lt.s32.totalorder %s45, 5
      %p552 = pnand %p550, %p551
      %p553 = pneg %p552
      // Predicated region
      $region9: #{mlp_att_twoway_conv.1} parent=5 // pred_check
        _
      $region10: #{mlp_att_twoway_conv.1} parent=5 // pred_check_branch
        %555 = sbr.rel (%p552) target = $region12
      $region11: #{mlp_att_twoway_conv.1} parent=5 // pred_region
        %s556 = ssub.s32 %s45, 1
        // Predicated region
        $region13: #{mlp_att_twoway_conv.1} parent=11 // pred_check
          %p557 = pneg %p156
        $region14: #{mlp_att_twoway_conv.1} parent=11 // pred_check_branch
          %559 = sbr.rel (%p557) target = $region16
        $region15: #{mlp_att_twoway_conv.1} parent=11 // pred_region
          %s561 = ssub.s32 128, 128
          %562 = vsyncadd [#allocation14], %s561
          %s563 = sshll.u32 [#allocation13], 4
          %s564 = int_to_ptr.vmem [resolvable:$true] %s563
          %569 = dma.hbm_to_vmem [thread:$0]  %s3, 128, %s564, [#allocation14], 64, 64, 4
        $region16: #{mlp_att_twoway_conv.1} parent=11 // pred_fallthru
          _
        // Predicated region
        $region17: #{mlp_att_twoway_conv.1} parent=11 // pred_check
          %p570 = pneg %p177
        $region18: #{mlp_att_twoway_conv.1} parent=11 // pred_check_branch
          %572 = sbr.rel (%p570) target = $region20
        $region19: #{mlp_att_twoway_conv.1} parent=11 // pred_region
          _
        $region20: #{mlp_att_twoway_conv.1} parent=11 // pred_fallthru
          _
        // Predicated region
        $region21: #{mlp_att_twoway_conv.1} parent=11 // pred_check
          %p573 = pneg %p354
        $region22: #{mlp_att_twoway_conv.1} parent=11 // pred_check_branch
          %575 = sbr.rel (%p573) target = $region24
        $region23: #{mlp_att_twoway_conv.1} parent=11 // pred_region
          %s577 = ssub.s32 1024, 1024
          %578 = vsyncadd [#allocation14], %s577
          %s579 = sshll.u32 [#allocation21], 4
          %s580 = int_to_ptr.vmem [resolvable:$true] %s579
          %585 = dma.hbm_to_vmem [thread:$0]  %s11, 1024, %s580, [#allocation14], 64, 64, 4
        $region24: #{mlp_att_twoway_conv.1} parent=11 // pred_fallthru
          _
        // Predicated region
        $region25: #{mlp_att_twoway_conv.1} parent=11 // pred_check
          %p586 = pneg %p375
        $region26: #{mlp_att_twoway_conv.1} parent=11 // pred_check_branch
          %588 = sbr.rel (%p586) target = $region28
        $region27: #{mlp_att_twoway_conv.1} parent=11 // pred_region
          %s590 = ssub.s32 1024, 1024
          %591 = vsyncadd [#allocation23], %s590
          %s592 = sshll.u32 [#allocation22], 4
          %s593 = int_to_ptr.vmem [resolvable:$true] %s592
          %598 = dma.hbm_to_vmem [thread:$0]  %s12, 1024, %s593, [#allocation23], 64, 64, 4
        $region28: #{mlp_att_twoway_conv.1} parent=11 // pred_fallthru
          _
        // Predicated region
        $region29: #{mlp_att_twoway_conv.1} parent=11 // pred_check
          %p599 = pneg %p396
        $region30: #{mlp_att_twoway_conv.1} parent=11 // pred_check_branch
          %601 = sbr.rel (%p599) target = $region32
        $region31: #{mlp_att_twoway_conv.1} parent=11 // pred_region
          %s603 = ssub.s32 1024, 1024
          %604 = vsyncadd [#allocation23], %s603
          %s605 = sshll.u32 [#allocation24], 4
          %s606 = int_to_ptr.vmem [resolvable:$true] %s605
          %611 = dma.hbm_to_vmem [thread:$0]  %s13, 1024, %s606, [#allocation23], 64, 64, 4
        $region32: #{mlp_att_twoway_conv.1} parent=11 // pred_fallthru
          _
        // Predicated region
        $region33: #{mlp_att_twoway_conv.1} parent=11 // pred_check
          %p612 = pneg %p443
        $region34: #{mlp_att_twoway_conv.1} parent=11 // pred_check_branch
          %614 = sbr.rel (%p612) target = $region36
        $region35: #{mlp_att_twoway_conv.1} parent=11 // pred_region
          %s616 = ssub.s32 64, 64
          %617 = vsyncadd [#allocation26], %s616
          %s619 = sshll.u32 [#allocation27], 4
          %s620 = int_to_ptr.vmem [resolvable:$true] %s619
          %622 = dma.hbm_to_vmem [thread:$0]  %s15, 64, %s620, [#allocation26]
        $region36: #{mlp_att_twoway_conv.1} parent=11 // pred_fallthru
          _
        // Predicated region
        $region37: #{mlp_att_twoway_conv.1} parent=11 // pred_check
          %p623 = pneg %p464
        $region38: #{mlp_att_twoway_conv.1} parent=11 // pred_check_branch
          %625 = sbr.rel (%p623) target = $region40
        $region39: #{mlp_att_twoway_conv.1} parent=11 // pred_region
          %s627 = ssub.s32 16, 16
          %628 = vsyncadd [#allocation29], %s627
          %s630 = sshll.u32 [#allocation28], 4
          %s631 = int_to_ptr.vmem [resolvable:$true] %s630
          %633 = dma.hbm_to_vmem [thread:$0]  %s16, 16, %s631, [#allocation29]
        $region40: #{mlp_att_twoway_conv.1} parent=11 // pred_fallthru
          _
      $region12: #{mlp_att_twoway_conv.1} parent=5 // pred_fallthru
        _
      %p634 = scmp.lt.s32.totalorder %s45, 4
      // Predicated region
      $region41: #{mlp_att_twoway_conv.1} parent=5 // pred_check
        %p635 = pneg %p634
      $region42: #{mlp_att_twoway_conv.1} parent=5 // pred_check_branch
        %637 = sbr.rel (%p635) target = $region44
      $region43: #{mlp_att_twoway_conv.1} parent=5 // pred_region
        // Predicated region
        $region45: #{mlp_att_twoway_conv.1} parent=43 // pred_check
          %p638 = pneg %p77
        $region46: #{mlp_att_twoway_conv.1} parent=43 // pred_check_branch
          %640 = sbr.rel (%p638) target = $region48
        $region47: #{mlp_att_twoway_conv.1} parent=43 // pred_region
          %s641 = sand.u32 %s45, 1
          %s642 = scalar_lea.sflag [#allocation8], %s641
          %s643 = sand.u32 %s67, 1
          %s644 = smul.addr %s643, 64
          %s645 = scalar_lea.vmem [#allocation7], %s644
          %s646 = smul.u32 16, %s52
          %s648 = ssub.s32 1024, 1024
          %649 = vsyncadd %s642, %s648
          %s650 = smul.addr %s646, 64
          %s651 = scalar_lea.hbm %s0, %s650
          %s652 = sshll.u32 %s645, 4
          %s653 = int_to_ptr.vmem [resolvable:$true] %s652
          %658 = dma.hbm_to_vmem [thread:$0]  %s651, 1024, %s653, %s642, 64, 64, 4
        $region48: #{mlp_att_twoway_conv.1} parent=43 // pred_fallthru
          _
        // Predicated region
        $region49: #{mlp_att_twoway_conv.1} parent=43 // pred_check
          %p659 = pneg %p103
        $region50: #{mlp_att_twoway_conv.1} parent=43 // pred_check_branch
          %661 = sbr.rel (%p659) target = $region52
        $region51: #{mlp_att_twoway_conv.1} parent=43 // pred_region
          %s662 = sand.u32 %s45, 1
          %s663 = scalar_lea.sflag [#allocation11], %s662
          %s664 = sand.u32 %s93, 1
          %s665 = smul.addr %s664, 64
          %s666 = scalar_lea.vmem [#allocation10], %s665
          %s667 = smul.u32 16, %s52
          %s669 = ssub.s32 1024, 1024
          %670 = vsyncadd %s663, %s669
          %s671 = smul.addr %s667, 64
          %s672 = scalar_lea.hbm %s1, %s671
          %s673 = sshll.u32 %s666, 4
          %s674 = int_to_ptr.vmem [resolvable:$true] %s673
          %679 = dma.hbm_to_vmem [thread:$0]  %s672, 1024, %s674, %s663, 64, 64, 4
        $region52: #{mlp_att_twoway_conv.1} parent=43 // pred_fallthru
          _
        // Predicated region
        $region53: #{mlp_att_twoway_conv.1} parent=43 // pred_check
          %p680 = pneg %p129
        $region54: #{mlp_att_twoway_conv.1} parent=43 // pred_check_branch
          %682 = sbr.rel (%p680) target = $region56
        $region55: #{mlp_att_twoway_conv.1} parent=43 // pred_region
          %s683 = sand.u32 %s45, 1
          %s684 = scalar_lea.sflag [#allocation11], %s683
          %s685 = sand.u32 %s119, 1
          %s686 = smul.addr %s685, 1024
          %s687 = scalar_lea.vmem [#allocation12], %s686
          %s688 = smul.u32 128, %s52
          %s690 = ssub.s32 16384, 16384
          %691 = vsyncadd %s684, %s690
          %s692 = smul.addr %s688, 2
          %s693 = smul.addr %s692, 64
          %s694 = scalar_lea.hbm %s2, %s693
          %s695 = sshll.u32 %s687, 4
          %s696 = int_to_ptr.vmem [resolvable:$true] %s695
          %701 = dma.hbm_to_vmem [thread:$0]  %s694, 16384, %s696, %s684, 64, 64, 4
        $region56: #{mlp_att_twoway_conv.1} parent=43 // pred_fallthru
          _
        // Predicated region
        $region57: #{mlp_att_twoway_conv.1} parent=43 // pred_check
          %p702 = pneg %p197
        $region58: #{mlp_att_twoway_conv.1} parent=43 // pred_check_branch
          %704 = sbr.rel (%p702) target = $region60
        $region59: #{mlp_att_twoway_conv.1} parent=43 // pred_region
          %s705 = sand.u32 %s45, 1
          %s706 = scalar_lea.sflag [#allocation8], %s705
          %s707 = sand.u32 %s187, 1
          %s708 = smul.addr %s707, 64
          %s709 = scalar_lea.vmem [#allocation15], %s708
          %s711 = ssub.s32 1024, 1024
          %712 = vsyncadd %s706, %s711
          %s713 = smul.addr %s53, 64
          %s714 = scalar_lea.hbm %s5, %s713
          %s715 = sshll.u32 %s709, 4
          %s716 = int_to_ptr.vmem [resolvable:$true] %s715
          %721 = dma.hbm_to_vmem [thread:$0]  %s714, 1024, %s716, %s706, 128, 64, 4
        $region60: #{mlp_att_twoway_conv.1} parent=43 // pred_fallthru
          _
        // Predicated region
        $region61: #{mlp_att_twoway_conv.1} parent=43 // pred_check
          %p722 = pneg %p223
        $region62: #{mlp_att_twoway_conv.1} parent=43 // pred_check_branch
          %724 = sbr.rel (%p722) target = $region64
        $region63: #{mlp_att_twoway_conv.1} parent=43 // pred_region
          %s725 = sand.u32 %s45, 1
          %s726 = scalar_lea.sflag [#allocation11], %s725
          %s727 = sand.u32 %s213, 1
          %s728 = smul.addr %s727, 64
          %s729 = scalar_lea.vmem [#allocation16], %s728
          %s731 = ssub.s32 1024, 1024
          %732 = vsyncadd %s726, %s731
          %s733 = smul.addr %s53, 64
          %s734 = scalar_lea.hbm %s6, %s733
          %s735 = sshll.u32 %s729, 4
          %s736 = int_to_ptr.vmem [resolvable:$true] %s735
          %741 = dma.hbm_to_vmem [thread:$0]  %s734, 1024, %s736, %s726, 128, 64, 4
        $region64: #{mlp_att_twoway_conv.1} parent=43 // pred_fallthru
          _
        // Predicated region
        $region65: #{mlp_att_twoway_conv.1} parent=43 // pred_check
          %p742 = pneg %p249
        $region66: #{mlp_att_twoway_conv.1} parent=43 // pred_check_branch
          %744 = sbr.rel (%p742) target = $region68
        $region67: #{mlp_att_twoway_conv.1} parent=43 // pred_region
          %s745 = sand.u32 %s45, 1
          %s746 = scalar_lea.sflag [#allocation8], %s745
          %s747 = sand.u32 %s239, 1
          %s748 = smul.addr %s747, 16
          %s749 = scalar_lea.vmem [#allocation17], %s748
          %s751 = ssub.s32 256, 256
          %752 = vsyncadd %s746, %s751
          %s753 = smul.addr %s53, 64
          %s754 = scalar_lea.hbm %s7, %s753
          %s755 = sshll.u32 %s749, 4
          %s756 = int_to_ptr.vmem [resolvable:$true] %s755
          %761 = dma.hbm_to_vmem [thread:$0]  %s754, 256, %s756, %s746, 128, 64, 4
        $region68: #{mlp_att_twoway_conv.1} parent=43 // pred_fallthru
          _
        // Predicated region
        $region69: #{mlp_att_twoway_conv.1} parent=43 // pred_check
          %p762 = pneg %p275
        $region70: #{mlp_att_twoway_conv.1} parent=43 // pred_check_branch
          %764 = sbr.rel (%p762) target = $region72
        $region71: #{mlp_att_twoway_conv.1} parent=43 // pred_region
          %s765 = sand.u32 %s45, 1
          %s766 = scalar_lea.sflag [#allocation11], %s765
          %s767 = sand.u32 %s265, 1
          %s768 = smul.addr %s767, 64
          %s769 = scalar_lea.vmem [#allocation18], %s768
          %s770 = smul.u32 16, %s53
          %s772 = ssub.s32 1024, 1024
          %773 = vsyncadd %s766, %s772
          %s774 = smul.addr %s770, 64
          %s775 = scalar_lea.hbm %s8, %s774
          %s776 = sshll.u32 %s769, 4
          %s777 = int_to_ptr.vmem [resolvable:$true] %s776
          %782 = dma.hbm_to_vmem [thread:$0]  %s775, 1024, %s777, %s766, 64, 64, 4
        $region72: #{mlp_att_twoway_conv.1} parent=43 // pred_fallthru
          _
        // Predicated region
        $region73: #{mlp_att_twoway_conv.1} parent=43 // pred_check
          %p783 = pneg %p301
        $region74: #{mlp_att_twoway_conv.1} parent=43 // pred_check_branch
          %785 = sbr.rel (%p783) target = $region76
        $region75: #{mlp_att_twoway_conv.1} parent=43 // pred_region
          %s786 = sand.u32 %s45, 1
          %s787 = scalar_lea.sflag [#allocation8], %s786
          %s788 = sand.u32 %s291, 1
          %s789 = smul.addr %s788, 64
          %s790 = scalar_lea.vmem [#allocation19], %s789
          %s791 = smul.u32 16, %s53
          %s793 = ssub.s32 1024, 1024
          %794 = vsyncadd %s787, %s793
          %s795 = smul.addr %s791, 64
          %s796 = scalar_lea.hbm %s9, %s795
          %s797 = sshll.u32 %s790, 4
          %s798 = int_to_ptr.vmem [resolvable:$true] %s797
          %803 = dma.hbm_to_vmem [thread:$0]  %s796, 1024, %s798, %s787, 64, 64, 4
        $region76: #{mlp_att_twoway_conv.1} parent=43 // pred_fallthru
          _
        // Predicated region
        $region77: #{mlp_att_twoway_conv.1} parent=43 // pred_check
          %p804 = pneg %p327
        $region78: #{mlp_att_twoway_conv.1} parent=43 // pred_check_branch
          %806 = sbr.rel (%p804) target = $region80
        $region79: #{mlp_att_twoway_conv.1} parent=43 // pred_region
          %s807 = sand.u32 %s45, 1
          %s808 = scalar_lea.sflag [#allocation11], %s807
          %s809 = sand.u32 %s317, 1
          %s810 = smul.addr %s809, 64
          %s811 = scalar_lea.vmem [#allocation20], %s810
          %s812 = smul.u32 16, %s53
          %s814 = ssub.s32 1024, 1024
          %815 = vsyncadd %s808, %s814
          %s816 = smul.addr %s812, 64
          %s817 = scalar_lea.hbm %s10, %s816
          %s818 = sshll.u32 %s811, 4
          %s819 = int_to_ptr.vmem [resolvable:$true] %s818
          %824 = dma.hbm_to_vmem [thread:$0]  %s817, 1024, %s819, %s808, 64, 64, 4
        $region80: #{mlp_att_twoway_conv.1} parent=43 // pred_fallthru
          _
        // Predicated region
        $region81: #{mlp_att_twoway_conv.1} parent=43 // pred_check
          %p825 = pneg %p416
        $region82: #{mlp_att_twoway_conv.1} parent=43 // pred_check_branch
          %827 = sbr.rel (%p825) target = $region84
        $region83: #{mlp_att_twoway_conv.1} parent=43 // pred_region
          %s828 = sand.u32 %s45, 1
          %s829 = scalar_lea.sflag [#allocation26], %s828
          %s830 = sand.u32 %s406, 1
          %s831 = smul.addr %s830, 4
          %s832 = scalar_lea.vmem [#allocation25], %s831
          %s834 = ssub.s32 64, 64
          %835 = vsyncadd %s829, %s834
          %s836 = smul.addr %s53, 64
          %s837 = scalar_lea.hbm %s14, %s836
          %s839 = sshll.u32 %s832, 4
          %s840 = int_to_ptr.vmem [resolvable:$true] %s839
          %842 = dma.hbm_to_vmem [thread:$0]  %s837, 64, %s840, %s829
        $region84: #{mlp_att_twoway_conv.1} parent=43 // pred_fallthru
          _
      $region44: #{mlp_att_twoway_conv.1} parent=5 // pred_fallthru
        _
      %p843 = scmp.le.s32.totalorder 1, %s45
      %p844 = scmp.lt.s32.totalorder %s45, 5
      %p845 = pnand %p843, %p844
      %p846 = pneg %p845
      // Predicated region
      $region85: #{mlp_att_twoway_conv.1} parent=5 // pred_check
        _
      $region86: #{mlp_att_twoway_conv.1} parent=5 // pred_check_branch
        %848 = sbr.rel (%p845) target = $region88
      $region87: #{mlp_att_twoway_conv.1} parent=5 // pred_region
        %s849 = ssub.s32 %s45, 1
        %s850 = sand.u32 %s50, 1
        %s851 = scalar_lea.sflag [#allocation8], %s850
        %s852 = sand.u32 %s70, 1
        %s853 = smul.addr %s852, 64
        %s854 = scalar_lea.vmem [#allocation7], %s853
        // Predicated region
        $region89: #{mlp_att_twoway_conv.1} parent=87 // pred_check
          %p855 = pneg %p83
        $region90: #{mlp_att_twoway_conv.1} parent=87 // pred_check_branch
          %857 = sbr.rel (%p855) target = $region92
        $region91: #{mlp_att_twoway_conv.1} parent=87 // pred_region
          %858 = dma.done %s851, 1024
        $region92: #{mlp_att_twoway_conv.1} parent=87 // pred_fallthru
          _
        %s859 = sand.u32 %s50, 1
        %s860 = scalar_lea.sflag [#allocation11], %s859
        %s861 = sand.u32 %s96, 1
        %s862 = smul.addr %s861, 64
        %s863 = scalar_lea.vmem [#allocation10], %s862
        // Predicated region
        $region93: #{mlp_att_twoway_conv.1} parent=87 // pred_check
          %p864 = pneg %p109
        $region94: #{mlp_att_twoway_conv.1} parent=87 // pred_check_branch
          %866 = sbr.rel (%p864) target = $region96
        $region95: #{mlp_att_twoway_conv.1} parent=87 // pred_region
          %867 = dma.done %s860, 1024
        $region96: #{mlp_att_twoway_conv.1} parent=87 // pred_fallthru
          _
        %s868 = sand.u32 %s50, 1
        %s869 = scalar_lea.sflag [#allocation11], %s868
        %s870 = sand.u32 %s122, 1
        %s871 = smul.addr %s870, 1024
        %s872 = scalar_lea.vmem [#allocation12], %s871
        // Predicated region
        $region97: #{mlp_att_twoway_conv.1} parent=87 // pred_check
          %p873 = pneg %p135
        $region98: #{mlp_att_twoway_conv.1} parent=87 // pred_check_branch
          %875 = sbr.rel (%p873) target = $region100
        $region99: #{mlp_att_twoway_conv.1} parent=87 // pred_region
          %876 = dma.done %s869, 16384
        $region100: #{mlp_att_twoway_conv.1} parent=87 // pred_fallthru
          _
        // Predicated region
        $region101: #{mlp_att_twoway_conv.1} parent=87 // pred_check
          %p877 = pneg %p156
        $region102: #{mlp_att_twoway_conv.1} parent=87 // pred_check_branch
          %879 = sbr.rel (%p877) target = $region104
        $region103: #{mlp_att_twoway_conv.1} parent=87 // pred_region
          %880 = dma.done [#allocation14], 128
        $region104: #{mlp_att_twoway_conv.1} parent=87 // pred_fallthru
          _
        %s881 = sand.u32 %s50, 1
        %s882 = scalar_lea.sflag [#allocation8], %s881
        %s883 = sand.u32 %s190, 1
        %s884 = smul.addr %s883, 64
        %s885 = scalar_lea.vmem [#allocation15], %s884
        // Predicated region
        $region105: #{mlp_att_twoway_conv.1} parent=87 // pred_check
          %p886 = pneg %p203
        $region106: #{mlp_att_twoway_conv.1} parent=87 // pred_check_branch
          %888 = sbr.rel (%p886) target = $region108
        $region107: #{mlp_att_twoway_conv.1} parent=87 // pred_region
          %889 = dma.done %s882, 1024
        $region108: #{mlp_att_twoway_conv.1} parent=87 // pred_fallthru
          _
        %s890 = sand.u32 %s50, 1
        %s891 = scalar_lea.sflag [#allocation11], %s890
        %s892 = sand.u32 %s216, 1
        %s893 = smul.addr %s892, 64
        %s894 = scalar_lea.vmem [#allocation16], %s893
        // Predicated region
        $region109: #{mlp_att_twoway_conv.1} parent=87 // pred_check
          %p895 = pneg %p229
        $region110: #{mlp_att_twoway_conv.1} parent=87 // pred_check_branch
          %897 = sbr.rel (%p895) target = $region112
        $region111: #{mlp_att_twoway_conv.1} parent=87 // pred_region
          %898 = dma.done %s891, 1024
        $region112: #{mlp_att_twoway_conv.1} parent=87 // pred_fallthru
          _
        %s899 = sand.u32 %s50, 1
        %s900 = scalar_lea.sflag [#allocation8], %s899
        %s901 = sand.u32 %s242, 1
        %s902 = smul.addr %s901, 16
        %s903 = scalar_lea.vmem [#allocation17], %s902
        // Predicated region
        $region113: #{mlp_att_twoway_conv.1} parent=87 // pred_check
          %p904 = pneg %p255
        $region114: #{mlp_att_twoway_conv.1} parent=87 // pred_check_branch
          %906 = sbr.rel (%p904) target = $region116
        $region115: #{mlp_att_twoway_conv.1} parent=87 // pred_region
          %907 = dma.done %s900, 256
        $region116: #{mlp_att_twoway_conv.1} parent=87 // pred_fallthru
          _
        %s908 = sand.u32 %s50, 1
        %s909 = scalar_lea.sflag [#allocation11], %s908
        %s910 = sand.u32 %s268, 1
        %s911 = smul.addr %s910, 64
        %s912 = scalar_lea.vmem [#allocation18], %s911
        // Predicated region
        $region117: #{mlp_att_twoway_conv.1} parent=87 // pred_check
          %p913 = pneg %p281
        $region118: #{mlp_att_twoway_conv.1} parent=87 // pred_check_branch
          %915 = sbr.rel (%p913) target = $region120
        $region119: #{mlp_att_twoway_conv.1} parent=87 // pred_region
          %916 = dma.done %s909, 1024
        $region120: #{mlp_att_twoway_conv.1} parent=87 // pred_fallthru
          _
        %s917 = sand.u32 %s50, 1
        %s918 = scalar_lea.sflag [#allocation8], %s917
        %s919 = sand.u32 %s294, 1
        %s920 = smul.addr %s919, 64
        %s921 = scalar_lea.vmem [#allocation19], %s920
        // Predicated region
        $region121: #{mlp_att_twoway_conv.1} parent=87 // pred_check
          %p922 = pneg %p307
        $region122: #{mlp_att_twoway_conv.1} parent=87 // pred_check_branch
          %924 = sbr.rel (%p922) target = $region124
        $region123: #{mlp_att_twoway_conv.1} parent=87 // pred_region
          %925 = dma.done %s918, 1024
        $region124: #{mlp_att_twoway_conv.1} parent=87 // pred_fallthru
          _
        %s926 = sand.u32 %s50, 1
        %s927 = scalar_lea.sflag [#allocation11], %s926
        %s928 = sand.u32 %s320, 1
        %s929 = smul.addr %s928, 64
        %s930 = scalar_lea.vmem [#allocation20], %s929
        // Predicated region
        $region125: #{mlp_att_twoway_conv.1} parent=87 // pred_check
          %p931 = pneg %p333
        $region126: #{mlp_att_twoway_conv.1} parent=87 // pred_check_branch
          %933 = sbr.rel (%p931) target = $region128
        $region127: #{mlp_att_twoway_conv.1} parent=87 // pred_region
          %934 = dma.done %s927, 1024
        $region128: #{mlp_att_twoway_conv.1} parent=87 // pred_fallthru
          _
        // Predicated region
        $region129: #{mlp_att_twoway_conv.1} parent=87 // pred_check
          %p935 = pneg %p354
        $region130: #{mlp_att_twoway_conv.1} parent=87 // pred_check_branch
          %937 = sbr.rel (%p935) target = $region132
        $region131: #{mlp_att_twoway_conv.1} parent=87 // pred_region
          %938 = dma.done [#allocation14], 1024
        $region132: #{mlp_att_twoway_conv.1} parent=87 // pred_fallthru
          _
        // Predicated region
        $region133: #{mlp_att_twoway_conv.1} parent=87 // pred_check
          %p939 = pneg %p375
        $region134: #{mlp_att_twoway_conv.1} parent=87 // pred_check_branch
          %941 = sbr.rel (%p939) target = $region136
        $region135: #{mlp_att_twoway_conv.1} parent=87 // pred_region
          %942 = dma.done [#allocation23], 1024
        $region136: #{mlp_att_twoway_conv.1} parent=87 // pred_fallthru
          _
        // Predicated region
        $region137: #{mlp_att_twoway_conv.1} parent=87 // pred_check
          %p943 = pneg %p396
        $region138: #{mlp_att_twoway_conv.1} parent=87 // pred_check_branch
          %945 = sbr.rel (%p943) target = $region140
        $region139: #{mlp_att_twoway_conv.1} parent=87 // pred_region
          %946 = dma.done [#allocation23], 1024
        $region140: #{mlp_att_twoway_conv.1} parent=87 // pred_fallthru
          _
        %s947 = sand.u32 %s50, 1
        %s948 = scalar_lea.sflag [#allocation26], %s947
        %s949 = sand.u32 %s409, 1
        %s950 = smul.addr %s949, 4
        %s951 = scalar_lea.vmem [#allocation25], %s950
        // Predicated region
        $region141: #{mlp_att_twoway_conv.1} parent=87 // pred_check
          %p952 = pneg %p422
        $region142: #{mlp_att_twoway_conv.1} parent=87 // pred_check_branch
          %954 = sbr.rel (%p952) target = $region144
        $region143: #{mlp_att_twoway_conv.1} parent=87 // pred_region
          %955 = dma.done %s948, 64
        $region144: #{mlp_att_twoway_conv.1} parent=87 // pred_fallthru
          _
        // Predicated region
        $region145: #{mlp_att_twoway_conv.1} parent=87 // pred_check
          %p956 = pneg %p443
        $region146: #{mlp_att_twoway_conv.1} parent=87 // pred_check_branch
          %958 = sbr.rel (%p956) target = $region148
        $region147: #{mlp_att_twoway_conv.1} parent=87 // pred_region
          %959 = dma.done [#allocation26], 64
        $region148: #{mlp_att_twoway_conv.1} parent=87 // pred_fallthru
          _
        // Predicated region
        $region149: #{mlp_att_twoway_conv.1} parent=87 // pred_check
          %p960 = pneg %p464
        $region150: #{mlp_att_twoway_conv.1} parent=87 // pred_check_branch
          %962 = sbr.rel (%p960) target = $region152
        $region151: #{mlp_att_twoway_conv.1} parent=87 // pred_region
          %963 = dma.done [#allocation29], 16
        $region152: #{mlp_att_twoway_conv.1} parent=87 // pred_fallthru
          _
        %s964 = sand.u32 %s50, 1
        %s965 = scalar_lea.sflag [#allocation8], %s964
        %s966 = sand.u32 %s70, 1
        %s967 = smul.addr %s966, 64
        %s968 = scalar_lea.vmem [#allocation7], %s967
        %p969 = pneg %p83
        %p970 = pneg %p80
        %s971 = sand.u32 %s50, 1
        %s972 = scalar_lea.sflag [#allocation11], %s971
        %s973 = sand.u32 %s96, 1
        %s974 = smul.addr %s973, 64
        %s975 = scalar_lea.vmem [#allocation10], %s974
        %p976 = pneg %p109
        %p977 = pneg %p106
        %s978 = sand.u32 %s50, 1
        %s979 = scalar_lea.sflag [#allocation11], %s978
        %s980 = sand.u32 %s122, 1
        %s981 = smul.addr %s980, 1024
        %s982 = scalar_lea.vmem [#allocation12], %s981
        %p983 = pneg %p135
        %p984 = pneg %p132
        %p985 = pneg %p156
        %p986 = pneg %p153
        %p987 = pneg %p177
        %p988 = pneg %p174
        %s989 = sand.u32 %s50, 1
        %s990 = scalar_lea.sflag [#allocation8], %s989
        %s991 = sand.u32 %s190, 1
        %s992 = smul.addr %s991, 64
        %s993 = scalar_lea.vmem [#allocation15], %s992
        %p994 = pneg %p203
        %p995 = pneg %p200
        %s996 = sand.u32 %s50, 1
        %s997 = scalar_lea.sflag [#allocation11], %s996
        %s998 = sand.u32 %s216, 1
        %s999 = smul.addr %s998, 64
        %s1000 = scalar_lea.vmem [#allocation16], %s999
        %p1001 = pneg %p229
        %p1002 = pneg %p226
        %s1003 = sand.u32 %s50, 1
        %s1004 = scalar_lea.sflag [#allocation8], %s1003
        %s1005 = sand.u32 %s242, 1
        %s1006 = smul.addr %s1005, 16
        %s1007 = scalar_lea.vmem [#allocation17], %s1006
        %p1008 = pneg %p255
        %p1009 = pneg %p252
        %s1010 = sand.u32 %s50, 1
        %s1011 = scalar_lea.sflag [#allocation11], %s1010
        %s1012 = sand.u32 %s268, 1
        %s1013 = smul.addr %s1012, 64
        %s1014 = scalar_lea.vmem [#allocation18], %s1013
        %p1015 = pneg %p281
        %p1016 = pneg %p278
        %s1017 = sand.u32 %s50, 1
        %s1018 = scalar_lea.sflag [#allocation8], %s1017
        %s1019 = sand.u32 %s294, 1
        %s1020 = smul.addr %s1019, 64
        %s1021 = scalar_lea.vmem [#allocation19], %s1020
        %p1022 = pneg %p307
        %p1023 = pneg %p304
        %s1024 = sand.u32 %s50, 1
        %s1025 = scalar_lea.sflag [#allocation11], %s1024
        %s1026 = sand.u32 %s320, 1
        %s1027 = smul.addr %s1026, 64
        %s1028 = scalar_lea.vmem [#allocation20], %s1027
        %p1029 = pneg %p333
        %p1030 = pneg %p330
        %p1031 = pneg %p354
        %p1032 = pneg %p351
        %p1033 = pneg %p375
        %p1034 = pneg %p372
        %p1035 = pneg %p396
        %p1036 = pneg %p393
        %s1037 = sand.u32 %s50, 1
        %s1038 = scalar_lea.sflag [#allocation26], %s1037
        %s1039 = sand.u32 %s409, 1
        %s1040 = smul.addr %s1039, 4
        %s1041 = scalar_lea.vmem [#allocation25], %s1040
        %p1042 = pneg %p422
        %p1043 = pneg %p419
        %p1044 = pneg %p443
        %p1045 = pneg %p440
        %p1046 = pneg %p464
        %p1047 = pneg %p461
        %p1048 = pneg %p490
        %p1049 = pneg %p487
        %s1050 = sand.u32 %s477, 1
        %s1051 = scalar_lea.sflag [#allocation9], %s1050
        %s1052 = sand.u32 %s477, 1
        %s1053 = smul.addr %s1052, 128
        %s1054 = scalar_lea.vmem [#allocation30], %s1053
        %p1055 = pneg %p516
        %p1056 = pneg %p513
        %s1057 = sand.u32 %s50, 1
        %s1058 = scalar_lea.sflag [#allocation32], %s1057
        %s1059 = sand.u32 %s503, 1
        %s1060 = smul.addr %s1059, 128
        %s1061 = scalar_lea.vmem [#allocation31], %s1060
        %p1062 = pneg %p542
        %p1063 = pneg %p539
        %s1064 = sand.u32 %s50, 1
        %s1065 = scalar_lea.sflag [#allocation32], %s1064
        %s1066 = sand.u32 %s529, 1
        %s1067 = smul.addr %s1066, 128
        %s1068 = scalar_lea.vmem [#allocation33], %s1067
        %s1069 = smul.u32 16, %s54
        %s1070 = smul.u32 16, %s54
        %s1071 = smul.u32 128, %s54
        %s1072 = smul.u32 16, %s55
        %s1073 = smul.u32 16, %s55
        %s1074 = smul.u32 16, %s55
        %s1075 = smul.u32 16, %s54
        %s1076 = smul.u32 16, %s54
        %s1077 = smul.u32 16, %s54
        %p1079 = scmp.eq.s32.totalorder %s55, 0
        // Predicated region
        $region153: #{mlp_att_twoway_conv.1} parent=87 // pred_check
          %p1080 = pneg %p1079
        $region154: #{mlp_att_twoway_conv.1} parent=87 // pred_check_branch
          %1082 = sbr.rel (%p1080) target = $region156
        $region155: #{mlp_att_twoway_conv.1} parent=87 // pred_region
          %1083 = vst [vmem:[#allocation2] sm:$0xff] 0.0
          %1084 = vst [vmem:[#allocation2 + $0x8] sm:$0xff] 0.0
          %1085 = vst [vmem:[#allocation2 + $0x10] sm:$0xff] 0.0
          %1086 = vst [vmem:[#allocation2 + $0x18] sm:$0xff] 0.0
          %1087 = vst [vmem:[#allocation2 + $0x20] sm:$0xff] 0.0
          %1088 = vst [vmem:[#allocation2 + $0x28] sm:$0xff] 0.0
          %1089 = vst [vmem:[#allocation2 + $0x30] sm:$0xff] 0.0
          %1090 = vst [vmem:[#allocation2 + $0x38] sm:$0xff] 0.0
          %1091 = vst [vmem:[#allocation2 + $0x40] sm:$0xff] 0.0
          %1092 = vst [vmem:[#allocation2 + $0x48] sm:$0xff] 0.0
          %1093 = vst [vmem:[#allocation2 + $0x50] sm:$0xff] 0.0
          %1094 = vst [vmem:[#allocation2 + $0x58] sm:$0xff] 0.0
          %1095 = vst [vmem:[#allocation2 + $0x60] sm:$0xff] 0.0
          %1096 = vst [vmem:[#allocation2 + $0x68] sm:$0xff] 0.0
          %1097 = vst [vmem:[#allocation2 + $0x70] sm:$0xff] 0.0
          %1098 = vst [vmem:[#allocation2 + $0x78] sm:$0xff] 0.0
          %1099 = vst [vmem:[#allocation3] sm:$0xff] 0.0
          %1100 = vst [vmem:[#allocation3 + $0x8] sm:$0xff] 0.0
          %1101 = vst [vmem:[#allocation3 + $0x10] sm:$0xff] 0.0
          %1102 = vst [vmem:[#allocation3 + $0x18] sm:$0xff] 0.0
          %1103 = vst [vmem:[#allocation3 + $0x20] sm:$0xff] 0.0
          %1104 = vst [vmem:[#allocation3 + $0x28] sm:$0xff] 0.0
          %1105 = vst [vmem:[#allocation3 + $0x30] sm:$0xff] 0.0
          %1106 = vst [vmem:[#allocation3 + $0x38] sm:$0xff] 0.0
          %1107 = vst [vmem:[#allocation3 + $0x40] sm:$0xff] 0.0
          %1108 = vst [vmem:[#allocation3 + $0x48] sm:$0xff] 0.0
          %1109 = vst [vmem:[#allocation3 + $0x50] sm:$0xff] 0.0
          %1110 = vst [vmem:[#allocation3 + $0x58] sm:$0xff] 0.0
          %1111 = vst [vmem:[#allocation3 + $0x60] sm:$0xff] 0.0
          %1112 = vst [vmem:[#allocation3 + $0x68] sm:$0xff] 0.0
          %1113 = vst [vmem:[#allocation3 + $0x70] sm:$0xff] 0.0
          %1114 = vst [vmem:[#allocation3 + $0x78] sm:$0xff] 0.0
          %1115 = vst [vmem:[#allocation4] sm:$0xff] 0.0
          %1116 = vst [vmem:[#allocation4 + $0x8] sm:$0xff] 0.0
          %1117 = vst [vmem:[#allocation4 + $0x10] sm:$0xff] 0.0
          %1118 = vst [vmem:[#allocation4 + $0x18] sm:$0xff] 0.0
          %1119 = vst [vmem:[#allocation4 + $0x20] sm:$0xff] 0.0
          %1120 = vst [vmem:[#allocation4 + $0x28] sm:$0xff] 0.0
          %1121 = vst [vmem:[#allocation4 + $0x30] sm:$0xff] 0.0
          %1122 = vst [vmem:[#allocation4 + $0x38] sm:$0xff] 0.0
          %1123 = vst [vmem:[#allocation4 + $0x40] sm:$0xff] 0.0
          %1124 = vst [vmem:[#allocation4 + $0x48] sm:$0xff] 0.0
          %1125 = vst [vmem:[#allocation4 + $0x50] sm:$0xff] 0.0
          %1126 = vst [vmem:[#allocation4 + $0x58] sm:$0xff] 0.0
          %1127 = vst [vmem:[#allocation4 + $0x60] sm:$0xff] 0.0
          %1128 = vst [vmem:[#allocation4 + $0x68] sm:$0xff] 0.0
          %1129 = vst [vmem:[#allocation4 + $0x70] sm:$0xff] 0.0
          %1130 = vst [vmem:[#allocation4 + $0x78] sm:$0xff] 0.0
          %v1131 = vld [vmem:[%s872] sm:$0xf]
          %v1132 = vld [vmem:[%s872 + $0x4] sm:$0xf]
          %v1133 = vld [vmem:[%s872 + $0x8] sm:$0xf]
          %v1134 = vld [vmem:[%s872 + $0xc] sm:$0xf]
          %v1135 = vld [vmem:[%s872 + $0x10] sm:$0xf]
          %v1136 = vld [vmem:[%s872 + $0x14] sm:$0xf]
          %v1137 = vld [vmem:[%s872 + $0x18] sm:$0xf]
          %v1138 = vld [vmem:[%s872 + $0x1c] sm:$0xf]
          %v1139 = vld [vmem:[%s872 + $0x20] sm:$0xf]
          %v1140 = vld [vmem:[%s872 + $0x24] sm:$0xf]
          %v1141 = vld [vmem:[%s872 + $0x28] sm:$0xf]
          %v1142 = vld [vmem:[%s872 + $0x2c] sm:$0xf]
          %v1143 = vld [vmem:[%s872 + $0x30] sm:$0xf]
          %v1144 = vld [vmem:[%s872 + $0x34] sm:$0xf]
          %v1145 = vld [vmem:[%s872 + $0x38] sm:$0xf]
          %v1146 = vld [vmem:[%s872 + $0x3c] sm:$0xf]
          %v1147 = vld [vmem:[%s872 + $0x40] sm:$0xf]
          %v1148 = vld [vmem:[%s872 + $0x44] sm:$0xf]
          %v1149 = vld [vmem:[%s872 + $0x48] sm:$0xf]
          %v1150 = vld [vmem:[%s872 + $0x4c] sm:$0xf]
          %v1151 = vld [vmem:[%s872 + $0x50] sm:$0xf]
          %v1152 = vld [vmem:[%s872 + $0x54] sm:$0xf]
          %v1153 = vld [vmem:[%s872 + $0x58] sm:$0xf]
          %v1154 = vld [vmem:[%s872 + $0x5c] sm:$0xf]
          %v1155 = vld [vmem:[%s872 + $0x60] sm:$0xf]
          %v1156 = vld [vmem:[%s872 + $0x64] sm:$0xf]
          %v1157 = vld [vmem:[%s872 + $0x68] sm:$0xf]
          %v1158 = vld [vmem:[%s872 + $0x6c] sm:$0xf]
          %v1159 = vld [vmem:[%s872 + $0x70] sm:$0xf]
          %v1160 = vld [vmem:[%s872 + $0x74] sm:$0xf]
          %v1161 = vld [vmem:[%s872 + $0x78] sm:$0xf]
          %v1162 = vld [vmem:[%s872 + $0x7c] sm:$0xf]
          %v1163 = vld [vmem:[%s872 + $0x80] sm:$0xf]
          %v1164 = vld [vmem:[%s872 + $0x84] sm:$0xf]
          %v1165 = vld [vmem:[%s872 + $0x88] sm:$0xf]
          %v1166 = vld [vmem:[%s872 + $0x8c] sm:$0xf]
          %v1167 = vld [vmem:[%s872 + $0x90] sm:$0xf]
          %v1168 = vld [vmem:[%s872 + $0x94] sm:$0xf]
          %v1169 = vld [vmem:[%s872 + $0x98] sm:$0xf]
          %v1170 = vld [vmem:[%s872 + $0x9c] sm:$0xf]
          %v1171 = vld [vmem:[%s872 + $0xa0] sm:$0xf]
          %v1172 = vld [vmem:[%s872 + $0xa4] sm:$0xf]
          %v1173 = vld [vmem:[%s872 + $0xa8] sm:$0xf]
          %v1174 = vld [vmem:[%s872 + $0xac] sm:$0xf]
          %v1175 = vld [vmem:[%s872 + $0xb0] sm:$0xf]
          %v1176 = vld [vmem:[%s872 + $0xb4] sm:$0xf]
          %v1177 = vld [vmem:[%s872 + $0xb8] sm:$0xf]
          %v1178 = vld [vmem:[%s872 + $0xbc] sm:$0xf]
          %v1179 = vld [vmem:[%s872 + $0xc0] sm:$0xf]
          %v1180 = vld [vmem:[%s872 + $0xc4] sm:$0xf]
          %v1181 = vld [vmem:[%s872 + $0xc8] sm:$0xf]
          %v1182 = vld [vmem:[%s872 + $0xcc] sm:$0xf]
          %v1183 = vld [vmem:[%s872 + $0xd0] sm:$0xf]
          %v1184 = vld [vmem:[%s872 + $0xd4] sm:$0xf]
          %v1185 = vld [vmem:[%s872 + $0xd8] sm:$0xf]
          %v1186 = vld [vmem:[%s872 + $0xdc] sm:$0xf]
          %v1187 = vld [vmem:[%s872 + $0xe0] sm:$0xf]
          %v1188 = vld [vmem:[%s872 + $0xe4] sm:$0xf]
          %v1189 = vld [vmem:[%s872 + $0xe8] sm:$0xf]
          %v1190 = vld [vmem:[%s872 + $0xec] sm:$0xf]
          %v1191 = vld [vmem:[%s872 + $0xf0] sm:$0xf]
          %v1192 = vld [vmem:[%s872 + $0xf4] sm:$0xf]
          %v1193 = vld [vmem:[%s872 + $0xf8] sm:$0xf]
          %v1194 = vld [vmem:[%s872 + $0xfc] sm:$0xf]
          %v1195 = vld [vmem:[%s872 + $0x100] sm:$0xf]
          %v1196 = vld [vmem:[%s872 + $0x104] sm:$0xf]
          %v1197 = vld [vmem:[%s872 + $0x108] sm:$0xf]
          %v1198 = vld [vmem:[%s872 + $0x10c] sm:$0xf]
          %v1199 = vld [vmem:[%s872 + $0x110] sm:$0xf]
          %v1200 = vld [vmem:[%s872 + $0x114] sm:$0xf]
          %v1201 = vld [vmem:[%s872 + $0x118] sm:$0xf]
          %v1202 = vld [vmem:[%s872 + $0x11c] sm:$0xf]
          %v1203 = vld [vmem:[%s872 + $0x120] sm:$0xf]
          %v1204 = vld [vmem:[%s872 + $0x124] sm:$0xf]
          %v1205 = vld [vmem:[%s872 + $0x128] sm:$0xf]
          %v1206 = vld [vmem:[%s872 + $0x12c] sm:$0xf]
          %v1207 = vld [vmem:[%s872 + $0x130] sm:$0xf]
          %v1208 = vld [vmem:[%s872 + $0x134] sm:$0xf]
          %v1209 = vld [vmem:[%s872 + $0x138] sm:$0xf]
          %v1210 = vld [vmem:[%s872 + $0x13c] sm:$0xf]
          %v1211 = vld [vmem:[%s872 + $0x140] sm:$0xf]
          %v1212 = vld [vmem:[%s872 + $0x144] sm:$0xf]
          %v1213 = vld [vmem:[%s872 + $0x148] sm:$0xf]
          %v1214 = vld [vmem:[%s872 + $0x14c] sm:$0xf]
          %v1215 = vld [vmem:[%s872 + $0x150] sm:$0xf]
          %v1216 = vld [vmem:[%s872 + $0x154] sm:$0xf]
          %v1217 = vld [vmem:[%s872 + $0x158] sm:$0xf]
          %v1218 = vld [vmem:[%s872 + $0x15c] sm:$0xf]
          %v1219 = vld [vmem:[%s872 + $0x160] sm:$0xf]
          %v1220 = vld [vmem:[%s872 + $0x164] sm:$0xf]
          %v1221 = vld [vmem:[%s872 + $0x168] sm:$0xf]
          %v1222 = vld [vmem:[%s872 + $0x16c] sm:$0xf]
          %v1223 = vld [vmem:[%s872 + $0x170] sm:$0xf]
          %v1224 = vld [vmem:[%s872 + $0x174] sm:$0xf]
          %v1225 = vld [vmem:[%s872 + $0x178] sm:$0xf]
          %v1226 = vld [vmem:[%s872 + $0x17c] sm:$0xf]
          %v1227 = vld [vmem:[%s872 + $0x180] sm:$0xf]
          %v1228 = vld [vmem:[%s872 + $0x184] sm:$0xf]
          %v1229 = vld [vmem:[%s872 + $0x188] sm:$0xf]
          %v1230 = vld [vmem:[%s872 + $0x18c] sm:$0xf]
          %v1231 = vld [vmem:[%s872 + $0x190] sm:$0xf]
          %v1232 = vld [vmem:[%s872 + $0x194] sm:$0xf]
          %v1233 = vld [vmem:[%s872 + $0x198] sm:$0xf]
          %v1234 = vld [vmem:[%s872 + $0x19c] sm:$0xf]
          %v1235 = vld [vmem:[%s872 + $0x1a0] sm:$0xf]
          %v1236 = vld [vmem:[%s872 + $0x1a4] sm:$0xf]
          %v1237 = vld [vmem:[%s872 + $0x1a8] sm:$0xf]
          %v1238 = vld [vmem:[%s872 + $0x1ac] sm:$0xf]
          %v1239 = vld [vmem:[%s872 + $0x1b0] sm:$0xf]
          %v1240 = vld [vmem:[%s872 + $0x1b4] sm:$0xf]
          %v1241 = vld [vmem:[%s872 + $0x1b8] sm:$0xf]
          %v1242 = vld [vmem:[%s872 + $0x1bc] sm:$0xf]
          %v1243 = vld [vmem:[%s872 + $0x1c0] sm:$0xf]
          %v1244 = vld [vmem:[%s872 + $0x1c4] sm:$0xf]
          %v1245 = vld [vmem:[%s872 + $0x1c8] sm:$0xf]
          %v1246 = vld [vmem:[%s872 + $0x1cc] sm:$0xf]
          %v1247 = vld [vmem:[%s872 + $0x1d0] sm:$0xf]
          %v1248 = vld [vmem:[%s872 + $0x1d4] sm:$0xf]
          %v1249 = vld [vmem:[%s872 + $0x1d8] sm:$0xf]
          %v1250 = vld [vmem:[%s872 + $0x1dc] sm:$0xf]
          %v1251 = vld [vmem:[%s872 + $0x1e0] sm:$0xf]
          %v1252 = vld [vmem:[%s872 + $0x1e4] sm:$0xf]
          %v1253 = vld [vmem:[%s872 + $0x1e8] sm:$0xf]
          %v1254 = vld [vmem:[%s872 + $0x1ec] sm:$0xf]
          %v1255 = vld [vmem:[%s872 + $0x1f0] sm:$0xf]
          %v1256 = vld [vmem:[%s872 + $0x1f4] sm:$0xf]
          %v1257 = vld [vmem:[%s872 + $0x1f8] sm:$0xf]
          %v1258 = vld [vmem:[%s872 + $0x1fc] sm:$0xf]
          %v1259 = vld [vmem:[%s872 + $0x200] sm:$0xf]
          %v1260 = vld [vmem:[%s872 + $0x204] sm:$0xf]
          %v1261 = vld [vmem:[%s872 + $0x208] sm:$0xf]
          %v1262 = vld [vmem:[%s872 + $0x20c] sm:$0xf]
          %v1263 = vld [vmem:[%s872 + $0x210] sm:$0xf]
          %v1264 = vld [vmem:[%s872 + $0x214] sm:$0xf]
          %v1265 = vld [vmem:[%s872 + $0x218] sm:$0xf]
          %v1266 = vld [vmem:[%s872 + $0x21c] sm:$0xf]
          %v1267 = vld [vmem:[%s872 + $0x220] sm:$0xf]
          %v1268 = vld [vmem:[%s872 + $0x224] sm:$0xf]
          %v1269 = vld [vmem:[%s872 + $0x228] sm:$0xf]
          %v1270 = vld [vmem:[%s872 + $0x22c] sm:$0xf]
          %v1271 = vld [vmem:[%s872 + $0x230] sm:$0xf]
          %v1272 = vld [vmem:[%s872 + $0x234] sm:$0xf]
          %v1273 = vld [vmem:[%s872 + $0x238] sm:$0xf]
          %v1274 = vld [vmem:[%s872 + $0x23c] sm:$0xf]
          %v1275 = vld [vmem:[%s872 + $0x240] sm:$0xf]
          %v1276 = vld [vmem:[%s872 + $0x244] sm:$0xf]
          %v1277 = vld [vmem:[%s872 + $0x248] sm:$0xf]
          %v1278 = vld [vmem:[%s872 + $0x24c] sm:$0xf]
          %v1279 = vld [vmem:[%s872 + $0x250] sm:$0xf]
          %v1280 = vld [vmem:[%s872 + $0x254] sm:$0xf]
          %v1281 = vld [vmem:[%s872 + $0x258] sm:$0xf]
          %v1282 = vld [vmem:[%s872 + $0x25c] sm:$0xf]
          %v1283 = vld [vmem:[%s872 + $0x260] sm:$0xf]
          %v1284 = vld [vmem:[%s872 + $0x264] sm:$0xf]
          %v1285 = vld [vmem:[%s872 + $0x268] sm:$0xf]
          %v1286 = vld [vmem:[%s872 + $0x26c] sm:$0xf]
          %v1287 = vld [vmem:[%s872 + $0x270] sm:$0xf]
          %v1288 = vld [vmem:[%s872 + $0x274] sm:$0xf]
          %v1289 = vld [vmem:[%s872 + $0x278] sm:$0xf]
          %v1290 = vld [vmem:[%s872 + $0x27c] sm:$0xf]
          %v1291 = vld [vmem:[%s872 + $0x280] sm:$0xf]
          %v1292 = vld [vmem:[%s872 + $0x284] sm:$0xf]
          %v1293 = vld [vmem:[%s872 + $0x288] sm:$0xf]
          %v1294 = vld [vmem:[%s872 + $0x28c] sm:$0xf]
          %v1295 = vld [vmem:[%s872 + $0x290] sm:$0xf]
          %v1296 = vld [vmem:[%s872 + $0x294] sm:$0xf]
          %v1297 = vld [vmem:[%s872 + $0x298] sm:$0xf]
          %v1298 = vld [vmem:[%s872 + $0x29c] sm:$0xf]
          %v1299 = vld [vmem:[%s872 + $0x2a0] sm:$0xf]
          %v1300 = vld [vmem:[%s872 + $0x2a4] sm:$0xf]
          %v1301 = vld [vmem:[%s872 + $0x2a8] sm:$0xf]
          %v1302 = vld [vmem:[%s872 + $0x2ac] sm:$0xf]
          %v1303 = vld [vmem:[%s872 + $0x2b0] sm:$0xf]
          %v1304 = vld [vmem:[%s872 + $0x2b4] sm:$0xf]
          %v1305 = vld [vmem:[%s872 + $0x2b8] sm:$0xf]
          %v1306 = vld [vmem:[%s872 + $0x2bc] sm:$0xf]
          %v1307 = vld [vmem:[%s872 + $0x2c0] sm:$0xf]
          %v1308 = vld [vmem:[%s872 + $0x2c4] sm:$0xf]
          %v1309 = vld [vmem:[%s872 + $0x2c8] sm:$0xf]
          %v1310 = vld [vmem:[%s872 + $0x2cc] sm:$0xf]
          %v1311 = vld [vmem:[%s872 + $0x2d0] sm:$0xf]
          %v1312 = vld [vmem:[%s872 + $0x2d4] sm:$0xf]
          %v1313 = vld [vmem:[%s872 + $0x2d8] sm:$0xf]
          %v1314 = vld [vmem:[%s872 + $0x2dc] sm:$0xf]
          %v1315 = vld [vmem:[%s872 + $0x2e0] sm:$0xf]
          %v1316 = vld [vmem:[%s872 + $0x2e4] sm:$0xf]
          %v1317 = vld [vmem:[%s872 + $0x2e8] sm:$0xf]
          %v1318 = vld [vmem:[%s872 + $0x2ec] sm:$0xf]
          %v1319 = vld [vmem:[%s872 + $0x2f0] sm:$0xf]
          %v1320 = vld [vmem:[%s872 + $0x2f4] sm:$0xf]
          %v1321 = vld [vmem:[%s872 + $0x2f8] sm:$0xf]
          %v1322 = vld [vmem:[%s872 + $0x2fc] sm:$0xf]
          %v1323 = vld [vmem:[%s872 + $0x300] sm:$0xf]
          %v1324 = vld [vmem:[%s872 + $0x304] sm:$0xf]
          %v1325 = vld [vmem:[%s872 + $0x308] sm:$0xf]
          %v1326 = vld [vmem:[%s872 + $0x30c] sm:$0xf]
          %v1327 = vld [vmem:[%s872 + $0x310] sm:$0xf]
          %v1328 = vld [vmem:[%s872 + $0x314] sm:$0xf]
          %v1329 = vld [vmem:[%s872 + $0x318] sm:$0xf]
          %v1330 = vld [vmem:[%s872 + $0x31c] sm:$0xf]
          %v1331 = vld [vmem:[%s872 + $0x320] sm:$0xf]
          %v1332 = vld [vmem:[%s872 + $0x324] sm:$0xf]
          %v1333 = vld [vmem:[%s872 + $0x328] sm:$0xf]
          %v1334 = vld [vmem:[%s872 + $0x32c] sm:$0xf]
          %v1335 = vld [vmem:[%s872 + $0x330] sm:$0xf]
          %v1336 = vld [vmem:[%s872 + $0x334] sm:$0xf]
          %v1337 = vld [vmem:[%s872 + $0x338] sm:$0xf]
          %v1338 = vld [vmem:[%s872 + $0x33c] sm:$0xf]
          %v1339 = vld [vmem:[%s872 + $0x340] sm:$0xf]
          %v1340 = vld [vmem:[%s872 + $0x344] sm:$0xf]
          %v1341 = vld [vmem:[%s872 + $0x348] sm:$0xf]
          %v1342 = vld [vmem:[%s872 + $0x34c] sm:$0xf]
          %v1343 = vld [vmem:[%s872 + $0x350] sm:$0xf]
          %v1344 = vld [vmem:[%s872 + $0x354] sm:$0xf]
          %v1345 = vld [vmem:[%s872 + $0x358] sm:$0xf]
          %v1346 = vld [vmem:[%s872 + $0x35c] sm:$0xf]
          %v1347 = vld [vmem:[%s872 + $0x360] sm:$0xf]
          %v1348 = vld [vmem:[%s872 + $0x364] sm:$0xf]
          %v1349 = vld [vmem:[%s872 + $0x368] sm:$0xf]
          %v1350 = vld [vmem:[%s872 + $0x36c] sm:$0xf]
          %v1351 = vld [vmem:[%s872 + $0x370] sm:$0xf]
          %v1352 = vld [vmem:[%s872 + $0x374] sm:$0xf]
          %v1353 = vld [vmem:[%s872 + $0x378] sm:$0xf]
          %v1354 = vld [vmem:[%s872 + $0x37c] sm:$0xf]
          %v1355 = vld [vmem:[%s872 + $0x380] sm:$0xf]
          %v1356 = vld [vmem:[%s872 + $0x384] sm:$0xf]
          %v1357 = vld [vmem:[%s872 + $0x388] sm:$0xf]
          %v1358 = vld [vmem:[%s872 + $0x38c] sm:$0xf]
          %v1359 = vld [vmem:[%s872 + $0x390] sm:$0xf]
          %v1360 = vld [vmem:[%s872 + $0x394] sm:$0xf]
          %v1361 = vld [vmem:[%s872 + $0x398] sm:$0xf]
          %v1362 = vld [vmem:[%s872 + $0x39c] sm:$0xf]
          %v1363 = vld [vmem:[%s872 + $0x3a0] sm:$0xf]
          %v1364 = vld [vmem:[%s872 + $0x3a4] sm:$0xf]
          %v1365 = vld [vmem:[%s872 + $0x3a8] sm:$0xf]
          %v1366 = vld [vmem:[%s872 + $0x3ac] sm:$0xf]
          %v1367 = vld [vmem:[%s872 + $0x3b0] sm:$0xf]
          %v1368 = vld [vmem:[%s872 + $0x3b4] sm:$0xf]
          %v1369 = vld [vmem:[%s872 + $0x3b8] sm:$0xf]
          %v1370 = vld [vmem:[%s872 + $0x3bc] sm:$0xf]
          %v1371 = vld [vmem:[%s872 + $0x3c0] sm:$0xf]
          %v1372 = vld [vmem:[%s872 + $0x3c4] sm:$0xf]
          %v1373 = vld [vmem:[%s872 + $0x3c8] sm:$0xf]
          %v1374 = vld [vmem:[%s872 + $0x3cc] sm:$0xf]
          %v1375 = vld [vmem:[%s872 + $0x3d0] sm:$0xf]
          %v1376 = vld [vmem:[%s872 + $0x3d4] sm:$0xf]
          %v1377 = vld [vmem:[%s872 + $0x3d8] sm:$0xf]
          %v1378 = vld [vmem:[%s872 + $0x3dc] sm:$0xf]
          %v1379 = vld [vmem:[%s872 + $0x3e0] sm:$0xf]
          %v1380 = vld [vmem:[%s872 + $0x3e4] sm:$0xf]
          %v1381 = vld [vmem:[%s872 + $0x3e8] sm:$0xf]
          %v1382 = vld [vmem:[%s872 + $0x3ec] sm:$0xf]
          %v1383 = vld [vmem:[%s872 + $0x3f0] sm:$0xf]
          %v1384 = vld [vmem:[%s872 + $0x3f4] sm:$0xf]
          %v1385 = vld [vmem:[%s872 + $0x3f8] sm:$0xf]
          %v1386 = vld [vmem:[%s872 + $0x3fc] sm:$0xf]
          %v1387 = vld [vmem:[#allocation13] sm:$0xf]
          %v1388 = vld [vmem:[#allocation13 + $0x4] sm:$0xf]
          %1390 = vset.pattern.permute.xlu0 0
          %1391 = vperm.xlu0 %1390, %v1387
          %v1392 = vpop.permute.xlu0 %1391
          %v1395 = vunpack.c.l.s4 839922192
          %v1396 = vunpack.c.0.s8 %v1395
          %v1397 = vlaneseq
          %v1398 = vshrl.u32 %v1397, 7
          %v1399 = vsub.s32 %v1396, %v1398
          %v1400 = vrot.slane %v1392, %v1399
          %1402 = vset.pattern.permute.xlu0 0
          %1403 = vperm.xlu0 %1402, %v1388
          %v1404 = vpop.permute.xlu0 %1403
          %v1407 = vunpack.c.l.s4 839922192
          %v1408 = vunpack.c.0.s8 %v1407
          %v1409 = vlaneseq
          %v1410 = vshrl.u32 %v1409, 7
          %v1411 = vsub.s32 %v1408, %v1410
          %v1412 = vrot.slane %v1404, %v1411
          %v1413 = vmul.bf16 %v1131, %v1400
          %v1414 = vmul.bf16 %v1132, %v1412
          %v1415 = vmul.bf16 %v1133, %v1400
          %v1416 = vmul.bf16 %v1134, %v1412
          %v1417 = vmul.bf16 %v1135, %v1400
          %v1418 = vmul.bf16 %v1136, %v1412
          %v1419 = vmul.bf16 %v1137, %v1400
          %v1420 = vmul.bf16 %v1138, %v1412
          %v1421 = vmul.bf16 %v1139, %v1400
          %v1422 = vmul.bf16 %v1140, %v1412
          %v1423 = vmul.bf16 %v1141, %v1400
          %v1424 = vmul.bf16 %v1142, %v1412
          %v1425 = vmul.bf16 %v1143, %v1400
          %v1426 = vmul.bf16 %v1144, %v1412
          %v1427 = vmul.bf16 %v1145, %v1400
          %v1428 = vmul.bf16 %v1146, %v1412
          %v1429 = vmul.bf16 %v1147, %v1400
          %v1430 = vmul.bf16 %v1148, %v1412
          %v1431 = vmul.bf16 %v1149, %v1400
          %v1432 = vmul.bf16 %v1150, %v1412
          %v1433 = vmul.bf16 %v1151, %v1400
          %v1434 = vmul.bf16 %v1152, %v1412
          %v1435 = vmul.bf16 %v1153, %v1400
          %v1436 = vmul.bf16 %v1154, %v1412
          %v1437 = vmul.bf16 %v1155, %v1400
          %v1438 = vmul.bf16 %v1156, %v1412
          %v1439 = vmul.bf16 %v1157, %v1400
          %v1440 = vmul.bf16 %v1158, %v1412
          %v1441 = vmul.bf16 %v1159, %v1400
          %v1442 = vmul.bf16 %v1160, %v1412
          %v1443 = vmul.bf16 %v1161, %v1400
          %v1444 = vmul.bf16 %v1162, %v1412
          %v1445 = vmul.bf16 %v1163, %v1400
          %v1446 = vmul.bf16 %v1164, %v1412
          %v1447 = vmul.bf16 %v1165, %v1400
          %v1448 = vmul.bf16 %v1166, %v1412
          %v1449 = vmul.bf16 %v1167, %v1400
          %v1450 = vmul.bf16 %v1168, %v1412
          %v1451 = vmul.bf16 %v1169, %v1400
          %v1452 = vmul.bf16 %v1170, %v1412
          %v1453 = vmul.bf16 %v1171, %v1400
          %v1454 = vmul.bf16 %v1172, %v1412
          %v1455 = vmul.bf16 %v1173, %v1400
          %v1456 = vmul.bf16 %v1174, %v1412
          %v1457 = vmul.bf16 %v1175, %v1400
          %v1458 = vmul.bf16 %v1176, %v1412
          %v1459 = vmul.bf16 %v1177, %v1400
          %v1460 = vmul.bf16 %v1178, %v1412
          %v1461 = vmul.bf16 %v1179, %v1400
          %v1462 = vmul.bf16 %v1180, %v1412
          %v1463 = vmul.bf16 %v1181, %v1400
          %v1464 = vmul.bf16 %v1182, %v1412
          %v1465 = vmul.bf16 %v1183, %v1400
          %v1466 = vmul.bf16 %v1184, %v1412
          %v1467 = vmul.bf16 %v1185, %v1400
          %v1468 = vmul.bf16 %v1186, %v1412
          %v1469 = vmul.bf16 %v1187, %v1400
          %v1470 = vmul.bf16 %v1188, %v1412
          %v1471 = vmul.bf16 %v1189, %v1400
          %v1472 = vmul.bf16 %v1190, %v1412
          %v1473 = vmul.bf16 %v1191, %v1400
          %v1474 = vmul.bf16 %v1192, %v1412
          %v1475 = vmul.bf16 %v1193, %v1400
          %v1476 = vmul.bf16 %v1194, %v1412
          %v1477 = vmul.bf16 %v1195, %v1400
          %v1478 = vmul.bf16 %v1196, %v1412
          %v1479 = vmul.bf16 %v1197, %v1400
          %v1480 = vmul.bf16 %v1198, %v1412
          %v1481 = vmul.bf16 %v1199, %v1400
          %v1482 = vmul.bf16 %v1200, %v1412
          %v1483 = vmul.bf16 %v1201, %v1400
          %v1484 = vmul.bf16 %v1202, %v1412
          %v1485 = vmul.bf16 %v1203, %v1400
          %v1486 = vmul.bf16 %v1204, %v1412
          %v1487 = vmul.bf16 %v1205, %v1400
          %v1488 = vmul.bf16 %v1206, %v1412
          %v1489 = vmul.bf16 %v1207, %v1400
          %v1490 = vmul.bf16 %v1208, %v1412
          %v1491 = vmul.bf16 %v1209, %v1400
          %v1492 = vmul.bf16 %v1210, %v1412
          %v1493 = vmul.bf16 %v1211, %v1400
          %v1494 = vmul.bf16 %v1212, %v1412
          %v1495 = vmul.bf16 %v1213, %v1400
          %v1496 = vmul.bf16 %v1214, %v1412
          %v1497 = vmul.bf16 %v1215, %v1400
          %v1498 = vmul.bf16 %v1216, %v1412
          %v1499 = vmul.bf16 %v1217, %v1400
          %v1500 = vmul.bf16 %v1218, %v1412
          %v1501 = vmul.bf16 %v1219, %v1400
          %v1502 = vmul.bf16 %v1220, %v1412
          %v1503 = vmul.bf16 %v1221, %v1400
          %v1504 = vmul.bf16 %v1222, %v1412
          %v1505 = vmul.bf16 %v1223, %v1400
          %v1506 = vmul.bf16 %v1224, %v1412
          %v1507 = vmul.bf16 %v1225, %v1400
          %v1508 = vmul.bf16 %v1226, %v1412
          %v1509 = vmul.bf16 %v1227, %v1400
          %v1510 = vmul.bf16 %v1228, %v1412
          %v1511 = vmul.bf16 %v1229, %v1400
          %v1512 = vmul.bf16 %v1230, %v1412
          %v1513 = vmul.bf16 %v1231, %v1400
          %v1514 = vmul.bf16 %v1232, %v1412
          %v1515 = vmul.bf16 %v1233, %v1400
          %v1516 = vmul.bf16 %v1234, %v1412
          %v1517 = vmul.bf16 %v1235, %v1400
          %v1518 = vmul.bf16 %v1236, %v1412
          %v1519 = vmul.bf16 %v1237, %v1400
          %v1520 = vmul.bf16 %v1238, %v1412
          %v1521 = vmul.bf16 %v1239, %v1400
          %v1522 = vmul.bf16 %v1240, %v1412
          %v1523 = vmul.bf16 %v1241, %v1400
          %v1524 = vmul.bf16 %v1242, %v1412
          %v1525 = vmul.bf16 %v1243, %v1400
          %v1526 = vmul.bf16 %v1244, %v1412
          %v1527 = vmul.bf16 %v1245, %v1400
          %v1528 = vmul.bf16 %v1246, %v1412
          %v1529 = vmul.bf16 %v1247, %v1400
          %v1530 = vmul.bf16 %v1248, %v1412
          %v1531 = vmul.bf16 %v1249, %v1400
          %v1532 = vmul.bf16 %v1250, %v1412
          %v1533 = vmul.bf16 %v1251, %v1400
          %v1534 = vmul.bf16 %v1252, %v1412
          %v1535 = vmul.bf16 %v1253, %v1400
          %v1536 = vmul.bf16 %v1254, %v1412
          %v1537 = vmul.bf16 %v1255, %v1400
          %v1538 = vmul.bf16 %v1256, %v1412
          %v1539 = vmul.bf16 %v1257, %v1400
          %v1540 = vmul.bf16 %v1258, %v1412
          %v1541 = vmul.bf16 %v1259, %v1400
          %v1542 = vmul.bf16 %v1260, %v1412
          %v1543 = vmul.bf16 %v1261, %v1400
          %v1544 = vmul.bf16 %v1262, %v1412
          %v1545 = vmul.bf16 %v1263, %v1400
          %v1546 = vmul.bf16 %v1264, %v1412
          %v1547 = vmul.bf16 %v1265, %v1400
          %v1548 = vmul.bf16 %v1266, %v1412
          %v1549 = vmul.bf16 %v1267, %v1400
          %v1550 = vmul.bf16 %v1268, %v1412
          %v1551 = vmul.bf16 %v1269, %v1400
          %v1552 = vmul.bf16 %v1270, %v1412
          %v1553 = vmul.bf16 %v1271, %v1400
          %v1554 = vmul.bf16 %v1272, %v1412
          %v1555 = vmul.bf16 %v1273, %v1400
          %v1556 = vmul.bf16 %v1274, %v1412
          %v1557 = vmul.bf16 %v1275, %v1400
          %v1558 = vmul.bf16 %v1276, %v1412
          %v1559 = vmul.bf16 %v1277, %v1400
          %v1560 = vmul.bf16 %v1278, %v1412
          %v1561 = vmul.bf16 %v1279, %v1400
          %v1562 = vmul.bf16 %v1280, %v1412
          %v1563 = vmul.bf16 %v1281, %v1400
          %v1564 = vmul.bf16 %v1282, %v1412
          %v1565 = vmul.bf16 %v1283, %v1400
          %v1566 = vmul.bf16 %v1284, %v1412
          %v1567 = vmul.bf16 %v1285, %v1400
          %v1568 = vmul.bf16 %v1286, %v1412
          %v1569 = vmul.bf16 %v1287, %v1400
          %v1570 = vmul.bf16 %v1288, %v1412
          %v1571 = vmul.bf16 %v1289, %v1400
          %v1572 = vmul.bf16 %v1290, %v1412
          %v1573 = vmul.bf16 %v1291, %v1400
          %v1574 = vmul.bf16 %v1292, %v1412
          %v1575 = vmul.bf16 %v1293, %v1400
          %v1576 = vmul.bf16 %v1294, %v1412
          %v1577 = vmul.bf16 %v1295, %v1400
          %v1578 = vmul.bf16 %v1296, %v1412
          %v1579 = vmul.bf16 %v1297, %v1400
          %v1580 = vmul.bf16 %v1298, %v1412
          %v1581 = vmul.bf16 %v1299, %v1400
          %v1582 = vmul.bf16 %v1300, %v1412
          %v1583 = vmul.bf16 %v1301, %v1400
          %v1584 = vmul.bf16 %v1302, %v1412
          %v1585 = vmul.bf16 %v1303, %v1400
          %v1586 = vmul.bf16 %v1304, %v1412
          %v1587 = vmul.bf16 %v1305, %v1400
          %v1588 = vmul.bf16 %v1306, %v1412
          %v1589 = vmul.bf16 %v1307, %v1400
          %v1590 = vmul.bf16 %v1308, %v1412
          %v1591 = vmul.bf16 %v1309, %v1400
          %v1592 = vmul.bf16 %v1310, %v1412
          %v1593 = vmul.bf16 %v1311, %v1400
          %v1594 = vmul.bf16 %v1312, %v1412
          %v1595 = vmul.bf16 %v1313, %v1400
          %v1596 = vmul.bf16 %v1314, %v1412
          %v1597 = vmul.bf16 %v1315, %v1400
          %v1598 = vmul.bf16 %v1316, %v1412
          %v1599 = vmul.bf16 %v1317, %v1400
          %v1600 = vmul.bf16 %v1318, %v1412
          %v1601 = vmul.bf16 %v1319, %v1400
          %v1602 = vmul.bf16 %v1320, %v1412
          %v1603 = vmul.bf16 %v1321, %v1400
          %v1604 = vmul.bf16 %v1322, %v1412
          %v1605 = vmul.bf16 %v1323, %v1400
          %v1606 = vmul.bf16 %v1324, %v1412
          %v1607 = vmul.bf16 %v1325, %v1400
          %v1608 = vmul.bf16 %v1326, %v1412
          %v1609 = vmul.bf16 %v1327, %v1400
          %v1610 = vmul.bf16 %v1328, %v1412
          %v1611 = vmul.bf16 %v1329, %v1400
          %v1612 = vmul.bf16 %v1330, %v1412
          %v1613 = vmul.bf16 %v1331, %v1400
          %v1614 = vmul.bf16 %v1332, %v1412
          %v1615 = vmul.bf16 %v1333, %v1400
          %v1616 = vmul.bf16 %v1334, %v1412
          %v1617 = vmul.bf16 %v1335, %v1400
          %v1618 = vmul.bf16 %v1336, %v1412
          %v1619 = vmul.bf16 %v1337, %v1400
          %v1620 = vmul.bf16 %v1338, %v1412
          %v1621 = vmul.bf16 %v1339, %v1400
          %v1622 = vmul.bf16 %v1340, %v1412
          %v1623 = vmul.bf16 %v1341, %v1400
          %v1624 = vmul.bf16 %v1342, %v1412
          %v1625 = vmul.bf16 %v1343, %v1400
          %v1626 = vmul.bf16 %v1344, %v1412
          %v1627 = vmul.bf16 %v1345, %v1400
          %v1628 = vmul.bf16 %v1346, %v1412
          %v1629 = vmul.bf16 %v1347, %v1400
          %v1630 = vmul.bf16 %v1348, %v1412
          %v1631 = vmul.bf16 %v1349, %v1400
          %v1632 = vmul.bf16 %v1350, %v1412
          %v1633 = vmul.bf16 %v1351, %v1400
          %v1634 = vmul.bf16 %v1352, %v1412
          %v1635 = vmul.bf16 %v1353, %v1400
          %v1636 = vmul.bf16 %v1354, %v1412
          %v1637 = vmul.bf16 %v1355, %v1400
          %v1638 = vmul.bf16 %v1356, %v1412
          %v1639 = vmul.bf16 %v1357, %v1400
          %v1640 = vmul.bf16 %v1358, %v1412
          %v1641 = vmul.bf16 %v1359, %v1400
          %v1642 = vmul.bf16 %v1360, %v1412
          %v1643 = vmul.bf16 %v1361, %v1400
          %v1644 = vmul.bf16 %v1362, %v1412
          %v1645 = vmul.bf16 %v1363, %v1400
          %v1646 = vmul.bf16 %v1364, %v1412
          %v1647 = vmul.bf16 %v1365, %v1400
          %v1648 = vmul.bf16 %v1366, %v1412
          %v1649 = vmul.bf16 %v1367, %v1400
          %v1650 = vmul.bf16 %v1368, %v1412
          %v1651 = vmul.bf16 %v1369, %v1400
          %v1652 = vmul.bf16 %v1370, %v1412
          %v1653 = vmul.bf16 %v1371, %v1400
          %v1654 = vmul.bf16 %v1372, %v1412
          %v1655 = vmul.bf16 %v1373, %v1400
          %v1656 = vmul.bf16 %v1374, %v1412
          %v1657 = vmul.bf16 %v1375, %v1400
          %v1658 = vmul.bf16 %v1376, %v1412
          %v1659 = vmul.bf16 %v1377, %v1400
          %v1660 = vmul.bf16 %v1378, %v1412
          %v1661 = vmul.bf16 %v1379, %v1400
          %v1662 = vmul.bf16 %v1380, %v1412
          %v1663 = vmul.bf16 %v1381, %v1400
          %v1664 = vmul.bf16 %v1382, %v1412
          %v1665 = vmul.bf16 %v1383, %v1400
          %v1666 = vmul.bf16 %v1384, %v1412
          %v1667 = vmul.bf16 %v1385, %v1400
          %v1668 = vmul.bf16 %v1386, %v1412
          %v1669 = vunpack.c.l.bf16 %v1413
          %v1670 = vunpack.c.l.bf16 %v1414
          %v1671 = vunpack.c.l.bf16 %v1415
          %v1672 = vunpack.c.l.bf16 %v1416
          %v1673 = vunpack.c.l.bf16 %v1417
          %v1674 = vunpack.c.l.bf16 %v1418
          %v1675 = vunpack.c.l.bf16 %v1419
          %v1676 = vunpack.c.l.bf16 %v1420
          %v1677 = vunpack.c.l.bf16 %v1421
          %v1678 = vunpack.c.l.bf16 %v1422
          %v1679 = vunpack.c.l.bf16 %v1423
          %v1680 = vunpack.c.l.bf16 %v1424
          %v1681 = vunpack.c.l.bf16 %v1425
          %v1682 = vunpack.c.l.bf16 %v1426
          %v1683 = vunpack.c.l.bf16 %v1427
          %v1684 = vunpack.c.l.bf16 %v1428
          %v1685 = vunpack.c.l.bf16 %v1429
          %v1686 = vunpack.c.l.bf16 %v1430
          %v1687 = vunpack.c.l.bf16 %v1431
          %v1688 = vunpack.c.l.bf16 %v1432
          %v1689 = vunpack.c.l.bf16 %v1433
          %v1690 = vunpack.c.l.bf16 %v1434
          %v1691 = vunpack.c.l.bf16 %v1435
          %v1692 = vunpack.c.l.bf16 %v1436
          %v1693 = vunpack.c.l.bf16 %v1437
          %v1694 = vunpack.c.l.bf16 %v1438
          %v1695 = vunpack.c.l.bf16 %v1439
          %v1696 = vunpack.c.l.bf16 %v1440
          %v1697 = vunpack.c.l.bf16 %v1441
          %v1698 = vunpack.c.l.bf16 %v1442
          %v1699 = vunpack.c.l.bf16 %v1443
          %v1700 = vunpack.c.l.bf16 %v1444
          %v1701 = vunpack.c.l.bf16 %v1445
          %v1702 = vunpack.c.l.bf16 %v1446
          %v1703 = vunpack.c.l.bf16 %v1447
          %v1704 = vunpack.c.l.bf16 %v1448
          %v1705 = vunpack.c.l.bf16 %v1449
          %v1706 = vunpack.c.l.bf16 %v1450
          %v1707 = vunpack.c.l.bf16 %v1451
          %v1708 = vunpack.c.l.bf16 %v1452
          %v1709 = vunpack.c.l.bf16 %v1453
          %v1710 = vunpack.c.l.bf16 %v1454
          %v1711 = vunpack.c.l.bf16 %v1455
          %v1712 = vunpack.c.l.bf16 %v1456
          %v1713 = vunpack.c.l.bf16 %v1457
          %v1714 = vunpack.c.l.bf16 %v1458
          %v1715 = vunpack.c.l.bf16 %v1459
          %v1716 = vunpack.c.l.bf16 %v1460
          %v1717 = vunpack.c.l.bf16 %v1461
          %v1718 = vunpack.c.l.bf16 %v1462
          %v1719 = vunpack.c.l.bf16 %v1463
          %v1720 = vunpack.c.l.bf16 %v1464
          %v1721 = vunpack.c.l.bf16 %v1465
          %v1722 = vunpack.c.l.bf16 %v1466
          %v1723 = vunpack.c.l.bf16 %v1467
          %v1724 = vunpack.c.l.bf16 %v1468
          %v1725 = vunpack.c.l.bf16 %v1469
          %v1726 = vunpack.c.l.bf16 %v1470
          %v1727 = vunpack.c.l.bf16 %v1471
          %v1728 = vunpack.c.l.bf16 %v1472
          %v1729 = vunpack.c.l.bf16 %v1473
          %v1730 = vunpack.c.l.bf16 %v1474
          %v1731 = vunpack.c.l.bf16 %v1475
          %v1732 = vunpack.c.l.bf16 %v1476
          %v1733 = vunpack.c.l.bf16 %v1477
          %v1734 = vunpack.c.l.bf16 %v1478
          %v1735 = vunpack.c.l.bf16 %v1479
          %v1736 = vunpack.c.l.bf16 %v1480
          %v1737 = vunpack.c.l.bf16 %v1481
          %v1738 = vunpack.c.l.bf16 %v1482
          %v1739 = vunpack.c.l.bf16 %v1483
          %v1740 = vunpack.c.l.bf16 %v1484
          %v1741 = vunpack.c.l.bf16 %v1485
          %v1742 = vunpack.c.l.bf16 %v1486
          %v1743 = vunpack.c.l.bf16 %v1487
          %v1744 = vunpack.c.l.bf16 %v1488
          %v1745 = vunpack.c.l.bf16 %v1489
          %v1746 = vunpack.c.l.bf16 %v1490
          %v1747 = vunpack.c.l.bf16 %v1491
          %v1748 = vunpack.c.l.bf16 %v1492
          %v1749 = vunpack.c.l.bf16 %v1493
          %v1750 = vunpack.c.l.bf16 %v1494
          %v1751 = vunpack.c.l.bf16 %v1495
          %v1752 = vunpack.c.l.bf16 %v1496
          %v1753 = vunpack.c.l.bf16 %v1497
          %v1754 = vunpack.c.l.bf16 %v1498
          %v1755 = vunpack.c.l.bf16 %v1499
          %v1756 = vunpack.c.l.bf16 %v1500
          %v1757 = vunpack.c.l.bf16 %v1501
          %v1758 = vunpack.c.l.bf16 %v1502
          %v1759 = vunpack.c.l.bf16 %v1503
          %v1760 = vunpack.c.l.bf16 %v1504
          %v1761 = vunpack.c.l.bf16 %v1505
          %v1762 = vunpack.c.l.bf16 %v1506
          %v1763 = vunpack.c.l.bf16 %v1507
          %v1764 = vunpack.c.l.bf16 %v1508
          %v1765 = vunpack.c.l.bf16 %v1509
          %v1766 = vunpack.c.l.bf16 %v1510
          %v1767 = vunpack.c.l.bf16 %v1511
          %v1768 = vunpack.c.l.bf16 %v1512
          %v1769 = vunpack.c.l.bf16 %v1513
          %v1770 = vunpack.c.l.bf16 %v1514
          %v1771 = vunpack.c.l.bf16 %v1515
          %v1772 = vunpack.c.l.bf16 %v1516
          %v1773 = vunpack.c.l.bf16 %v1517
          %v1774 = vunpack.c.l.bf16 %v1518
          %v1775 = vunpack.c.l.bf16 %v1519
          %v1776 = vunpack.c.l.bf16 %v1520
          %v1777 = vunpack.c.l.bf16 %v1521
          %v1778 = vunpack.c.l.bf16 %v1522
          %v1779 = vunpack.c.l.bf16 %v1523
          %v1780 = vunpack.c.l.bf16 %v1524
          %v1781 = vunpack.c.l.bf16 %v1525
          %v1782 = vunpack.c.l.bf16 %v1526
          %v1783 = vunpack.c.l.bf16 %v1527
          %v1784 = vunpack.c.l.bf16 %v1528
          %v1785 = vunpack.c.l.bf16 %v1529
          %v1786 = vunpack.c.l.bf16 %v1530
          %v1787 = vunpack.c.l.bf16 %v1531
          %v1788 = vunpack.c.l.bf16 %v1532
          %v1789 = vunpack.c.l.bf16 %v1533
          %v1790 = vunpack.c.l.bf16 %v1534
          %v1791 = vunpack.c.l.bf16 %v1535
          %v1792 = vunpack.c.l.bf16 %v1536
          %v1793 = vunpack.c.l.bf16 %v1537
          %v1794 = vunpack.c.l.bf16 %v1538
          %v1795 = vunpack.c.l.bf16 %v1539
          %v1796 = vunpack.c.l.bf16 %v1540
          %v1797 = vunpack.c.l.bf16 %v1541
          %v1798 = vunpack.c.l.bf16 %v1542
          %v1799 = vunpack.c.l.bf16 %v1543
          %v1800 = vunpack.c.l.bf16 %v1544
          %v1801 = vunpack.c.l.bf16 %v1545
          %v1802 = vunpack.c.l.bf16 %v1546
          %v1803 = vunpack.c.l.bf16 %v1547
          %v1804 = vunpack.c.l.bf16 %v1548
          %v1805 = vunpack.c.l.bf16 %v1549
          %v1806 = vunpack.c.l.bf16 %v1550
          %v1807 = vunpack.c.l.bf16 %v1551
          %v1808 = vunpack.c.l.bf16 %v1552
          %v1809 = vunpack.c.l.bf16 %v1553
          %v1810 = vunpack.c.l.bf16 %v1554
          %v1811 = vunpack.c.l.bf16 %v1555
          %v1812 = vunpack.c.l.bf16 %v1556
          %v1813 = vunpack.c.l.bf16 %v1557
          %v1814 = vunpack.c.l.bf16 %v1558
          %v1815 = vunpack.c.l.bf16 %v1559
          %v1816 = vunpack.c.l.bf16 %v1560
          %v1817 = vunpack.c.l.bf16 %v1561
          %v1818 = vunpack.c.l.bf16 %v1562
          %v1819 = vunpack.c.l.bf16 %v1563
          %v1820 = vunpack.c.l.bf16 %v1564
          %v1821 = vunpack.c.l.bf16 %v1565
          %v1822 = vunpack.c.l.bf16 %v1566
          %v1823 = vunpack.c.l.bf16 %v1567
          %v1824 = vunpack.c.l.bf16 %v1568
          %v1825 = vunpack.c.l.bf16 %v1569
          %v1826 = vunpack.c.l.bf16 %v1570
          %v1827 = vunpack.c.l.bf16 %v1571
          %v1828 = vunpack.c.l.bf16 %v1572
          %v1829 = vunpack.c.l.bf16 %v1573
          %v1830 = vunpack.c.l.bf16 %v1574
          %v1831 = vunpack.c.l.bf16 %v1575
          %v1832 = vunpack.c.l.bf16 %v1576
          %v1833 = vunpack.c.l.bf16 %v1577
          %v1834 = vunpack.c.l.bf16 %v1578
          %v1835 = vunpack.c.l.bf16 %v1579
          %v1836 = vunpack.c.l.bf16 %v1580
          %v1837 = vunpack.c.l.bf16 %v1581
          %v1838 = vunpack.c.l.bf16 %v1582
          %v1839 = vunpack.c.l.bf16 %v1583
          %v1840 = vunpack.c.l.bf16 %v1584
          %v1841 = vunpack.c.l.bf16 %v1585
          %v1842 = vunpack.c.l.bf16 %v1586
          %v1843 = vunpack.c.l.bf16 %v1587
          %v1844 = vunpack.c.l.bf16 %v1588
          %v1845 = vunpack.c.l.bf16 %v1589
          %v1846 = vunpack.c.l.bf16 %v1590
          %v1847 = vunpack.c.l.bf16 %v1591
          %v1848 = vunpack.c.l.bf16 %v1592
          %v1849 = vunpack.c.l.bf16 %v1593
          %v1850 = vunpack.c.l.bf16 %v1594
          %v1851 = vunpack.c.l.bf16 %v1595
          %v1852 = vunpack.c.l.bf16 %v1596
          %v1853 = vunpack.c.l.bf16 %v1597
          %v1854 = vunpack.c.l.bf16 %v1598
          %v1855 = vunpack.c.l.bf16 %v1599
          %v1856 = vunpack.c.l.bf16 %v1600
          %v1857 = vunpack.c.l.bf16 %v1601
          %v1858 = vunpack.c.l.bf16 %v1602
          %v1859 = vunpack.c.l.bf16 %v1603
          %v1860 = vunpack.c.l.bf16 %v1604
          %v1861 = vunpack.c.l.bf16 %v1605
          %v1862 = vunpack.c.l.bf16 %v1606
          %v1863 = vunpack.c.l.bf16 %v1607
          %v1864 = vunpack.c.l.bf16 %v1608
          %v1865 = vunpack.c.l.bf16 %v1609
          %v1866 = vunpack.c.l.bf16 %v1610
          %v1867 = vunpack.c.l.bf16 %v1611
          %v1868 = vunpack.c.l.bf16 %v1612
          %v1869 = vunpack.c.l.bf16 %v1613
          %v1870 = vunpack.c.l.bf16 %v1614
          %v1871 = vunpack.c.l.bf16 %v1615
          %v1872 = vunpack.c.l.bf16 %v1616
          %v1873 = vunpack.c.l.bf16 %v1617
          %v1874 = vunpack.c.l.bf16 %v1618
          %v1875 = vunpack.c.l.bf16 %v1619
          %v1876 = vunpack.c.l.bf16 %v1620
          %v1877 = vunpack.c.l.bf16 %v1621
          %v1878 = vunpack.c.l.bf16 %v1622
          %v1879 = vunpack.c.l.bf16 %v1623
          %v1880 = vunpack.c.l.bf16 %v1624
          %v1881 = vunpack.c.l.bf16 %v1625
          %v1882 = vunpack.c.l.bf16 %v1626
          %v1883 = vunpack.c.l.bf16 %v1627
          %v1884 = vunpack.c.l.bf16 %v1628
          %v1885 = vunpack.c.l.bf16 %v1629
          %v1886 = vunpack.c.l.bf16 %v1630
          %v1887 = vunpack.c.l.bf16 %v1631
          %v1888 = vunpack.c.l.bf16 %v1632
          %v1889 = vunpack.c.l.bf16 %v1633
          %v1890 = vunpack.c.l.bf16 %v1634
          %v1891 = vunpack.c.l.bf16 %v1635
          %v1892 = vunpack.c.l.bf16 %v1636
          %v1893 = vunpack.c.l.bf16 %v1637
          %v1894 = vunpack.c.l.bf16 %v1638
          %v1895 = vunpack.c.l.bf16 %v1639
          %v1896 = vunpack.c.l.bf16 %v1640
          %v1897 = vunpack.c.l.bf16 %v1641
          %v1898 = vunpack.c.l.bf16 %v1642
          %v1899 = vunpack.c.l.bf16 %v1643
          %v1900 = vunpack.c.l.bf16 %v1644
          %v1901 = vunpack.c.l.bf16 %v1645
          %v1902 = vunpack.c.l.bf16 %v1646
          %v1903 = vunpack.c.l.bf16 %v1647
          %v1904 = vunpack.c.l.bf16 %v1648
          %v1905 = vunpack.c.l.bf16 %v1649
          %v1906 = vunpack.c.l.bf16 %v1650
          %v1907 = vunpack.c.l.bf16 %v1651
          %v1908 = vunpack.c.l.bf16 %v1652
          %v1909 = vunpack.c.l.bf16 %v1653
          %v1910 = vunpack.c.l.bf16 %v1654
          %v1911 = vunpack.c.l.bf16 %v1655
          %v1912 = vunpack.c.l.bf16 %v1656
          %v1913 = vunpack.c.l.bf16 %v1657
          %v1914 = vunpack.c.l.bf16 %v1658
          %v1915 = vunpack.c.l.bf16 %v1659
          %v1916 = vunpack.c.l.bf16 %v1660
          %v1917 = vunpack.c.l.bf16 %v1661
          %v1918 = vunpack.c.l.bf16 %v1662
          %v1919 = vunpack.c.l.bf16 %v1663
          %v1920 = vunpack.c.l.bf16 %v1664
          %v1921 = vunpack.c.l.bf16 %v1665
          %v1922 = vunpack.c.l.bf16 %v1666
          %v1923 = vunpack.c.l.bf16 %v1667
          %v1924 = vunpack.c.l.bf16 %v1668
          %vm1925 = vcmask 261120
          %v1926 = vsel %vm1925, %v1669, 0.0
          %v1927 = vsel %vm1925, %v1670, 0.0
          %v1928 = vadd.f32 %v1926, %v1927
          %v1929 = vrot.slane %v1928, 4
          %v1930 = vadd.f32 %v1928, %v1929
          %v1931 = vrot.slane %v1930, 2
          %v1932 = vadd.f32 %v1930, %v1931
          %v1933 = vrot.slane %v1932, 1
          %v1934 = vadd.f32 %v1932, %v1933
          %v1935 = vsel %vm1925, %v1671, 0.0
          %v1936 = vsel %vm1925, %v1672, 0.0
          %v1937 = vadd.f32 %v1935, %v1936
          %v1938 = vrot.slane %v1937, 4
          %v1939 = vadd.f32 %v1937, %v1938
          %v1940 = vrot.slane %v1939, 2
          %v1941 = vadd.f32 %v1939, %v1940
          %v1942 = vrot.slane %v1941, 1
          %v1943 = vadd.f32 %v1941, %v1942
          %v1944 = vsel %vm1925, %v1673, 0.0
          %v1945 = vsel %vm1925, %v1674, 0.0
          %v1946 = vadd.f32 %v1944, %v1945
          %v1947 = vrot.slane %v1946, 4
          %v1948 = vadd.f32 %v1946, %v1947
          %v1949 = vrot.slane %v1948, 2
          %v1950 = vadd.f32 %v1948, %v1949
          %v1951 = vrot.slane %v1950, 1
          %v1952 = vadd.f32 %v1950, %v1951
          %v1953 = vsel %vm1925, %v1675, 0.0
          %v1954 = vsel %vm1925, %v1676, 0.0
          %v1955 = vadd.f32 %v1953, %v1954
          %v1956 = vrot.slane %v1955, 4
          %v1957 = vadd.f32 %v1955, %v1956
          %v1958 = vrot.slane %v1957, 2
          %v1959 = vadd.f32 %v1957, %v1958
          %v1960 = vrot.slane %v1959, 1
          %v1961 = vadd.f32 %v1959, %v1960
          %v1962 = vsel %vm1925, %v1677, 0.0
          %v1963 = vsel %vm1925, %v1678, 0.0
          %v1964 = vadd.f32 %v1962, %v1963
          %v1965 = vrot.slane %v1964, 4
          %v1966 = vadd.f32 %v1964, %v1965
          %v1967 = vrot.slane %v1966, 2
          %v1968 = vadd.f32 %v1966, %v1967
          %v1969 = vrot.slane %v1968, 1
          %v1970 = vadd.f32 %v1968, %v1969
          %v1971 = vsel %vm1925, %v1679, 0.0
          %v1972 = vsel %vm1925, %v1680, 0.0
          %v1973 = vadd.f32 %v1971, %v1972
          %v1974 = vrot.slane %v1973, 4
          %v1975 = vadd.f32 %v1973, %v1974
          %v1976 = vrot.slane %v1975, 2
          %v1977 = vadd.f32 %v1975, %v1976
          %v1978 = vrot.slane %v1977, 1
          %v1979 = vadd.f32 %v1977, %v1978
          %v1980 = vsel %vm1925, %v1681, 0.0
          %v1981 = vsel %vm1925, %v1682, 0.0
          %v1982 = vadd.f32 %v1980, %v1981
          %v1983 = vrot.slane %v1982, 4
          %v1984 = vadd.f32 %v1982, %v1983
          %v1985 = vrot.slane %v1984, 2
          %v1986 = vadd.f32 %v1984, %v1985
          %v1987 = vrot.slane %v1986, 1
          %v1988 = vadd.f32 %v1986, %v1987
          %v1989 = vsel %vm1925, %v1683, 0.0
          %v1990 = vsel %vm1925, %v1684, 0.0
          %v1991 = vadd.f32 %v1989, %v1990
          %v1992 = vrot.slane %v1991, 4
          %v1993 = vadd.f32 %v1991, %v1992
          %v1994 = vrot.slane %v1993, 2
          %v1995 = vadd.f32 %v1993, %v1994
          %v1996 = vrot.slane %v1995, 1
          %v1997 = vadd.f32 %v1995, %v1996
          %v1998 = vsel %vm1925, %v1685, 0.0
          %v1999 = vsel %vm1925, %v1686, 0.0
          %v2000 = vadd.f32 %v1998, %v1999
          %v2001 = vrot.slane %v2000, 4
          %v2002 = vadd.f32 %v2000, %v2001
          %v2003 = vrot.slane %v2002, 2
          %v2004 = vadd.f32 %v2002, %v2003
          %v2005 = vrot.slane %v2004, 1
          %v2006 = vadd.f32 %v2004, %v2005
          %v2007 = vsel %vm1925, %v1687, 0.0
          %v2008 = vsel %vm1925, %v1688, 0.0
          %v2009 = vadd.f32 %v2007, %v2008
          %v2010 = vrot.slane %v2009, 4
          %v2011 = vadd.f32 %v2009, %v2010
          %v2012 = vrot.slane %v2011, 2
          %v2013 = vadd.f32 %v2011, %v2012
          %v2014 = vrot.slane %v2013, 1
          %v2015 = vadd.f32 %v2013, %v2014
          %v2016 = vsel %vm1925, %v1689, 0.0
          %v2017 = vsel %vm1925, %v1690, 0.0
          %v2018 = vadd.f32 %v2016, %v2017
          %v2019 = vrot.slane %v2018, 4
          %v2020 = vadd.f32 %v2018, %v2019
          %v2021 = vrot.slane %v2020, 2
          %v2022 = vadd.f32 %v2020, %v2021
          %v2023 = vrot.slane %v2022, 1
          %v2024 = vadd.f32 %v2022, %v2023
          %v2025 = vsel %vm1925, %v1691, 0.0
          %v2026 = vsel %vm1925, %v1692, 0.0
          %v2027 = vadd.f32 %v2025, %v2026
          %v2028 = vrot.slane %v2027, 4
          %v2029 = vadd.f32 %v2027, %v2028
          %v2030 = vrot.slane %v2029, 2
          %v2031 = vadd.f32 %v2029, %v2030
          %v2032 = vrot.slane %v2031, 1
          %v2033 = vadd.f32 %v2031, %v2032
          %v2034 = vsel %vm1925, %v1693, 0.0
          %v2035 = vsel %vm1925, %v1694, 0.0
          %v2036 = vadd.f32 %v2034, %v2035
          %v2037 = vrot.slane %v2036, 4
          %v2038 = vadd.f32 %v2036, %v2037
          %v2039 = vrot.slane %v2038, 2
          %v2040 = vadd.f32 %v2038, %v2039
          %v2041 = vrot.slane %v2040, 1
          %v2042 = vadd.f32 %v2040, %v2041
          %v2043 = vsel %vm1925, %v1695, 0.0
          %v2044 = vsel %vm1925, %v1696, 0.0
          %v2045 = vadd.f32 %v2043, %v2044
          %v2046 = vrot.slane %v2045, 4
          %v2047 = vadd.f32 %v2045, %v2046
          %v2048 = vrot.slane %v2047, 2
          %v2049 = vadd.f32 %v2047, %v2048
          %v2050 = vrot.slane %v2049, 1
          %v2051 = vadd.f32 %v2049, %v2050
          %v2052 = vsel %vm1925, %v1697, 0.0
          %v2053 = vsel %vm1925, %v1698, 0.0
          %v2054 = vadd.f32 %v2052, %v2053
          %v2055 = vrot.slane %v2054, 4
          %v2056 = vadd.f32 %v2054, %v2055
          %v2057 = vrot.slane %v2056, 2
          %v2058 = vadd.f32 %v2056, %v2057
          %v2059 = vrot.slane %v2058, 1
          %v2060 = vadd.f32 %v2058, %v2059
          %v2061 = vsel %vm1925, %v1699, 0.0
          %v2062 = vsel %vm1925, %v1700, 0.0
          %v2063 = vadd.f32 %v2061, %v2062
          %v2064 = vrot.slane %v2063, 4
          %v2065 = vadd.f32 %v2063, %v2064
          %v2066 = vrot.slane %v2065, 2
          %v2067 = vadd.f32 %v2065, %v2066
          %v2068 = vrot.slane %v2067, 1
          %v2069 = vadd.f32 %v2067, %v2068
          %v2070 = vsel %vm1925, %v1701, 0.0
          %v2071 = vsel %vm1925, %v1702, 0.0
          %v2072 = vadd.f32 %v2070, %v2071
          %v2073 = vrot.slane %v2072, 4
          %v2074 = vadd.f32 %v2072, %v2073
          %v2075 = vrot.slane %v2074, 2
          %v2076 = vadd.f32 %v2074, %v2075
          %v2077 = vrot.slane %v2076, 1
          %v2078 = vadd.f32 %v2076, %v2077
          %v2079 = vsel %vm1925, %v1703, 0.0
          %v2080 = vsel %vm1925, %v1704, 0.0
          %v2081 = vadd.f32 %v2079, %v2080
          %v2082 = vrot.slane %v2081, 4
          %v2083 = vadd.f32 %v2081, %v2082
          %v2084 = vrot.slane %v2083, 2
          %v2085 = vadd.f32 %v2083, %v2084
          %v2086 = vrot.slane %v2085, 1
          %v2087 = vadd.f32 %v2085, %v2086
          %v2088 = vsel %vm1925, %v1705, 0.0
          %v2089 = vsel %vm1925, %v1706, 0.0
          %v2090 = vadd.f32 %v2088, %v2089
          %v2091 = vrot.slane %v2090, 4
          %v2092 = vadd.f32 %v2090, %v2091
          %v2093 = vrot.slane %v2092, 2
          %v2094 = vadd.f32 %v2092, %v2093
          %v2095 = vrot.slane %v2094, 1
          %v2096 = vadd.f32 %v2094, %v2095
          %v2097 = vsel %vm1925, %v1707, 0.0
          %v2098 = vsel %vm1925, %v1708, 0.0
          %v2099 = vadd.f32 %v2097, %v2098
          %v2100 = vrot.slane %v2099, 4
          %v2101 = vadd.f32 %v2099, %v2100
          %v2102 = vrot.slane %v2101, 2
          %v2103 = vadd.f32 %v2101, %v2102
          %v2104 = vrot.slane %v2103, 1
          %v2105 = vadd.f32 %v2103, %v2104
          %v2106 = vsel %vm1925, %v1709, 0.0
          %v2107 = vsel %vm1925, %v1710, 0.0
          %v2108 = vadd.f32 %v2106, %v2107
          %v2109 = vrot.slane %v2108, 4
          %v2110 = vadd.f32 %v2108, %v2109
          %v2111 = vrot.slane %v2110, 2
          %v2112 = vadd.f32 %v2110, %v2111
          %v2113 = vrot.slane %v2112, 1
          %v2114 = vadd.f32 %v2112, %v2113
          %v2115 = vsel %vm1925, %v1711, 0.0
          %v2116 = vsel %vm1925, %v1712, 0.0
          %v2117 = vadd.f32 %v2115, %v2116
          %v2118 = vrot.slane %v2117, 4
          %v2119 = vadd.f32 %v2117, %v2118
          %v2120 = vrot.slane %v2119, 2
          %v2121 = vadd.f32 %v2119, %v2120
          %v2122 = vrot.slane %v2121, 1
          %v2123 = vadd.f32 %v2121, %v2122
          %v2124 = vsel %vm1925, %v1713, 0.0
          %v2125 = vsel %vm1925, %v1714, 0.0
          %v2126 = vadd.f32 %v2124, %v2125
          %v2127 = vrot.slane %v2126, 4
          %v2128 = vadd.f32 %v2126, %v2127
          %v2129 = vrot.slane %v2128, 2
          %v2130 = vadd.f32 %v2128, %v2129
          %v2131 = vrot.slane %v2130, 1
          %v2132 = vadd.f32 %v2130, %v2131
          %v2133 = vsel %vm1925, %v1715, 0.0
          %v2134 = vsel %vm1925, %v1716, 0.0
          %v2135 = vadd.f32 %v2133, %v2134
          %v2136 = vrot.slane %v2135, 4
          %v2137 = vadd.f32 %v2135, %v2136
          %v2138 = vrot.slane %v2137, 2
          %v2139 = vadd.f32 %v2137, %v2138
          %v2140 = vrot.slane %v2139, 1
          %v2141 = vadd.f32 %v2139, %v2140
          %v2142 = vsel %vm1925, %v1717, 0.0
          %v2143 = vsel %vm1925, %v1718, 0.0
          %v2144 = vadd.f32 %v2142, %v2143
          %v2145 = vrot.slane %v2144, 4
          %v2146 = vadd.f32 %v2144, %v2145
          %v2147 = vrot.slane %v2146, 2
          %v2148 = vadd.f32 %v2146, %v2147
          %v2149 = vrot.slane %v2148, 1
          %v2150 = vadd.f32 %v2148, %v2149
          %v2151 = vsel %vm1925, %v1719, 0.0
          %v2152 = vsel %vm1925, %v1720, 0.0
          %v2153 = vadd.f32 %v2151, %v2152
          %v2154 = vrot.slane %v2153, 4
          %v2155 = vadd.f32 %v2153, %v2154
          %v2156 = vrot.slane %v2155, 2
          %v2157 = vadd.f32 %v2155, %v2156
          %v2158 = vrot.slane %v2157, 1
          %v2159 = vadd.f32 %v2157, %v2158
          %v2160 = vsel %vm1925, %v1721, 0.0
          %v2161 = vsel %vm1925, %v1722, 0.0
          %v2162 = vadd.f32 %v2160, %v2161
          %v2163 = vrot.slane %v2162, 4
          %v2164 = vadd.f32 %v2162, %v2163
          %v2165 = vrot.slane %v2164, 2
          %v2166 = vadd.f32 %v2164, %v2165
          %v2167 = vrot.slane %v2166, 1
          %v2168 = vadd.f32 %v2166, %v2167
          %v2169 = vsel %vm1925, %v1723, 0.0
          %v2170 = vsel %vm1925, %v1724, 0.0
          %v2171 = vadd.f32 %v2169, %v2170
          %v2172 = vrot.slane %v2171, 4
          %v2173 = vadd.f32 %v2171, %v2172
          %v2174 = vrot.slane %v2173, 2
          %v2175 = vadd.f32 %v2173, %v2174
          %v2176 = vrot.slane %v2175, 1
          %v2177 = vadd.f32 %v2175, %v2176
          %v2178 = vsel %vm1925, %v1725, 0.0
          %v2179 = vsel %vm1925, %v1726, 0.0
          %v2180 = vadd.f32 %v2178, %v2179
          %v2181 = vrot.slane %v2180, 4
          %v2182 = vadd.f32 %v2180, %v2181
          %v2183 = vrot.slane %v2182, 2
          %v2184 = vadd.f32 %v2182, %v2183
          %v2185 = vrot.slane %v2184, 1
          %v2186 = vadd.f32 %v2184, %v2185
          %v2187 = vsel %vm1925, %v1727, 0.0
          %v2188 = vsel %vm1925, %v1728, 0.0
          %v2189 = vadd.f32 %v2187, %v2188
          %v2190 = vrot.slane %v2189, 4
          %v2191 = vadd.f32 %v2189, %v2190
          %v2192 = vrot.slane %v2191, 2
          %v2193 = vadd.f32 %v2191, %v2192
          %v2194 = vrot.slane %v2193, 1
          %v2195 = vadd.f32 %v2193, %v2194
          %v2196 = vsel %vm1925, %v1729, 0.0
          %v2197 = vsel %vm1925, %v1730, 0.0
          %v2198 = vadd.f32 %v2196, %v2197
          %v2199 = vrot.slane %v2198, 4
          %v2200 = vadd.f32 %v2198, %v2199
          %v2201 = vrot.slane %v2200, 2
          %v2202 = vadd.f32 %v2200, %v2201
          %v2203 = vrot.slane %v2202, 1
          %v2204 = vadd.f32 %v2202, %v2203
          %v2205 = vsel %vm1925, %v1731, 0.0
          %v2206 = vsel %vm1925, %v1732, 0.0
          %v2207 = vadd.f32 %v2205, %v2206
          %v2208 = vrot.slane %v2207, 4
          %v2209 = vadd.f32 %v2207, %v2208
          %v2210 = vrot.slane %v2209, 2
          %v2211 = vadd.f32 %v2209, %v2210
          %v2212 = vrot.slane %v2211, 1
          %v2213 = vadd.f32 %v2211, %v2212
          %v2214 = vsel %vm1925, %v1733, 0.0
          %v2215 = vsel %vm1925, %v1734, 0.0
          %v2216 = vadd.f32 %v2214, %v2215
          %v2217 = vrot.slane %v2216, 4
          %v2218 = vadd.f32 %v2216, %v2217
          %v2219 = vrot.slane %v2218, 2
          %v2220 = vadd.f32 %v2218, %v2219
          %v2221 = vrot.slane %v2220, 1
          %v2222 = vadd.f32 %v2220, %v2221
          %v2223 = vsel %vm1925, %v1735, 0.0
          %v2224 = vsel %vm1925, %v1736, 0.0
          %v2225 = vadd.f32 %v2223, %v2224
          %v2226 = vrot.slane %v2225, 4
          %v2227 = vadd.f32 %v2225, %v2226
          %v2228 = vrot.slane %v2227, 2
          %v2229 = vadd.f32 %v2227, %v2228
          %v2230 = vrot.slane %v2229, 1
          %v2231 = vadd.f32 %v2229, %v2230
          %v2232 = vsel %vm1925, %v1737, 0.0
          %v2233 = vsel %vm1925, %v1738, 0.0
          %v2234 = vadd.f32 %v2232, %v2233
          %v2235 = vrot.slane %v2234, 4
          %v2236 = vadd.f32 %v2234, %v2235
          %v2237 = vrot.slane %v2236, 2
          %v2238 = vadd.f32 %v2236, %v2237
          %v2239 = vrot.slane %v2238, 1
          %v2240 = vadd.f32 %v2238, %v2239
          %v2241 = vsel %vm1925, %v1739, 0.0
          %v2242 = vsel %vm1925, %v1740, 0.0
          %v2243 = vadd.f32 %v2241, %v2242
          %v2244 = vrot.slane %v2243, 4
          %v2245 = vadd.f32 %v2243, %v2244
          %v2246 = vrot.slane %v2245, 2
          %v2247 = vadd.f32 %v2245, %v2246
          %v2248 = vrot.slane %v2247, 1
          %v2249 = vadd.f32 %v2247, %v2248
          %v2250 = vsel %vm1925, %v1741, 0.0
          %v2251 = vsel %vm1925, %v1742, 0.0
          %v2252 = vadd.f32 %v2250, %v2251
          %v2253 = vrot.slane %v2252, 4
          %v2254 = vadd.f32 %v2252, %v2253
          %v2255 = vrot.slane %v2254, 2
          %v2256 = vadd.f32 %v2254, %v2255
          %v2257 = vrot.slane %v2256, 1
          %v2258 = vadd.f32 %v2256, %v2257
          %v2259 = vsel %vm1925, %v1743, 0.0
          %v2260 = vsel %vm1925, %v1744, 0.0
          %v2261 = vadd.f32 %v2259, %v2260
          %v2262 = vrot.slane %v2261, 4
          %v2263 = vadd.f32 %v2261, %v2262
          %v2264 = vrot.slane %v2263, 2
          %v2265 = vadd.f32 %v2263, %v2264
          %v2266 = vrot.slane %v2265, 1
          %v2267 = vadd.f32 %v2265, %v2266
          %v2268 = vsel %vm1925, %v1745, 0.0
          %v2269 = vsel %vm1925, %v1746, 0.0
          %v2270 = vadd.f32 %v2268, %v2269
          %v2271 = vrot.slane %v2270, 4
          %v2272 = vadd.f32 %v2270, %v2271
          %v2273 = vrot.slane %v2272, 2
          %v2274 = vadd.f32 %v2272, %v2273
          %v2275 = vrot.slane %v2274, 1
          %v2276 = vadd.f32 %v2274, %v2275
          %v2277 = vsel %vm1925, %v1747, 0.0
          %v2278 = vsel %vm1925, %v1748, 0.0
          %v2279 = vadd.f32 %v2277, %v2278
          %v2280 = vrot.slane %v2279, 4
          %v2281 = vadd.f32 %v2279, %v2280
          %v2282 = vrot.slane %v2281, 2
          %v2283 = vadd.f32 %v2281, %v2282
          %v2284 = vrot.slane %v2283, 1
          %v2285 = vadd.f32 %v2283, %v2284
          %v2286 = vsel %vm1925, %v1749, 0.0
          %v2287 = vsel %vm1925, %v1750, 0.0
          %v2288 = vadd.f32 %v2286, %v2287
          %v2289 = vrot.slane %v2288, 4
          %v2290 = vadd.f32 %v2288, %v2289
          %v2291 = vrot.slane %v2290, 2
          %v2292 = vadd.f32 %v2290, %v2291
          %v2293 = vrot.slane %v2292, 1
          %v2294 = vadd.f32 %v2292, %v2293
          %v2295 = vsel %vm1925, %v1751, 0.0
          %v2296 = vsel %vm1925, %v1752, 0.0
          %v2297 = vadd.f32 %v2295, %v2296
          %v2298 = vrot.slane %v2297, 4
          %v2299 = vadd.f32 %v2297, %v2298
          %v2300 = vrot.slane %v2299, 2
          %v2301 = vadd.f32 %v2299, %v2300
          %v2302 = vrot.slane %v2301, 1
          %v2303 = vadd.f32 %v2301, %v2302
          %v2304 = vsel %vm1925, %v1753, 0.0
          %v2305 = vsel %vm1925, %v1754, 0.0
          %v2306 = vadd.f32 %v2304, %v2305
          %v2307 = vrot.slane %v2306, 4
          %v2308 = vadd.f32 %v2306, %v2307
          %v2309 = vrot.slane %v2308, 2
          %v2310 = vadd.f32 %v2308, %v2309
          %v2311 = vrot.slane %v2310, 1
          %v2312 = vadd.f32 %v2310, %v2311
          %v2313 = vsel %vm1925, %v1755, 0.0
          %v2314 = vsel %vm1925, %v1756, 0.0
          %v2315 = vadd.f32 %v2313, %v2314
          %v2316 = vrot.slane %v2315, 4
          %v2317 = vadd.f32 %v2315, %v2316
          %v2318 = vrot.slane %v2317, 2
          %v2319 = vadd.f32 %v2317, %v2318
          %v2320 = vrot.slane %v2319, 1
          %v2321 = vadd.f32 %v2319, %v2320
          %v2322 = vsel %vm1925, %v1757, 0.0
          %v2323 = vsel %vm1925, %v1758, 0.0
          %v2324 = vadd.f32 %v2322, %v2323
          %v2325 = vrot.slane %v2324, 4
          %v2326 = vadd.f32 %v2324, %v2325
          %v2327 = vrot.slane %v2326, 2
          %v2328 = vadd.f32 %v2326, %v2327
          %v2329 = vrot.slane %v2328, 1
          %v2330 = vadd.f32 %v2328, %v2329
          %v2331 = vsel %vm1925, %v1759, 0.0
          %v2332 = vsel %vm1925, %v1760, 0.0
          %v2333 = vadd.f32 %v2331, %v2332
          %v2334 = vrot.slane %v2333, 4
          %v2335 = vadd.f32 %v2333, %v2334
          %v2336 = vrot.slane %v2335, 2
          %v2337 = vadd.f32 %v2335, %v2336
          %v2338 = vrot.slane %v2337, 1
          %v2339 = vadd.f32 %v2337, %v2338
          %v2340 = vsel %vm1925, %v1761, 0.0
          %v2341 = vsel %vm1925, %v1762, 0.0
          %v2342 = vadd.f32 %v2340, %v2341
          %v2343 = vrot.slane %v2342, 4
          %v2344 = vadd.f32 %v2342, %v2343
          %v2345 = vrot.slane %v2344, 2
          %v2346 = vadd.f32 %v2344, %v2345
          %v2347 = vrot.slane %v2346, 1
          %v2348 = vadd.f32 %v2346, %v2347
          %v2349 = vsel %vm1925, %v1763, 0.0
          %v2350 = vsel %vm1925, %v1764, 0.0
          %v2351 = vadd.f32 %v2349, %v2350
          %v2352 = vrot.slane %v2351, 4
          %v2353 = vadd.f32 %v2351, %v2352
          %v2354 = vrot.slane %v2353, 2
          %v2355 = vadd.f32 %v2353, %v2354
          %v2356 = vrot.slane %v2355, 1
          %v2357 = vadd.f32 %v2355, %v2356
          %v2358 = vsel %vm1925, %v1765, 0.0
          %v2359 = vsel %vm1925, %v1766, 0.0
          %v2360 = vadd.f32 %v2358, %v2359
          %v2361 = vrot.slane %v2360, 4
          %v2362 = vadd.f32 %v2360, %v2361
          %v2363 = vrot.slane %v2362, 2
          %v2364 = vadd.f32 %v2362, %v2363
          %v2365 = vrot.slane %v2364, 1
          %v2366 = vadd.f32 %v2364, %v2365
          %v2367 = vsel %vm1925, %v1767, 0.0
          %v2368 = vsel %vm1925, %v1768, 0.0
          %v2369 = vadd.f32 %v2367, %v2368
          %v2370 = vrot.slane %v2369, 4
          %v2371 = vadd.f32 %v2369, %v2370
          %v2372 = vrot.slane %v2371, 2
          %v2373 = vadd.f32 %v2371, %v2372
          %v2374 = vrot.slane %v2373, 1
          %v2375 = vadd.f32 %v2373, %v2374
          %v2376 = vsel %vm1925, %v1769, 0.0
          %v2377 = vsel %vm1925, %v1770, 0.0
          %v2378 = vadd.f32 %v2376, %v2377
          %v2379 = vrot.slane %v2378, 4
          %v2380 = vadd.f32 %v2378, %v2379
          %v2381 = vrot.slane %v2380, 2
          %v2382 = vadd.f32 %v2380, %v2381
          %v2383 = vrot.slane %v2382, 1
          %v2384 = vadd.f32 %v2382, %v2383
          %v2385 = vsel %vm1925, %v1771, 0.0
          %v2386 = vsel %vm1925, %v1772, 0.0
          %v2387 = vadd.f32 %v2385, %v2386
          %v2388 = vrot.slane %v2387, 4
          %v2389 = vadd.f32 %v2387, %v2388
          %v2390 = vrot.slane %v2389, 2
          %v2391 = vadd.f32 %v2389, %v2390
          %v2392 = vrot.slane %v2391, 1
          %v2393 = vadd.f32 %v2391, %v2392
          %v2394 = vsel %vm1925, %v1773, 0.0
          %v2395 = vsel %vm1925, %v1774, 0.0
          %v2396 = vadd.f32 %v2394, %v2395
          %v2397 = vrot.slane %v2396, 4
          %v2398 = vadd.f32 %v2396, %v2397
          %v2399 = vrot.slane %v2398, 2
          %v2400 = vadd.f32 %v2398, %v2399
          %v2401 = vrot.slane %v2400, 1
          %v2402 = vadd.f32 %v2400, %v2401
          %v2403 = vsel %vm1925, %v1775, 0.0
          %v2404 = vsel %vm1925, %v1776, 0.0
          %v2405 = vadd.f32 %v2403, %v2404
          %v2406 = vrot.slane %v2405, 4
          %v2407 = vadd.f32 %v2405, %v2406
          %v2408 = vrot.slane %v2407, 2
          %v2409 = vadd.f32 %v2407, %v2408
          %v2410 = vrot.slane %v2409, 1
          %v2411 = vadd.f32 %v2409, %v2410
          %v2412 = vsel %vm1925, %v1777, 0.0
          %v2413 = vsel %vm1925, %v1778, 0.0
          %v2414 = vadd.f32 %v2412, %v2413
          %v2415 = vrot.slane %v2414, 4
          %v2416 = vadd.f32 %v2414, %v2415
          %v2417 = vrot.slane %v2416, 2
          %v2418 = vadd.f32 %v2416, %v2417
          %v2419 = vrot.slane %v2418, 1
          %v2420 = vadd.f32 %v2418, %v2419
          %v2421 = vsel %vm1925, %v1779, 0.0
          %v2422 = vsel %vm1925, %v1780, 0.0
          %v2423 = vadd.f32 %v2421, %v2422
          %v2424 = vrot.slane %v2423, 4
          %v2425 = vadd.f32 %v2423, %v2424
          %v2426 = vrot.slane %v2425, 2
          %v2427 = vadd.f32 %v2425, %v2426
          %v2428 = vrot.slane %v2427, 1
          %v2429 = vadd.f32 %v2427, %v2428
          %v2430 = vsel %vm1925, %v1781, 0.0
          %v2431 = vsel %vm1925, %v1782, 0.0
          %v2432 = vadd.f32 %v2430, %v2431
          %v2433 = vrot.slane %v2432, 4
          %v2434 = vadd.f32 %v2432, %v2433
          %v2435 = vrot.slane %v2434, 2
          %v2436 = vadd.f32 %v2434, %v2435
          %v2437 = vrot.slane %v2436, 1
          %v2438 = vadd.f32 %v2436, %v2437
          %v2439 = vsel %vm1925, %v1783, 0.0
          %v2440 = vsel %vm1925, %v1784, 0.0
          %v2441 = vadd.f32 %v2439, %v2440
          %v2442 = vrot.slane %v2441, 4
          %v2443 = vadd.f32 %v2441, %v2442
          %v2444 = vrot.slane %v2443, 2
          %v2445 = vadd.f32 %v2443, %v2444
          %v2446 = vrot.slane %v2445, 1
          %v2447 = vadd.f32 %v2445, %v2446
          %v2448 = vsel %vm1925, %v1785, 0.0
          %v2449 = vsel %vm1925, %v1786, 0.0
          %v2450 = vadd.f32 %v2448, %v2449
          %v2451 = vrot.slane %v2450, 4
          %v2452 = vadd.f32 %v2450, %v2451
          %v2453 = vrot.slane %v2452, 2
          %v2454 = vadd.f32 %v2452, %v2453
          %v2455 = vrot.slane %v2454, 1
          %v2456 = vadd.f32 %v2454, %v2455
          %v2457 = vsel %vm1925, %v1787, 0.0
          %v2458 = vsel %vm1925, %v1788, 0.0
          %v2459 = vadd.f32 %v2457, %v2458
          %v2460 = vrot.slane %v2459, 4
          %v2461 = vadd.f32 %v2459, %v2460
          %v2462 = vrot.slane %v2461, 2
          %v2463 = vadd.f32 %v2461, %v2462
          %v2464 = vrot.slane %v2463, 1
          %v2465 = vadd.f32 %v2463, %v2464
          %v2466 = vsel %vm1925, %v1789, 0.0
          %v2467 = vsel %vm1925, %v1790, 0.0
          %v2468 = vadd.f32 %v2466, %v2467
          %v2469 = vrot.slane %v2468, 4
          %v2470 = vadd.f32 %v2468, %v2469
          %v2471 = vrot.slane %v2470, 2
          %v2472 = vadd.f32 %v2470, %v2471
          %v2473 = vrot.slane %v2472, 1
          %v2474 = vadd.f32 %v2472, %v2473
          %v2475 = vsel %vm1925, %v1791, 0.0
          %v2476 = vsel %vm1925, %v1792, 0.0
          %v2477 = vadd.f32 %v2475, %v2476
          %v2478 = vrot.slane %v2477, 4
          %v2479 = vadd.f32 %v2477, %v2478
          %v2480 = vrot.slane %v2479, 2
          %v2481 = vadd.f32 %v2479, %v2480
          %v2482 = vrot.slane %v2481, 1
          %v2483 = vadd.f32 %v2481, %v2482
          %v2484 = vsel %vm1925, %v1793, 0.0
          %v2485 = vsel %vm1925, %v1794, 0.0
          %v2486 = vadd.f32 %v2484, %v2485
          %v2487 = vrot.slane %v2486, 4
          %v2488 = vadd.f32 %v2486, %v2487
          %v2489 = vrot.slane %v2488, 2
          %v2490 = vadd.f32 %v2488, %v2489
          %v2491 = vrot.slane %v2490, 1
          %v2492 = vadd.f32 %v2490, %v2491
          %v2493 = vsel %vm1925, %v1795, 0.0
          %v2494 = vsel %vm1925, %v1796, 0.0
          %v2495 = vadd.f32 %v2493, %v2494
          %v2496 = vrot.slane %v2495, 4
          %v2497 = vadd.f32 %v2495, %v2496
          %v2498 = vrot.slane %v2497, 2
          %v2499 = vadd.f32 %v2497, %v2498
          %v2500 = vrot.slane %v2499, 1
          %v2501 = vadd.f32 %v2499, %v2500
          %v2502 = vsel %vm1925, %v1797, 0.0
          %v2503 = vsel %vm1925, %v1798, 0.0
          %v2504 = vadd.f32 %v2502, %v2503
          %v2505 = vrot.slane %v2504, 4
          %v2506 = vadd.f32 %v2504, %v2505
          %v2507 = vrot.slane %v2506, 2
          %v2508 = vadd.f32 %v2506, %v2507
          %v2509 = vrot.slane %v2508, 1
          %v2510 = vadd.f32 %v2508, %v2509
          %v2511 = vsel %vm1925, %v1799, 0.0
          %v2512 = vsel %vm1925, %v1800, 0.0
          %v2513 = vadd.f32 %v2511, %v2512
          %v2514 = vrot.slane %v2513, 4
          %v2515 = vadd.f32 %v2513, %v2514
          %v2516 = vrot.slane %v2515, 2
          %v2517 = vadd.f32 %v2515, %v2516
          %v2518 = vrot.slane %v2517, 1
          %v2519 = vadd.f32 %v2517, %v2518
          %v2520 = vsel %vm1925, %v1801, 0.0
          %v2521 = vsel %vm1925, %v1802, 0.0
          %v2522 = vadd.f32 %v2520, %v2521
          %v2523 = vrot.slane %v2522, 4
          %v2524 = vadd.f32 %v2522, %v2523
          %v2525 = vrot.slane %v2524, 2
          %v2526 = vadd.f32 %v2524, %v2525
          %v2527 = vrot.slane %v2526, 1
          %v2528 = vadd.f32 %v2526, %v2527
          %v2529 = vsel %vm1925, %v1803, 0.0
          %v2530 = vsel %vm1925, %v1804, 0.0
          %v2531 = vadd.f32 %v2529, %v2530
          %v2532 = vrot.slane %v2531, 4
          %v2533 = vadd.f32 %v2531, %v2532
          %v2534 = vrot.slane %v2533, 2
          %v2535 = vadd.f32 %v2533, %v2534
          %v2536 = vrot.slane %v2535, 1
          %v2537 = vadd.f32 %v2535, %v2536
          %v2538 = vsel %vm1925, %v1805, 0.0
          %v2539 = vsel %vm1925, %v1806, 0.0
          %v2540 = vadd.f32 %v2538, %v2539
          %v2541 = vrot.slane %v2540, 4
          %v2542 = vadd.f32 %v2540, %v2541
          %v2543 = vrot.slane %v2542, 2
          %v2544 = vadd.f32 %v2542, %v2543
          %v2545 = vrot.slane %v2544, 1
          %v2546 = vadd.f32 %v2544, %v2545
          %v2547 = vsel %vm1925, %v1807, 0.0
          %v2548 = vsel %vm1925, %v1808, 0.0
          %v2549 = vadd.f32 %v2547, %v2548
          %v2550 = vrot.slane %v2549, 4
          %v2551 = vadd.f32 %v2549, %v2550
          %v2552 = vrot.slane %v2551, 2
          %v2553 = vadd.f32 %v2551, %v2552
          %v2554 = vrot.slane %v2553, 1
          %v2555 = vadd.f32 %v2553, %v2554
          %v2556 = vsel %vm1925, %v1809, 0.0
          %v2557 = vsel %vm1925, %v1810, 0.0
          %v2558 = vadd.f32 %v2556, %v2557
          %v2559 = vrot.slane %v2558, 4
          %v2560 = vadd.f32 %v2558, %v2559
          %v2561 = vrot.slane %v2560, 2
          %v2562 = vadd.f32 %v2560, %v2561
          %v2563 = vrot.slane %v2562, 1
          %v2564 = vadd.f32 %v2562, %v2563
          %v2565 = vsel %vm1925, %v1811, 0.0
          %v2566 = vsel %vm1925, %v1812, 0.0
          %v2567 = vadd.f32 %v2565, %v2566
          %v2568 = vrot.slane %v2567, 4
          %v2569 = vadd.f32 %v2567, %v2568
          %v2570 = vrot.slane %v2569, 2
          %v2571 = vadd.f32 %v2569, %v2570
          %v2572 = vrot.slane %v2571, 1
          %v2573 = vadd.f32 %v2571, %v2572
          %v2574 = vsel %vm1925, %v1813, 0.0
          %v2575 = vsel %vm1925, %v1814, 0.0
          %v2576 = vadd.f32 %v2574, %v2575
          %v2577 = vrot.slane %v2576, 4
          %v2578 = vadd.f32 %v2576, %v2577
          %v2579 = vrot.slane %v2578, 2
          %v2580 = vadd.f32 %v2578, %v2579
          %v2581 = vrot.slane %v2580, 1
          %v2582 = vadd.f32 %v2580, %v2581
          %v2583 = vsel %vm1925, %v1815, 0.0
          %v2584 = vsel %vm1925, %v1816, 0.0
          %v2585 = vadd.f32 %v2583, %v2584
          %v2586 = vrot.slane %v2585, 4
          %v2587 = vadd.f32 %v2585, %v2586
          %v2588 = vrot.slane %v2587, 2
          %v2589 = vadd.f32 %v2587, %v2588
          %v2590 = vrot.slane %v2589, 1
          %v2591 = vadd.f32 %v2589, %v2590
          %v2592 = vsel %vm1925, %v1817, 0.0
          %v2593 = vsel %vm1925, %v1818, 0.0
          %v2594 = vadd.f32 %v2592, %v2593
          %v2595 = vrot.slane %v2594, 4
          %v2596 = vadd.f32 %v2594, %v2595
          %v2597 = vrot.slane %v2596, 2
          %v2598 = vadd.f32 %v2596, %v2597
          %v2599 = vrot.slane %v2598, 1
          %v2600 = vadd.f32 %v2598, %v2599
          %v2601 = vsel %vm1925, %v1819, 0.0
          %v2602 = vsel %vm1925, %v1820, 0.0
          %v2603 = vadd.f32 %v2601, %v2602
          %v2604 = vrot.slane %v2603, 4
          %v2605 = vadd.f32 %v2603, %v2604
          %v2606 = vrot.slane %v2605, 2
          %v2607 = vadd.f32 %v2605, %v2606
          %v2608 = vrot.slane %v2607, 1
          %v2609 = vadd.f32 %v2607, %v2608
          %v2610 = vsel %vm1925, %v1821, 0.0
          %v2611 = vsel %vm1925, %v1822, 0.0
          %v2612 = vadd.f32 %v2610, %v2611
          %v2613 = vrot.slane %v2612, 4
          %v2614 = vadd.f32 %v2612, %v2613
          %v2615 = vrot.slane %v2614, 2
          %v2616 = vadd.f32 %v2614, %v2615
          %v2617 = vrot.slane %v2616, 1
          %v2618 = vadd.f32 %v2616, %v2617
          %v2619 = vsel %vm1925, %v1823, 0.0
          %v2620 = vsel %vm1925, %v1824, 0.0
          %v2621 = vadd.f32 %v2619, %v2620
          %v2622 = vrot.slane %v2621, 4
          %v2623 = vadd.f32 %v2621, %v2622
          %v2624 = vrot.slane %v2623, 2
          %v2625 = vadd.f32 %v2623, %v2624
          %v2626 = vrot.slane %v2625, 1
          %v2627 = vadd.f32 %v2625, %v2626
          %v2628 = vsel %vm1925, %v1825, 0.0
          %v2629 = vsel %vm1925, %v1826, 0.0
          %v2630 = vadd.f32 %v2628, %v2629
          %v2631 = vrot.slane %v2630, 4
          %v2632 = vadd.f32 %v2630, %v2631
          %v2633 = vrot.slane %v2632, 2
          %v2634 = vadd.f32 %v2632, %v2633
          %v2635 = vrot.slane %v2634, 1
          %v2636 = vadd.f32 %v2634, %v2635
          %v2637 = vsel %vm1925, %v1827, 0.0
          %v2638 = vsel %vm1925, %v1828, 0.0
          %v2639 = vadd.f32 %v2637, %v2638
          %v2640 = vrot.slane %v2639, 4
          %v2641 = vadd.f32 %v2639, %v2640
          %v2642 = vrot.slane %v2641, 2
          %v2643 = vadd.f32 %v2641, %v2642
          %v2644 = vrot.slane %v2643, 1
          %v2645 = vadd.f32 %v2643, %v2644
          %v2646 = vsel %vm1925, %v1829, 0.0
          %v2647 = vsel %vm1925, %v1830, 0.0
          %v2648 = vadd.f32 %v2646, %v2647
          %v2649 = vrot.slane %v2648, 4
          %v2650 = vadd.f32 %v2648, %v2649
          %v2651 = vrot.slane %v2650, 2
          %v2652 = vadd.f32 %v2650, %v2651
          %v2653 = vrot.slane %v2652, 1
          %v2654 = vadd.f32 %v2652, %v2653
          %v2655 = vsel %vm1925, %v1831, 0.0
          %v2656 = vsel %vm1925, %v1832, 0.0
          %v2657 = vadd.f32 %v2655, %v2656
          %v2658 = vrot.slane %v2657, 4
          %v2659 = vadd.f32 %v2657, %v2658
          %v2660 = vrot.slane %v2659, 2
          %v2661 = vadd.f32 %v2659, %v2660
          %v2662 = vrot.slane %v2661, 1
          %v2663 = vadd.f32 %v2661, %v2662
          %v2664 = vsel %vm1925, %v1833, 0.0
          %v2665 = vsel %vm1925, %v1834, 0.0
          %v2666 = vadd.f32 %v2664, %v2665
          %v2667 = vrot.slane %v2666, 4
          %v2668 = vadd.f32 %v2666, %v2667
          %v2669 = vrot.slane %v2668, 2
          %v2670 = vadd.f32 %v2668, %v2669
          %v2671 = vrot.slane %v2670, 1
          %v2672 = vadd.f32 %v2670, %v2671
          %v2673 = vsel %vm1925, %v1835, 0.0
          %v2674 = vsel %vm1925, %v1836, 0.0
          %v2675 = vadd.f32 %v2673, %v2674
          %v2676 = vrot.slane %v2675, 4
          %v2677 = vadd.f32 %v2675, %v2676
          %v2678 = vrot.slane %v2677, 2
          %v2679 = vadd.f32 %v2677, %v2678
          %v2680 = vrot.slane %v2679, 1
          %v2681 = vadd.f32 %v2679, %v2680
          %v2682 = vsel %vm1925, %v1837, 0.0
          %v2683 = vsel %vm1925, %v1838, 0.0
          %v2684 = vadd.f32 %v2682, %v2683
          %v2685 = vrot.slane %v2684, 4
          %v2686 = vadd.f32 %v2684, %v2685
          %v2687 = vrot.slane %v2686, 2
          %v2688 = vadd.f32 %v2686, %v2687
          %v2689 = vrot.slane %v2688, 1
          %v2690 = vadd.f32 %v2688, %v2689
          %v2691 = vsel %vm1925, %v1839, 0.0
          %v2692 = vsel %vm1925, %v1840, 0.0
          %v2693 = vadd.f32 %v2691, %v2692
          %v2694 = vrot.slane %v2693, 4
          %v2695 = vadd.f32 %v2693, %v2694
          %v2696 = vrot.slane %v2695, 2
          %v2697 = vadd.f32 %v2695, %v2696
          %v2698 = vrot.slane %v2697, 1
          %v2699 = vadd.f32 %v2697, %v2698
          %v2700 = vsel %vm1925, %v1841, 0.0
          %v2701 = vsel %vm1925, %v1842, 0.0
          %v2702 = vadd.f32 %v2700, %v2701
          %v2703 = vrot.slane %v2702, 4
          %v2704 = vadd.f32 %v2702, %v2703
          %v2705 = vrot.slane %v2704, 2
          %v2706 = vadd.f32 %v2704, %v2705
          %v2707 = vrot.slane %v2706, 1
          %v2708 = vadd.f32 %v2706, %v2707
          %v2709 = vsel %vm1925, %v1843, 0.0
          %v2710 = vsel %vm1925, %v1844, 0.0
          %v2711 = vadd.f32 %v2709, %v2710
          %v2712 = vrot.slane %v2711, 4
          %v2713 = vadd.f32 %v2711, %v2712
          %v2714 = vrot.slane %v2713, 2
          %v2715 = vadd.f32 %v2713, %v2714
          %v2716 = vrot.slane %v2715, 1
          %v2717 = vadd.f32 %v2715, %v2716
          %v2718 = vsel %vm1925, %v1845, 0.0
          %v2719 = vsel %vm1925, %v1846, 0.0
          %v2720 = vadd.f32 %v2718, %v2719
          %v2721 = vrot.slane %v2720, 4
          %v2722 = vadd.f32 %v2720, %v2721
          %v2723 = vrot.slane %v2722, 2
          %v2724 = vadd.f32 %v2722, %v2723
          %v2725 = vrot.slane %v2724, 1
          %v2726 = vadd.f32 %v2724, %v2725
          %v2727 = vsel %vm1925, %v1847, 0.0
          %v2728 = vsel %vm1925, %v1848, 0.0
          %v2729 = vadd.f32 %v2727, %v2728
          %v2730 = vrot.slane %v2729, 4
          %v2731 = vadd.f32 %v2729, %v2730
          %v2732 = vrot.slane %v2731, 2
          %v2733 = vadd.f32 %v2731, %v2732
          %v2734 = vrot.slane %v2733, 1
          %v2735 = vadd.f32 %v2733, %v2734
          %v2736 = vsel %vm1925, %v1849, 0.0
          %v2737 = vsel %vm1925, %v1850, 0.0
          %v2738 = vadd.f32 %v2736, %v2737
          %v2739 = vrot.slane %v2738, 4
          %v2740 = vadd.f32 %v2738, %v2739
          %v2741 = vrot.slane %v2740, 2
          %v2742 = vadd.f32 %v2740, %v2741
          %v2743 = vrot.slane %v2742, 1
          %v2744 = vadd.f32 %v2742, %v2743
          %v2745 = vsel %vm1925, %v1851, 0.0
          %v2746 = vsel %vm1925, %v1852, 0.0
          %v2747 = vadd.f32 %v2745, %v2746
          %v2748 = vrot.slane %v2747, 4
          %v2749 = vadd.f32 %v2747, %v2748
          %v2750 = vrot.slane %v2749, 2
          %v2751 = vadd.f32 %v2749, %v2750
          %v2752 = vrot.slane %v2751, 1
          %v2753 = vadd.f32 %v2751, %v2752
          %v2754 = vsel %vm1925, %v1853, 0.0
          %v2755 = vsel %vm1925, %v1854, 0.0
          %v2756 = vadd.f32 %v2754, %v2755
          %v2757 = vrot.slane %v2756, 4
          %v2758 = vadd.f32 %v2756, %v2757
          %v2759 = vrot.slane %v2758, 2
          %v2760 = vadd.f32 %v2758, %v2759
          %v2761 = vrot.slane %v2760, 1
          %v2762 = vadd.f32 %v2760, %v2761
          %v2763 = vsel %vm1925, %v1855, 0.0
          %v2764 = vsel %vm1925, %v1856, 0.0
          %v2765 = vadd.f32 %v2763, %v2764
          %v2766 = vrot.slane %v2765, 4
          %v2767 = vadd.f32 %v2765, %v2766
          %v2768 = vrot.slane %v2767, 2
          %v2769 = vadd.f32 %v2767, %v2768
          %v2770 = vrot.slane %v2769, 1
          %v2771 = vadd.f32 %v2769, %v2770
          %v2772 = vsel %vm1925, %v1857, 0.0
          %v2773 = vsel %vm1925, %v1858, 0.0
          %v2774 = vadd.f32 %v2772, %v2773
          %v2775 = vrot.slane %v2774, 4
          %v2776 = vadd.f32 %v2774, %v2775
          %v2777 = vrot.slane %v2776, 2
          %v2778 = vadd.f32 %v2776, %v2777
          %v2779 = vrot.slane %v2778, 1
          %v2780 = vadd.f32 %v2778, %v2779
          %v2781 = vsel %vm1925, %v1859, 0.0
          %v2782 = vsel %vm1925, %v1860, 0.0
          %v2783 = vadd.f32 %v2781, %v2782
          %v2784 = vrot.slane %v2783, 4
          %v2785 = vadd.f32 %v2783, %v2784
          %v2786 = vrot.slane %v2785, 2
          %v2787 = vadd.f32 %v2785, %v2786
          %v2788 = vrot.slane %v2787, 1
          %v2789 = vadd.f32 %v2787, %v2788
          %v2790 = vsel %vm1925, %v1861, 0.0
          %v2791 = vsel %vm1925, %v1862, 0.0
          %v2792 = vadd.f32 %v2790, %v2791
          %v2793 = vrot.slane %v2792, 4
          %v2794 = vadd.f32 %v2792, %v2793
          %v2795 = vrot.slane %v2794, 2
          %v2796 = vadd.f32 %v2794, %v2795
          %v2797 = vrot.slane %v2796, 1
          %v2798 = vadd.f32 %v2796, %v2797
          %v2799 = vsel %vm1925, %v1863, 0.0
          %v2800 = vsel %vm1925, %v1864, 0.0
          %v2801 = vadd.f32 %v2799, %v2800
          %v2802 = vrot.slane %v2801, 4
          %v2803 = vadd.f32 %v2801, %v2802
          %v2804 = vrot.slane %v2803, 2
          %v2805 = vadd.f32 %v2803, %v2804
          %v2806 = vrot.slane %v2805, 1
          %v2807 = vadd.f32 %v2805, %v2806
          %v2808 = vsel %vm1925, %v1865, 0.0
          %v2809 = vsel %vm1925, %v1866, 0.0
          %v2810 = vadd.f32 %v2808, %v2809
          %v2811 = vrot.slane %v2810, 4
          %v2812 = vadd.f32 %v2810, %v2811
          %v2813 = vrot.slane %v2812, 2
          %v2814 = vadd.f32 %v2812, %v2813
          %v2815 = vrot.slane %v2814, 1
          %v2816 = vadd.f32 %v2814, %v2815
          %v2817 = vsel %vm1925, %v1867, 0.0
          %v2818 = vsel %vm1925, %v1868, 0.0
          %v2819 = vadd.f32 %v2817, %v2818
          %v2820 = vrot.slane %v2819, 4
          %v2821 = vadd.f32 %v2819, %v2820
          %v2822 = vrot.slane %v2821, 2
          %v2823 = vadd.f32 %v2821, %v2822
          %v2824 = vrot.slane %v2823, 1
          %v2825 = vadd.f32 %v2823, %v2824
          %v2826 = vsel %vm1925, %v1869, 0.0
          %v2827 = vsel %vm1925, %v1870, 0.0
          %v2828 = vadd.f32 %v2826, %v2827
          %v2829 = vrot.slane %v2828, 4
          %v2830 = vadd.f32 %v2828, %v2829
          %v2831 = vrot.slane %v2830, 2
          %v2832 = vadd.f32 %v2830, %v2831
          %v2833 = vrot.slane %v2832, 1
          %v2834 = vadd.f32 %v2832, %v2833
          %v2835 = vsel %vm1925, %v1871, 0.0
          %v2836 = vsel %vm1925, %v1872, 0.0
          %v2837 = vadd.f32 %v2835, %v2836
          %v2838 = vrot.slane %v2837, 4
          %v2839 = vadd.f32 %v2837, %v2838
          %v2840 = vrot.slane %v2839, 2
          %v2841 = vadd.f32 %v2839, %v2840
          %v2842 = vrot.slane %v2841, 1
          %v2843 = vadd.f32 %v2841, %v2842
          %v2844 = vsel %vm1925, %v1873, 0.0
          %v2845 = vsel %vm1925, %v1874, 0.0
          %v2846 = vadd.f32 %v2844, %v2845
          %v2847 = vrot.slane %v2846, 4
          %v2848 = vadd.f32 %v2846, %v2847
          %v2849 = vrot.slane %v2848, 2
          %v2850 = vadd.f32 %v2848, %v2849
          %v2851 = vrot.slane %v2850, 1
          %v2852 = vadd.f32 %v2850, %v2851
          %v2853 = vsel %vm1925, %v1875, 0.0
          %v2854 = vsel %vm1925, %v1876, 0.0
          %v2855 = vadd.f32 %v2853, %v2854
          %v2856 = vrot.slane %v2855, 4
          %v2857 = vadd.f32 %v2855, %v2856
          %v2858 = vrot.slane %v2857, 2
          %v2859 = vadd.f32 %v2857, %v2858
          %v2860 = vrot.slane %v2859, 1
          %v2861 = vadd.f32 %v2859, %v2860
          %v2862 = vsel %vm1925, %v1877, 0.0
          %v2863 = vsel %vm1925, %v1878, 0.0
          %v2864 = vadd.f32 %v2862, %v2863
          %v2865 = vrot.slane %v2864, 4
          %v2866 = vadd.f32 %v2864, %v2865
          %v2867 = vrot.slane %v2866, 2
          %v2868 = vadd.f32 %v2866, %v2867
          %v2869 = vrot.slane %v2868, 1
          %v2870 = vadd.f32 %v2868, %v2869
          %v2871 = vsel %vm1925, %v1879, 0.0
          %v2872 = vsel %vm1925, %v1880, 0.0
          %v2873 = vadd.f32 %v2871, %v2872
          %v2874 = vrot.slane %v2873, 4
          %v2875 = vadd.f32 %v2873, %v2874
          %v2876 = vrot.slane %v2875, 2
          %v2877 = vadd.f32 %v2875, %v2876
          %v2878 = vrot.slane %v2877, 1
          %v2879 = vadd.f32 %v2877, %v2878
          %v2880 = vsel %vm1925, %v1881, 0.0
          %v2881 = vsel %vm1925, %v1882, 0.0
          %v2882 = vadd.f32 %v2880, %v2881
          %v2883 = vrot.slane %v2882, 4
          %v2884 = vadd.f32 %v2882, %v2883
          %v2885 = vrot.slane %v2884, 2
          %v2886 = vadd.f32 %v2884, %v2885
          %v2887 = vrot.slane %v2886, 1
          %v2888 = vadd.f32 %v2886, %v2887
          %v2889 = vsel %vm1925, %v1883, 0.0
          %v2890 = vsel %vm1925, %v1884, 0.0
          %v2891 = vadd.f32 %v2889, %v2890
          %v2892 = vrot.slane %v2891, 4
          %v2893 = vadd.f32 %v2891, %v2892
          %v2894 = vrot.slane %v2893, 2
          %v2895 = vadd.f32 %v2893, %v2894
          %v2896 = vrot.slane %v2895, 1
          %v2897 = vadd.f32 %v2895, %v2896
          %v2898 = vsel %vm1925, %v1885, 0.0
          %v2899 = vsel %vm1925, %v1886, 0.0
          %v2900 = vadd.f32 %v2898, %v2899
          %v2901 = vrot.slane %v2900, 4
          %v2902 = vadd.f32 %v2900, %v2901
          %v2903 = vrot.slane %v2902, 2
          %v2904 = vadd.f32 %v2902, %v2903
          %v2905 = vrot.slane %v2904, 1
          %v2906 = vadd.f32 %v2904, %v2905
          %v2907 = vsel %vm1925, %v1887, 0.0
          %v2908 = vsel %vm1925, %v1888, 0.0
          %v2909 = vadd.f32 %v2907, %v2908
          %v2910 = vrot.slane %v2909, 4
          %v2911 = vadd.f32 %v2909, %v2910
          %v2912 = vrot.slane %v2911, 2
          %v2913 = vadd.f32 %v2911, %v2912
          %v2914 = vrot.slane %v2913, 1
          %v2915 = vadd.f32 %v2913, %v2914
          %v2916 = vsel %vm1925, %v1889, 0.0
          %v2917 = vsel %vm1925, %v1890, 0.0
          %v2918 = vadd.f32 %v2916, %v2917
          %v2919 = vrot.slane %v2918, 4
          %v2920 = vadd.f32 %v2918, %v2919
          %v2921 = vrot.slane %v2920, 2
          %v2922 = vadd.f32 %v2920, %v2921
          %v2923 = vrot.slane %v2922, 1
          %v2924 = vadd.f32 %v2922, %v2923
          %v2925 = vsel %vm1925, %v1891, 0.0
          %v2926 = vsel %vm1925, %v1892, 0.0
          %v2927 = vadd.f32 %v2925, %v2926
          %v2928 = vrot.slane %v2927, 4
          %v2929 = vadd.f32 %v2927, %v2928
          %v2930 = vrot.slane %v2929, 2
          %v2931 = vadd.f32 %v2929, %v2930
          %v2932 = vrot.slane %v2931, 1
          %v2933 = vadd.f32 %v2931, %v2932
          %v2934 = vsel %vm1925, %v1893, 0.0
          %v2935 = vsel %vm1925, %v1894, 0.0
          %v2936 = vadd.f32 %v2934, %v2935
          %v2937 = vrot.slane %v2936, 4
          %v2938 = vadd.f32 %v2936, %v2937
          %v2939 = vrot.slane %v2938, 2
          %v2940 = vadd.f32 %v2938, %v2939
          %v2941 = vrot.slane %v2940, 1
          %v2942 = vadd.f32 %v2940, %v2941
          %v2943 = vsel %vm1925, %v1895, 0.0
          %v2944 = vsel %vm1925, %v1896, 0.0
          %v2945 = vadd.f32 %v2943, %v2944
          %v2946 = vrot.slane %v2945, 4
          %v2947 = vadd.f32 %v2945, %v2946
          %v2948 = vrot.slane %v2947, 2
          %v2949 = vadd.f32 %v2947, %v2948
          %v2950 = vrot.slane %v2949, 1
          %v2951 = vadd.f32 %v2949, %v2950
          %v2952 = vsel %vm1925, %v1897, 0.0
          %v2953 = vsel %vm1925, %v1898, 0.0
          %v2954 = vadd.f32 %v2952, %v2953
          %v2955 = vrot.slane %v2954, 4
          %v2956 = vadd.f32 %v2954, %v2955
          %v2957 = vrot.slane %v2956, 2
          %v2958 = vadd.f32 %v2956, %v2957
          %v2959 = vrot.slane %v2958, 1
          %v2960 = vadd.f32 %v2958, %v2959
          %v2961 = vsel %vm1925, %v1899, 0.0
          %v2962 = vsel %vm1925, %v1900, 0.0
          %v2963 = vadd.f32 %v2961, %v2962
          %v2964 = vrot.slane %v2963, 4
          %v2965 = vadd.f32 %v2963, %v2964
          %v2966 = vrot.slane %v2965, 2
          %v2967 = vadd.f32 %v2965, %v2966
          %v2968 = vrot.slane %v2967, 1
          %v2969 = vadd.f32 %v2967, %v2968
          %v2970 = vsel %vm1925, %v1901, 0.0
          %v2971 = vsel %vm1925, %v1902, 0.0
          %v2972 = vadd.f32 %v2970, %v2971
          %v2973 = vrot.slane %v2972, 4
          %v2974 = vadd.f32 %v2972, %v2973
          %v2975 = vrot.slane %v2974, 2
          %v2976 = vadd.f32 %v2974, %v2975
          %v2977 = vrot.slane %v2976, 1
          %v2978 = vadd.f32 %v2976, %v2977
          %v2979 = vsel %vm1925, %v1903, 0.0
          %v2980 = vsel %vm1925, %v1904, 0.0
          %v2981 = vadd.f32 %v2979, %v2980
          %v2982 = vrot.slane %v2981, 4
          %v2983 = vadd.f32 %v2981, %v2982
          %v2984 = vrot.slane %v2983, 2
          %v2985 = vadd.f32 %v2983, %v2984
          %v2986 = vrot.slane %v2985, 1
          %v2987 = vadd.f32 %v2985, %v2986
          %v2988 = vsel %vm1925, %v1905, 0.0
          %v2989 = vsel %vm1925, %v1906, 0.0
          %v2990 = vadd.f32 %v2988, %v2989
          %v2991 = vrot.slane %v2990, 4
          %v2992 = vadd.f32 %v2990, %v2991
          %v2993 = vrot.slane %v2992, 2
          %v2994 = vadd.f32 %v2992, %v2993
          %v2995 = vrot.slane %v2994, 1
          %v2996 = vadd.f32 %v2994, %v2995
          %v2997 = vsel %vm1925, %v1907, 0.0
          %v2998 = vsel %vm1925, %v1908, 0.0
          %v2999 = vadd.f32 %v2997, %v2998
          %v3000 = vrot.slane %v2999, 4
          %v3001 = vadd.f32 %v2999, %v3000
          %v3002 = vrot.slane %v3001, 2
          %v3003 = vadd.f32 %v3001, %v3002
          %v3004 = vrot.slane %v3003, 1
          %v3005 = vadd.f32 %v3003, %v3004
          %v3006 = vsel %vm1925, %v1909, 0.0
          %v3007 = vsel %vm1925, %v1910, 0.0
          %v3008 = vadd.f32 %v3006, %v3007
          %v3009 = vrot.slane %v3008, 4
          %v3010 = vadd.f32 %v3008, %v3009
          %v3011 = vrot.slane %v3010, 2
          %v3012 = vadd.f32 %v3010, %v3011
          %v3013 = vrot.slane %v3012, 1
          %v3014 = vadd.f32 %v3012, %v3013
          %v3015 = vsel %vm1925, %v1911, 0.0
          %v3016 = vsel %vm1925, %v1912, 0.0
          %v3017 = vadd.f32 %v3015, %v3016
          %v3018 = vrot.slane %v3017, 4
          %v3019 = vadd.f32 %v3017, %v3018
          %v3020 = vrot.slane %v3019, 2
          %v3021 = vadd.f32 %v3019, %v3020
          %v3022 = vrot.slane %v3021, 1
          %v3023 = vadd.f32 %v3021, %v3022
          %v3024 = vsel %vm1925, %v1913, 0.0
          %v3025 = vsel %vm1925, %v1914, 0.0
          %v3026 = vadd.f32 %v3024, %v3025
          %v3027 = vrot.slane %v3026, 4
          %v3028 = vadd.f32 %v3026, %v3027
          %v3029 = vrot.slane %v3028, 2
          %v3030 = vadd.f32 %v3028, %v3029
          %v3031 = vrot.slane %v3030, 1
          %v3032 = vadd.f32 %v3030, %v3031
          %v3033 = vsel %vm1925, %v1915, 0.0
          %v3034 = vsel %vm1925, %v1916, 0.0
          %v3035 = vadd.f32 %v3033, %v3034
          %v3036 = vrot.slane %v3035, 4
          %v3037 = vadd.f32 %v3035, %v3036
          %v3038 = vrot.slane %v3037, 2
          %v3039 = vadd.f32 %v3037, %v3038
          %v3040 = vrot.slane %v3039, 1
          %v3041 = vadd.f32 %v3039, %v3040
          %v3042 = vsel %vm1925, %v1917, 0.0
          %v3043 = vsel %vm1925, %v1918, 0.0
          %v3044 = vadd.f32 %v3042, %v3043
          %v3045 = vrot.slane %v3044, 4
          %v3046 = vadd.f32 %v3044, %v3045
          %v3047 = vrot.slane %v3046, 2
          %v3048 = vadd.f32 %v3046, %v3047
          %v3049 = vrot.slane %v3048, 1
          %v3050 = vadd.f32 %v3048, %v3049
          %v3051 = vsel %vm1925, %v1919, 0.0
          %v3052 = vsel %vm1925, %v1920, 0.0
          %v3053 = vadd.f32 %v3051, %v3052
          %v3054 = vrot.slane %v3053, 4
          %v3055 = vadd.f32 %v3053, %v3054
          %v3056 = vrot.slane %v3055, 2
          %v3057 = vadd.f32 %v3055, %v3056
          %v3058 = vrot.slane %v3057, 1
          %v3059 = vadd.f32 %v3057, %v3058
          %v3060 = vsel %vm1925, %v1921, 0.0
          %v3061 = vsel %vm1925, %v1922, 0.0
          %v3062 = vadd.f32 %v3060, %v3061
          %v3063 = vrot.slane %v3062, 4
          %v3064 = vadd.f32 %v3062, %v3063
          %v3065 = vrot.slane %v3064, 2
          %v3066 = vadd.f32 %v3064, %v3065
          %v3067 = vrot.slane %v3066, 1
          %v3068 = vadd.f32 %v3066, %v3067
          %v3069 = vsel %vm1925, %v1923, 0.0
          %v3070 = vsel %vm1925, %v1924, 0.0
          %v3071 = vadd.f32 %v3069, %v3070
          %v3072 = vrot.slane %v3071, 4
          %v3073 = vadd.f32 %v3071, %v3072
          %v3074 = vrot.slane %v3073, 2
          %v3075 = vadd.f32 %v3073, %v3074
          %v3076 = vrot.slane %v3075, 1
          %v3077 = vadd.f32 %v3075, %v3076
          %s3078 = sld [smem:[#allocation6]]
          %v3079 = vstv %s3078
          %v3080 = vadd.f32 %v1934, %v3079
          %v3081 = vadd.f32 %v1943, %v3079
          %v3082 = vadd.f32 %v1952, %v3079
          %v3083 = vadd.f32 %v1961, %v3079
          %v3084 = vadd.f32 %v1970, %v3079
          %v3085 = vadd.f32 %v1979, %v3079
          %v3086 = vadd.f32 %v1988, %v3079
          %v3087 = vadd.f32 %v1997, %v3079
          %v3088 = vadd.f32 %v2006, %v3079
          %v3089 = vadd.f32 %v2015, %v3079
          %v3090 = vadd.f32 %v2024, %v3079
          %v3091 = vadd.f32 %v2033, %v3079
          %v3092 = vadd.f32 %v2042, %v3079
          %v3093 = vadd.f32 %v2051, %v3079
          %v3094 = vadd.f32 %v2060, %v3079
          %v3095 = vadd.f32 %v2069, %v3079
          %v3096 = vadd.f32 %v2078, %v3079
          %v3097 = vadd.f32 %v2087, %v3079
          %v3098 = vadd.f32 %v2096, %v3079
          %v3099 = vadd.f32 %v2105, %v3079
          %v3100 = vadd.f32 %v2114, %v3079
          %v3101 = vadd.f32 %v2123, %v3079
          %v3102 = vadd.f32 %v2132, %v3079
          %v3103 = vadd.f32 %v2141, %v3079
          %v3104 = vadd.f32 %v2150, %v3079
          %v3105 = vadd.f32 %v2159, %v3079
          %v3106 = vadd.f32 %v2168, %v3079
          %v3107 = vadd.f32 %v2177, %v3079
          %v3108 = vadd.f32 %v2186, %v3079
          %v3109 = vadd.f32 %v2195, %v3079
          %v3110 = vadd.f32 %v2204, %v3079
          %v3111 = vadd.f32 %v2213, %v3079
          %v3112 = vadd.f32 %v2222, %v3079
          %v3113 = vadd.f32 %v2231, %v3079
          %v3114 = vadd.f32 %v2240, %v3079
          %v3115 = vadd.f32 %v2249, %v3079
          %v3116 = vadd.f32 %v2258, %v3079
          %v3117 = vadd.f32 %v2267, %v3079
          %v3118 = vadd.f32 %v2276, %v3079
          %v3119 = vadd.f32 %v2285, %v3079
          %v3120 = vadd.f32 %v2294, %v3079
          %v3121 = vadd.f32 %v2303, %v3079
          %v3122 = vadd.f32 %v2312, %v3079
          %v3123 = vadd.f32 %v2321, %v3079
          %v3124 = vadd.f32 %v2330, %v3079
          %v3125 = vadd.f32 %v2339, %v3079
          %v3126 = vadd.f32 %v2348, %v3079
          %v3127 = vadd.f32 %v2357, %v3079
          %v3128 = vadd.f32 %v2366, %v3079
          %v3129 = vadd.f32 %v2375, %v3079
          %v3130 = vadd.f32 %v2384, %v3079
          %v3131 = vadd.f32 %v2393, %v3079
          %v3132 = vadd.f32 %v2402, %v3079
          %v3133 = vadd.f32 %v2411, %v3079
          %v3134 = vadd.f32 %v2420, %v3079
          %v3135 = vadd.f32 %v2429, %v3079
          %v3136 = vadd.f32 %v2438, %v3079
          %v3137 = vadd.f32 %v2447, %v3079
          %v3138 = vadd.f32 %v2456, %v3079
          %v3139 = vadd.f32 %v2465, %v3079
          %v3140 = vadd.f32 %v2474, %v3079
          %v3141 = vadd.f32 %v2483, %v3079
          %v3142 = vadd.f32 %v2492, %v3079
          %v3143 = vadd.f32 %v2501, %v3079
          %v3144 = vadd.f32 %v2510, %v3079
          %v3145 = vadd.f32 %v2519, %v3079
          %v3146 = vadd.f32 %v2528, %v3079
          %v3147 = vadd.f32 %v2537, %v3079
          %v3148 = vadd.f32 %v2546, %v3079
          %v3149 = vadd.f32 %v2555, %v3079
          %v3150 = vadd.f32 %v2564, %v3079
          %v3151 = vadd.f32 %v2573, %v3079
          %v3152 = vadd.f32 %v2582, %v3079
          %v3153 = vadd.f32 %v2591, %v3079
          %v3154 = vadd.f32 %v2600, %v3079
          %v3155 = vadd.f32 %v2609, %v3079
          %v3156 = vadd.f32 %v2618, %v3079
          %v3157 = vadd.f32 %v2627, %v3079
          %v3158 = vadd.f32 %v2636, %v3079
          %v3159 = vadd.f32 %v2645, %v3079
          %v3160 = vadd.f32 %v2654, %v3079
          %v3161 = vadd.f32 %v2663, %v3079
          %v3162 = vadd.f32 %v2672, %v3079
          %v3163 = vadd.f32 %v2681, %v3079
          %v3164 = vadd.f32 %v2690, %v3079
          %v3165 = vadd.f32 %v2699, %v3079
          %v3166 = vadd.f32 %v2708, %v3079
          %v3167 = vadd.f32 %v2717, %v3079
          %v3168 = vadd.f32 %v2726, %v3079
          %v3169 = vadd.f32 %v2735, %v3079
          %v3170 = vadd.f32 %v2744, %v3079
          %v3171 = vadd.f32 %v2753, %v3079
          %v3172 = vadd.f32 %v2762, %v3079
          %v3173 = vadd.f32 %v2771, %v3079
          %v3174 = vadd.f32 %v2780, %v3079
          %v3175 = vadd.f32 %v2789, %v3079
          %v3176 = vadd.f32 %v2798, %v3079
          %v3177 = vadd.f32 %v2807, %v3079
          %v3178 = vadd.f32 %v2816, %v3079
          %v3179 = vadd.f32 %v2825, %v3079
          %v3180 = vadd.f32 %v2834, %v3079
          %v3181 = vadd.f32 %v2843, %v3079
          %v3182 = vadd.f32 %v2852, %v3079
          %v3183 = vadd.f32 %v2861, %v3079
          %v3184 = vadd.f32 %v2870, %v3079
          %v3185 = vadd.f32 %v2879, %v3079
          %v3186 = vadd.f32 %v2888, %v3079
          %v3187 = vadd.f32 %v2897, %v3079
          %v3188 = vadd.f32 %v2906, %v3079
          %v3189 = vadd.f32 %v2915, %v3079
          %v3190 = vadd.f32 %v2924, %v3079
          %v3191 = vadd.f32 %v2933, %v3079
          %v3192 = vadd.f32 %v2942, %v3079
          %v3193 = vadd.f32 %v2951, %v3079
          %v3194 = vadd.f32 %v2960, %v3079
          %v3195 = vadd.f32 %v2969, %v3079
          %v3196 = vadd.f32 %v2978, %v3079
          %v3197 = vadd.f32 %v2987, %v3079
          %v3198 = vadd.f32 %v2996, %v3079
          %v3199 = vadd.f32 %v3005, %v3079
          %v3200 = vadd.f32 %v3014, %v3079
          %v3201 = vadd.f32 %v3023, %v3079
          %v3202 = vadd.f32 %v3032, %v3079
          %v3203 = vadd.f32 %v3041, %v3079
          %v3204 = vadd.f32 %v3050, %v3079
          %v3205 = vadd.f32 %v3059, %v3079
          %v3206 = vadd.f32 %v3068, %v3079
          %v3207 = vadd.f32 %v3077, %v3079
          %v3208 = vmax.f32 %v3080, 0.0
          %v3209 = vmax.f32 %v3081, 0.0
          %v3210 = vmax.f32 %v3082, 0.0
          %v3211 = vmax.f32 %v3083, 0.0
          %v3212 = vmax.f32 %v3084, 0.0
          %v3213 = vmax.f32 %v3085, 0.0
          %v3214 = vmax.f32 %v3086, 0.0
          %v3215 = vmax.f32 %v3087, 0.0
          %v3216 = vmax.f32 %v3088, 0.0
          %v3217 = vmax.f32 %v3089, 0.0
          %v3218 = vmax.f32 %v3090, 0.0
          %v3219 = vmax.f32 %v3091, 0.0
          %v3220 = vmax.f32 %v3092, 0.0
          %v3221 = vmax.f32 %v3093, 0.0
          %v3222 = vmax.f32 %v3094, 0.0
          %v3223 = vmax.f32 %v3095, 0.0
          %v3224 = vmax.f32 %v3096, 0.0
          %v3225 = vmax.f32 %v3097, 0.0
          %v3226 = vmax.f32 %v3098, 0.0
          %v3227 = vmax.f32 %v3099, 0.0
          %v3228 = vmax.f32 %v3100, 0.0
          %v3229 = vmax.f32 %v3101, 0.0
          %v3230 = vmax.f32 %v3102, 0.0
          %v3231 = vmax.f32 %v3103, 0.0
          %v3232 = vmax.f32 %v3104, 0.0
          %v3233 = vmax.f32 %v3105, 0.0
          %v3234 = vmax.f32 %v3106, 0.0
          %v3235 = vmax.f32 %v3107, 0.0
          %v3236 = vmax.f32 %v3108, 0.0
          %v3237 = vmax.f32 %v3109, 0.0
          %v3238 = vmax.f32 %v3110, 0.0
          %v3239 = vmax.f32 %v3111, 0.0
          %v3240 = vmax.f32 %v3112, 0.0
          %v3241 = vmax.f32 %v3113, 0.0
          %v3242 = vmax.f32 %v3114, 0.0
          %v3243 = vmax.f32 %v3115, 0.0
          %v3244 = vmax.f32 %v3116, 0.0
          %v3245 = vmax.f32 %v3117, 0.0
          %v3246 = vmax.f32 %v3118, 0.0
          %v3247 = vmax.f32 %v3119, 0.0
          %v3248 = vmax.f32 %v3120, 0.0
          %v3249 = vmax.f32 %v3121, 0.0
          %v3250 = vmax.f32 %v3122, 0.0
          %v3251 = vmax.f32 %v3123, 0.0
          %v3252 = vmax.f32 %v3124, 0.0
          %v3253 = vmax.f32 %v3125, 0.0
          %v3254 = vmax.f32 %v3126, 0.0
          %v3255 = vmax.f32 %v3127, 0.0
          %v3256 = vmax.f32 %v3128, 0.0
          %v3257 = vmax.f32 %v3129, 0.0
          %v3258 = vmax.f32 %v3130, 0.0
          %v3259 = vmax.f32 %v3131, 0.0
          %v3260 = vmax.f32 %v3132, 0.0
          %v3261 = vmax.f32 %v3133, 0.0
          %v3262 = vmax.f32 %v3134, 0.0
          %v3263 = vmax.f32 %v3135, 0.0
          %v3264 = vmax.f32 %v3136, 0.0
          %v3265 = vmax.f32 %v3137, 0.0
          %v3266 = vmax.f32 %v3138, 0.0
          %v3267 = vmax.f32 %v3139, 0.0
          %v3268 = vmax.f32 %v3140, 0.0
          %v3269 = vmax.f32 %v3141, 0.0
          %v3270 = vmax.f32 %v3142, 0.0
          %v3271 = vmax.f32 %v3143, 0.0
          %v3272 = vmax.f32 %v3144, 0.0
          %v3273 = vmax.f32 %v3145, 0.0
          %v3274 = vmax.f32 %v3146, 0.0
          %v3275 = vmax.f32 %v3147, 0.0
          %v3276 = vmax.f32 %v3148, 0.0
          %v3277 = vmax.f32 %v3149, 0.0
          %v3278 = vmax.f32 %v3150, 0.0
          %v3279 = vmax.f32 %v3151, 0.0
          %v3280 = vmax.f32 %v3152, 0.0
          %v3281 = vmax.f32 %v3153, 0.0
          %v3282 = vmax.f32 %v3154, 0.0
          %v3283 = vmax.f32 %v3155, 0.0
          %v3284 = vmax.f32 %v3156, 0.0
          %v3285 = vmax.f32 %v3157, 0.0
          %v3286 = vmax.f32 %v3158, 0.0
          %v3287 = vmax.f32 %v3159, 0.0
          %v3288 = vmax.f32 %v3160, 0.0
          %v3289 = vmax.f32 %v3161, 0.0
          %v3290 = vmax.f32 %v3162, 0.0
          %v3291 = vmax.f32 %v3163, 0.0
          %v3292 = vmax.f32 %v3164, 0.0
          %v3293 = vmax.f32 %v3165, 0.0
          %v3294 = vmax.f32 %v3166, 0.0
          %v3295 = vmax.f32 %v3167, 0.0
          %v3296 = vmax.f32 %v3168, 0.0
          %v3297 = vmax.f32 %v3169, 0.0
          %v3298 = vmax.f32 %v3170, 0.0
          %v3299 = vmax.f32 %v3171, 0.0
          %v3300 = vmax.f32 %v3172, 0.0
          %v3301 = vmax.f32 %v3173, 0.0
          %v3302 = vmax.f32 %v3174, 0.0
          %v3303 = vmax.f32 %v3175, 0.0
          %v3304 = vmax.f32 %v3176, 0.0
          %v3305 = vmax.f32 %v3177, 0.0
          %v3306 = vmax.f32 %v3178, 0.0
          %v3307 = vmax.f32 %v3179, 0.0
          %v3308 = vmax.f32 %v3180, 0.0
          %v3309 = vmax.f32 %v3181, 0.0
          %v3310 = vmax.f32 %v3182, 0.0
          %v3311 = vmax.f32 %v3183, 0.0
          %v3312 = vmax.f32 %v3184, 0.0
          %v3313 = vmax.f32 %v3185, 0.0
          %v3314 = vmax.f32 %v3186, 0.0
          %v3315 = vmax.f32 %v3187, 0.0
          %v3316 = vmax.f32 %v3188, 0.0
          %v3317 = vmax.f32 %v3189, 0.0
          %v3318 = vmax.f32 %v3190, 0.0
          %v3319 = vmax.f32 %v3191, 0.0
          %v3320 = vmax.f32 %v3192, 0.0
          %v3321 = vmax.f32 %v3193, 0.0
          %v3322 = vmax.f32 %v3194, 0.0
          %v3323 = vmax.f32 %v3195, 0.0
          %v3324 = vmax.f32 %v3196, 0.0
          %v3325 = vmax.f32 %v3197, 0.0
          %v3326 = vmax.f32 %v3198, 0.0
          %v3327 = vmax.f32 %v3199, 0.0
          %v3328 = vmax.f32 %v3200, 0.0
          %v3329 = vmax.f32 %v3201, 0.0
          %v3330 = vmax.f32 %v3202, 0.0
          %v3331 = vmax.f32 %v3203, 0.0
          %v3332 = vmax.f32 %v3204, 0.0
          %v3333 = vmax.f32 %v3205, 0.0
          %v3334 = vmax.f32 %v3206, 0.0
          %v3335 = vmax.f32 %v3207, 0.0
          %v3336 = vpack.c.bf16 %v3208, %v3208
          %v3337 = vpack.c.bf16 %v3209, %v3209
          %v3338 = vpack.c.bf16 %v3210, %v3210
          %v3339 = vpack.c.bf16 %v3211, %v3211
          %v3340 = vpack.c.bf16 %v3212, %v3212
          %v3341 = vpack.c.bf16 %v3213, %v3213
          %v3342 = vpack.c.bf16 %v3214, %v3214
          %v3343 = vpack.c.bf16 %v3215, %v3215
          %v3344 = vpack.c.bf16 %v3216, %v3216
          %v3345 = vpack.c.bf16 %v3217, %v3217
          %v3346 = vpack.c.bf16 %v3218, %v3218
          %v3347 = vpack.c.bf16 %v3219, %v3219
          %v3348 = vpack.c.bf16 %v3220, %v3220
          %v3349 = vpack.c.bf16 %v3221, %v3221
          %v3350 = vpack.c.bf16 %v3222, %v3222
          %v3351 = vpack.c.bf16 %v3223, %v3223
          %v3352 = vpack.c.bf16 %v3224, %v3224
          %v3353 = vpack.c.bf16 %v3225, %v3225
          %v3354 = vpack.c.bf16 %v3226, %v3226
          %v3355 = vpack.c.bf16 %v3227, %v3227
          %v3356 = vpack.c.bf16 %v3228, %v3228
          %v3357 = vpack.c.bf16 %v3229, %v3229
          %v3358 = vpack.c.bf16 %v3230, %v3230
          %v3359 = vpack.c.bf16 %v3231, %v3231
          %v3360 = vpack.c.bf16 %v3232, %v3232
          %v3361 = vpack.c.bf16 %v3233, %v3233
          %v3362 = vpack.c.bf16 %v3234, %v3234
          %v3363 = vpack.c.bf16 %v3235, %v3235
          %v3364 = vpack.c.bf16 %v3236, %v3236
          %v3365 = vpack.c.bf16 %v3237, %v3237
          %v3366 = vpack.c.bf16 %v3238, %v3238
          %v3367 = vpack.c.bf16 %v3239, %v3239
          %v3368 = vpack.c.bf16 %v3240, %v3240
          %v3369 = vpack.c.bf16 %v3241, %v3241
          %v3370 = vpack.c.bf16 %v3242, %v3242
          %v3371 = vpack.c.bf16 %v3243, %v3243
          %v3372 = vpack.c.bf16 %v3244, %v3244
          %v3373 = vpack.c.bf16 %v3245, %v3245
          %v3374 = vpack.c.bf16 %v3246, %v3246
          %v3375 = vpack.c.bf16 %v3247, %v3247
          %v3376 = vpack.c.bf16 %v3248, %v3248
          %v3377 = vpack.c.bf16 %v3249, %v3249
          %v3378 = vpack.c.bf16 %v3250, %v3250
          %v3379 = vpack.c.bf16 %v3251, %v3251
          %v3380 = vpack.c.bf16 %v3252, %v3252
          %v3381 = vpack.c.bf16 %v3253, %v3253
          %v3382 = vpack.c.bf16 %v3254, %v3254
          %v3383 = vpack.c.bf16 %v3255, %v3255
          %v3384 = vpack.c.bf16 %v3256, %v3256
          %v3385 = vpack.c.bf16 %v3257, %v3257
          %v3386 = vpack.c.bf16 %v3258, %v3258
          %v3387 = vpack.c.bf16 %v3259, %v3259
          %v3388 = vpack.c.bf16 %v3260, %v3260
          %v3389 = vpack.c.bf16 %v3261, %v3261
          %v3390 = vpack.c.bf16 %v3262, %v3262
          %v3391 = vpack.c.bf16 %v3263, %v3263
          %v3392 = vpack.c.bf16 %v3264, %v3264
          %v3393 = vpack.c.bf16 %v3265, %v3265
          %v3394 = vpack.c.bf16 %v3266, %v3266
          %v3395 = vpack.c.bf16 %v3267, %v3267
          %v3396 = vpack.c.bf16 %v3268, %v3268
          %v3397 = vpack.c.bf16 %v3269, %v3269
          %v3398 = vpack.c.bf16 %v3270, %v3270
          %v3399 = vpack.c.bf16 %v3271, %v3271
          %v3400 = vpack.c.bf16 %v3272, %v3272
          %v3401 = vpack.c.bf16 %v3273, %v3273
          %v3402 = vpack.c.bf16 %v3274, %v3274
          %v3403 = vpack.c.bf16 %v3275, %v3275
          %v3404 = vpack.c.bf16 %v3276, %v3276
          %v3405 = vpack.c.bf16 %v3277, %v3277
          %v3406 = vpack.c.bf16 %v3278, %v3278
          %v3407 = vpack.c.bf16 %v3279, %v3279
          %v3408 = vpack.c.bf16 %v3280, %v3280
          %v3409 = vpack.c.bf16 %v3281, %v3281
          %v3410 = vpack.c.bf16 %v3282, %v3282
          %v3411 = vpack.c.bf16 %v3283, %v3283
          %v3412 = vpack.c.bf16 %v3284, %v3284
          %v3413 = vpack.c.bf16 %v3285, %v3285
          %v3414 = vpack.c.bf16 %v3286, %v3286
          %v3415 = vpack.c.bf16 %v3287, %v3287
          %v3416 = vpack.c.bf16 %v3288, %v3288
          %v3417 = vpack.c.bf16 %v3289, %v3289
          %v3418 = vpack.c.bf16 %v3290, %v3290
          %v3419 = vpack.c.bf16 %v3291, %v3291
          %v3420 = vpack.c.bf16 %v3292, %v3292
          %v3421 = vpack.c.bf16 %v3293, %v3293
          %v3422 = vpack.c.bf16 %v3294, %v3294
          %v3423 = vpack.c.bf16 %v3295, %v3295
          %v3424 = vpack.c.bf16 %v3296, %v3296
          %v3425 = vpack.c.bf16 %v3297, %v3297
          %v3426 = vpack.c.bf16 %v3298, %v3298
          %v3427 = vpack.c.bf16 %v3299, %v3299
          %v3428 = vpack.c.bf16 %v3300, %v3300
          %v3429 = vpack.c.bf16 %v3301, %v3301
          %v3430 = vpack.c.bf16 %v3302, %v3302
          %v3431 = vpack.c.bf16 %v3303, %v3303
          %v3432 = vpack.c.bf16 %v3304, %v3304
          %v3433 = vpack.c.bf16 %v3305, %v3305
          %v3434 = vpack.c.bf16 %v3306, %v3306
          %v3435 = vpack.c.bf16 %v3307, %v3307
          %v3436 = vpack.c.bf16 %v3308, %v3308
          %v3437 = vpack.c.bf16 %v3309, %v3309
          %v3438 = vpack.c.bf16 %v3310, %v3310
          %v3439 = vpack.c.bf16 %v3311, %v3311
          %v3440 = vpack.c.bf16 %v3312, %v3312
          %v3441 = vpack.c.bf16 %v3313, %v3313
          %v3442 = vpack.c.bf16 %v3314, %v3314
          %v3443 = vpack.c.bf16 %v3315, %v3315
          %v3444 = vpack.c.bf16 %v3316, %v3316
          %v3445 = vpack.c.bf16 %v3317, %v3317
          %v3446 = vpack.c.bf16 %v3318, %v3318
          %v3447 = vpack.c.bf16 %v3319, %v3319
          %v3448 = vpack.c.bf16 %v3320, %v3320
          %v3449 = vpack.c.bf16 %v3321, %v3321
          %v3450 = vpack.c.bf16 %v3322, %v3322
          %v3451 = vpack.c.bf16 %v3323, %v3323
          %v3452 = vpack.c.bf16 %v3324, %v3324
          %v3453 = vpack.c.bf16 %v3325, %v3325
          %v3454 = vpack.c.bf16 %v3326, %v3326
          %v3455 = vpack.c.bf16 %v3327, %v3327
          %v3456 = vpack.c.bf16 %v3328, %v3328
          %v3457 = vpack.c.bf16 %v3329, %v3329
          %v3458 = vpack.c.bf16 %v3330, %v3330
          %v3459 = vpack.c.bf16 %v3331, %v3331
          %v3460 = vpack.c.bf16 %v3332, %v3332
          %v3461 = vpack.c.bf16 %v3333, %v3333
          %v3462 = vpack.c.bf16 %v3334, %v3334
          %v3463 = vpack.c.bf16 %v3335, %v3335
          %v3592 = vunpack.c.l.b16 %v3336
          %v3593 = vunpack.c.l.b16 %v3337
          %v3594 = vunpack.c.l.b16 %v3338
          %v3595 = vunpack.c.l.b16 %v3339
          %v3596 = vunpack.c.l.b16 %v3340
          %v3597 = vunpack.c.l.b16 %v3341
          %v3598 = vunpack.c.l.b16 %v3342
          %v3599 = vunpack.c.l.b16 %v3343
          %v3600 = vunpack.c.l.b16 %v3344
          %v3601 = vunpack.c.l.b16 %v3345
          %v3602 = vunpack.c.l.b16 %v3346
          %v3603 = vunpack.c.l.b16 %v3347
          %v3604 = vunpack.c.l.b16 %v3348
          %v3605 = vunpack.c.l.b16 %v3349
          %v3606 = vunpack.c.l.b16 %v3350
          %v3607 = vunpack.c.l.b16 %v3351
          %v3608 = vunpack.c.l.b16 %v3352
          %v3609 = vunpack.c.l.b16 %v3353
          %v3610 = vunpack.c.l.b16 %v3354
          %v3611 = vunpack.c.l.b16 %v3355
          %v3612 = vunpack.c.l.b16 %v3356
          %v3613 = vunpack.c.l.b16 %v3357
          %v3614 = vunpack.c.l.b16 %v3358
          %v3615 = vunpack.c.l.b16 %v3359
          %v3616 = vunpack.c.l.b16 %v3360
          %v3617 = vunpack.c.l.b16 %v3361
          %v3618 = vunpack.c.l.b16 %v3362
          %v3619 = vunpack.c.l.b16 %v3363
          %v3620 = vunpack.c.l.b16 %v3364
          %v3621 = vunpack.c.l.b16 %v3365
          %v3622 = vunpack.c.l.b16 %v3366
          %v3623 = vunpack.c.l.b16 %v3367
          %v3624 = vunpack.c.l.b16 %v3368
          %v3625 = vunpack.c.l.b16 %v3369
          %v3626 = vunpack.c.l.b16 %v3370
          %v3627 = vunpack.c.l.b16 %v3371
          %v3628 = vunpack.c.l.b16 %v3372
          %v3629 = vunpack.c.l.b16 %v3373
          %v3630 = vunpack.c.l.b16 %v3374
          %v3631 = vunpack.c.l.b16 %v3375
          %v3632 = vunpack.c.l.b16 %v3376
          %v3633 = vunpack.c.l.b16 %v3377
          %v3634 = vunpack.c.l.b16 %v3378
          %v3635 = vunpack.c.l.b16 %v3379
          %v3636 = vunpack.c.l.b16 %v3380
          %v3637 = vunpack.c.l.b16 %v3381
          %v3638 = vunpack.c.l.b16 %v3382
          %v3639 = vunpack.c.l.b16 %v3383
          %v3640 = vunpack.c.l.b16 %v3384
          %v3641 = vunpack.c.l.b16 %v3385
          %v3642 = vunpack.c.l.b16 %v3386
          %v3643 = vunpack.c.l.b16 %v3387
          %v3644 = vunpack.c.l.b16 %v3388
          %v3645 = vunpack.c.l.b16 %v3389
          %v3646 = vunpack.c.l.b16 %v3390
          %v3647 = vunpack.c.l.b16 %v3391
          %v3648 = vunpack.c.l.b16 %v3392
          %v3649 = vunpack.c.l.b16 %v3393
          %v3650 = vunpack.c.l.b16 %v3394
          %v3651 = vunpack.c.l.b16 %v3395
          %v3652 = vunpack.c.l.b16 %v3396
          %v3653 = vunpack.c.l.b16 %v3397
          %v3654 = vunpack.c.l.b16 %v3398
          %v3655 = vunpack.c.l.b16 %v3399
          %v3656 = vunpack.c.l.b16 %v3400
          %v3657 = vunpack.c.l.b16 %v3401
          %v3658 = vunpack.c.l.b16 %v3402
          %v3659 = vunpack.c.l.b16 %v3403
          %v3660 = vunpack.c.l.b16 %v3404
          %v3661 = vunpack.c.l.b16 %v3405
          %v3662 = vunpack.c.l.b16 %v3406
          %v3663 = vunpack.c.l.b16 %v3407
          %v3664 = vunpack.c.l.b16 %v3408
          %v3665 = vunpack.c.l.b16 %v3409
          %v3666 = vunpack.c.l.b16 %v3410
          %v3667 = vunpack.c.l.b16 %v3411
          %v3668 = vunpack.c.l.b16 %v3412
          %v3669 = vunpack.c.l.b16 %v3413
          %v3670 = vunpack.c.l.b16 %v3414
          %v3671 = vunpack.c.l.b16 %v3415
          %v3672 = vunpack.c.l.b16 %v3416
          %v3673 = vunpack.c.l.b16 %v3417
          %v3674 = vunpack.c.l.b16 %v3418
          %v3675 = vunpack.c.l.b16 %v3419
          %v3676 = vunpack.c.l.b16 %v3420
          %v3677 = vunpack.c.l.b16 %v3421
          %v3678 = vunpack.c.l.b16 %v3422
          %v3679 = vunpack.c.l.b16 %v3423
          %v3680 = vunpack.c.l.b16 %v3424
          %v3681 = vunpack.c.l.b16 %v3425
          %v3682 = vunpack.c.l.b16 %v3426
          %v3683 = vunpack.c.l.b16 %v3427
          %v3684 = vunpack.c.l.b16 %v3428
          %v3685 = vunpack.c.l.b16 %v3429
          %v3686 = vunpack.c.l.b16 %v3430
          %v3687 = vunpack.c.l.b16 %v3431
          %v3688 = vunpack.c.l.b16 %v3432
          %v3689 = vunpack.c.l.b16 %v3433
          %v3690 = vunpack.c.l.b16 %v3434
          %v3691 = vunpack.c.l.b16 %v3435
          %v3692 = vunpack.c.l.b16 %v3436
          %v3693 = vunpack.c.l.b16 %v3437
          %v3694 = vunpack.c.l.b16 %v3438
          %v3695 = vunpack.c.l.b16 %v3439
          %v3696 = vunpack.c.l.b16 %v3440
          %v3697 = vunpack.c.l.b16 %v3441
          %v3698 = vunpack.c.l.b16 %v3442
          %v3699 = vunpack.c.l.b16 %v3443
          %v3700 = vunpack.c.l.b16 %v3444
          %v3701 = vunpack.c.l.b16 %v3445
          %v3702 = vunpack.c.l.b16 %v3446
          %v3703 = vunpack.c.l.b16 %v3447
          %v3704 = vunpack.c.l.b16 %v3448
          %v3705 = vunpack.c.l.b16 %v3449
          %v3706 = vunpack.c.l.b16 %v3450
          %v3707 = vunpack.c.l.b16 %v3451
          %v3708 = vunpack.c.l.b16 %v3452
          %v3709 = vunpack.c.l.b16 %v3453
          %v3710 = vunpack.c.l.b16 %v3454
          %v3711 = vunpack.c.l.b16 %v3455
          %v3712 = vunpack.c.l.b16 %v3456
          %v3713 = vunpack.c.l.b16 %v3457
          %v3714 = vunpack.c.l.b16 %v3458
          %v3715 = vunpack.c.l.b16 %v3459
          %v3716 = vunpack.c.l.b16 %v3460
          %v3717 = vunpack.c.l.b16 %v3461
          %v3718 = vunpack.c.l.b16 %v3462
          %v3719 = vunpack.c.l.b16 %v3463
          %vm3720 = vcmask 1041409
          %v3721 = vsel %vm3720, %v3593, %v3592
          %vm3722 = vcmask 1042434
          %v3723 = vsel %vm3722, %v3594, %v3721
          %vm3724 = vcmask 1043459
          %v3725 = vsel %vm3724, %v3595, %v3723
          %vm3726 = vcmask 1044484
          %v3727 = vsel %vm3726, %v3596, %v3725
          %vm3728 = vcmask 1045509
          %v3729 = vsel %vm3728, %v3597, %v3727
          %vm3730 = vcmask 1046534
          %v3731 = vsel %vm3730, %v3598, %v3729
          %vm3732 = vcmask 1047559
          %v3733 = vsel %vm3732, %v3599, %v3731
          %v3734 = vsel %vm3720, %v3601, %v3600
          %v3735 = vsel %vm3722, %v3602, %v3734
          %v3736 = vsel %vm3724, %v3603, %v3735
          %v3737 = vsel %vm3726, %v3604, %v3736
          %v3738 = vsel %vm3728, %v3605, %v3737
          %v3739 = vsel %vm3730, %v3606, %v3738
          %v3740 = vsel %vm3732, %v3607, %v3739
          %v3741 = vsel %vm3720, %v3609, %v3608
          %v3742 = vsel %vm3722, %v3610, %v3741
          %v3743 = vsel %vm3724, %v3611, %v3742
          %v3744 = vsel %vm3726, %v3612, %v3743
          %v3745 = vsel %vm3728, %v3613, %v3744
          %v3746 = vsel %vm3730, %v3614, %v3745
          %v3747 = vsel %vm3732, %v3615, %v3746
          %v3748 = vsel %vm3720, %v3617, %v3616
          %v3749 = vsel %vm3722, %v3618, %v3748
          %v3750 = vsel %vm3724, %v3619, %v3749
          %v3751 = vsel %vm3726, %v3620, %v3750
          %v3752 = vsel %vm3728, %v3621, %v3751
          %v3753 = vsel %vm3730, %v3622, %v3752
          %v3754 = vsel %vm3732, %v3623, %v3753
          %v3755 = vsel %vm3720, %v3625, %v3624
          %v3756 = vsel %vm3722, %v3626, %v3755
          %v3757 = vsel %vm3724, %v3627, %v3756
          %v3758 = vsel %vm3726, %v3628, %v3757
          %v3759 = vsel %vm3728, %v3629, %v3758
          %v3760 = vsel %vm3730, %v3630, %v3759
          %v3761 = vsel %vm3732, %v3631, %v3760
          %v3762 = vsel %vm3720, %v3633, %v3632
          %v3763 = vsel %vm3722, %v3634, %v3762
          %v3764 = vsel %vm3724, %v3635, %v3763
          %v3765 = vsel %vm3726, %v3636, %v3764
          %v3766 = vsel %vm3728, %v3637, %v3765
          %v3767 = vsel %vm3730, %v3638, %v3766
          %v3768 = vsel %vm3732, %v3639, %v3767
          %v3769 = vsel %vm3720, %v3641, %v3640
          %v3770 = vsel %vm3722, %v3642, %v3769
          %v3771 = vsel %vm3724, %v3643, %v3770
          %v3772 = vsel %vm3726, %v3644, %v3771
          %v3773 = vsel %vm3728, %v3645, %v3772
          %v3774 = vsel %vm3730, %v3646, %v3773
          %v3775 = vsel %vm3732, %v3647, %v3774
          %v3776 = vsel %vm3720, %v3649, %v3648
          %v3777 = vsel %vm3722, %v3650, %v3776
          %v3778 = vsel %vm3724, %v3651, %v3777
          %v3779 = vsel %vm3726, %v3652, %v3778
          %v3780 = vsel %vm3728, %v3653, %v3779
          %v3781 = vsel %vm3730, %v3654, %v3780
          %v3782 = vsel %vm3732, %v3655, %v3781
          %v3783 = vsel %vm3720, %v3657, %v3656
          %v3784 = vsel %vm3722, %v3658, %v3783
          %v3785 = vsel %vm3724, %v3659, %v3784
          %v3786 = vsel %vm3726, %v3660, %v3785
          %v3787 = vsel %vm3728, %v3661, %v3786
          %v3788 = vsel %vm3730, %v3662, %v3787
          %v3789 = vsel %vm3732, %v3663, %v3788
          %v3790 = vsel %vm3720, %v3665, %v3664
          %v3791 = vsel %vm3722, %v3666, %v3790
          %v3792 = vsel %vm3724, %v3667, %v3791
          %v3793 = vsel %vm3726, %v3668, %v3792
          %v3794 = vsel %vm3728, %v3669, %v3793
          %v3795 = vsel %vm3730, %v3670, %v3794
          %v3796 = vsel %vm3732, %v3671, %v3795
          %v3797 = vsel %vm3720, %v3673, %v3672
          %v3798 = vsel %vm3722, %v3674, %v3797
          %v3799 = vsel %vm3724, %v3675, %v3798
          %v3800 = vsel %vm3726, %v3676, %v3799
          %v3801 = vsel %vm3728, %v3677, %v3800
          %v3802 = vsel %vm3730, %v3678, %v3801
          %v3803 = vsel %vm3732, %v3679, %v3802
          %v3804 = vsel %vm3720, %v3681, %v3680
          %v3805 = vsel %vm3722, %v3682, %v3804
          %v3806 = vsel %vm3724, %v3683, %v3805
          %v3807 = vsel %vm3726, %v3684, %v3806
          %v3808 = vsel %vm3728, %v3685, %v3807
          %v3809 = vsel %vm3730, %v3686, %v3808
          %v3810 = vsel %vm3732, %v3687, %v3809
          %v3811 = vsel %vm3720, %v3689, %v3688
          %v3812 = vsel %vm3722, %v3690, %v3811
          %v3813 = vsel %vm3724, %v3691, %v3812
          %v3814 = vsel %vm3726, %v3692, %v3813
          %v3815 = vsel %vm3728, %v3693, %v3814
          %v3816 = vsel %vm3730, %v3694, %v3815
          %v3817 = vsel %vm3732, %v3695, %v3816
          %v3818 = vsel %vm3720, %v3697, %v3696
          %v3819 = vsel %vm3722, %v3698, %v3818
          %v3820 = vsel %vm3724, %v3699, %v3819
          %v3821 = vsel %vm3726, %v3700, %v3820
          %v3822 = vsel %vm3728, %v3701, %v3821
          %v3823 = vsel %vm3730, %v3702, %v3822
          %v3824 = vsel %vm3732, %v3703, %v3823
          %v3825 = vsel %vm3720, %v3705, %v3704
          %v3826 = vsel %vm3722, %v3706, %v3825
          %v3827 = vsel %vm3724, %v3707, %v3826
          %v3828 = vsel %vm3726, %v3708, %v3827
          %v3829 = vsel %vm3728, %v3709, %v3828
          %v3830 = vsel %vm3730, %v3710, %v3829
          %v3831 = vsel %vm3732, %v3711, %v3830
          %v3832 = vsel %vm3720, %v3713, %v3712
          %v3833 = vsel %vm3722, %v3714, %v3832
          %v3834 = vsel %vm3724, %v3715, %v3833
          %v3835 = vsel %vm3726, %v3716, %v3834
          %v3836 = vsel %vm3728, %v3717, %v3835
          %v3837 = vsel %vm3730, %v3718, %v3836
          %v3838 = vsel %vm3732, %v3719, %v3837
          %v3839 = vpack.c.b16 %v3740, %v3733
          %v3840 = vpack.c.b16 %v3754, %v3747
          %v3841 = vpack.c.b16 %v3768, %v3761
          %v3842 = vpack.c.b16 %v3782, %v3775
          %v3843 = vpack.c.b16 %v3796, %v3789
          %v3844 = vpack.c.b16 %v3810, %v3803
          %v3845 = vpack.c.b16 %v3824, %v3817
          %v3846 = vpack.c.b16 %v3838, %v3831
          %3855 = vst.msk [vmem:[#allocation5] sm:$0xff] %vm1925, %v3839
          %3856 = vst.msk [vmem:[#allocation5 + $0x8] sm:$0xff] %vm1925, %v3840
          %3857 = vst.msk [vmem:[#allocation5 + $0x10] sm:$0xff] %vm1925, %v3841
          %3858 = vst.msk [vmem:[#allocation5 + $0x18] sm:$0xff] %vm1925, %v3842
          %3859 = vst.msk [vmem:[#allocation5 + $0x20] sm:$0xff] %vm1925, %v3843
          %3860 = vst.msk [vmem:[#allocation5 + $0x28] sm:$0xff] %vm1925, %v3844
          %3861 = vst.msk [vmem:[#allocation5 + $0x30] sm:$0xff] %vm1925, %v3845
          %3862 = vst.msk [vmem:[#allocation5 + $0x38] sm:$0xff] %vm1925, %v3846
        $region156: #{mlp_att_twoway_conv.1} parent=87 // pred_fallthru
          _
        %v3863 = vld [vmem:[%s951] sm:$0x7]
        %v3864 = vld [vmem:[%s854] sm:$0xf]
        %v3865 = vld [vmem:[%s854 + $0x4] sm:$0xf]
        %v3866 = vld [vmem:[%s854 + $0x8] sm:$0xf]
        %v3867 = vld [vmem:[%s854 + $0xc] sm:$0xf]
        %v3868 = vld [vmem:[%s854 + $0x10] sm:$0xf]
        %v3869 = vld [vmem:[%s854 + $0x14] sm:$0xf]
        %v3870 = vld [vmem:[%s854 + $0x18] sm:$0xf]
        %v3871 = vld [vmem:[%s854 + $0x1c] sm:$0xf]
        %v3872 = vld [vmem:[%s854 + $0x20] sm:$0xf]
        %v3873 = vld [vmem:[%s854 + $0x24] sm:$0xf]
        %v3874 = vld [vmem:[%s854 + $0x28] sm:$0xf]
        %v3875 = vld [vmem:[%s854 + $0x2c] sm:$0xf]
        %v3876 = vld [vmem:[%s854 + $0x30] sm:$0xf]
        %v3877 = vld [vmem:[%s854 + $0x34] sm:$0xf]
        %v3878 = vld [vmem:[%s854 + $0x38] sm:$0xf]
        %v3879 = vld [vmem:[%s854 + $0x3c] sm:$0xf]
        %v3880 = vld [vmem:[%s885] sm:$0xf]
        %v3881 = vld [vmem:[%s885 + $0x4] sm:$0xf]
        %v3882 = vld [vmem:[%s885 + $0x8] sm:$0xf]
        %v3883 = vld [vmem:[%s885 + $0xc] sm:$0xf]
        %v3884 = vld [vmem:[%s885 + $0x10] sm:$0xf]
        %v3885 = vld [vmem:[%s885 + $0x14] sm:$0xf]
        %v3886 = vld [vmem:[%s885 + $0x18] sm:$0xf]
        %v3887 = vld [vmem:[%s885 + $0x1c] sm:$0xf]
        %v3888 = vld [vmem:[%s885 + $0x20] sm:$0xf]
        %v3889 = vld [vmem:[%s885 + $0x24] sm:$0xf]
        %v3890 = vld [vmem:[%s885 + $0x28] sm:$0xf]
        %v3891 = vld [vmem:[%s885 + $0x2c] sm:$0xf]
        %v3892 = vld [vmem:[%s885 + $0x30] sm:$0xf]
        %v3893 = vld [vmem:[%s885 + $0x34] sm:$0xf]
        %v3894 = vld [vmem:[%s885 + $0x38] sm:$0xf]
        %v3895 = vld [vmem:[%s885 + $0x3c] sm:$0xf]
        %v3896 = vlaneseq
        %v3897 = vshrl.u32 %v3896, 7
        %v3898 = vsub.s32 0, %v3897
        %v3899 = vrot.slane %v3863, %v3898
        %v3916 = vunpack.c.l.b16 %v3864
        %v3917 = vunpack.c.l.b16 %v3865
        %v3918 = vunpack.c.l.b16 %v3866
        %v3919 = vunpack.c.l.b16 %v3867
        %v3920 = vunpack.c.l.b16 %v3868
        %v3921 = vunpack.c.l.b16 %v3869
        %v3922 = vunpack.c.l.b16 %v3870
        %v3923 = vunpack.c.l.b16 %v3871
        %v3924 = vunpack.c.l.b16 %v3872
        %v3925 = vunpack.c.l.b16 %v3873
        %v3926 = vunpack.c.l.b16 %v3874
        %v3927 = vunpack.c.l.b16 %v3875
        %v3928 = vunpack.c.l.b16 %v3876
        %v3929 = vunpack.c.l.b16 %v3877
        %v3930 = vunpack.c.l.b16 %v3878
        %v3931 = vunpack.c.l.b16 %v3879
        %v3932 = vpack.c.b16 %v3917, %v3916
        %v3933 = vpack.c.b16 %v3919, %v3918
        %v3934 = vpack.c.b16 %v3921, %v3920
        %v3935 = vpack.c.b16 %v3923, %v3922
        %v3936 = vpack.c.b16 %v3925, %v3924
        %v3937 = vpack.c.b16 %v3927, %v3926
        %v3938 = vpack.c.b16 %v3929, %v3928
        %v3939 = vpack.c.b16 %v3931, %v3930
        %v3964 = vunpack.c.l.b16 %v3880
        %v3965 = vunpack.c.l.b16 %v3881
        %v3966 = vunpack.c.l.b16 %v3882
        %v3967 = vunpack.c.l.b16 %v3883
        %v3968 = vunpack.c.l.b16 %v3884
        %v3969 = vunpack.c.l.b16 %v3885
        %v3970 = vunpack.c.l.b16 %v3886
        %v3971 = vunpack.c.l.b16 %v3887
        %v3972 = vunpack.c.l.b16 %v3888
        %v3973 = vunpack.c.l.b16 %v3889
        %v3974 = vunpack.c.l.b16 %v3890
        %v3975 = vunpack.c.l.b16 %v3891
        %v3976 = vunpack.c.l.b16 %v3892
        %v3977 = vunpack.c.l.b16 %v3893
        %v3978 = vunpack.c.l.b16 %v3894
        %v3979 = vunpack.c.l.b16 %v3895
        %v3980 = vpack.c.b16 %v3965, %v3964
        %v3981 = vpack.c.b16 %v3967, %v3966
        %v3982 = vpack.c.b16 %v3969, %v3968
        %v3983 = vpack.c.b16 %v3971, %v3970
        %v3984 = vpack.c.b16 %v3973, %v3972
        %v3985 = vpack.c.b16 %v3975, %v3974
        %v3986 = vpack.c.b16 %v3977, %v3976
        %v3987 = vpack.c.b16 %v3979, %v3978
        %3996 = vmatprep.subr.bf16.mxu0 0
        %3997 = vmatpush1.bf16.msra.mxu0 %v3980
        %3998 = vmatprep.subr.bf16.mxu0 0
        %3999 = vmatpush1.bf16.msra.mxu0 %v3981
        %4000 = vmatprep.subr.bf16.mxu0 0
        %4001 = vmatpush1.bf16.msra.mxu0 %v3982
        %4002 = vmatprep.subr.bf16.mxu0 0
        %4003 = vmatpush1.bf16.msra.mxu0 %v3983
        %4004 = vmatprep.subr.bf16.mxu0 0
        %4005 = vmatpush1.bf16.msra.mxu0 %v3984
        %4006 = vmatprep.subr.bf16.mxu0 0
        %4007 = vmatpush1.bf16.msra.mxu0 %v3985
        %4008 = vmatprep.subr.bf16.mxu0 0
        %4009 = vmatpush1.bf16.msra.mxu0 %v3986
        %4010 = vmatprep.subr.bf16.mxu0 0
        %4011 = vmatpush1.bf16.msra.mxu0 %v3987
        %4012 = vmatprep.subr.bf16.mxu0 0
        %4013 = vmatpush1.bf16.msra.mxu0 0
        %4014 = vmatprep.subr.bf16.mxu0 0
        %4015 = vmatpush1.bf16.msra.mxu0 0
        %4016 = vmatprep.subr.bf16.mxu0 0
        %4017 = vmatpush1.bf16.msra.mxu0 0
        %4018 = vmatprep.subr.bf16.mxu0 0
        %4019 = vmatpush1.bf16.msra.mxu0 0
        %4020 = vmatprep.subr.bf16.mxu0 0
        %4021 = vmatpush1.bf16.msra.mxu0 0
        %4022 = vmatprep.subr.bf16.mxu0 0
        %4023 = vmatpush1.bf16.msra.mxu0 0
        %4024 = vmatprep.subr.bf16.mxu0 0
        %4025 = vmatpush1.bf16.msra.mxu0 0
        %4026 = vmatprep.subr.bf16.mxu0 0
        %4027 = vmatpush1.bf16.msra.mxu0 0
        %4028 = vmatprep.mubr.bf16.mxu0 0
        %4029 = vmatmul.mubr.bf16.gmra.mrb[0].mxu0 %v3932
        %v4030 = vpop.f32.mrb[0].mxu0
        %v4031 = vadd.f32 %v3899, %v4030
        %v4032 = vpop.f32.mrb[0].mxu0
        %v4033 = vpop.f32.mrb[0].mxu0
        %v4034 = vadd.f32 %v3899, %v4033
        %v4035 = vpop.f32.mrb[0].mxu0
        %4036 = vmatprep.mubr.bf16.mxu0 0
        %4037 = vmatmul.mubr.bf16.gmra.mrb[0].mxu0 %v3933
        %v4038 = vpop.f32.mrb[0].mxu0
        %v4039 = vadd.f32 %v3899, %v4038
        %v4040 = vpop.f32.mrb[0].mxu0
        %v4041 = vpop.f32.mrb[0].mxu0
        %v4042 = vadd.f32 %v3899, %v4041
        %v4043 = vpop.f32.mrb[0].mxu0
        %4044 = vmatprep.mubr.bf16.mxu0 0
        %4045 = vmatmul.mubr.bf16.gmra.mrb[0].mxu0 %v3934
        %v4046 = vpop.f32.mrb[0].mxu0
        %v4047 = vadd.f32 %v3899, %v4046
        %v4048 = vpop.f32.mrb[0].mxu0
        %v4049 = vpop.f32.mrb[0].mxu0
        %v4050 = vadd.f32 %v3899, %v4049
        %v4051 = vpop.f32.mrb[0].mxu0
        %4052 = vmatprep.mubr.bf16.mxu0 0
        %4053 = vmatmul.mubr.bf16.gmra.mrb[0].mxu0 %v3935
        %v4054 = vpop.f32.mrb[0].mxu0
        %v4055 = vadd.f32 %v3899, %v4054
        %v4056 = vpop.f32.mrb[0].mxu0
        %v4057 = vpop.f32.mrb[0].mxu0
        %v4058 = vadd.f32 %v3899, %v4057
        %v4059 = vpop.f32.mrb[0].mxu0
        %4060 = vmatprep.mubr.bf16.mxu0 0
        %4061 = vmatmul.mubr.bf16.gmra.mrb[0].mxu0 %v3936
        %v4062 = vpop.f32.mrb[0].mxu0
        %v4063 = vadd.f32 %v3899, %v4062
        %v4064 = vpop.f32.mrb[0].mxu0
        %v4065 = vpop.f32.mrb[0].mxu0
        %v4066 = vadd.f32 %v3899, %v4065
        %v4067 = vpop.f32.mrb[0].mxu0
        %4068 = vmatprep.mubr.bf16.mxu0 0
        %4069 = vmatmul.mubr.bf16.gmra.mrb[0].mxu0 %v3937
        %v4070 = vpop.f32.mrb[0].mxu0
        %v4071 = vadd.f32 %v3899, %v4070
        %v4072 = vpop.f32.mrb[0].mxu0
        %v4073 = vpop.f32.mrb[0].mxu0
        %v4074 = vadd.f32 %v3899, %v4073
        %v4075 = vpop.f32.mrb[0].mxu0
        %4076 = vmatprep.mubr.bf16.mxu0 0
        %4077 = vmatmul.mubr.bf16.gmra.mrb[0].mxu0 %v3938
        %v4078 = vpop.f32.mrb[0].mxu0
        %v4079 = vadd.f32 %v3899, %v4078
        %v4080 = vpop.f32.mrb[0].mxu0
        %v4081 = vpop.f32.mrb[0].mxu0
        %v4082 = vadd.f32 %v3899, %v4081
        %v4083 = vpop.f32.mrb[0].mxu0
        %4084 = vmatprep.mubr.bf16.mxu0 0
        %4085 = vmatmul.mubr.bf16.gmra.mrb[0].mxu0 %v3939
        %v4086 = vpop.f32.mrb[0].mxu0
        %v4087 = vadd.f32 %v3899, %v4086
        %v4088 = vpop.f32.mrb[0].mxu0
        %v4089 = vpop.f32.mrb[0].mxu0
        %v4090 = vadd.f32 %v3899, %v4089
        %v4091 = vpop.f32.mrb[0].mxu0
        %4092 = vdwg.mxu0
        %v4093 = vmax.f32 %v4031, 0.0
        %v4094 = vmax.f32 %v4034, 0.0
        %v4095 = vmax.f32 %v4039, 0.0
        %v4096 = vmax.f32 %v4042, 0.0
        %v4097 = vmax.f32 %v4047, 0.0
        %v4098 = vmax.f32 %v4050, 0.0
        %v4099 = vmax.f32 %v4055, 0.0
        %v4100 = vmax.f32 %v4058, 0.0
        %v4101 = vmax.f32 %v4063, 0.0
        %v4102 = vmax.f32 %v4066, 0.0
        %v4103 = vmax.f32 %v4071, 0.0
        %v4104 = vmax.f32 %v4074, 0.0
        %v4105 = vmax.f32 %v4079, 0.0
        %v4106 = vmax.f32 %v4082, 0.0
        %v4107 = vmax.f32 %v4087, 0.0
        %v4108 = vmax.f32 %v4090, 0.0
        %v4109 = vpack.c.bf16 %v4094, %v4093
        %v4110 = vpack.c.bf16 %v4096, %v4095
        %v4111 = vpack.c.bf16 %v4098, %v4097
        %v4112 = vpack.c.bf16 %v4100, %v4099
        %v4113 = vpack.c.bf16 %v4102, %v4101
        %v4114 = vpack.c.bf16 %v4104, %v4103
        %v4115 = vpack.c.bf16 %v4106, %v4105
        %v4116 = vpack.c.bf16 %v4108, %v4107
        %v4117 = vld [vmem:[#allocation2] sm:$0xff]
        %v4118 = vld [vmem:[#allocation2 + $0x8] sm:$0xff]
        %v4119 = vld [vmem:[#allocation2 + $0x10] sm:$0xff]
        %v4120 = vld [vmem:[#allocation2 + $0x18] sm:$0xff]
        %v4121 = vld [vmem:[#allocation2 + $0x20] sm:$0xff]
        %v4122 = vld [vmem:[#allocation2 + $0x28] sm:$0xff]
        %v4123 = vld [vmem:[#allocation2 + $0x30] sm:$0xff]
        %v4124 = vld [vmem:[#allocation2 + $0x38] sm:$0xff]
        %v4125 = vld [vmem:[#allocation2 + $0x40] sm:$0xff]
        %v4126 = vld [vmem:[#allocation2 + $0x48] sm:$0xff]
        %v4127 = vld [vmem:[#allocation2 + $0x50] sm:$0xff]
        %v4128 = vld [vmem:[#allocation2 + $0x58] sm:$0xff]
        %v4129 = vld [vmem:[#allocation2 + $0x60] sm:$0xff]
        %v4130 = vld [vmem:[#allocation2 + $0x68] sm:$0xff]
        %v4131 = vld [vmem:[#allocation2 + $0x70] sm:$0xff]
        %v4132 = vld [vmem:[#allocation2 + $0x78] sm:$0xff]
        %v4133 = vld [vmem:[%s912] sm:$0xf]
        %v4134 = vld [vmem:[%s912 + $0x4] sm:$0xf]
        %v4135 = vld [vmem:[%s912 + $0x8] sm:$0xf]
        %v4136 = vld [vmem:[%s912 + $0xc] sm:$0xf]
        %v4137 = vld [vmem:[%s912 + $0x10] sm:$0xf]
        %v4138 = vld [vmem:[%s912 + $0x14] sm:$0xf]
        %v4139 = vld [vmem:[%s912 + $0x18] sm:$0xf]
        %v4140 = vld [vmem:[%s912 + $0x1c] sm:$0xf]
        %v4141 = vld [vmem:[%s912 + $0x20] sm:$0xf]
        %v4142 = vld [vmem:[%s912 + $0x24] sm:$0xf]
        %v4143 = vld [vmem:[%s912 + $0x28] sm:$0xf]
        %v4144 = vld [vmem:[%s912 + $0x2c] sm:$0xf]
        %v4145 = vld [vmem:[%s912 + $0x30] sm:$0xf]
        %v4146 = vld [vmem:[%s912 + $0x34] sm:$0xf]
        %v4147 = vld [vmem:[%s912 + $0x38] sm:$0xf]
        %v4148 = vld [vmem:[%s912 + $0x3c] sm:$0xf]
        %v4165 = vunpack.c.l.b16 %v4133
        %v4166 = vunpack.c.l.b16 %v4134
        %v4167 = vunpack.c.l.b16 %v4135
        %v4168 = vunpack.c.l.b16 %v4136
        %v4169 = vunpack.c.l.b16 %v4137
        %v4170 = vunpack.c.l.b16 %v4138
        %v4171 = vunpack.c.l.b16 %v4139
        %v4172 = vunpack.c.l.b16 %v4140
        %v4173 = vunpack.c.l.b16 %v4141
        %v4174 = vunpack.c.l.b16 %v4142
        %v4175 = vunpack.c.l.b16 %v4143
        %v4176 = vunpack.c.l.b16 %v4144
        %v4177 = vunpack.c.l.b16 %v4145
        %v4178 = vunpack.c.l.b16 %v4146
        %v4179 = vunpack.c.l.b16 %v4147
        %v4180 = vunpack.c.l.b16 %v4148
        %v4181 = vpack.c.b16 %v4166, %v4165
        %v4182 = vpack.c.b16 %v4168, %v4167
        %v4183 = vpack.c.b16 %v4170, %v4169
        %v4184 = vpack.c.b16 %v4172, %v4171
        %v4185 = vpack.c.b16 %v4174, %v4173
        %v4186 = vpack.c.b16 %v4176, %v4175
        %v4187 = vpack.c.b16 %v4178, %v4177
        %v4188 = vpack.c.b16 %v4180, %v4179
        %4197 = vmatprep.subr.bf16.mxu0 0
        %4198 = vmatpush1.bf16.msra.mxu0 %v4181
        %4199 = vmatprep.subr.bf16.mxu0 0
        %4200 = vmatpush1.bf16.msra.mxu0 %v4182
        %4201 = vmatprep.subr.bf16.mxu0 0
        %4202 = vmatpush1.bf16.msra.mxu0 %v4183
        %4203 = vmatprep.subr.bf16.mxu0 0
        %4204 = vmatpush1.bf16.msra.mxu0 %v4184
        %4205 = vmatprep.subr.bf16.mxu0 0
        %4206 = vmatpush1.bf16.msra.mxu0 %v4185
        %4207 = vmatprep.subr.bf16.mxu0 0
        %4208 = vmatpush1.bf16.msra.mxu0 %v4186
        %4209 = vmatprep.subr.bf16.mxu0 0
        %4210 = vmatpush1.bf16.msra.mxu0 %v4187
        %4211 = vmatprep.subr.bf16.mxu0 0
        %4212 = vmatpush1.bf16.msra.mxu0 %v4188
        %4213 = vmatprep.subr.bf16.mxu0 0
        %4214 = vmatpush1.bf16.msra.mxu0 0
        %4215 = vmatprep.subr.bf16.mxu0 0
        %4216 = vmatpush1.bf16.msra.mxu0 0
        %4217 = vmatprep.subr.bf16.mxu0 0
        %4218 = vmatpush1.bf16.msra.mxu0 0
        %4219 = vmatprep.subr.bf16.mxu0 0
        %4220 = vmatpush1.bf16.msra.mxu0 0
        %4221 = vmatprep.subr.bf16.mxu0 0
        %4222 = vmatpush1.bf16.msra.mxu0 0
        %4223 = vmatprep.subr.bf16.mxu0 0
        %4224 = vmatpush1.bf16.msra.mxu0 0
        %4225 = vmatprep.subr.bf16.mxu0 0
        %4226 = vmatpush1.bf16.msra.mxu0 0
        %4227 = vmatprep.subr.bf16.mxu0 0
        %4228 = vmatpush1.bf16.msra.mxu0 0
        %4229 = vmatprep.mubr.bf16.mxu0 0
        %4230 = vmatmul.mubr.bf16.gmra.mrb[0].mxu0 %v4109
        %v4231 = vpop.f32.mrb[0].mxu0
        %v4232 = vadd.f32 0.0, %v4231
        %v4233 = vpop.f32.mrb[0].mxu0
        %v4234 = vpop.f32.mrb[0].mxu0
        %v4235 = vadd.f32 0.0, %v4234
        %v4236 = vpop.f32.mrb[0].mxu0
        %4237 = vmatprep.mubr.bf16.mxu0 0
        %4238 = vmatmul.mubr.bf16.gmra.mrb[0].mxu0 %v4110
        %v4239 = vpop.f32.mrb[0].mxu0
        %v4240 = vadd.f32 0.0, %v4239
        %v4241 = vpop.f32.mrb[0].mxu0
        %v4242 = vpop.f32.mrb[0].mxu0
        %v4243 = vadd.f32 0.0, %v4242
        %v4244 = vpop.f32.mrb[0].mxu0
        %4245 = vmatprep.mubr.bf16.mxu0 0
        %4246 = vmatmul.mubr.bf16.gmra.mrb[0].mxu0 %v4111
        %v4247 = vpop.f32.mrb[0].mxu0
        %v4248 = vadd.f32 0.0, %v4247
        %v4249 = vpop.f32.mrb[0].mxu0
        %v4250 = vpop.f32.mrb[0].mxu0
        %v4251 = vadd.f32 0.0, %v4250
        %v4252 = vpop.f32.mrb[0].mxu0
        %4253 = vmatprep.mubr.bf16.mxu0 0
        %4254 = vmatmul.mubr.bf16.gmra.mrb[0].mxu0 %v4112
        %v4255 = vpop.f32.mrb[0].mxu0
        %v4256 = vadd.f32 0.0, %v4255
        %v4257 = vpop.f32.mrb[0].mxu0
        %v4258 = vpop.f32.mrb[0].mxu0
        %v4259 = vadd.f32 0.0, %v4258
        %v4260 = vpop.f32.mrb[0].mxu0
        %4261 = vmatprep.mubr.bf16.mxu0 0
        %4262 = vmatmul.mubr.bf16.gmra.mrb[0].mxu0 %v4113
        %v4263 = vpop.f32.mrb[0].mxu0
        %v4264 = vadd.f32 0.0, %v4263
        %v4265 = vpop.f32.mrb[0].mxu0
        %v4266 = vpop.f32.mrb[0].mxu0
        %v4267 = vadd.f32 0.0, %v4266
        %v4268 = vpop.f32.mrb[0].mxu0
        %4269 = vmatprep.mubr.bf16.mxu0 0
        %4270 = vmatmul.mubr.bf16.gmra.mrb[0].mxu0 %v4114
        %v4271 = vpop.f32.mrb[0].mxu0
        %v4272 = vadd.f32 0.0, %v4271
        %v4273 = vpop.f32.mrb[0].mxu0
        %v4274 = vpop.f32.mrb[0].mxu0
        %v4275 = vadd.f32 0.0, %v4274
        %v4276 = vpop.f32.mrb[0].mxu0
        %4277 = vmatprep.mubr.bf16.mxu0 0
        %4278 = vmatmul.mubr.bf16.gmra.mrb[0].mxu0 %v4115
        %v4279 = vpop.f32.mrb[0].mxu0
        %v4280 = vadd.f32 0.0, %v4279
        %v4281 = vpop.f32.mrb[0].mxu0
        %v4282 = vpop.f32.mrb[0].mxu0
        %v4283 = vadd.f32 0.0, %v4282
        %v4284 = vpop.f32.mrb[0].mxu0
        %4285 = vmatprep.mubr.bf16.mxu0 0
        %4286 = vmatmul.mubr.bf16.gmra.mrb[0].mxu0 %v4116
        %v4287 = vpop.f32.mrb[0].mxu0
        %v4288 = vadd.f32 0.0, %v4287
        %v4289 = vpop.f32.mrb[0].mxu0
        %v4290 = vpop.f32.mrb[0].mxu0
        %v4291 = vadd.f32 0.0, %v4290
        %v4292 = vpop.f32.mrb[0].mxu0
        %4293 = vdwg.mxu0
        %v4294 = vadd.f32 %v4117, %v4232
        %v4295 = vadd.f32 %v4118, %v4235
        %v4296 = vadd.f32 %v4119, %v4240
        %v4297 = vadd.f32 %v4120, %v4243
        %v4298 = vadd.f32 %v4121, %v4248
        %v4299 = vadd.f32 %v4122, %v4251
        %v4300 = vadd.f32 %v4123, %v4256
        %v4301 = vadd.f32 %v4124, %v4259
        %v4302 = vadd.f32 %v4125, %v4264
        %v4303 = vadd.f32 %v4126, %v4267
        %v4304 = vadd.f32 %v4127, %v4272
        %v4305 = vadd.f32 %v4128, %v4275
        %v4306 = vadd.f32 %v4129, %v4280
        %v4307 = vadd.f32 %v4130, %v4283
        %v4308 = vadd.f32 %v4131, %v4288
        %v4309 = vadd.f32 %v4132, %v4291
        %4310 = vst [vmem:[#allocation2] sm:$0xff] %v4294
        %4311 = vst [vmem:[#allocation2 + $0x8] sm:$0xff] %v4295
        %4312 = vst [vmem:[#allocation2 + $0x10] sm:$0xff] %v4296
        %4313 = vst [vmem:[#allocation2 + $0x18] sm:$0xff] %v4297
        %4314 = vst [vmem:[#allocation2 + $0x20] sm:$0xff] %v4298
        %4315 = vst [vmem:[#allocation2 + $0x28] sm:$0xff] %v4299
        %4316 = vst [vmem:[#allocation2 + $0x30] sm:$0xff] %v4300
        %4317 = vst [vmem:[#allocation2 + $0x38] sm:$0xff] %v4301
        %4318 = vst [vmem:[#allocation2 + $0x40] sm:$0xff] %v4302
        %4319 = vst [vmem:[#allocation2 + $0x48] sm:$0xff] %v4303
        %4320 = vst [vmem:[#allocation2 + $0x50] sm:$0xff] %v4304
        %4321 = vst [vmem:[#allocation2 + $0x58] sm:$0xff] %v4305
        %4322 = vst [vmem:[#allocation2 + $0x60] sm:$0xff] %v4306
        %4323 = vst [vmem:[#allocation2 + $0x68] sm:$0xff] %v4307
        %4324 = vst [vmem:[#allocation2 + $0x70] sm:$0xff] %v4308
        %4325 = vst [vmem:[#allocation2 + $0x78] sm:$0xff] %v4309
        %v4326 = vld [vmem:[%s863] sm:$0xf]
        %v4327 = vld [vmem:[%s863 + $0x4] sm:$0xf]
        %v4328 = vld [vmem:[%s863 + $0x8] sm:$0xf]
        %v4329 = vld [vmem:[%s863 + $0xc] sm:$0xf]
        %v4330 = vld [vmem:[%s863 + $0x10] sm:$0xf]
        %v4331 = vld [vmem:[%s863 + $0x14] sm:$0xf]
        %v4332 = vld [vmem:[%s863 + $0x18] sm:$0xf]
        %v4333 = vld [vmem:[%s863 + $0x1c] sm:$0xf]
        %v4334 = vld [vmem:[%s863 + $0x20] sm:$0xf]
        %v4335 = vld [vmem:[%s863 + $0x24] sm:$0xf]
        %v4336 = vld [vmem:[%s863 + $0x28] sm:$0xf]
        %v4337 = vld [vmem:[%s863 + $0x2c] sm:$0xf]
        %v4338 = vld [vmem:[%s863 + $0x30] sm:$0xf]
        %v4339 = vld [vmem:[%s863 + $0x34] sm:$0xf]
        %v4340 = vld [vmem:[%s863 + $0x38] sm:$0xf]
        %v4341 = vld [vmem:[%s863 + $0x3c] sm:$0xf]
        %v4342 = vld [vmem:[%s894] sm:$0xf]
        %v4343 = vld [vmem:[%s894 + $0x4] sm:$0xf]
        %v4344 = vld [vmem:[%s894 + $0x8] sm:$0xf]
        %v4345 = vld [vmem:[%s894 + $0xc] sm:$0xf]
        %v4346 = vld [vmem:[%s894 + $0x10] sm:$0xf]
        %v4347 = vld [vmem:[%s894 + $0x14] sm:$0xf]
        %v4348 = vld [vmem:[%s894 + $0x18] sm:$0xf]
        %v4349 = vld [vmem:[%s894 + $0x1c] sm:$0xf]
        %v4350 = vld [vmem:[%s894 + $0x20] sm:$0xf]
        %v4351 = vld [vmem:[%s894 + $0x24] sm:$0xf]
        %v4352 = vld [vmem:[%s894 + $0x28] sm:$0xf]
        %v4353 = vld [vmem:[%s894 + $0x2c] sm:$0xf]
        %v4354 = vld [vmem:[%s894 + $0x30] sm:$0xf]
        %v4355 = vld [vmem:[%s894 + $0x34] sm:$0xf]
        %v4356 = vld [vmem:[%s894 + $0x38] sm:$0xf]
        %v4357 = vld [vmem:[%s894 + $0x3c] sm:$0xf]
        %v4358 = vlaneseq
        %v4359 = vshrl.u32 %v4358, 7
        %v4360 = vsub.s32 1, %v4359
        %v4361 = vrot.slane %v3863, %v4360
        %v4378 = vunpack.c.l.b16 %v4326
        %v4379 = vunpack.c.l.b16 %v4327
        %v4380 = vunpack.c.l.b16 %v4328
        %v4381 = vunpack.c.l.b16 %v4329
        %v4382 = vunpack.c.l.b16 %v4330
        %v4383 = vunpack.c.l.b16 %v4331
        %v4384 = vunpack.c.l.b16 %v4332
        %v4385 = vunpack.c.l.b16 %v4333
        %v4386 = vunpack.c.l.b16 %v4334
        %v4387 = vunpack.c.l.b16 %v4335
        %v4388 = vunpack.c.l.b16 %v4336
        %v4389 = vunpack.c.l.b16 %v4337
        %v4390 = vunpack.c.l.b16 %v4338
        %v4391 = vunpack.c.l.b16 %v4339
        %v4392 = vunpack.c.l.b16 %v4340
        %v4393 = vunpack.c.l.b16 %v4341
        %v4394 = vpack.c.b16 %v4379, %v4378
        %v4395 = vpack.c.b16 %v4381, %v4380
        %v4396 = vpack.c.b16 %v4383, %v4382
        %v4397 = vpack.c.b16 %v4385, %v4384
        %v4398 = vpack.c.b16 %v4387, %v4386
        %v4399 = vpack.c.b16 %v4389, %v4388
        %v4400 = vpack.c.b16 %v4391, %v4390
        %v4401 = vpack.c.b16 %v4393, %v4392
        %v4426 = vunpack.c.l.b16 %v4342
        %v4427 = vunpack.c.l.b16 %v4343
        %v4428 = vunpack.c.l.b16 %v4344
        %v4429 = vunpack.c.l.b16 %v4345
        %v4430 = vunpack.c.l.b16 %v4346
        %v4431 = vunpack.c.l.b16 %v4347
        %v4432 = vunpack.c.l.b16 %v4348
        %v4433 = vunpack.c.l.b16 %v4349
        %v4434 = vunpack.c.l.b16 %v4350
        %v4435 = vunpack.c.l.b16 %v4351
        %v4436 = vunpack.c.l.b16 %v4352
        %v4437 = vunpack.c.l.b16 %v4353
        %v4438 = vunpack.c.l.b16 %v4354
        %v4439 = vunpack.c.l.b16 %v4355
        %v4440 = vunpack.c.l.b16 %v4356
        %v4441 = vunpack.c.l.b16 %v4357
        %v4442 = vpack.c.b16 %v4427, %v4426
        %v4443 = vpack.c.b16 %v4429, %v4428
        %v4444 = vpack.c.b16 %v4431, %v4430
        %v4445 = vpack.c.b16 %v4433, %v4432
        %v4446 = vpack.c.b16 %v4435, %v4434
        %v4447 = vpack.c.b16 %v4437, %v4436
        %v4448 = vpack.c.b16 %v4439, %v4438
        %v4449 = vpack.c.b16 %v4441, %v4440
        %4458 = vmatprep.subr.bf16.mxu0 0
        %4459 = vmatpush1.bf16.msra.mxu0 %v4442
        %4460 = vmatprep.subr.bf16.mxu0 0
        %4461 = vmatpush1.bf16.msra.mxu0 %v4443
        %4462 = vmatprep.subr.bf16.mxu0 0
        %4463 = vmatpush1.bf16.msra.mxu0 %v4444
        %4464 = vmatprep.subr.bf16.mxu0 0
        %4465 = vmatpush1.bf16.msra.mxu0 %v4445
        %4466 = vmatprep.subr.bf16.mxu0 0
        %4467 = vmatpush1.bf16.msra.mxu0 %v4446
        %4468 = vmatprep.subr.bf16.mxu0 0
        %4469 = vmatpush1.bf16.msra.mxu0 %v4447
        %4470 = vmatprep.subr.bf16.mxu0 0
        %4471 = vmatpush1.bf16.msra.mxu0 %v4448
        %4472 = vmatprep.subr.bf16.mxu0 0
        %4473 = vmatpush1.bf16.msra.mxu0 %v4449
        %4474 = vmatprep.subr.bf16.mxu0 0
        %4475 = vmatpush1.bf16.msra.mxu0 0
        %4476 = vmatprep.subr.bf16.mxu0 0
        %4477 = vmatpush1.bf16.msra.mxu0 0
        %4478 = vmatprep.subr.bf16.mxu0 0
        %4479 = vmatpush1.bf16.msra.mxu0 0
        %4480 = vmatprep.subr.bf16.mxu0 0
        %4481 = vmatpush1.bf16.msra.mxu0 0
        %4482 = vmatprep.subr.bf16.mxu0 0
        %4483 = vmatpush1.bf16.msra.mxu0 0
        %4484 = vmatprep.subr.bf16.mxu0 0
        %4485 = vmatpush1.bf16.msra.mxu0 0
        %4486 = vmatprep.subr.bf16.mxu0 0
        %4487 = vmatpush1.bf16.msra.mxu0 0
        %4488 = vmatprep.subr.bf16.mxu0 0
        %4489 = vmatpush1.bf16.msra.mxu0 0
        %4490 = vmatprep.mubr.bf16.mxu0 0
        %4491 = vmatmul.mubr.bf16.gmra.mrb[0].mxu0 %v4394
        %v4492 = vpop.f32.mrb[0].mxu0
        %v4493 = vadd.f32 %v4361, %v4492
        %v4494 = vpop.f32.mrb[0].mxu0
        %v4495 = vpop.f32.mrb[0].mxu0
        %v4496 = vadd.f32 %v4361, %v4495
        %v4497 = vpop.f32.mrb[0].mxu0
        %4498 = vmatprep.mubr.bf16.mxu0 0
        %4499 = vmatmul.mubr.bf16.gmra.mrb[0].mxu0 %v4395
        %v4500 = vpop.f32.mrb[0].mxu0
        %v4501 = vadd.f32 %v4361, %v4500
        %v4502 = vpop.f32.mrb[0].mxu0
        %v4503 = vpop.f32.mrb[0].mxu0
        %v4504 = vadd.f32 %v4361, %v4503
        %v4505 = vpop.f32.mrb[0].mxu0
        %4506 = vmatprep.mubr.bf16.mxu0 0
        %4507 = vmatmul.mubr.bf16.gmra.mrb[0].mxu0 %v4396
        %v4508 = vpop.f32.mrb[0].mxu0
        %v4509 = vadd.f32 %v4361, %v4508
        %v4510 = vpop.f32.mrb[0].mxu0
        %v4511 = vpop.f32.mrb[0].mxu0
        %v4512 = vadd.f32 %v4361, %v4511
        %v4513 = vpop.f32.mrb[0].mxu0
        %4514 = vmatprep.mubr.bf16.mxu0 0
        %4515 = vmatmul.mubr.bf16.gmra.mrb[0].mxu0 %v4397
        %v4516 = vpop.f32.mrb[0].mxu0
        %v4517 = vadd.f32 %v4361, %v4516
        %v4518 = vpop.f32.mrb[0].mxu0
        %v4519 = vpop.f32.mrb[0].mxu0
        %v4520 = vadd.f32 %v4361, %v4519
        %v4521 = vpop.f32.mrb[0].mxu0
        %4522 = vmatprep.mubr.bf16.mxu0 0
        %4523 = vmatmul.mubr.bf16.gmra.mrb[0].mxu0 %v4398
        %v4524 = vpop.f32.mrb[0].mxu0
        %v4525 = vadd.f32 %v4361, %v4524
        %v4526 = vpop.f32.mrb[0].mxu0
        %v4527 = vpop.f32.mrb[0].mxu0
        %v4528 = vadd.f32 %v4361, %v4527
        %v4529 = vpop.f32.mrb[0].mxu0
        %4530 = vmatprep.mubr.bf16.mxu0 0
        %4531 = vmatmul.mubr.bf16.gmra.mrb[0].mxu0 %v4399
        %v4532 = vpop.f32.mrb[0].mxu0
        %v4533 = vadd.f32 %v4361, %v4532
        %v4534 = vpop.f32.mrb[0].mxu0
        %v4535 = vpop.f32.mrb[0].mxu0
        %v4536 = vadd.f32 %v4361, %v4535
        %v4537 = vpop.f32.mrb[0].mxu0
        %4538 = vmatprep.mubr.bf16.mxu0 0
        %4539 = vmatmul.mubr.bf16.gmra.mrb[0].mxu0 %v4400
        %v4540 = vpop.f32.mrb[0].mxu0
        %v4541 = vadd.f32 %v4361, %v4540
        %v4542 = vpop.f32.mrb[0].mxu0
        %v4543 = vpop.f32.mrb[0].mxu0
        %v4544 = vadd.f32 %v4361, %v4543
        %v4545 = vpop.f32.mrb[0].mxu0
        %4546 = vmatprep.mubr.bf16.mxu0 0
        %4547 = vmatmul.mubr.bf16.gmra.mrb[0].mxu0 %v4401
        %v4548 = vpop.f32.mrb[0].mxu0
        %v4549 = vadd.f32 %v4361, %v4548
        %v4550 = vpop.f32.mrb[0].mxu0
        %v4551 = vpop.f32.mrb[0].mxu0
        %v4552 = vadd.f32 %v4361, %v4551
        %v4553 = vpop.f32.mrb[0].mxu0
        %4554 = vdwg.mxu0
        %v4555 = vmax.f32 %v4493, 0.0
        %v4556 = vmax.f32 %v4496, 0.0
        %v4557 = vmax.f32 %v4501, 0.0
        %v4558 = vmax.f32 %v4504, 0.0
        %v4559 = vmax.f32 %v4509, 0.0
        %v4560 = vmax.f32 %v4512, 0.0
        %v4561 = vmax.f32 %v4517, 0.0
        %v4562 = vmax.f32 %v4520, 0.0
        %v4563 = vmax.f32 %v4525, 0.0
        %v4564 = vmax.f32 %v4528, 0.0
        %v4565 = vmax.f32 %v4533, 0.0
        %v4566 = vmax.f32 %v4536, 0.0
        %v4567 = vmax.f32 %v4541, 0.0
        %v4568 = vmax.f32 %v4544, 0.0
        %v4569 = vmax.f32 %v4549, 0.0
        %v4570 = vmax.f32 %v4552, 0.0
        %v4571 = vpack.c.bf16 %v4556, %v4555
        %v4572 = vpack.c.bf16 %v4558, %v4557
        %v4573 = vpack.c.bf16 %v4560, %v4559
        %v4574 = vpack.c.bf16 %v4562, %v4561
        %v4575 = vpack.c.bf16 %v4564, %v4563
        %v4576 = vpack.c.bf16 %v4566, %v4565
        %v4577 = vpack.c.bf16 %v4568, %v4567
        %v4578 = vpack.c.bf16 %v4570, %v4569
        %v4579 = vld [vmem:[#allocation3] sm:$0xff]
        %v4580 = vld [vmem:[#allocation3 + $0x8] sm:$0xff]
        %v4581 = vld [vmem:[#allocation3 + $0x10] sm:$0xff]
        %v4582 = vld [vmem:[#allocation3 + $0x18] sm:$0xff]
        %v4583 = vld [vmem:[#allocation3 + $0x20] sm:$0xff]
        %v4584 = vld [vmem:[#allocation3 + $0x28] sm:$0xff]
        %v4585 = vld [vmem:[#allocation3 + $0x30] sm:$0xff]
        %v4586 = vld [vmem:[#allocation3 + $0x38] sm:$0xff]
        %v4587 = vld [vmem:[#allocation3 + $0x40] sm:$0xff]
        %v4588 = vld [vmem:[#allocation3 + $0x48] sm:$0xff]
        %v4589 = vld [vmem:[#allocation3 + $0x50] sm:$0xff]
        %v4590 = vld [vmem:[#allocation3 + $0x58] sm:$0xff]
        %v4591 = vld [vmem:[#allocation3 + $0x60] sm:$0xff]
        %v4592 = vld [vmem:[#allocation3 + $0x68] sm:$0xff]
        %v4593 = vld [vmem:[#allocation3 + $0x70] sm:$0xff]
        %v4594 = vld [vmem:[#allocation3 + $0x78] sm:$0xff]
        %v4595 = vld [vmem:[%s921] sm:$0xf]
        %v4596 = vld [vmem:[%s921 + $0x4] sm:$0xf]
        %v4597 = vld [vmem:[%s921 + $0x8] sm:$0xf]
        %v4598 = vld [vmem:[%s921 + $0xc] sm:$0xf]
        %v4599 = vld [vmem:[%s921 + $0x10] sm:$0xf]
        %v4600 = vld [vmem:[%s921 + $0x14] sm:$0xf]
        %v4601 = vld [vmem:[%s921 + $0x18] sm:$0xf]
        %v4602 = vld [vmem:[%s921 + $0x1c] sm:$0xf]
        %v4603 = vld [vmem:[%s921 + $0x20] sm:$0xf]
        %v4604 = vld [vmem:[%s921 + $0x24] sm:$0xf]
        %v4605 = vld [vmem:[%s921 + $0x28] sm:$0xf]
        %v4606 = vld [vmem:[%s921 + $0x2c] sm:$0xf]
        %v4607 = vld [vmem:[%s921 + $0x30] sm:$0xf]
        %v4608 = vld [vmem:[%s921 + $0x34] sm:$0xf]
        %v4609 = vld [vmem:[%s921 + $0x38] sm:$0xf]
        %v4610 = vld [vmem:[%s921 + $0x3c] sm:$0xf]
        %v4627 = vunpack.c.l.b16 %v4595
        %v4628 = vunpack.c.l.b16 %v4596
        %v4629 = vunpack.c.l.b16 %v4597
        %v4630 = vunpack.c.l.b16 %v4598
        %v4631 = vunpack.c.l.b16 %v4599
        %v4632 = vunpack.c.l.b16 %v4600
        %v4633 = vunpack.c.l.b16 %v4601
        %v4634 = vunpack.c.l.b16 %v4602
        %v4635 = vunpack.c.l.b16 %v4603
        %v4636 = vunpack.c.l.b16 %v4604
        %v4637 = vunpack.c.l.b16 %v4605
        %v4638 = vunpack.c.l.b16 %v4606
        %v4639 = vunpack.c.l.b16 %v4607
        %v4640 = vunpack.c.l.b16 %v4608
        %v4641 = vunpack.c.l.b16 %v4609
        %v4642 = vunpack.c.l.b16 %v4610
        %v4643 = vpack.c.b16 %v4628, %v4627
        %v4644 = vpack.c.b16 %v4630, %v4629
        %v4645 = vpack.c.b16 %v4632, %v4631
        %v4646 = vpack.c.b16 %v4634, %v4633
        %v4647 = vpack.c.b16 %v4636, %v4635
        %v4648 = vpack.c.b16 %v4638, %v4637
        %v4649 = vpack.c.b16 %v4640, %v4639
        %v4650 = vpack.c.b16 %v4642, %v4641
        %4659 = vmatprep.subr.bf16.mxu0 0
        %4660 = vmatpush1.bf16.msra.mxu0 %v4643
        %4661 = vmatprep.subr.bf16.mxu0 0
        %4662 = vmatpush1.bf16.msra.mxu0 %v4644
        %4663 = vmatprep.subr.bf16.mxu0 0
        %4664 = vmatpush1.bf16.msra.mxu0 %v4645
        %4665 = vmatprep.subr.bf16.mxu0 0
        %4666 = vmatpush1.bf16.msra.mxu0 %v4646
        %4667 = vmatprep.subr.bf16.mxu0 0
        %4668 = vmatpush1.bf16.msra.mxu0 %v4647
        %4669 = vmatprep.subr.bf16.mxu0 0
        %4670 = vmatpush1.bf16.msra.mxu0 %v4648
        %4671 = vmatprep.subr.bf16.mxu0 0
        %4672 = vmatpush1.bf16.msra.mxu0 %v4649
        %4673 = vmatprep.subr.bf16.mxu0 0
        %4674 = vmatpush1.bf16.msra.mxu0 %v4650
        %4675 = vmatprep.subr.bf16.mxu0 0
        %4676 = vmatpush1.bf16.msra.mxu0 0
        %4677 = vmatprep.subr.bf16.mxu0 0
        %4678 = vmatpush1.bf16.msra.mxu0 0
        %4679 = vmatprep.subr.bf16.mxu0 0
        %4680 = vmatpush1.bf16.msra.mxu0 0
        %4681 = vmatprep.subr.bf16.mxu0 0
        %4682 = vmatpush1.bf16.msra.mxu0 0
        %4683 = vmatprep.subr.bf16.mxu0 0
        %4684 = vmatpush1.bf16.msra.mxu0 0
        %4685 = vmatprep.subr.bf16.mxu0 0
        %4686 = vmatpush1.bf16.msra.mxu0 0
        %4687 = vmatprep.subr.bf16.mxu0 0
        %4688 = vmatpush1.bf16.msra.mxu0 0
        %4689 = vmatprep.subr.bf16.mxu0 0
        %4690 = vmatpush1.bf16.msra.mxu0 0
        %4691 = vmatprep.mubr.bf16.mxu0 0
        %4692 = vmatmul.mubr.bf16.gmra.mrb[0].mxu0 %v4571
        %v4693 = vpop.f32.mrb[0].mxu0
        %v4694 = vadd.f32 0.0, %v4693
        %v4695 = vpop.f32.mrb[0].mxu0
        %v4696 = vpop.f32.mrb[0].mxu0
        %v4697 = vadd.f32 0.0, %v4696
        %v4698 = vpop.f32.mrb[0].mxu0
        %4699 = vmatprep.mubr.bf16.mxu0 0
        %4700 = vmatmul.mubr.bf16.gmra.mrb[0].mxu0 %v4572
        %v4701 = vpop.f32.mrb[0].mxu0
        %v4702 = vadd.f32 0.0, %v4701
        %v4703 = vpop.f32.mrb[0].mxu0
        %v4704 = vpop.f32.mrb[0].mxu0
        %v4705 = vadd.f32 0.0, %v4704
        %v4706 = vpop.f32.mrb[0].mxu0
        %4707 = vmatprep.mubr.bf16.mxu0 0
        %4708 = vmatmul.mubr.bf16.gmra.mrb[0].mxu0 %v4573
        %v4709 = vpop.f32.mrb[0].mxu0
        %v4710 = vadd.f32 0.0, %v4709
        %v4711 = vpop.f32.mrb[0].mxu0
        %v4712 = vpop.f32.mrb[0].mxu0
        %v4713 = vadd.f32 0.0, %v4712
        %v4714 = vpop.f32.mrb[0].mxu0
        %4715 = vmatprep.mubr.bf16.mxu0 0
        %4716 = vmatmul.mubr.bf16.gmra.mrb[0].mxu0 %v4574
        %v4717 = vpop.f32.mrb[0].mxu0
        %v4718 = vadd.f32 0.0, %v4717
        %v4719 = vpop.f32.mrb[0].mxu0
        %v4720 = vpop.f32.mrb[0].mxu0
        %v4721 = vadd.f32 0.0, %v4720
        %v4722 = vpop.f32.mrb[0].mxu0
        %4723 = vmatprep.mubr.bf16.mxu0 0
        %4724 = vmatmul.mubr.bf16.gmra.mrb[0].mxu0 %v4575
        %v4725 = vpop.f32.mrb[0].mxu0
        %v4726 = vadd.f32 0.0, %v4725
        %v4727 = vpop.f32.mrb[0].mxu0
        %v4728 = vpop.f32.mrb[0].mxu0
        %v4729 = vadd.f32 0.0, %v4728
        %v4730 = vpop.f32.mrb[0].mxu0
        %4731 = vmatprep.mubr.bf16.mxu0 0
        %4732 = vmatmul.mubr.bf16.gmra.mrb[0].mxu0 %v4576
        %v4733 = vpop.f32.mrb[0].mxu0
        %v4734 = vadd.f32 0.0, %v4733
        %v4735 = vpop.f32.mrb[0].mxu0
        %v4736 = vpop.f32.mrb[0].mxu0
        %v4737 = vadd.f32 0.0, %v4736
        %v4738 = vpop.f32.mrb[0].mxu0
        %4739 = vmatprep.mubr.bf16.mxu0 0
        %4740 = vmatmul.mubr.bf16.gmra.mrb[0].mxu0 %v4577
        %v4741 = vpop.f32.mrb[0].mxu0
        %v4742 = vadd.f32 0.0, %v4741
        %v4743 = vpop.f32.mrb[0].mxu0
        %v4744 = vpop.f32.mrb[0].mxu0
        %v4745 = vadd.f32 0.0, %v4744
        %v4746 = vpop.f32.mrb[0].mxu0
        %4747 = vmatprep.mubr.bf16.mxu0 0
        %4748 = vmatmul.mubr.bf16.gmra.mrb[0].mxu0 %v4578
        %v4749 = vpop.f32.mrb[0].mxu0
        %v4750 = vadd.f32 0.0, %v4749
        %v4751 = vpop.f32.mrb[0].mxu0
        %v4752 = vpop.f32.mrb[0].mxu0
        %v4753 = vadd.f32 0.0, %v4752
        %v4754 = vpop.f32.mrb[0].mxu0
        %4755 = vdwg.mxu0
        %v4756 = vadd.f32 %v4579, %v4694
        %v4757 = vadd.f32 %v4580, %v4697
        %v4758 = vadd.f32 %v4581, %v4702
        %v4759 = vadd.f32 %v4582, %v4705
        %v4760 = vadd.f32 %v4583, %v4710
        %v4761 = vadd.f32 %v4584, %v4713
        %v4762 = vadd.f32 %v4585, %v4718
        %v4763 = vadd.f32 %v4586, %v4721
        %v4764 = vadd.f32 %v4587, %v4726
        %v4765 = vadd.f32 %v4588, %v4729
        %v4766 = vadd.f32 %v4589, %v4734
        %v4767 = vadd.f32 %v4590, %v4737
        %v4768 = vadd.f32 %v4591, %v4742
        %v4769 = vadd.f32 %v4592, %v4745
        %v4770 = vadd.f32 %v4593, %v4750
        %v4771 = vadd.f32 %v4594, %v4753
        %4772 = vst [vmem:[#allocation3] sm:$0xff] %v4756
        %4773 = vst [vmem:[#allocation3 + $0x8] sm:$0xff] %v4757
        %4774 = vst [vmem:[#allocation3 + $0x10] sm:$0xff] %v4758
        %4775 = vst [vmem:[#allocation3 + $0x18] sm:$0xff] %v4759
        %4776 = vst [vmem:[#allocation3 + $0x20] sm:$0xff] %v4760
        %4777 = vst [vmem:[#allocation3 + $0x28] sm:$0xff] %v4761
        %4778 = vst [vmem:[#allocation3 + $0x30] sm:$0xff] %v4762
        %4779 = vst [vmem:[#allocation3 + $0x38] sm:$0xff] %v4763
        %4780 = vst [vmem:[#allocation3 + $0x40] sm:$0xff] %v4764
        %4781 = vst [vmem:[#allocation3 + $0x48] sm:$0xff] %v4765
        %4782 = vst [vmem:[#allocation3 + $0x50] sm:$0xff] %v4766
        %4783 = vst [vmem:[#allocation3 + $0x58] sm:$0xff] %v4767
        %4784 = vst [vmem:[#allocation3 + $0x60] sm:$0xff] %v4768
        %4785 = vst [vmem:[#allocation3 + $0x68] sm:$0xff] %v4769
        %4786 = vst [vmem:[#allocation3 + $0x70] sm:$0xff] %v4770
        %4787 = vst [vmem:[#allocation3 + $0x78] sm:$0xff] %v4771
        %v4788 = vld [vmem:[#allocation5] sm:$0xff]
        %v4789 = vld [vmem:[#allocation5 + $0x8] sm:$0xff]
        %v4790 = vld [vmem:[#allocation5 + $0x10] sm:$0xff]
        %v4791 = vld [vmem:[#allocation5 + $0x18] sm:$0xff]
        %v4792 = vld [vmem:[#allocation5 + $0x20] sm:$0xff]
        %v4793 = vld [vmem:[#allocation5 + $0x28] sm:$0xff]
        %v4794 = vld [vmem:[#allocation5 + $0x30] sm:$0xff]
        %v4795 = vld [vmem:[#allocation5 + $0x38] sm:$0xff]
        %v4796 = vld [vmem:[%s903] sm:$0xf]
        %v4797 = vld [vmem:[%s903 + $0x4] sm:$0xf]
        %v4798 = vld [vmem:[%s903 + $0x8] sm:$0xf]
        %v4799 = vld [vmem:[%s903 + $0xc] sm:$0xf]
        %v4800 = vlaneseq
        %v4801 = vshrl.u32 %v4800, 7
        %v4802 = vsub.s32 2, %v4801
        %v4803 = vrot.slane %v3863, %v4802
        %v4808 = vunpack.c.l.b16 %v4796
        %v4809 = vunpack.c.l.b16 %v4797
        %v4810 = vunpack.c.l.b16 %v4798
        %v4811 = vunpack.c.l.b16 %v4799
        %v4812 = vpack.c.b16 %v4809, %v4808
        %v4813 = vpack.c.b16 %v4811, %v4810
        %vm4816 = vcmask 261120
        %v4818 = vsel %vm4816, %v4788, 0
        %v4821 = vsel %vm4816, %v4789, 0
        %v4824 = vsel %vm4816, %v4790, 0
        %v4827 = vsel %vm4816, %v4791, 0
        %v4830 = vsel %vm4816, %v4792, 0
        %v4833 = vsel %vm4816, %v4793, 0
        %v4836 = vsel %vm4816, %v4794, 0
        %v4839 = vsel %vm4816, %v4795, 0
        %4841 = vmatprep.subr.bf16.mxu0 0
        %4842 = vmatpush1.bf16.msra.mxu0 %v4812
        %4843 = vmatprep.subr.bf16.mxu0 0
        %4844 = vmatpush1.bf16.msra.mxu0 %v4813
        %4845 = vmatprep.subr.bf16.mxu0 0
        %4846 = vmatpush1.bf16.msra.mxu0 0
        %4847 = vmatprep.subr.bf16.mxu0 0
        %4848 = vmatpush1.bf16.msra.mxu0 0
        %4849 = vmatprep.subr.bf16.mxu0 0
        %4850 = vmatpush1.bf16.msra.mxu0 0
        %4851 = vmatprep.subr.bf16.mxu0 0
        %4852 = vmatpush1.bf16.msra.mxu0 0
        %4853 = vmatprep.subr.bf16.mxu0 0
        %4854 = vmatpush1.bf16.msra.mxu0 0
        %4855 = vmatprep.subr.bf16.mxu0 0
        %4856 = vmatpush1.bf16.msra.mxu0 0
        %4857 = vmatprep.subr.bf16.mxu0 0
        %4858 = vmatpush1.bf16.msra.mxu0 0
        %4859 = vmatprep.subr.bf16.mxu0 0
        %4860 = vmatpush1.bf16.msra.mxu0 0
        %4861 = vmatprep.subr.bf16.mxu0 0
        %4862 = vmatpush1.bf16.msra.mxu0 0
        %4863 = vmatprep.subr.bf16.mxu0 0
        %4864 = vmatpush1.bf16.msra.mxu0 0
        %4865 = vmatprep.subr.bf16.mxu0 0
        %4866 = vmatpush1.bf16.msra.mxu0 0
        %4867 = vmatprep.subr.bf16.mxu0 0
        %4868 = vmatpush1.bf16.msra.mxu0 0
        %4869 = vmatprep.subr.bf16.mxu0 0
        %4870 = vmatpush1.bf16.msra.mxu0 0
        %4871 = vmatprep.subr.bf16.mxu0 0
        %4872 = vmatpush1.bf16.msra.mxu0 0
        %4873 = vmatprep.mubr.bf16.mxu0 0
        %4874 = vmatmul.mubr.bf16.gmra.mrb[0].mxu0 %v4818
        %v4875 = vpop.f32.mrb[0].mxu0
        %v4876 = vadd.f32 %v4803, %v4875
        %v4877 = vpop.f32.mrb[0].mxu0
        %v4878 = vpop.f32.mrb[0].mxu0
        %v4879 = vadd.f32 %v4803, %v4878
        %v4880 = vpop.f32.mrb[0].mxu0
        %4881 = vmatprep.mubr.bf16.mxu0 0
        %4882 = vmatmul.mubr.bf16.gmra.mrb[0].mxu0 %v4821
        %v4883 = vpop.f32.mrb[0].mxu0
        %v4884 = vadd.f32 %v4803, %v4883
        %v4885 = vpop.f32.mrb[0].mxu0
        %v4886 = vpop.f32.mrb[0].mxu0
        %v4887 = vadd.f32 %v4803, %v4886
        %v4888 = vpop.f32.mrb[0].mxu0
        %4889 = vmatprep.mubr.bf16.mxu0 0
        %4890 = vmatmul.mubr.bf16.gmra.mrb[0].mxu0 %v4824
        %v4891 = vpop.f32.mrb[0].mxu0
        %v4892 = vadd.f32 %v4803, %v4891
        %v4893 = vpop.f32.mrb[0].mxu0
        %v4894 = vpop.f32.mrb[0].mxu0
        %v4895 = vadd.f32 %v4803, %v4894
        %v4896 = vpop.f32.mrb[0].mxu0
        %4897 = vmatprep.mubr.bf16.mxu0 0
        %4898 = vmatmul.mubr.bf16.gmra.mrb[0].mxu0 %v4827
        %v4899 = vpop.f32.mrb[0].mxu0
        %v4900 = vadd.f32 %v4803, %v4899
        %v4901 = vpop.f32.mrb[0].mxu0
        %v4902 = vpop.f32.mrb[0].mxu0
        %v4903 = vadd.f32 %v4803, %v4902
        %v4904 = vpop.f32.mrb[0].mxu0
        %4905 = vmatprep.mubr.bf16.mxu0 0
        %4906 = vmatmul.mubr.bf16.gmra.mrb[0].mxu0 %v4830
        %v4907 = vpop.f32.mrb[0].mxu0
        %v4908 = vadd.f32 %v4803, %v4907
        %v4909 = vpop.f32.mrb[0].mxu0
        %v4910 = vpop.f32.mrb[0].mxu0
        %v4911 = vadd.f32 %v4803, %v4910
        %v4912 = vpop.f32.mrb[0].mxu0
        %4913 = vmatprep.mubr.bf16.mxu0 0
        %4914 = vmatmul.mubr.bf16.gmra.mrb[0].mxu0 %v4833
        %v4915 = vpop.f32.mrb[0].mxu0
        %v4916 = vadd.f32 %v4803, %v4915
        %v4917 = vpop.f32.mrb[0].mxu0
        %v4918 = vpop.f32.mrb[0].mxu0
        %v4919 = vadd.f32 %v4803, %v4918
        %v4920 = vpop.f32.mrb[0].mxu0
        %4921 = vmatprep.mubr.bf16.mxu0 0
        %4922 = vmatmul.mubr.bf16.gmra.mrb[0].mxu0 %v4836
        %v4923 = vpop.f32.mrb[0].mxu0
        %v4924 = vadd.f32 %v4803, %v4923
        %v4925 = vpop.f32.mrb[0].mxu0
        %v4926 = vpop.f32.mrb[0].mxu0
        %v4927 = vadd.f32 %v4803, %v4926
        %v4928 = vpop.f32.mrb[0].mxu0
        %4929 = vmatprep.mubr.bf16.mxu0 0
        %4930 = vmatmul.mubr.bf16.gmra.mrb[0].mxu0 %v4839
        %v4931 = vpop.f32.mrb[0].mxu0
        %v4932 = vadd.f32 %v4803, %v4931
        %v4933 = vpop.f32.mrb[0].mxu0
        %v4934 = vpop.f32.mrb[0].mxu0
        %v4935 = vadd.f32 %v4803, %v4934
        %v4936 = vpop.f32.mrb[0].mxu0
        %4937 = vdwg.mxu0
        %v4938 = vmax.f32 %v4876, 0.0
        %v4939 = vmax.f32 %v4879, 0.0
        %v4940 = vmax.f32 %v4884, 0.0
        %v4941 = vmax.f32 %v4887, 0.0
        %v4942 = vmax.f32 %v4892, 0.0
        %v4943 = vmax.f32 %v4895, 0.0
        %v4944 = vmax.f32 %v4900, 0.0
        %v4945 = vmax.f32 %v4903, 0.0
        %v4946 = vmax.f32 %v4908, 0.0
        %v4947 = vmax.f32 %v4911, 0.0
        %v4948 = vmax.f32 %v4916, 0.0
        %v4949 = vmax.f32 %v4919, 0.0
        %v4950 = vmax.f32 %v4924, 0.0
        %v4951 = vmax.f32 %v4927, 0.0
        %v4952 = vmax.f32 %v4932, 0.0
        %v4953 = vmax.f32 %v4935, 0.0
        %v4954 = vpack.c.bf16 %v4939, %v4938
        %v4955 = vpack.c.bf16 %v4941, %v4940
        %v4956 = vpack.c.bf16 %v4943, %v4942
        %v4957 = vpack.c.bf16 %v4945, %v4944
        %v4958 = vpack.c.bf16 %v4947, %v4946
        %v4959 = vpack.c.bf16 %v4949, %v4948
        %v4960 = vpack.c.bf16 %v4951, %v4950
        %v4961 = vpack.c.bf16 %v4953, %v4952
        %v4962 = vld [vmem:[#allocation4] sm:$0xff]
        %v4963 = vld [vmem:[#allocation4 + $0x8] sm:$0xff]
        %v4964 = vld [vmem:[#allocation4 + $0x10] sm:$0xff]
        %v4965 = vld [vmem:[#allocation4 + $0x18] sm:$0xff]
        %v4966 = vld [vmem:[#allocation4 + $0x20] sm:$0xff]
        %v4967 = vld [vmem:[#allocation4 + $0x28] sm:$0xff]
        %v4968 = vld [vmem:[#allocation4 + $0x30] sm:$0xff]
        %v4969 = vld [vmem:[#allocation4 + $0x38] sm:$0xff]
        %v4970 = vld [vmem:[#allocation4 + $0x40] sm:$0xff]
        %v4971 = vld [vmem:[#allocation4 + $0x48] sm:$0xff]
        %v4972 = vld [vmem:[#allocation4 + $0x50] sm:$0xff]
        %v4973 = vld [vmem:[#allocation4 + $0x58] sm:$0xff]
        %v4974 = vld [vmem:[#allocation4 + $0x60] sm:$0xff]
        %v4975 = vld [vmem:[#allocation4 + $0x68] sm:$0xff]
        %v4976 = vld [vmem:[#allocation4 + $0x70] sm:$0xff]
        %v4977 = vld [vmem:[#allocation4 + $0x78] sm:$0xff]
        %v4978 = vld [vmem:[%s930] sm:$0xf]
        %v4979 = vld [vmem:[%s930 + $0x4] sm:$0xf]
        %v4980 = vld [vmem:[%s930 + $0x8] sm:$0xf]
        %v4981 = vld [vmem:[%s930 + $0xc] sm:$0xf]
        %v4982 = vld [vmem:[%s930 + $0x10] sm:$0xf]
        %v4983 = vld [vmem:[%s930 + $0x14] sm:$0xf]
        %v4984 = vld [vmem:[%s930 + $0x18] sm:$0xf]
        %v4985 = vld [vmem:[%s930 + $0x1c] sm:$0xf]
        %v4986 = vld [vmem:[%s930 + $0x20] sm:$0xf]
        %v4987 = vld [vmem:[%s930 + $0x24] sm:$0xf]
        %v4988 = vld [vmem:[%s930 + $0x28] sm:$0xf]
        %v4989 = vld [vmem:[%s930 + $0x2c] sm:$0xf]
        %v4990 = vld [vmem:[%s930 + $0x30] sm:$0xf]
        %v4991 = vld [vmem:[%s930 + $0x34] sm:$0xf]
        %v4992 = vld [vmem:[%s930 + $0x38] sm:$0xf]
        %v4993 = vld [vmem:[%s930 + $0x3c] sm:$0xf]
        %v5010 = vunpack.c.l.b16 %v4978
        %v5011 = vunpack.c.l.b16 %v4979
        %v5012 = vunpack.c.l.b16 %v4980
        %v5013 = vunpack.c.l.b16 %v4981
        %v5014 = vunpack.c.l.b16 %v4982
        %v5015 = vunpack.c.l.b16 %v4983
        %v5016 = vunpack.c.l.b16 %v4984
        %v5017 = vunpack.c.l.b16 %v4985
        %v5018 = vunpack.c.l.b16 %v4986
        %v5019 = vunpack.c.l.b16 %v4987
        %v5020 = vunpack.c.l.b16 %v4988
        %v5021 = vunpack.c.l.b16 %v4989
        %v5022 = vunpack.c.l.b16 %v4990
        %v5023 = vunpack.c.l.b16 %v4991
        %v5024 = vunpack.c.l.b16 %v4992
        %v5025 = vunpack.c.l.b16 %v4993
        %v5026 = vpack.c.b16 %v5011, %v5010
        %v5027 = vpack.c.b16 %v5013, %v5012
        %v5028 = vpack.c.b16 %v5015, %v5014
        %v5029 = vpack.c.b16 %v5017, %v5016
        %v5030 = vpack.c.b16 %v5019, %v5018
        %v5031 = vpack.c.b16 %v5021, %v5020
        %v5032 = vpack.c.b16 %v5023, %v5022
        %v5033 = vpack.c.b16 %v5025, %v5024
        %5042 = vmatprep.subr.bf16.mxu0 0
        %5043 = vmatpush1.bf16.msra.mxu0 %v5026
        %5044 = vmatprep.subr.bf16.mxu0 0
        %5045 = vmatpush1.bf16.msra.mxu0 %v5027
        %5046 = vmatprep.subr.bf16.mxu0 0
        %5047 = vmatpush1.bf16.msra.mxu0 %v5028
        %5048 = vmatprep.subr.bf16.mxu0 0
        %5049 = vmatpush1.bf16.msra.mxu0 %v5029
        %5050 = vmatprep.subr.bf16.mxu0 0
        %5051 = vmatpush1.bf16.msra.mxu0 %v5030
        %5052 = vmatprep.subr.bf16.mxu0 0
        %5053 = vmatpush1.bf16.msra.mxu0 %v5031
        %5054 = vmatprep.subr.bf16.mxu0 0
        %5055 = vmatpush1.bf16.msra.mxu0 %v5032
        %5056 = vmatprep.subr.bf16.mxu0 0
        %5057 = vmatpush1.bf16.msra.mxu0 %v5033
        %5058 = vmatprep.subr.bf16.mxu0 0
        %5059 = vmatpush1.bf16.msra.mxu0 0
        %5060 = vmatprep.subr.bf16.mxu0 0
        %5061 = vmatpush1.bf16.msra.mxu0 0
        %5062 = vmatprep.subr.bf16.mxu0 0
        %5063 = vmatpush1.bf16.msra.mxu0 0
        %5064 = vmatprep.subr.bf16.mxu0 0
        %5065 = vmatpush1.bf16.msra.mxu0 0
        %5066 = vmatprep.subr.bf16.mxu0 0
        %5067 = vmatpush1.bf16.msra.mxu0 0
        %5068 = vmatprep.subr.bf16.mxu0 0
        %5069 = vmatpush1.bf16.msra.mxu0 0
        %5070 = vmatprep.subr.bf16.mxu0 0
        %5071 = vmatpush1.bf16.msra.mxu0 0
        %5072 = vmatprep.subr.bf16.mxu0 0
        %5073 = vmatpush1.bf16.msra.mxu0 0
        %5074 = vmatprep.mubr.bf16.mxu0 0
        %5075 = vmatmul.mubr.bf16.gmra.mrb[0].mxu0 %v4954
        %v5076 = vpop.f32.mrb[0].mxu0
        %v5077 = vadd.f32 0.0, %v5076
        %v5078 = vpop.f32.mrb[0].mxu0
        %v5079 = vpop.f32.mrb[0].mxu0
        %v5080 = vadd.f32 0.0, %v5079
        %v5081 = vpop.f32.mrb[0].mxu0
        %5082 = vmatprep.mubr.bf16.mxu0 0
        %5083 = vmatmul.mubr.bf16.gmra.mrb[0].mxu0 %v4955
        %v5084 = vpop.f32.mrb[0].mxu0
        %v5085 = vadd.f32 0.0, %v5084
        %v5086 = vpop.f32.mrb[0].mxu0
        %v5087 = vpop.f32.mrb[0].mxu0
        %v5088 = vadd.f32 0.0, %v5087
        %v5089 = vpop.f32.mrb[0].mxu0
        %5090 = vmatprep.mubr.bf16.mxu0 0
        %5091 = vmatmul.mubr.bf16.gmra.mrb[0].mxu0 %v4956
        %v5092 = vpop.f32.mrb[0].mxu0
        %v5093 = vadd.f32 0.0, %v5092
        %v5094 = vpop.f32.mrb[0].mxu0
        %v5095 = vpop.f32.mrb[0].mxu0
        %v5096 = vadd.f32 0.0, %v5095
        %v5097 = vpop.f32.mrb[0].mxu0
        %5098 = vmatprep.mubr.bf16.mxu0 0
        %5099 = vmatmul.mubr.bf16.gmra.mrb[0].mxu0 %v4957
        %v5100 = vpop.f32.mrb[0].mxu0
        %v5101 = vadd.f32 0.0, %v5100
        %v5102 = vpop.f32.mrb[0].mxu0
        %v5103 = vpop.f32.mrb[0].mxu0
        %v5104 = vadd.f32 0.0, %v5103
        %v5105 = vpop.f32.mrb[0].mxu0
        %5106 = vmatprep.mubr.bf16.mxu0 0
        %5107 = vmatmul.mubr.bf16.gmra.mrb[0].mxu0 %v4958
        %v5108 = vpop.f32.mrb[0].mxu0
        %v5109 = vadd.f32 0.0, %v5108
        %v5110 = vpop.f32.mrb[0].mxu0
        %v5111 = vpop.f32.mrb[0].mxu0
        %v5112 = vadd.f32 0.0, %v5111
        %v5113 = vpop.f32.mrb[0].mxu0
        %5114 = vmatprep.mubr.bf16.mxu0 0
        %5115 = vmatmul.mubr.bf16.gmra.mrb[0].mxu0 %v4959
        %v5116 = vpop.f32.mrb[0].mxu0
        %v5117 = vadd.f32 0.0, %v5116
        %v5118 = vpop.f32.mrb[0].mxu0
        %v5119 = vpop.f32.mrb[0].mxu0
        %v5120 = vadd.f32 0.0, %v5119
        %v5121 = vpop.f32.mrb[0].mxu0
        %5122 = vmatprep.mubr.bf16.mxu0 0
        %5123 = vmatmul.mubr.bf16.gmra.mrb[0].mxu0 %v4960
        %v5124 = vpop.f32.mrb[0].mxu0
        %v5125 = vadd.f32 0.0, %v5124
        %v5126 = vpop.f32.mrb[0].mxu0
        %v5127 = vpop.f32.mrb[0].mxu0
        %v5128 = vadd.f32 0.0, %v5127
        %v5129 = vpop.f32.mrb[0].mxu0
        %5130 = vmatprep.mubr.bf16.mxu0 0
        %5131 = vmatmul.mubr.bf16.gmra.mrb[0].mxu0 %v4961
        %v5132 = vpop.f32.mrb[0].mxu0
        %v5133 = vadd.f32 0.0, %v5132
        %v5134 = vpop.f32.mrb[0].mxu0
        %v5135 = vpop.f32.mrb[0].mxu0
        %v5136 = vadd.f32 0.0, %v5135
        %v5137 = vpop.f32.mrb[0].mxu0
        %5138 = vdwg.mxu0
        %v5139 = vadd.f32 %v4962, %v5077
        %v5140 = vadd.f32 %v4963, %v5080
        %v5141 = vadd.f32 %v4964, %v5085
        %v5142 = vadd.f32 %v4965, %v5088
        %v5143 = vadd.f32 %v4966, %v5093
        %v5144 = vadd.f32 %v4967, %v5096
        %v5145 = vadd.f32 %v4968, %v5101
        %v5146 = vadd.f32 %v4969, %v5104
        %v5147 = vadd.f32 %v4970, %v5109
        %v5148 = vadd.f32 %v4971, %v5112
        %v5149 = vadd.f32 %v4972, %v5117
        %v5150 = vadd.f32 %v4973, %v5120
        %v5151 = vadd.f32 %v4974, %v5125
        %v5152 = vadd.f32 %v4975, %v5128
        %v5153 = vadd.f32 %v4976, %v5133
        %v5154 = vadd.f32 %v4977, %v5136
        %5155 = vst [vmem:[#allocation4] sm:$0xff] %v5139
        %5156 = vst [vmem:[#allocation4 + $0x8] sm:$0xff] %v5140
        %5157 = vst [vmem:[#allocation4 + $0x10] sm:$0xff] %v5141
        %5158 = vst [vmem:[#allocation4 + $0x18] sm:$0xff] %v5142
        %5159 = vst [vmem:[#allocation4 + $0x20] sm:$0xff] %v5143
        %5160 = vst [vmem:[#allocation4 + $0x28] sm:$0xff] %v5144
        %5161 = vst [vmem:[#allocation4 + $0x30] sm:$0xff] %v5145
        %5162 = vst [vmem:[#allocation4 + $0x38] sm:$0xff] %v5146
        %5163 = vst [vmem:[#allocation4 + $0x40] sm:$0xff] %v5147
        %5164 = vst [vmem:[#allocation4 + $0x48] sm:$0xff] %v5148
        %5165 = vst [vmem:[#allocation4 + $0x50] sm:$0xff] %v5149
        %5166 = vst [vmem:[#allocation4 + $0x58] sm:$0xff] %v5150
        %5167 = vst [vmem:[#allocation4 + $0x60] sm:$0xff] %v5151
        %5168 = vst [vmem:[#allocation4 + $0x68] sm:$0xff] %v5152
        %5169 = vst [vmem:[#allocation4 + $0x70] sm:$0xff] %v5153
        %5170 = vst [vmem:[#allocation4 + $0x78] sm:$0xff] %v5154
        %p5171 = scmp.eq.s32.totalorder %s55, 1
        // Predicated region
        $region157: #{mlp_att_twoway_conv.1} parent=87 // pred_check
          %p5172 = pneg %p5171
        $region158: #{mlp_att_twoway_conv.1} parent=87 // pred_check_branch
          %5174 = sbr.rel (%p5172) target = $region160
        $region159: #{mlp_att_twoway_conv.1} parent=87 // pred_region
          %v5175 = vld [vmem:[#allocation27] sm:$0xf]
          %v5176 = vld [vmem:[#allocation2] sm:$0xff]
          %v5177 = vld [vmem:[#allocation2 + $0x8] sm:$0xff]
          %v5178 = vld [vmem:[#allocation2 + $0x10] sm:$0xff]
          %v5179 = vld [vmem:[#allocation2 + $0x18] sm:$0xff]
          %v5180 = vld [vmem:[#allocation2 + $0x20] sm:$0xff]
          %v5181 = vld [vmem:[#allocation2 + $0x28] sm:$0xff]
          %v5182 = vld [vmem:[#allocation2 + $0x30] sm:$0xff]
          %v5183 = vld [vmem:[#allocation2 + $0x38] sm:$0xff]
          %v5184 = vld [vmem:[#allocation2 + $0x40] sm:$0xff]
          %v5185 = vld [vmem:[#allocation2 + $0x48] sm:$0xff]
          %v5186 = vld [vmem:[#allocation2 + $0x50] sm:$0xff]
          %v5187 = vld [vmem:[#allocation2 + $0x58] sm:$0xff]
          %v5188 = vld [vmem:[#allocation2 + $0x60] sm:$0xff]
          %v5189 = vld [vmem:[#allocation2 + $0x68] sm:$0xff]
          %v5190 = vld [vmem:[#allocation2 + $0x70] sm:$0xff]
          %v5191 = vld [vmem:[#allocation2 + $0x78] sm:$0xff]
          %v5192 = vlaneseq
          %v5193 = vshrl.u32 %v5192, 7
          %v5194 = vsub.s32 0, %v5193
          %v5195 = vrot.slane %v5175, %v5194
          %v5196 = vadd.f32 %v5176, %v5195
          %v5197 = vadd.f32 %v5177, %v5195
          %v5198 = vadd.f32 %v5178, %v5195
          %v5199 = vadd.f32 %v5179, %v5195
          %v5200 = vadd.f32 %v5180, %v5195
          %v5201 = vadd.f32 %v5181, %v5195
          %v5202 = vadd.f32 %v5182, %v5195
          %v5203 = vadd.f32 %v5183, %v5195
          %v5204 = vadd.f32 %v5184, %v5195
          %v5205 = vadd.f32 %v5185, %v5195
          %v5206 = vadd.f32 %v5186, %v5195
          %v5207 = vadd.f32 %v5187, %v5195
          %v5208 = vadd.f32 %v5188, %v5195
          %v5209 = vadd.f32 %v5189, %v5195
          %v5210 = vadd.f32 %v5190, %v5195
          %v5211 = vadd.f32 %v5191, %v5195
          %5212 = vst [vmem:[%s1054] sm:$0xff] %v5196
          %5213 = vst [vmem:[%s1054 + $0x8] sm:$0xff] %v5197
          %5214 = vst [vmem:[%s1054 + $0x10] sm:$0xff] %v5198
          %5215 = vst [vmem:[%s1054 + $0x18] sm:$0xff] %v5199
          %5216 = vst [vmem:[%s1054 + $0x20] sm:$0xff] %v5200
          %5217 = vst [vmem:[%s1054 + $0x28] sm:$0xff] %v5201
          %5218 = vst [vmem:[%s1054 + $0x30] sm:$0xff] %v5202
          %5219 = vst [vmem:[%s1054 + $0x38] sm:$0xff] %v5203
          %5220 = vst [vmem:[%s1054 + $0x40] sm:$0xff] %v5204
          %5221 = vst [vmem:[%s1054 + $0x48] sm:$0xff] %v5205
          %5222 = vst [vmem:[%s1054 + $0x50] sm:$0xff] %v5206
          %5223 = vst [vmem:[%s1054 + $0x58] sm:$0xff] %v5207
          %5224 = vst [vmem:[%s1054 + $0x60] sm:$0xff] %v5208
          %5225 = vst [vmem:[%s1054 + $0x68] sm:$0xff] %v5209
          %5226 = vst [vmem:[%s1054 + $0x70] sm:$0xff] %v5210
          %5227 = vst [vmem:[%s1054 + $0x78] sm:$0xff] %v5211
          %v5228 = vpack.c.bf16 %v5197, %v5196
          %v5229 = vpack.c.bf16 %v5199, %v5198
          %v5230 = vpack.c.bf16 %v5201, %v5200
          %v5231 = vpack.c.bf16 %v5203, %v5202
          %v5232 = vpack.c.bf16 %v5205, %v5204
          %v5233 = vpack.c.bf16 %v5207, %v5206
          %v5234 = vpack.c.bf16 %v5209, %v5208
          %v5235 = vpack.c.bf16 %v5211, %v5210
          %v5236 = vld [vmem:[#allocation21] sm:$0xf]
          %v5237 = vld [vmem:[#allocation21 + $0x4] sm:$0xf]
          %v5238 = vld [vmem:[#allocation21 + $0x8] sm:$0xf]
          %v5239 = vld [vmem:[#allocation21 + $0xc] sm:$0xf]
          %v5240 = vld [vmem:[#allocation21 + $0x10] sm:$0xf]
          %v5241 = vld [vmem:[#allocation21 + $0x14] sm:$0xf]
          %v5242 = vld [vmem:[#allocation21 + $0x18] sm:$0xf]
          %v5243 = vld [vmem:[#allocation21 + $0x1c] sm:$0xf]
          %v5244 = vld [vmem:[#allocation21 + $0x20] sm:$0xf]
          %v5245 = vld [vmem:[#allocation21 + $0x24] sm:$0xf]
          %v5246 = vld [vmem:[#allocation21 + $0x28] sm:$0xf]
          %v5247 = vld [vmem:[#allocation21 + $0x2c] sm:$0xf]
          %v5248 = vld [vmem:[#allocation21 + $0x30] sm:$0xf]
          %v5249 = vld [vmem:[#allocation21 + $0x34] sm:$0xf]
          %v5250 = vld [vmem:[#allocation21 + $0x38] sm:$0xf]
          %v5251 = vld [vmem:[#allocation21 + $0x3c] sm:$0xf]
          %v5252 = vld [vmem:[#allocation28] sm:$0x1]
          %v5254 = vlaneseq
          %v5255 = vshrl.u32 %v5254, 7
          %v5256 = vsub.s32 0, %v5255
          %v5257 = vrot.slane %v5252, %v5256
          %v5275 = vunpack.c.l.b16 %v5236
          %v5276 = vunpack.c.l.b16 %v5237
          %v5277 = vunpack.c.l.b16 %v5238
          %v5278 = vunpack.c.l.b16 %v5239
          %v5279 = vunpack.c.l.b16 %v5240
          %v5280 = vunpack.c.l.b16 %v5241
          %v5281 = vunpack.c.l.b16 %v5242
          %v5282 = vunpack.c.l.b16 %v5243
          %v5283 = vunpack.c.l.b16 %v5244
          %v5284 = vunpack.c.l.b16 %v5245
          %v5285 = vunpack.c.l.b16 %v5246
          %v5286 = vunpack.c.l.b16 %v5247
          %v5287 = vunpack.c.l.b16 %v5248
          %v5288 = vunpack.c.l.b16 %v5249
          %v5289 = vunpack.c.l.b16 %v5250
          %v5290 = vunpack.c.l.b16 %v5251
          %v5291 = vpack.c.b16 %v5276, %v5275
          %v5292 = vpack.c.b16 %v5278, %v5277
          %v5293 = vpack.c.b16 %v5280, %v5279
          %v5294 = vpack.c.b16 %v5282, %v5281
          %v5295 = vpack.c.b16 %v5284, %v5283
          %v5296 = vpack.c.b16 %v5286, %v5285
          %v5297 = vpack.c.b16 %v5288, %v5287
          %v5298 = vpack.c.b16 %v5290, %v5289
          %5307 = vmatprep.subr.bf16.mxu0 0
          %5308 = vmatpush1.bf16.msra.mxu0 %v5291
          %5309 = vmatprep.subr.bf16.mxu0 0
          %5310 = vmatpush1.bf16.msra.mxu0 %v5292
          %5311 = vmatprep.subr.bf16.mxu0 0
          %5312 = vmatpush1.bf16.msra.mxu0 %v5293
          %5313 = vmatprep.subr.bf16.mxu0 0
          %5314 = vmatpush1.bf16.msra.mxu0 %v5294
          %5315 = vmatprep.subr.bf16.mxu0 0
          %5316 = vmatpush1.bf16.msra.mxu0 %v5295
          %5317 = vmatprep.subr.bf16.mxu0 0
          %5318 = vmatpush1.bf16.msra.mxu0 %v5296
          %5319 = vmatprep.subr.bf16.mxu0 0
          %5320 = vmatpush1.bf16.msra.mxu0 %v5297
          %5321 = vmatprep.subr.bf16.mxu0 0
          %5322 = vmatpush1.bf16.msra.mxu0 %v5298
          %5323 = vmatprep.subr.bf16.mxu0 0
          %5324 = vmatpush1.bf16.msra.mxu0 0
          %5325 = vmatprep.subr.bf16.mxu0 0
          %5326 = vmatpush1.bf16.msra.mxu0 0
          %5327 = vmatprep.subr.bf16.mxu0 0
          %5328 = vmatpush1.bf16.msra.mxu0 0
          %5329 = vmatprep.subr.bf16.mxu0 0
          %5330 = vmatpush1.bf16.msra.mxu0 0
          %5331 = vmatprep.subr.bf16.mxu0 0
          %5332 = vmatpush1.bf16.msra.mxu0 0
          %5333 = vmatprep.subr.bf16.mxu0 0
          %5334 = vmatpush1.bf16.msra.mxu0 0
          %5335 = vmatprep.subr.bf16.mxu0 0
          %5336 = vmatpush1.bf16.msra.mxu0 0
          %5337 = vmatprep.subr.bf16.mxu0 0
          %5338 = vmatpush1.bf16.msra.mxu0 0
          %5339 = vmatprep.mubr.bf16.mxu0 0
          %5340 = vmatmul.mubr.bf16.gmra.mrb[0].mxu0 %v5228
          %v5341 = vpop.f32.mrb[0].mxu0
          %v5342 = vadd.f32 %v5257, %v5341
          %v5343 = vpop.f32.mrb[0].mxu0
          %v5344 = vpop.f32.mrb[0].mxu0
          %v5345 = vadd.f32 %v5257, %v5344
          %v5346 = vpop.f32.mrb[0].mxu0
          %5347 = vmatprep.mubr.bf16.mxu0 0
          %5348 = vmatmul.mubr.bf16.gmra.mrb[0].mxu0 %v5229
          %v5349 = vpop.f32.mrb[0].mxu0
          %v5350 = vadd.f32 %v5257, %v5349
          %v5351 = vpop.f32.mrb[0].mxu0
          %v5352 = vpop.f32.mrb[0].mxu0
          %v5353 = vadd.f32 %v5257, %v5352
          %v5354 = vpop.f32.mrb[0].mxu0
          %5355 = vmatprep.mubr.bf16.mxu0 0
          %5356 = vmatmul.mubr.bf16.gmra.mrb[0].mxu0 %v5230
          %v5357 = vpop.f32.mrb[0].mxu0
          %v5358 = vadd.f32 %v5257, %v5357
          %v5359 = vpop.f32.mrb[0].mxu0
          %v5360 = vpop.f32.mrb[0].mxu0
          %v5361 = vadd.f32 %v5257, %v5360
          %v5362 = vpop.f32.mrb[0].mxu0
          %5363 = vmatprep.mubr.bf16.mxu0 0
          %5364 = vmatmul.mubr.bf16.gmra.mrb[0].mxu0 %v5231
          %v5365 = vpop.f32.mrb[0].mxu0
          %v5366 = vadd.f32 %v5257, %v5365
          %v5367 = vpop.f32.mrb[0].mxu0
          %v5368 = vpop.f32.mrb[0].mxu0
          %v5369 = vadd.f32 %v5257, %v5368
          %v5370 = vpop.f32.mrb[0].mxu0
          %5371 = vmatprep.mubr.bf16.mxu0 0
          %5372 = vmatmul.mubr.bf16.gmra.mrb[0].mxu0 %v5232
          %v5373 = vpop.f32.mrb[0].mxu0
          %v5374 = vadd.f32 %v5257, %v5373
          %v5375 = vpop.f32.mrb[0].mxu0
          %v5376 = vpop.f32.mrb[0].mxu0
          %v5377 = vadd.f32 %v5257, %v5376
          %v5378 = vpop.f32.mrb[0].mxu0
          %5379 = vmatprep.mubr.bf16.mxu0 0
          %5380 = vmatmul.mubr.bf16.gmra.mrb[0].mxu0 %v5233
          %v5381 = vpop.f32.mrb[0].mxu0
          %v5382 = vadd.f32 %v5257, %v5381
          %v5383 = vpop.f32.mrb[0].mxu0
          %v5384 = vpop.f32.mrb[0].mxu0
          %v5385 = vadd.f32 %v5257, %v5384
          %v5386 = vpop.f32.mrb[0].mxu0
          %5387 = vmatprep.mubr.bf16.mxu0 0
          %5388 = vmatmul.mubr.bf16.gmra.mrb[0].mxu0 %v5234
          %v5389 = vpop.f32.mrb[0].mxu0
          %v5390 = vadd.f32 %v5257, %v5389
          %v5391 = vpop.f32.mrb[0].mxu0
          %v5392 = vpop.f32.mrb[0].mxu0
          %v5393 = vadd.f32 %v5257, %v5392
          %v5394 = vpop.f32.mrb[0].mxu0
          %5395 = vmatprep.mubr.bf16.mxu0 0
          %5396 = vmatmul.mubr.bf16.gmra.mrb[0].mxu0 %v5235
          %v5397 = vpop.f32.mrb[0].mxu0
          %v5398 = vadd.f32 %v5257, %v5397
          %v5399 = vpop.f32.mrb[0].mxu0
          %v5400 = vpop.f32.mrb[0].mxu0
          %v5401 = vadd.f32 %v5257, %v5400
          %v5402 = vpop.f32.mrb[0].mxu0
          %5403 = vdwg.mxu0
          %5404 = vmax.xlane.f32.xlu0 %v5342
          %v5405 = vpop.xlane.xlu0 %5404
          %5406 = vmax.xlane.f32.xlu0 %v5345
          %v5407 = vpop.xlane.xlu0 %5406
          %5408 = vmax.xlane.f32.xlu0 %v5350
          %v5409 = vpop.xlane.xlu0 %5408
          %5410 = vmax.xlane.f32.xlu0 %v5353
          %v5411 = vpop.xlane.xlu0 %5410
          %5412 = vmax.xlane.f32.xlu0 %v5358
          %v5413 = vpop.xlane.xlu0 %5412
          %5414 = vmax.xlane.f32.xlu0 %v5361
          %v5415 = vpop.xlane.xlu0 %5414
          %5416 = vmax.xlane.f32.xlu0 %v5366
          %v5417 = vpop.xlane.xlu0 %5416
          %5418 = vmax.xlane.f32.xlu0 %v5369
          %v5419 = vpop.xlane.xlu0 %5418
          %5420 = vmax.xlane.f32.xlu0 %v5374
          %v5421 = vpop.xlane.xlu0 %5420
          %5422 = vmax.xlane.f32.xlu0 %v5377
          %v5423 = vpop.xlane.xlu0 %5422
          %5424 = vmax.xlane.f32.xlu0 %v5382
          %v5425 = vpop.xlane.xlu0 %5424
          %5426 = vmax.xlane.f32.xlu0 %v5385
          %v5427 = vpop.xlane.xlu0 %5426
          %5428 = vmax.xlane.f32.xlu0 %v5390
          %v5429 = vpop.xlane.xlu0 %5428
          %5430 = vmax.xlane.f32.xlu0 %v5393
          %v5431 = vpop.xlane.xlu0 %5430
          %5432 = vmax.xlane.f32.xlu0 %v5398
          %v5433 = vpop.xlane.xlu0 %5432
          %5434 = vmax.xlane.f32.xlu0 %v5401
          %v5435 = vpop.xlane.xlu0 %5434
          %v5436 = vsub.f32 %v5342, %v5405
          %v5437 = vsub.f32 %v5345, %v5407
          %v5438 = vsub.f32 %v5350, %v5409
          %v5439 = vsub.f32 %v5353, %v5411
          %v5440 = vsub.f32 %v5358, %v5413
          %v5441 = vsub.f32 %v5361, %v5415
          %v5442 = vsub.f32 %v5366, %v5417
          %v5443 = vsub.f32 %v5369, %v5419
          %v5444 = vsub.f32 %v5374, %v5421
          %v5445 = vsub.f32 %v5377, %v5423
          %v5446 = vsub.f32 %v5382, %v5425
          %v5447 = vsub.f32 %v5385, %v5427
          %v5448 = vsub.f32 %v5390, %v5429
          %v5449 = vsub.f32 %v5393, %v5431
          %v5450 = vsub.f32 %v5398, %v5433
          %v5451 = vsub.f32 %v5401, %v5435
          %v5452 = vmul.f32 %v5436, 1.442695
          %v5453 = vpow.pop %v5452
          %v5454 = vmul.f32 %v5437, 1.442695
          %v5455 = vpow.pop %v5454
          %v5456 = vmul.f32 %v5438, 1.442695
          %v5457 = vpow.pop %v5456
          %v5458 = vmul.f32 %v5439, 1.442695
          %v5459 = vpow.pop %v5458
          %v5460 = vmul.f32 %v5440, 1.442695
          %v5461 = vpow.pop %v5460
          %v5462 = vmul.f32 %v5441, 1.442695
          %v5463 = vpow.pop %v5462
          %v5464 = vmul.f32 %v5442, 1.442695
          %v5465 = vpow.pop %v5464
          %v5466 = vmul.f32 %v5443, 1.442695
          %v5467 = vpow.pop %v5466
          %v5468 = vmul.f32 %v5444, 1.442695
          %v5469 = vpow.pop %v5468
          %v5470 = vmul.f32 %v5445, 1.442695
          %v5471 = vpow.pop %v5470
          %v5472 = vmul.f32 %v5446, 1.442695
          %v5473 = vpow.pop %v5472
          %v5474 = vmul.f32 %v5447, 1.442695
          %v5475 = vpow.pop %v5474
          %v5476 = vmul.f32 %v5448, 1.442695
          %v5477 = vpow.pop %v5476
          %v5478 = vmul.f32 %v5449, 1.442695
          %v5479 = vpow.pop %v5478
          %v5480 = vmul.f32 %v5450, 1.442695
          %v5481 = vpow.pop %v5480
          %v5482 = vmul.f32 %v5451, 1.442695
          %v5483 = vpow.pop %v5482
          %5484 = vadd.xlane.f32.xlu0 %v5453
          %v5485 = vpop.xlane.xlu0 %5484
          %5486 = vadd.xlane.f32.xlu0 %v5455
          %v5487 = vpop.xlane.xlu0 %5486
          %5488 = vadd.xlane.f32.xlu0 %v5457
          %v5489 = vpop.xlane.xlu0 %5488
          %5490 = vadd.xlane.f32.xlu0 %v5459
          %v5491 = vpop.xlane.xlu0 %5490
          %5492 = vadd.xlane.f32.xlu0 %v5461
          %v5493 = vpop.xlane.xlu0 %5492
          %5494 = vadd.xlane.f32.xlu0 %v5463
          %v5495 = vpop.xlane.xlu0 %5494
          %5496 = vadd.xlane.f32.xlu0 %v5465
          %v5497 = vpop.xlane.xlu0 %5496
          %5498 = vadd.xlane.f32.xlu0 %v5467
          %v5499 = vpop.xlane.xlu0 %5498
          %5500 = vadd.xlane.f32.xlu0 %v5469
          %v5501 = vpop.xlane.xlu0 %5500
          %5502 = vadd.xlane.f32.xlu0 %v5471
          %v5503 = vpop.xlane.xlu0 %5502
          %5504 = vadd.xlane.f32.xlu0 %v5473
          %v5505 = vpop.xlane.xlu0 %5504
          %5506 = vadd.xlane.f32.xlu0 %v5475
          %v5507 = vpop.xlane.xlu0 %5506
          %5508 = vadd.xlane.f32.xlu0 %v5477
          %v5509 = vpop.xlane.xlu0 %5508
          %5510 = vadd.xlane.f32.xlu0 %v5479
          %v5511 = vpop.xlane.xlu0 %5510
          %5512 = vadd.xlane.f32.xlu0 %v5481
          %v5513 = vpop.xlane.xlu0 %5512
          %5514 = vadd.xlane.f32.xlu0 %v5483
          %v5515 = vpop.xlane.xlu0 %5514
          %v5516 = vlog2.pop %v5485
          %v5517 = vmul.f32 %v5516, 0.6931472
          %v5518 = vlog2.pop %v5487
          %v5519 = vmul.f32 %v5518, 0.6931472
          %v5520 = vlog2.pop %v5489
          %v5521 = vmul.f32 %v5520, 0.6931472
          %v5522 = vlog2.pop %v5491
          %v5523 = vmul.f32 %v5522, 0.6931472
          %v5524 = vlog2.pop %v5493
          %v5525 = vmul.f32 %v5524, 0.6931472
          %v5526 = vlog2.pop %v5495
          %v5527 = vmul.f32 %v5526, 0.6931472
          %v5528 = vlog2.pop %v5497
          %v5529 = vmul.f32 %v5528, 0.6931472
          %v5530 = vlog2.pop %v5499
          %v5531 = vmul.f32 %v5530, 0.6931472
          %v5532 = vlog2.pop %v5501
          %v5533 = vmul.f32 %v5532, 0.6931472
          %v5534 = vlog2.pop %v5503
          %v5535 = vmul.f32 %v5534, 0.6931472
          %v5536 = vlog2.pop %v5505
          %v5537 = vmul.f32 %v5536, 0.6931472
          %v5538 = vlog2.pop %v5507
          %v5539 = vmul.f32 %v5538, 0.6931472
          %v5540 = vlog2.pop %v5509
          %v5541 = vmul.f32 %v5540, 0.6931472
          %v5542 = vlog2.pop %v5511
          %v5543 = vmul.f32 %v5542, 0.6931472
          %v5544 = vlog2.pop %v5513
          %v5545 = vmul.f32 %v5544, 0.6931472
          %v5546 = vlog2.pop %v5515
          %v5547 = vmul.f32 %v5546, 0.6931472
          %v5548 = vsub.f32 %v5436, %v5517
          %v5549 = vsub.f32 %v5437, %v5519
          %v5550 = vsub.f32 %v5438, %v5521
          %v5551 = vsub.f32 %v5439, %v5523
          %v5552 = vsub.f32 %v5440, %v5525
          %v5553 = vsub.f32 %v5441, %v5527
          %v5554 = vsub.f32 %v5442, %v5529
          %v5555 = vsub.f32 %v5443, %v5531
          %v5556 = vsub.f32 %v5444, %v5533
          %v5557 = vsub.f32 %v5445, %v5535
          %v5558 = vsub.f32 %v5446, %v5537
          %v5559 = vsub.f32 %v5447, %v5539
          %v5560 = vsub.f32 %v5448, %v5541
          %v5561 = vsub.f32 %v5449, %v5543
          %v5562 = vsub.f32 %v5450, %v5545
          %v5563 = vsub.f32 %v5451, %v5547
          %5564 = vst [vmem:[%s1068] sm:$0xff] %v5548
          %5565 = vst [vmem:[%s1068 + $0x8] sm:$0xff] %v5549
          %5566 = vst [vmem:[%s1068 + $0x10] sm:$0xff] %v5550
          %5567 = vst [vmem:[%s1068 + $0x18] sm:$0xff] %v5551
          %5568 = vst [vmem:[%s1068 + $0x20] sm:$0xff] %v5552
          %5569 = vst [vmem:[%s1068 + $0x28] sm:$0xff] %v5553
          %5570 = vst [vmem:[%s1068 + $0x30] sm:$0xff] %v5554
          %5571 = vst [vmem:[%s1068 + $0x38] sm:$0xff] %v5555
          %5572 = vst [vmem:[%s1068 + $0x40] sm:$0xff] %v5556
          %5573 = vst [vmem:[%s1068 + $0x48] sm:$0xff] %v5557
          %5574 = vst [vmem:[%s1068 + $0x50] sm:$0xff] %v5558
          %5575 = vst [vmem:[%s1068 + $0x58] sm:$0xff] %v5559
          %5576 = vst [vmem:[%s1068 + $0x60] sm:$0xff] %v5560
          %5577 = vst [vmem:[%s1068 + $0x68] sm:$0xff] %v5561
          %5578 = vst [vmem:[%s1068 + $0x70] sm:$0xff] %v5562
          %5579 = vst [vmem:[%s1068 + $0x78] sm:$0xff] %v5563
          %v5580 = vld [vmem:[#allocation3] sm:$0xff]
          %v5581 = vld [vmem:[#allocation3 + $0x8] sm:$0xff]
          %v5582 = vld [vmem:[#allocation3 + $0x10] sm:$0xff]
          %v5583 = vld [vmem:[#allocation3 + $0x18] sm:$0xff]
          %v5584 = vld [vmem:[#allocation3 + $0x20] sm:$0xff]
          %v5585 = vld [vmem:[#allocation3 + $0x28] sm:$0xff]
          %v5586 = vld [vmem:[#allocation3 + $0x30] sm:$0xff]
          %v5587 = vld [vmem:[#allocation3 + $0x38] sm:$0xff]
          %v5588 = vld [vmem:[#allocation3 + $0x40] sm:$0xff]
          %v5589 = vld [vmem:[#allocation3 + $0x48] sm:$0xff]
          %v5590 = vld [vmem:[#allocation3 + $0x50] sm:$0xff]
          %v5591 = vld [vmem:[#allocation3 + $0x58] sm:$0xff]
          %v5592 = vld [vmem:[#allocation3 + $0x60] sm:$0xff]
          %v5593 = vld [vmem:[#allocation3 + $0x68] sm:$0xff]
          %v5594 = vld [vmem:[#allocation3 + $0x70] sm:$0xff]
          %v5595 = vld [vmem:[#allocation3 + $0x78] sm:$0xff]
          %v5596 = vlaneseq
          %v5597 = vshrl.u32 %v5596, 7
          %v5598 = vsub.s32 1, %v5597
          %v5599 = vrot.slane %v5175, %v5598
          %v5600 = vadd.f32 %v5580, %v5599
          %v5601 = vadd.f32 %v5581, %v5599
          %v5602 = vadd.f32 %v5582, %v5599
          %v5603 = vadd.f32 %v5583, %v5599
          %v5604 = vadd.f32 %v5584, %v5599
          %v5605 = vadd.f32 %v5585, %v5599
          %v5606 = vadd.f32 %v5586, %v5599
          %v5607 = vadd.f32 %v5587, %v5599
          %v5608 = vadd.f32 %v5588, %v5599
          %v5609 = vadd.f32 %v5589, %v5599
          %v5610 = vadd.f32 %v5590, %v5599
          %v5611 = vadd.f32 %v5591, %v5599
          %v5612 = vadd.f32 %v5592, %v5599
          %v5613 = vadd.f32 %v5593, %v5599
          %v5614 = vadd.f32 %v5594, %v5599
          %v5615 = vadd.f32 %v5595, %v5599
          %v5616 = vld [vmem:[#allocation4] sm:$0xff]
          %v5617 = vld [vmem:[#allocation4 + $0x8] sm:$0xff]
          %v5618 = vld [vmem:[#allocation4 + $0x10] sm:$0xff]
          %v5619 = vld [vmem:[#allocation4 + $0x18] sm:$0xff]
          %v5620 = vld [vmem:[#allocation4 + $0x20] sm:$0xff]
          %v5621 = vld [vmem:[#allocation4 + $0x28] sm:$0xff]
          %v5622 = vld [vmem:[#allocation4 + $0x30] sm:$0xff]
          %v5623 = vld [vmem:[#allocation4 + $0x38] sm:$0xff]
          %v5624 = vld [vmem:[#allocation4 + $0x40] sm:$0xff]
          %v5625 = vld [vmem:[#allocation4 + $0x48] sm:$0xff]
          %v5626 = vld [vmem:[#allocation4 + $0x50] sm:$0xff]
          %v5627 = vld [vmem:[#allocation4 + $0x58] sm:$0xff]
          %v5628 = vld [vmem:[#allocation4 + $0x60] sm:$0xff]
          %v5629 = vld [vmem:[#allocation4 + $0x68] sm:$0xff]
          %v5630 = vld [vmem:[#allocation4 + $0x70] sm:$0xff]
          %v5631 = vld [vmem:[#allocation4 + $0x78] sm:$0xff]
          %v5632 = vlaneseq
          %v5633 = vshrl.u32 %v5632, 7
          %v5634 = vsub.s32 2, %v5633
          %v5635 = vrot.slane %v5175, %v5634
          %v5636 = vadd.f32 %v5616, %v5635
          %v5637 = vadd.f32 %v5617, %v5635
          %v5638 = vadd.f32 %v5618, %v5635
          %v5639 = vadd.f32 %v5619, %v5635
          %v5640 = vadd.f32 %v5620, %v5635
          %v5641 = vadd.f32 %v5621, %v5635
          %v5642 = vadd.f32 %v5622, %v5635
          %v5643 = vadd.f32 %v5623, %v5635
          %v5644 = vadd.f32 %v5624, %v5635
          %v5645 = vadd.f32 %v5625, %v5635
          %v5646 = vadd.f32 %v5626, %v5635
          %v5647 = vadd.f32 %v5627, %v5635
          %v5648 = vadd.f32 %v5628, %v5635
          %v5649 = vadd.f32 %v5629, %v5635
          %v5650 = vadd.f32 %v5630, %v5635
          %v5651 = vadd.f32 %v5631, %v5635
          %v5652 = vmax.f32 %v5600, 0.0
          %v5653 = vmax.f32 %v5601, 0.0
          %v5654 = vmax.f32 %v5602, 0.0
          %v5655 = vmax.f32 %v5603, 0.0
          %v5656 = vmax.f32 %v5604, 0.0
          %v5657 = vmax.f32 %v5605, 0.0
          %v5658 = vmax.f32 %v5606, 0.0
          %v5659 = vmax.f32 %v5607, 0.0
          %v5660 = vmax.f32 %v5608, 0.0
          %v5661 = vmax.f32 %v5609, 0.0
          %v5662 = vmax.f32 %v5610, 0.0
          %v5663 = vmax.f32 %v5611, 0.0
          %v5664 = vmax.f32 %v5612, 0.0
          %v5665 = vmax.f32 %v5613, 0.0
          %v5666 = vmax.f32 %v5614, 0.0
          %v5667 = vmax.f32 %v5615, 0.0
          %v5668 = vpack.c.bf16 %v5653, %v5652
          %v5669 = vpack.c.bf16 %v5655, %v5654
          %v5670 = vpack.c.bf16 %v5657, %v5656
          %v5671 = vpack.c.bf16 %v5659, %v5658
          %v5672 = vpack.c.bf16 %v5661, %v5660
          %v5673 = vpack.c.bf16 %v5663, %v5662
          %v5674 = vpack.c.bf16 %v5665, %v5664
          %v5675 = vpack.c.bf16 %v5667, %v5666
          %v5676 = vmax.f32 %v5636, 0.0
          %v5677 = vmax.f32 %v5637, 0.0
          %v5678 = vmax.f32 %v5638, 0.0
          %v5679 = vmax.f32 %v5639, 0.0
          %v5680 = vmax.f32 %v5640, 0.0
          %v5681 = vmax.f32 %v5641, 0.0
          %v5682 = vmax.f32 %v5642, 0.0
          %v5683 = vmax.f32 %v5643, 0.0
          %v5684 = vmax.f32 %v5644, 0.0
          %v5685 = vmax.f32 %v5645, 0.0
          %v5686 = vmax.f32 %v5646, 0.0
          %v5687 = vmax.f32 %v5647, 0.0
          %v5688 = vmax.f32 %v5648, 0.0
          %v5689 = vmax.f32 %v5649, 0.0
          %v5690 = vmax.f32 %v5650, 0.0
          %v5691 = vmax.f32 %v5651, 0.0
          %v5692 = vpack.c.bf16 %v5677, %v5676
          %v5693 = vpack.c.bf16 %v5679, %v5678
          %v5694 = vpack.c.bf16 %v5681, %v5680
          %v5695 = vpack.c.bf16 %v5683, %v5682
          %v5696 = vpack.c.bf16 %v5685, %v5684
          %v5697 = vpack.c.bf16 %v5687, %v5686
          %v5698 = vpack.c.bf16 %v5689, %v5688
          %v5699 = vpack.c.bf16 %v5691, %v5690
          %v5700 = vld [vmem:[#allocation22] sm:$0xf]
          %v5701 = vld [vmem:[#allocation22 + $0x4] sm:$0xf]
          %v5702 = vld [vmem:[#allocation22 + $0x8] sm:$0xf]
          %v5703 = vld [vmem:[#allocation22 + $0xc] sm:$0xf]
          %v5704 = vld [vmem:[#allocation22 + $0x10] sm:$0xf]
          %v5705 = vld [vmem:[#allocation22 + $0x14] sm:$0xf]
          %v5706 = vld [vmem:[#allocation22 + $0x18] sm:$0xf]
          %v5707 = vld [vmem:[#allocation22 + $0x1c] sm:$0xf]
          %v5708 = vld [vmem:[#allocation22 + $0x20] sm:$0xf]
          %v5709 = vld [vmem:[#allocation22 + $0x24] sm:$0xf]
          %v5710 = vld [vmem:[#allocation22 + $0x28] sm:$0xf]
          %v5711 = vld [vmem:[#allocation22 + $0x2c] sm:$0xf]
          %v5712 = vld [vmem:[#allocation22 + $0x30] sm:$0xf]
          %v5713 = vld [vmem:[#allocation22 + $0x34] sm:$0xf]
          %v5714 = vld [vmem:[#allocation22 + $0x38] sm:$0xf]
          %v5715 = vld [vmem:[#allocation22 + $0x3c] sm:$0xf]
          %v5716 = vld [vmem:[#allocation24] sm:$0xf]
          %v5717 = vld [vmem:[#allocation24 + $0x4] sm:$0xf]
          %v5718 = vld [vmem:[#allocation24 + $0x8] sm:$0xf]
          %v5719 = vld [vmem:[#allocation24 + $0xc] sm:$0xf]
          %v5720 = vld [vmem:[#allocation24 + $0x10] sm:$0xf]
          %v5721 = vld [vmem:[#allocation24 + $0x14] sm:$0xf]
          %v5722 = vld [vmem:[#allocation24 + $0x18] sm:$0xf]
          %v5723 = vld [vmem:[#allocation24 + $0x1c] sm:$0xf]
          %v5724 = vld [vmem:[#allocation24 + $0x20] sm:$0xf]
          %v5725 = vld [vmem:[#allocation24 + $0x24] sm:$0xf]
          %v5726 = vld [vmem:[#allocation24 + $0x28] sm:$0xf]
          %v5727 = vld [vmem:[#allocation24 + $0x2c] sm:$0xf]
          %v5728 = vld [vmem:[#allocation24 + $0x30] sm:$0xf]
          %v5729 = vld [vmem:[#allocation24 + $0x34] sm:$0xf]
          %v5730 = vld [vmem:[#allocation24 + $0x38] sm:$0xf]
          %v5731 = vld [vmem:[#allocation24 + $0x3c] sm:$0xf]
          %v5748 = vunpack.c.l.b16 %v5716
          %v5749 = vunpack.c.l.b16 %v5717
          %v5750 = vunpack.c.l.b16 %v5718
          %v5751 = vunpack.c.l.b16 %v5719
          %v5752 = vunpack.c.l.b16 %v5720
          %v5753 = vunpack.c.l.b16 %v5721
          %v5754 = vunpack.c.l.b16 %v5722
          %v5755 = vunpack.c.l.b16 %v5723
          %v5756 = vunpack.c.l.b16 %v5724
          %v5757 = vunpack.c.l.b16 %v5725
          %v5758 = vunpack.c.l.b16 %v5726
          %v5759 = vunpack.c.l.b16 %v5727
          %v5760 = vunpack.c.l.b16 %v5728
          %v5761 = vunpack.c.l.b16 %v5729
          %v5762 = vunpack.c.l.b16 %v5730
          %v5763 = vunpack.c.l.b16 %v5731
          %v5764 = vpack.c.b16 %v5749, %v5748
          %v5765 = vpack.c.b16 %v5751, %v5750
          %v5766 = vpack.c.b16 %v5753, %v5752
          %v5767 = vpack.c.b16 %v5755, %v5754
          %v5768 = vpack.c.b16 %v5757, %v5756
          %v5769 = vpack.c.b16 %v5759, %v5758
          %v5770 = vpack.c.b16 %v5761, %v5760
          %v5771 = vpack.c.b16 %v5763, %v5762
          %5780 = vmatprep.subr.bf16.mxu0 0
          %5781 = vmatpush1.bf16.msra.mxu0 %v5764
          %5782 = vmatprep.subr.bf16.mxu0 0
          %5783 = vmatpush1.bf16.msra.mxu0 %v5765
          %5784 = vmatprep.subr.bf16.mxu0 0
          %5785 = vmatpush1.bf16.msra.mxu0 %v5766
          %5786 = vmatprep.subr.bf16.mxu0 0
          %5787 = vmatpush1.bf16.msra.mxu0 %v5767
          %5788 = vmatprep.subr.bf16.mxu0 0
          %5789 = vmatpush1.bf16.msra.mxu0 %v5768
          %5790 = vmatprep.subr.bf16.mxu0 0
          %5791 = vmatpush1.bf16.msra.mxu0 %v5769
          %5792 = vmatprep.subr.bf16.mxu0 0
          %5793 = vmatpush1.bf16.msra.mxu0 %v5770
          %5794 = vmatprep.subr.bf16.mxu0 0
          %5795 = vmatpush1.bf16.msra.mxu0 %v5771
          %5796 = vmatprep.subr.bf16.mxu0 0
          %5797 = vmatpush1.bf16.msra.mxu0 0
          %5798 = vmatprep.subr.bf16.mxu0 0
          %5799 = vmatpush1.bf16.msra.mxu0 0
          %5800 = vmatprep.subr.bf16.mxu0 0
          %5801 = vmatpush1.bf16.msra.mxu0 0
          %5802 = vmatprep.subr.bf16.mxu0 0
          %5803 = vmatpush1.bf16.msra.mxu0 0
          %5804 = vmatprep.subr.bf16.mxu0 0
          %5805 = vmatpush1.bf16.msra.mxu0 0
          %5806 = vmatprep.subr.bf16.mxu0 0
          %5807 = vmatpush1.bf16.msra.mxu0 0
          %5808 = vmatprep.subr.bf16.mxu0 0
          %5809 = vmatpush1.bf16.msra.mxu0 0
          %5810 = vmatprep.subr.bf16.mxu0 0
          %5811 = vmatpush1.bf16.msra.mxu0 0
          %5812 = vmatprep.mubr.bf16.mxu0 0
          %5813 = vmatmul.mubr.bf16.gmra.mrb[0].mxu0 %v5692
          %v5814 = vpop.f32.mrb[0].mxu0
          %v5815 = vadd.f32 0.0, %v5814
          %v5816 = vpop.f32.mrb[0].mxu0
          %v5817 = vpop.f32.mrb[0].mxu0
          %v5818 = vadd.f32 0.0, %v5817
          %v5819 = vpop.f32.mrb[0].mxu0
          %5820 = vmatprep.mubr.bf16.mxu0 0
          %5821 = vmatmul.mubr.bf16.gmra.mrb[0].mxu0 %v5693
          %v5822 = vpop.f32.mrb[0].mxu0
          %v5823 = vadd.f32 0.0, %v5822
          %v5824 = vpop.f32.mrb[0].mxu0
          %v5825 = vpop.f32.mrb[0].mxu0
          %v5826 = vadd.f32 0.0, %v5825
          %v5827 = vpop.f32.mrb[0].mxu0
          %5828 = vmatprep.mubr.bf16.mxu0 0
          %5829 = vmatmul.mubr.bf16.gmra.mrb[0].mxu0 %v5694
          %v5830 = vpop.f32.mrb[0].mxu0
          %v5831 = vadd.f32 0.0, %v5830
          %v5832 = vpop.f32.mrb[0].mxu0
          %v5833 = vpop.f32.mrb[0].mxu0
          %v5834 = vadd.f32 0.0, %v5833
          %v5835 = vpop.f32.mrb[0].mxu0
          %5836 = vmatprep.mubr.bf16.mxu0 0
          %5837 = vmatmul.mubr.bf16.gmra.mrb[0].mxu0 %v5695
          %v5838 = vpop.f32.mrb[0].mxu0
          %v5839 = vadd.f32 0.0, %v5838
          %v5840 = vpop.f32.mrb[0].mxu0
          %v5841 = vpop.f32.mrb[0].mxu0
          %v5842 = vadd.f32 0.0, %v5841
          %v5843 = vpop.f32.mrb[0].mxu0
          %5844 = vmatprep.mubr.bf16.mxu0 0
          %5845 = vmatmul.mubr.bf16.gmra.mrb[0].mxu0 %v5696
          %v5846 = vpop.f32.mrb[0].mxu0
          %v5847 = vadd.f32 0.0, %v5846
          %v5848 = vpop.f32.mrb[0].mxu0
          %v5849 = vpop.f32.mrb[0].mxu0
          %v5850 = vadd.f32 0.0, %v5849
          %v5851 = vpop.f32.mrb[0].mxu0
          %5852 = vmatprep.mubr.bf16.mxu0 0
          %5853 = vmatmul.mubr.bf16.gmra.mrb[0].mxu0 %v5697
          %v5854 = vpop.f32.mrb[0].mxu0
          %v5855 = vadd.f32 0.0, %v5854
          %v5856 = vpop.f32.mrb[0].mxu0
          %v5857 = vpop.f32.mrb[0].mxu0
          %v5858 = vadd.f32 0.0, %v5857
          %v5859 = vpop.f32.mrb[0].mxu0
          %5860 = vmatprep.mubr.bf16.mxu0 0
          %5861 = vmatmul.mubr.bf16.gmra.mrb[0].mxu0 %v5698
          %v5862 = vpop.f32.mrb[0].mxu0
          %v5863 = vadd.f32 0.0, %v5862
          %v5864 = vpop.f32.mrb[0].mxu0
          %v5865 = vpop.f32.mrb[0].mxu0
          %v5866 = vadd.f32 0.0, %v5865
          %v5867 = vpop.f32.mrb[0].mxu0
          %5868 = vmatprep.mubr.bf16.mxu0 0
          %5869 = vmatmul.mubr.bf16.gmra.mrb[0].mxu0 %v5699
          %v5870 = vpop.f32.mrb[0].mxu0
          %v5871 = vadd.f32 0.0, %v5870
          %v5872 = vpop.f32.mrb[0].mxu0
          %v5873 = vpop.f32.mrb[0].mxu0
          %v5874 = vadd.f32 0.0, %v5873
          %v5875 = vpop.f32.mrb[0].mxu0
          %5876 = vdwg.mxu0
          %v5893 = vunpack.c.l.b16 %v5700
          %v5894 = vunpack.c.l.b16 %v5701
          %v5895 = vunpack.c.l.b16 %v5702
          %v5896 = vunpack.c.l.b16 %v5703
          %v5897 = vunpack.c.l.b16 %v5704
          %v5898 = vunpack.c.l.b16 %v5705
          %v5899 = vunpack.c.l.b16 %v5706
          %v5900 = vunpack.c.l.b16 %v5707
          %v5901 = vunpack.c.l.b16 %v5708
          %v5902 = vunpack.c.l.b16 %v5709
          %v5903 = vunpack.c.l.b16 %v5710
          %v5904 = vunpack.c.l.b16 %v5711
          %v5905 = vunpack.c.l.b16 %v5712
          %v5906 = vunpack.c.l.b16 %v5713
          %v5907 = vunpack.c.l.b16 %v5714
          %v5908 = vunpack.c.l.b16 %v5715
          %v5909 = vpack.c.b16 %v5894, %v5893
          %v5910 = vpack.c.b16 %v5896, %v5895
          %v5911 = vpack.c.b16 %v5898, %v5897
          %v5912 = vpack.c.b16 %v5900, %v5899
          %v5913 = vpack.c.b16 %v5902, %v5901
          %v5914 = vpack.c.b16 %v5904, %v5903
          %v5915 = vpack.c.b16 %v5906, %v5905
          %v5916 = vpack.c.b16 %v5908, %v5907
          %5925 = vmatprep.subr.bf16.mxu0 0
          %5926 = vmatpush1.bf16.msra.mxu0 %v5909
          %5927 = vmatprep.subr.bf16.mxu0 0
          %5928 = vmatpush1.bf16.msra.mxu0 %v5910
          %5929 = vmatprep.subr.bf16.mxu0 0
          %5930 = vmatpush1.bf16.msra.mxu0 %v5911
          %5931 = vmatprep.subr.bf16.mxu0 0
          %5932 = vmatpush1.bf16.msra.mxu0 %v5912
          %5933 = vmatprep.subr.bf16.mxu0 0
          %5934 = vmatpush1.bf16.msra.mxu0 %v5913
          %5935 = vmatprep.subr.bf16.mxu0 0
          %5936 = vmatpush1.bf16.msra.mxu0 %v5914
          %5937 = vmatprep.subr.bf16.mxu0 0
          %5938 = vmatpush1.bf16.msra.mxu0 %v5915
          %5939 = vmatprep.subr.bf16.mxu0 0
          %5940 = vmatpush1.bf16.msra.mxu0 %v5916
          %5941 = vmatprep.subr.bf16.mxu0 0
          %5942 = vmatpush1.bf16.msra.mxu0 0
          %5943 = vmatprep.subr.bf16.mxu0 0
          %5944 = vmatpush1.bf16.msra.mxu0 0
          %5945 = vmatprep.subr.bf16.mxu0 0
          %5946 = vmatpush1.bf16.msra.mxu0 0
          %5947 = vmatprep.subr.bf16.mxu0 0
          %5948 = vmatpush1.bf16.msra.mxu0 0
          %5949 = vmatprep.subr.bf16.mxu0 0
          %5950 = vmatpush1.bf16.msra.mxu0 0
          %5951 = vmatprep.subr.bf16.mxu0 0
          %5952 = vmatpush1.bf16.msra.mxu0 0
          %5953 = vmatprep.subr.bf16.mxu0 0
          %5954 = vmatpush1.bf16.msra.mxu0 0
          %5955 = vmatprep.subr.bf16.mxu0 0
          %5956 = vmatpush1.bf16.msra.mxu0 0
          %5957 = vmatprep.mubr.bf16.mxu0 0
          %5958 = vmatmul.mubr.bf16.gmra.mrb[0].mxu0 %v5668
          %v5959 = vpop.f32.mrb[0].mxu0
          %v5960 = vadd.f32 %v5815, %v5959
          %v5961 = vpop.f32.mrb[0].mxu0
          %v5962 = vpop.f32.mrb[0].mxu0
          %v5963 = vadd.f32 %v5818, %v5962
          %v5964 = vpop.f32.mrb[0].mxu0
          %5965 = vmatprep.mubr.bf16.mxu0 0
          %5966 = vmatmul.mubr.bf16.gmra.mrb[0].mxu0 %v5669
          %v5967 = vpop.f32.mrb[0].mxu0
          %v5968 = vadd.f32 %v5823, %v5967
          %v5969 = vpop.f32.mrb[0].mxu0
          %v5970 = vpop.f32.mrb[0].mxu0
          %v5971 = vadd.f32 %v5826, %v5970
          %v5972 = vpop.f32.mrb[0].mxu0
          %5973 = vmatprep.mubr.bf16.mxu0 0
          %5974 = vmatmul.mubr.bf16.gmra.mrb[0].mxu0 %v5670
          %v5975 = vpop.f32.mrb[0].mxu0
          %v5976 = vadd.f32 %v5831, %v5975
          %v5977 = vpop.f32.mrb[0].mxu0
          %v5978 = vpop.f32.mrb[0].mxu0
          %v5979 = vadd.f32 %v5834, %v5978
          %v5980 = vpop.f32.mrb[0].mxu0
          %5981 = vmatprep.mubr.bf16.mxu0 0
          %5982 = vmatmul.mubr.bf16.gmra.mrb[0].mxu0 %v5671
          %v5983 = vpop.f32.mrb[0].mxu0
          %v5984 = vadd.f32 %v5839, %v5983
          %v5985 = vpop.f32.mrb[0].mxu0
          %v5986 = vpop.f32.mrb[0].mxu0
          %v5987 = vadd.f32 %v5842, %v5986
          %v5988 = vpop.f32.mrb[0].mxu0
          %5989 = vmatprep.mubr.bf16.mxu0 0
          %5990 = vmatmul.mubr.bf16.gmra.mrb[0].mxu0 %v5672
          %v5991 = vpop.f32.mrb[0].mxu0
          %v5992 = vadd.f32 %v5847, %v5991
          %v5993 = vpop.f32.mrb[0].mxu0
          %v5994 = vpop.f32.mrb[0].mxu0
          %v5995 = vadd.f32 %v5850, %v5994
          %v5996 = vpop.f32.mrb[0].mxu0
          %5997 = vmatprep.mubr.bf16.mxu0 0
          %5998 = vmatmul.mubr.bf16.gmra.mrb[0].mxu0 %v5673
          %v5999 = vpop.f32.mrb[0].mxu0
          %v6000 = vadd.f32 %v5855, %v5999
          %v6001 = vpop.f32.mrb[0].mxu0
          %v6002 = vpop.f32.mrb[0].mxu0
          %v6003 = vadd.f32 %v5858, %v6002
          %v6004 = vpop.f32.mrb[0].mxu0
          %6005 = vmatprep.mubr.bf16.mxu0 0
          %6006 = vmatmul.mubr.bf16.gmra.mrb[0].mxu0 %v5674
          %v6007 = vpop.f32.mrb[0].mxu0
          %v6008 = vadd.f32 %v5863, %v6007
          %v6009 = vpop.f32.mrb[0].mxu0
          %v6010 = vpop.f32.mrb[0].mxu0
          %v6011 = vadd.f32 %v5866, %v6010
          %v6012 = vpop.f32.mrb[0].mxu0
          %6013 = vmatprep.mubr.bf16.mxu0 0
          %6014 = vmatmul.mubr.bf16.gmra.mrb[0].mxu0 %v5675
          %v6015 = vpop.f32.mrb[0].mxu0
          %v6016 = vadd.f32 %v5871, %v6015
          %v6017 = vpop.f32.mrb[0].mxu0
          %v6018 = vpop.f32.mrb[0].mxu0
          %v6019 = vadd.f32 %v5874, %v6018
          %v6020 = vpop.f32.mrb[0].mxu0
          %6021 = vdwg.mxu0
          %v6022 = vlaneseq
          %v6023 = vshrl.u32 %v6022, 7
          %v6024 = vsub.s32 3, %v6023
          %v6025 = vrot.slane %v5175, %v6024
          %v6026 = vadd.f32 %v5960, %v6025
          %v6027 = vadd.f32 %v5963, %v6025
          %v6028 = vadd.f32 %v5968, %v6025
          %v6029 = vadd.f32 %v5971, %v6025
          %v6030 = vadd.f32 %v5976, %v6025
          %v6031 = vadd.f32 %v5979, %v6025
          %v6032 = vadd.f32 %v5984, %v6025
          %v6033 = vadd.f32 %v5987, %v6025
          %v6034 = vadd.f32 %v5992, %v6025
          %v6035 = vadd.f32 %v5995, %v6025
          %v6036 = vadd.f32 %v6000, %v6025
          %v6037 = vadd.f32 %v6003, %v6025
          %v6038 = vadd.f32 %v6008, %v6025
          %v6039 = vadd.f32 %v6011, %v6025
          %v6040 = vadd.f32 %v6016, %v6025
          %v6041 = vadd.f32 %v6019, %v6025
          %6042 = vst [vmem:[%s1061] sm:$0xff] %v6026
          %6043 = vst [vmem:[%s1061 + $0x8] sm:$0xff] %v6027
          %6044 = vst [vmem:[%s1061 + $0x10] sm:$0xff] %v6028
          %6045 = vst [vmem:[%s1061 + $0x18] sm:$0xff] %v6029
          %6046 = vst [vmem:[%s1061 + $0x20] sm:$0xff] %v6030
          %6047 = vst [vmem:[%s1061 + $0x28] sm:$0xff] %v6031
          %6048 = vst [vmem:[%s1061 + $0x30] sm:$0xff] %v6032
          %6049 = vst [vmem:[%s1061 + $0x38] sm:$0xff] %v6033
          %6050 = vst [vmem:[%s1061 + $0x40] sm:$0xff] %v6034
          %6051 = vst [vmem:[%s1061 + $0x48] sm:$0xff] %v6035
          %6052 = vst [vmem:[%s1061 + $0x50] sm:$0xff] %v6036
          %6053 = vst [vmem:[%s1061 + $0x58] sm:$0xff] %v6037
          %6054 = vst [vmem:[%s1061 + $0x60] sm:$0xff] %v6038
          %6055 = vst [vmem:[%s1061 + $0x68] sm:$0xff] %v6039
          %6056 = vst [vmem:[%s1061 + $0x70] sm:$0xff] %v6040
          %6057 = vst [vmem:[%s1061 + $0x78] sm:$0xff] %v6041
        $region160: #{mlp_att_twoway_conv.1} parent=87 // pred_fallthru
          _
        %s6058 = sand.u32 %s477, 1
        %s6059 = scalar_lea.sflag [#allocation9], %s6058
        %s6060 = sand.u32 %s477, 1
        %s6061 = smul.addr %s6060, 128
        %s6062 = scalar_lea.vmem [#allocation30], %s6061
        %s6063 = sand.u32 %s50, 1
        %s6064 = scalar_lea.sflag [#allocation32], %s6063
        %s6065 = sand.u32 %s503, 1
        %s6066 = smul.addr %s6065, 128
        %s6067 = scalar_lea.vmem [#allocation31], %s6066
        %s6068 = sand.u32 %s50, 1
        %s6069 = scalar_lea.sflag [#allocation32], %s6068
        %s6070 = sand.u32 %s529, 1
        %s6071 = smul.addr %s6070, 128
        %s6072 = scalar_lea.vmem [#allocation33], %s6071
        // Predicated region
        $region161: #{mlp_att_twoway_conv.1} parent=87 // pred_check
          %p6073 = pneg %p487
        $region162: #{mlp_att_twoway_conv.1} parent=87 // pred_check_branch
          %6075 = sbr.rel (%p6073) target = $region164
        $region163: #{mlp_att_twoway_conv.1} parent=87 // pred_region
          %s6076 = smul.u32 16, %s54
          %s6078 = ssub.s32 2048, 2048
          %6079 = vsyncadd %s6059, %s6078
          %s6080 = smul.addr %s6076, 128
          %s6081 = scalar_lea.hbm %s17, %s6080
          %s6082 = sshll.u32 %s6062, 4
          %s6083 = int_to_ptr.vmem [resolvable:$true] %s6082
          %6088 = dma.vmem_to_hbm [thread:$0]  %s6083, 2048, %s6081, %s6059, 128, 128, 8
        $region164: #{mlp_att_twoway_conv.1} parent=87 // pred_fallthru
          _
        // Predicated region
        $region165: #{mlp_att_twoway_conv.1} parent=87 // pred_check
          %p6089 = pneg %p513
        $region166: #{mlp_att_twoway_conv.1} parent=87 // pred_check_branch
          %6091 = sbr.rel (%p6089) target = $region168
        $region167: #{mlp_att_twoway_conv.1} parent=87 // pred_region
          %s6092 = smul.u32 16, %s54
          %s6094 = ssub.s32 2048, 2048
          %6095 = vsyncadd %s6064, %s6094
          %s6096 = smul.addr %s6092, 128
          %s6097 = scalar_lea.hbm %s18, %s6096
          %s6098 = sshll.u32 %s6067, 4
          %s6099 = int_to_ptr.vmem [resolvable:$true] %s6098
          %6104 = dma.vmem_to_hbm [thread:$0]  %s6099, 2048, %s6097, %s6064, 128, 128, 8
        $region168: #{mlp_att_twoway_conv.1} parent=87 // pred_fallthru
          _
        // Predicated region
        $region169: #{mlp_att_twoway_conv.1} parent=87 // pred_check
          %p6105 = pneg %p539
        $region170: #{mlp_att_twoway_conv.1} parent=87 // pred_check_branch
          %6107 = sbr.rel (%p6105) target = $region172
        $region171: #{mlp_att_twoway_conv.1} parent=87 // pred_region
          %s6108 = smul.u32 16, %s54
          %s6110 = ssub.s32 2048, 2048
          %6111 = vsyncadd %s6069, %s6110
          %s6112 = smul.addr %s6108, 128
          %s6113 = scalar_lea.hbm %s19, %s6112
          %s6114 = sshll.u32 %s6072, 4
          %s6115 = int_to_ptr.vmem [resolvable:$true] %s6114
          %6120 = dma.vmem_to_hbm [thread:$0]  %s6115, 2048, %s6113, %s6069, 128, 128, 8
        $region172: #{mlp_att_twoway_conv.1} parent=87 // pred_fallthru
          _
      $region88: #{mlp_att_twoway_conv.1} parent=5 // pred_fallthru
        _
      %p6121 = scmp.le.s32.totalorder 2, %s45
      // Predicated region
      $region173: #{mlp_att_twoway_conv.1} parent=5 // pred_check
        %p6122 = pneg %p6121
      $region174: #{mlp_att_twoway_conv.1} parent=5 // pred_check_branch
        %6124 = sbr.rel (%p6122) target = $region176
      $region175: #{mlp_att_twoway_conv.1} parent=5 // pred_region
        %s6125 = ssub.s32 %s45, 2
        // Predicated region
        $region177: #{mlp_att_twoway_conv.1} parent=175 // pred_check
          %p6126 = pneg %p493
        $region178: #{mlp_att_twoway_conv.1} parent=175 // pred_check_branch
          %6128 = sbr.rel (%p6126) target = $region180
        $region179: #{mlp_att_twoway_conv.1} parent=175 // pred_region
          %s6129 = sand.u32 %s478, 1
          %s6130 = scalar_lea.sflag [#allocation9], %s6129
          %s6131 = sand.u32 %s478, 1
          %s6132 = smul.addr %s6131, 128
          %s6133 = scalar_lea.vmem [#allocation30], %s6132
          %6134 = dma.done %s6130, 2048
        $region180: #{mlp_att_twoway_conv.1} parent=175 // pred_fallthru
          _
        // Predicated region
        $region181: #{mlp_att_twoway_conv.1} parent=175 // pred_check
          %p6135 = pneg %p519
        $region182: #{mlp_att_twoway_conv.1} parent=175 // pred_check_branch
          %6137 = sbr.rel (%p6135) target = $region184
        $region183: #{mlp_att_twoway_conv.1} parent=175 // pred_region
          %s6138 = sand.u32 %s51, 1
          %s6139 = scalar_lea.sflag [#allocation32], %s6138
          %s6140 = sand.u32 %s504, 1
          %s6141 = smul.addr %s6140, 128
          %s6142 = scalar_lea.vmem [#allocation31], %s6141
          %6143 = dma.done %s6139, 2048
        $region184: #{mlp_att_twoway_conv.1} parent=175 // pred_fallthru
          _
        // Predicated region
        $region185: #{mlp_att_twoway_conv.1} parent=175 // pred_check
          %p6144 = pneg %p545
        $region186: #{mlp_att_twoway_conv.1} parent=175 // pred_check_branch
          %6146 = sbr.rel (%p6144) target = $region188
        $region187: #{mlp_att_twoway_conv.1} parent=175 // pred_region
          %s6147 = sand.u32 %s51, 1
          %s6148 = scalar_lea.sflag [#allocation32], %s6147
          %s6149 = sand.u32 %s530, 1
          %s6150 = smul.addr %s6149, 128
          %s6151 = scalar_lea.vmem [#allocation33], %s6150
          %6152 = dma.done %s6148, 2048
        $region188: #{mlp_att_twoway_conv.1} parent=175 // pred_fallthru
          _
      $region176: #{mlp_att_twoway_conv.1} parent=5 // pred_fallthru
        _
    $region6: #{mlp_att_twoway_conv.1} parent=1 // loop_footer
      %s49 = sadd.s32 1, %s45
    $region7: #{mlp_att_twoway_conv.1} parent=1 // loop_footer_branch
      %44 = sbr.rel target = $region3
    $region8: #{mlp_att_twoway_conv.1} parent=1 // loop_exit
      _
    %6153 = vsyncpa [#allocation8], 1
    %s6154 = scalar_lea.sflag [#allocation8], 1
    %6155 = vsyncpa %s6154, 1
    %6156 = vsyncpa [#allocation11], 1
    %s6157 = scalar_lea.sflag [#allocation11], 1
    %6158 = vsyncpa %s6157, 1
    %6159 = vsyncpa [#allocation14], 1
    %6160 = vsyncpa [#allocation23], 1
    %6161 = vsyncpa [#allocation26], 1
    %s6162 = scalar_lea.sflag [#allocation26], 1
    %6163 = vsyncpa %s6162, 1
    %6164 = vsyncpa [#allocation29], 1
    %6165 = vsyncpa [#allocation9], 1
    %s6166 = scalar_lea.sflag [#allocation9], 1
    %6167 = vsyncpa %s6166, 1
    %6168 = vsyncpa [#allocation32], 1
    %s6169 = scalar_lea.sflag [#allocation32], 1
    %6170 = vsyncpa %s6169, 1

</llo_original>
